<compile_context>
chip_gen: v7x
topology: tpu7x:2x2x1
jax: 0.10.0
libtpu: 0.0.40
codegen_flags: <defaults>
</compile_context>

<pallas_src>
import math
import functools

import jax
import jax.numpy as jnp
from jax import lax
from jax.experimental import pallas as pl
from jax.experimental.pallas import tpu as pltpu


# ----------------------------------------------------------------------------
# helpers
# ----------------------------------------------------------------------------
def _rep_spec(shape):
    """Full-array block, identical for every grid step (weight replicated)."""
    nd = len(shape)
    return pl.BlockSpec(shape, lambda i, _nd=nd: (0,) * _nd)


def _layernorm(x, gamma, beta, eps=1e-5):
    mu = jnp.mean(x, axis=-1, keepdims=True)
    var = jnp.mean((x - mu) ** 2, axis=-1, keepdims=True)
    return (x - mu) * lax.rsqrt(var + eps) * gamma + beta


# ----------------------------------------------------------------------------
# Fused forward kernel: one grid step per batch block (default: whole batch)
# ----------------------------------------------------------------------------
def _fused_forward_kernel(src_ref, ew1_ref, eb1_ref, ew2_ref, eb2_ref, pos_ref,
                          wqkv_ref, bwide_ref, wout_ref, vece_ref,
                          wff1_ref, wff2_ref, wd_ref, bd_ref,
                          o_ref, x_scr, ctx_scr, *, nhead, has_mask):
    B, C, Dsrc = src_ref.shape
    S, E = pos_ref.shape
    nlayers = wqkv_ref.shape[0]
    nhid = wff1_ref.shape[2]
    hd = E // nhead

    # ---- TokenEmbedding on all batch rows at once (sqrt(E) folded in ew2/eb2)
    x0 = src_ref[...].reshape(B * C, Dsrc)
    h = jnp.dot(x0, ew1_ref[...], preferred_element_type=jnp.float32) + eb1_ref[...]
    h = jnp.maximum(h, 0.0)
    y = jnp.dot(h, ew2_ref[...], preferred_element_type=jnp.float32) + eb2_ref[...]

    # ---- LearnPosEncoding: token_embedding + pos_embedding. The cls token is
    #      pre-folded into pos row C; rows are written in place into a VMEM
    #      scratch (avoids the sublane concatenate).
    pos = pos_ref[...]
    pos_tok = pos[:C, :]
    for b in range(B):
        x_scr[b * S:b * S + C, :] = y[b * C:(b + 1) * C, :] + pos_tok
        x_scr[b * S + C:b * S + C + 1, :] = pos[C:C + 1, :]
    x = x_scr[...]                                               # (B*S, E)

    # ---- causal additive mask, built once per grid step
    if has_mask:
        rows = lax.broadcasted_iota(jnp.int32, (S, S), 0)
        cols = lax.broadcasted_iota(jnp.int32, (S, S), 1)
        mask = jnp.where(cols <= rows, 0.0, -1e9).astype(jnp.float32)

    # ---- encoder layers, statically unrolled; all weights resident in VMEM
    for l in range(nlayers):
        w_qkv = wqkv_ref[l]                                      # (E, 3E)
        w_out = wout_ref[l]                                      # (E, E)
        w_ff1 = wff1_ref[l]                                      # (E, nhid)
        w_ff2 = wff2_ref[l]                                      # (nhid, E)
        bwide = bwide_ref[l]                                     # (2, W)
        vec = vece_ref[l]                                        # (6, E)
        b_qkv = bwide[0:1, :3 * E]
        b_ff1 = bwide[1:2, :nhid]
        b_out = vec[0:1, :]; g1 = vec[1:2, :]; be1 = vec[2:3, :]
        b_ff2 = vec[3:4, :]; g2 = vec[4:5, :]; be2 = vec[5:6, :]

        # fused Q/K/V projection: one lane-dense matmul over all batch rows
        # (1/sqrt(hd) already folded into the Q columns of w_qkv / b_qkv)
        qkv = jnp.dot(x, w_qkv, preferred_element_type=jnp.float32) + b_qkv

        # per-(batch, head) attention on 2D tiles; context tiles are written
        # back into ctx_scr so the output projection is a single (M,E)@(E,E)
        for b in range(B):
            r0 = b * S
            for hh in range(nhead):
                c0 = hh * hd
                qs = qkv[r0:r0 + S, c0:c0 + hd]
                ks = qkv[r0:r0 + S, E + c0:E + c0 + hd]
                vs = qkv[r0:r0 + S, 2 * E + c0:2 * E + c0 + hd]
                # contract last dims of both operands (no explicit K transpose)
                s = lax.dot_general(qs, ks, (((1,), (1,)), ((), ())),
                                    preferred_element_type=jnp.float32)
                if has_mask:
                    s = s + mask
                s = s - jnp.max(s, axis=-1, keepdims=True)
                p = jnp.exp(s)
                p = p * pl.reciprocal(jnp.sum(p, axis=-1, keepdims=True),
                                      approx=True)
                ctx_scr[r0:r0 + S, c0:c0 + hd] = jnp.dot(
                    p, vs, preferred_element_type=jnp.float32)

        # single output projection; head-concat is just the scratch layout
        attn = jnp.dot(ctx_scr[...], w_out,
                       preferred_element_type=jnp.float32) + b_out
        x1 = _layernorm(x + attn, g1, be1)

        ff = jnp.maximum(jnp.dot(x1, w_ff1,
                                 preferred_element_type=jnp.float32) + b_ff1, 0.0)
        ff = jnp.dot(ff, w_ff2, preferred_element_type=jnp.float32) + b_ff2
        x = _layernorm(x1 + ff, g2, be2)

    # ---- decoder Linear(emb, tgt_h*tgt_w); per-batch row stores
    out2d = jnp.dot(x, wd_ref[...], preferred_element_type=jnp.float32) + bd_ref[...]
    for b in range(B):
        o_ref[b] = out2d[b * S:(b + 1) * S, :]


# ----------------------------------------------------------------------------
# Parameter construction (deterministic, synthetic) + one-time preparation
# ----------------------------------------------------------------------------
def init_params(key, src_size, tgt_size, emb_size, nhead, nhid, nlayers, frames):
    HID_EMB = 2000            # hard-coded in TokenEmbedding
    HID_PAD = 2048            # padded to a multiple of 128 lanes (zero tail, exact)
    tgt_len = tgt_size[0] * tgt_size[1]
    keys = iter(jax.random.split(key, 64))

    def nrm(shape, scale=0.02):
        return (scale * jax.random.normal(next(keys), shape)).astype(jnp.float32)

    pad_c = HID_PAD - HID_EMB
    params = {
        "cls_token": nrm((1, 1, emb_size), 1.0),
        "pos_embedding": nrm((1, frames + 1, emb_size), 1.0),
        # TokenEmbedding weights stored (in, out); padded columns/rows are zero
        "emb_w1": jnp.pad(nrm((src_size, HID_EMB)), ((0, 0), (0, pad_c))),
        "emb_b1": jnp.pad(nrm((1, HID_EMB)), ((0, 0), (0, pad_c))),
        "emb_w2": jnp.pad(nrm((HID_EMB, emb_size)), ((0, pad_c), (0, 0))),
        "emb_b2": nrm((1, emb_size)),
        # decoder: nn.init.uniform_(-0.1, 0.1) on weight
        "dec_w": jax.random.uniform(next(keys), (emb_size, tgt_len),
                                    minval=-0.1, maxval=0.1).astype(jnp.float32),
        "dec_b": jnp.zeros((1, tgt_len), jnp.float32),
        "layers": [],
    }
    for _ in range(nlayers):
        params["layers"].append({
            "w_in": nrm((emb_size, 3 * emb_size)),
            "b_in": nrm((1, 3 * emb_size)),
            "w_out": nrm((emb_size, emb_size)),
            "b_out": nrm((1, emb_size)),
            "ln1_g": jnp.ones((1, emb_size), jnp.float32),
            "ln1_b": jnp.zeros((1, emb_size), jnp.float32),
            "w_ff1": nrm((emb_size, nhid)),
            "b_ff1": nrm((1, nhid)),
            "w_ff2": nrm((nhid, emb_size)),
            "b_ff2": nrm((1, emb_size)),
            "ln2_g": jnp.ones((1, emb_size), jnp.float32),
            "ln2_b": jnp.zeros((1, emb_size), jnp.float32),
        })
    return params


def prepare_params(params, *, emb_size, nhead):
    """One-time weight re-layout / scale folding / slab packing (cold path)."""
    E = emb_size
    hd = E // nhead
    sqrt_e = math.sqrt(E)
    inv_sqrt_hd = 1.0 / math.sqrt(hd)

    # Fold the cls token into the last positional-encoding row:
    #   concat(y, cls) + pos == rows<C: y + pos[:C] ; row C: cls + pos[C]
    pos = params["pos_embedding"].reshape(-1, E)
    pos = pos.at[pos.shape[0] - 1].add(params["cls_token"].reshape(E))

    nhid = params["layers"][0]["b_ff1"].shape[1]
    W = max(3 * E, nhid)
    # scale only the Q columns by 1/sqrt(hd)
    q_scale = jnp.concatenate([jnp.full((1, E), inv_sqrt_hd, jnp.float32),
                               jnp.ones((1, 2 * E), jnp.float32)], axis=1)

    wqkv, bwide, wout, vece, wff1, wff2 = [], [], [], [], [], []
    for lp in params["layers"]:
        wqkv.append(lp["w_in"] * q_scale)                              # (E, 3E)
        b_in = jnp.pad(lp["b_in"] * q_scale, ((0, 0), (0, W - 3 * E)))
        b_f1 = jnp.pad(lp["b_ff1"], ((0, 0), (0, W - nhid)))
        bwide.append(jnp.concatenate([b_in, b_f1], axis=0))            # (2, W)
        wout.append(lp["w_out"])
        vece.append(jnp.concatenate([lp["b_out"], lp["ln1_g"], lp["ln1_b"],
                                     lp["b_ff2"], lp["ln2_g"], lp["ln2_b"]],
                                    axis=0))                           # (6, E)
        wff1.append(lp["w_ff1"])
        wff2.append(lp["w_ff2"])

    return {
        "emb_w1": params["emb_w1"], "emb_b1": params["emb_b1"],
        "emb_w2": params["emb_w2"] * sqrt_e,     # sqrt(emb) folded in
        "emb_b2": params["emb_b2"] * sqrt_e,
        "pos": pos,
        "wqkv": jnp.stack(wqkv), "bwide": jnp.stack(bwide),
        "wout": jnp.stack(wout), "vece": jnp.stack(vece),
        "wff1": jnp.stack(wff1), "wff2": jnp.stack(wff2),
        "dec_w": params["dec_w"], "dec_b": params["dec_b"],
    }


# ----------------------------------------------------------------------------
# Forward pass (mirrors Seq2SingleTransformer.forward) — single pallas_call
# ----------------------------------------------------------------------------
def seq2single_forward(prep, src, *, emb_size, nhead, tgt_size,
                       has_mask=True, batch_block=None):
    N, C, Dsrc = src.shape
    S = C + 1                                    # cls token appended at the end
    T = tgt_size[0] * tgt_size[1]
    B = N if batch_block is None else batch_block   # default: whole batch / step
    assert N % B == 0

    args = (src, prep["emb_w1"], prep["emb_b1"], prep["emb_w2"], prep["emb_b2"],
            prep["pos"], prep["wqkv"], prep["bwide"], prep["wout"], prep["vece"],
            prep["wff1"], prep["wff2"], prep["dec_w"], prep["dec_b"])

    in_specs = [pl.BlockSpec((B, C, Dsrc), lambda i: (i, 0, 0))] + \
               [_rep_spec(a.shape) for a in args[1:]]

    out = pl.pallas_call(
        functools.partial(_fused_forward_kernel, nhead=nhead, has_mask=has_mask),
        out_shape=jax.ShapeDtypeStruct((N, S, T), jnp.float32),
        grid=(N // B,),
        in_specs=in_specs,
        out_specs=pl.BlockSpec((B, S, T), lambda i: (i, 0, 0)),
        scratch_shapes=[pltpu.VMEM((B * S, emb_size), jnp.float32),   # x assembly
                        pltpu.VMEM((B * S, emb_size), jnp.float32)],  # ctx assembly
        compiler_params=pltpu.CompilerParams(
            dimension_semantics=("parallel",),
            vmem_limit_bytes=32 * 1024 * 1024),
    )(*args)
    # TODO(synk): for large tgt sizes, flatten to (N, S*T) with T a multiple of
    # 128 for lane-dense stores; negligible at T=16.
    return out.reshape(N, S, tgt_size[0], tgt_size[1])


# ----------------------------------------------------------------------------
# Pure-JAX reference (original, unfused math) for a correctness cross-check
# ----------------------------------------------------------------------------
def _reference_forward(params, src, *, emb_size, nhead, tgt_size, has_mask=True):
    N, C, Dsrc = src.shape
    S = C + 1
    E = emb_size
    hd = E // nhead
    x = jnp.maximum(src @ params["emb_w1"] + params["emb_b1"], 0.0)
    x = (x @ params["emb_w2"] + params["emb_b2"]) * math.sqrt(E)
    cls = jnp.broadcast_to(params["cls_token"], (N, 1, E))
    x = jnp.concatenate([x, cls], axis=1) + params["pos_embedding"]
    if has_mask:
        allow = jnp.tril(jnp.ones((S, S), dtype=bool))
        mask = jnp.where(allow, 0.0, -jnp.inf).astype(jnp.float32)
    else:
        mask = jnp.zeros((S, S), jnp.float32)
    for lp in params["layers"]:
        qkv = x @ lp["w_in"] + lp["b_in"]
        q, k, v = qkv[..., :E], qkv[..., E:2 * E], qkv[..., 2 * E:]
        heads = []
        for h in range(nhead):
            qh, kh, vh = (t[..., h * hd:(h + 1) * hd] for t in (q, k, v))
            s = jnp.einsum('nqd,nkd->nqk', qh, kh) / math.sqrt(hd) + mask
            p = jax.nn.softmax(s, axis=-1)
            heads.append(jnp.einsum('nqk,nkd->nqd', p, vh))
        attn = jnp.concatenate(heads, axis=-1) @ lp["w_out"] + lp["b_out"]
        x1 = _layernorm(x + attn, lp["ln1_g"], lp["ln1_b"])
        ff = jnp.maximum(x1 @ lp["w_ff1"] + lp["b_ff1"], 0.0) @ lp["w_ff2"] + lp["b_ff2"]
        x = _layernorm(x1 + ff, lp["ln2_g"], lp["ln2_b"])
    out = x @ params["dec_w"] + params["dec_b"]
    return out.reshape(N, S, tgt_size[0], tgt_size[1])


# ----------------------------------------------------------------------------
if __name__ == "__main__":
    # small, module-consistent shapes
    N = 2            # batch
    frames = 8       # src sequence length C; C+1 after cls token
    src_size = 16    # per-frame feature dim
    emb_size = 32
    nhead = 4
    nhid = 64
    nlayers = 2
    tgt_size = (4, 4)

    key = jax.random.PRNGKey(0)
    k_params, k_input = jax.random.split(key)

    params = init_params(k_params, src_size, tgt_size, emb_size,
                         nhead, nhid, nlayers, frames)
    prepared = prepare_params(params, emb_size=emb_size, nhead=nhead)
    src = jax.random.normal(k_input, (N, frames, src_size), dtype=jnp.float32)

    out = seq2single_forward(prepared, src, emb_size=emb_size, nhead=nhead,
                             tgt_size=tgt_size, has_mask=True)
    out = jax.block_until_ready(out)

    assert out.shape == (N, frames + 1, tgt_size[0], tgt_size[1]), out.shape
    assert bool(jnp.all(jnp.isfinite(out))), "non-finite output"

    ref = _reference_forward(params, src, emb_size=emb_size, nhead=nhead,
                             tgt_size=tgt_size, has_mask=True)
    assert bool(jnp.allclose(out, ref, atol=2e-2, rtol=2e-2)), \
        float(jnp.max(jnp.abs(out - ref)))
    print("KERNEL_OK")
</pallas_src>

<mosaic_0001>
module attributes {stable_mosaic.version = 11 : i64} {
  func.func @_fused_forward_kernel(%arg0: i32, %arg1: memref<2x8x16xf32, #tpu.memory_space<vmem>>, %arg2: memref<16x2048xf32, #tpu.memory_space<vmem>>, %arg3: memref<1x2048xf32, #tpu.memory_space<vmem>>, %arg4: memref<2048x32xf32, #tpu.memory_space<vmem>>, %arg5: memref<1x32xf32, #tpu.memory_space<vmem>>, %arg6: memref<9x32xf32, #tpu.memory_space<vmem>>, %arg7: memref<2x32x96xf32, #tpu.memory_space<vmem>>, %arg8: memref<2x2x96xf32, #tpu.memory_space<vmem>>, %arg9: memref<2x32x32xf32, #tpu.memory_space<vmem>>, %arg10: memref<2x6x32xf32, #tpu.memory_space<vmem>>, %arg11: memref<2x32x64xf32, #tpu.memory_space<vmem>>, %arg12: memref<2x64x32xf32, #tpu.memory_space<vmem>>, %arg13: memref<32x16xf32, #tpu.memory_space<vmem>>, %arg14: memref<1x16xf32, #tpu.memory_space<vmem>>, %arg15: memref<2x9x16xf32, #tpu.memory_space<vmem>>, %arg16: memref<18x32xf32, #tpu.memory_space<vmem>>, %arg17: memref<18x32xf32, #tpu.memory_space<vmem>>) attributes {dimension_semantics = [#tpu.dimension_semantics<parallel>], iteration_bounds = array<i64: 1>, scalar_prefetch = 0 : i64, scratch_operands = 2 : i64, tpu.core_type = #tpu.core_type<tc>, window_params = [{transform_indices = @transform_0, window_bounds = array<i64: 2, 8, 16>}, {pipeline_mode = #tpu.pipeline_mode<synchronous>, transform_indices = @transform_1, window_bounds = array<i64: 16, 2048>}, {pipeline_mode = #tpu.pipeline_mode<synchronous>, transform_indices = @transform_2, window_bounds = array<i64: 1, 2048>}, {pipeline_mode = #tpu.pipeline_mode<synchronous>, transform_indices = @transform_3, window_bounds = array<i64: 2048, 32>}, {pipeline_mode = #tpu.pipeline_mode<synchronous>, transform_indices = @transform_4, window_bounds = array<i64: 1, 32>}, {pipeline_mode = #tpu.pipeline_mode<synchronous>, transform_indices = @transform_5, window_bounds = array<i64: 9, 32>}, {pipeline_mode = #tpu.pipeline_mode<synchronous>, transform_indices = @transform_6, window_bounds = array<i64: 2, 32, 96>}, {pipeline_mode = #tpu.pipeline_mode<synchronous>, transform_indices = @transform_7, window_bounds = array<i64: 2, 2, 96>}, {pipeline_mode = #tpu.pipeline_mode<synchronous>, transform_indices = @transform_8, window_bounds = array<i64: 2, 32, 32>}, {pipeline_mode = #tpu.pipeline_mode<synchronous>, transform_indices = @transform_9, window_bounds = array<i64: 2, 6, 32>}, {pipeline_mode = #tpu.pipeline_mode<synchronous>, transform_indices = @transform_10, window_bounds = array<i64: 2, 32, 64>}, {pipeline_mode = #tpu.pipeline_mode<synchronous>, transform_indices = @transform_11, window_bounds = array<i64: 2, 64, 32>}, {pipeline_mode = #tpu.pipeline_mode<synchronous>, transform_indices = @transform_12, window_bounds = array<i64: 32, 16>}, {pipeline_mode = #tpu.pipeline_mode<synchronous>, transform_indices = @transform_13, window_bounds = array<i64: 1, 16>}, {transform_indices = @transform_14, window_bounds = array<i64: 2, 9, 16>}]} {
    %c0 = arith.constant 0 : index
    %c0_0 = arith.constant 0 : index
    %c0_1 = arith.constant 0 : index
    %0 = vector.load %arg1[%c0, %c0_0, %c0_1] : memref<2x8x16xf32, #tpu.memory_space<vmem>>, vector<2x8x16xf32>
    %1 = vector.shape_cast %0 : vector<2x8x16xf32> to vector<16x16xf32>
    %c0_2 = arith.constant 0 : index
    %c0_3 = arith.constant 0 : index
    %2 = vector.load %arg2[%c0_2, %c0_3] : memref<16x2048xf32, #tpu.memory_space<vmem>>, vector<16x2048xf32>
    %cst = arith.constant dense<0.000000e+00> : vector<16x2048xf32>
    %3 = tpu.matmul %1, %2, %cst {dimension_numbers = #tpu.dot_dimension_numbers<[1], [0], [0], [1], [0, 0, 1, 1], [], []>} : vector<16x16xf32>, vector<16x2048xf32>, vector<16x2048xf32> -> vector<16x2048xf32>
    %c0_4 = arith.constant 0 : index
    %c0_5 = arith.constant 0 : index
    %4 = vector.load %arg3[%c0_4, %c0_5] : memref<1x2048xf32, #tpu.memory_space<vmem>>, vector<1x2048xf32>
    %5 = vector.broadcast %4 : vector<1x2048xf32> to vector<16x2048xf32>
    %6 = arith.addf %3, %5 : vector<16x2048xf32>
    %cst_6 = arith.constant 0.000000e+00 : f32
    %7 = vector.broadcast %cst_6 : f32 to vector<16x2048xf32>
    %8 = arith.maximumf %6, %7 : vector<16x2048xf32>
    %c0_7 = arith.constant 0 : index
    %c0_8 = arith.constant 0 : index
    %9 = vector.load %arg4[%c0_7, %c0_8] : memref<2048x32xf32, #tpu.memory_space<vmem>>, vector<2048x32xf32>
    %cst_9 = arith.constant dense<0.000000e+00> : vector<16x32xf32>
    %10 = tpu.matmul %8, %9, %cst_9 {dimension_numbers = #tpu.dot_dimension_numbers<[1], [0], [0], [1], [0, 0, 1, 1], [], []>} : vector<16x2048xf32>, vector<2048x32xf32>, vector<16x32xf32> -> vector<16x32xf32>
    %c0_10 = arith.constant 0 : index
    %c0_11 = arith.constant 0 : index
    %11 = vector.load %arg5[%c0_10, %c0_11] : memref<1x32xf32, #tpu.memory_space<vmem>>, vector<1x32xf32>
    %12 = vector.broadcast %11 : vector<1x32xf32> to vector<16x32xf32>
    %13 = arith.addf %10, %12 : vector<16x32xf32>
    %c0_12 = arith.constant 0 : index
    %c0_13 = arith.constant 0 : index
    %14 = vector.load %arg6[%c0_12, %c0_13] : memref<9x32xf32, #tpu.memory_space<vmem>>, vector<9x32xf32>
    %15 = vector.extract_strided_slice %14 {offsets = [0, 0], sizes = [8, 32], strides = [1, 1]} : vector<9x32xf32> to vector<8x32xf32>
    %16 = vector.extract_strided_slice %13 {offsets = [0, 0], sizes = [8, 32], strides = [1, 1]} : vector<16x32xf32> to vector<8x32xf32>
    %17 = arith.addf %16, %15 : vector<8x32xf32>
    %c0_14 = arith.constant 0 : index
    %c0_15 = arith.constant 0 : index
    %18 = vector.load %arg16[%c0_14, %c0_15] : memref<18x32xf32, #tpu.memory_space<vmem>>, vector<8x32xf32>
    tpu.vector_store %arg16[%c0_14, %c0_15], %17 {strides = array<i32>} : memref<18x32xf32, #tpu.memory_space<vmem>>, vector<8x32xf32>,
    %19 = vector.extract_strided_slice %14 {offsets = [8, 0], sizes = [1, 32], strides = [1, 1]} : vector<9x32xf32> to vector<1x32xf32>
    %c8 = arith.constant 8 : index
    %c0_16 = arith.constant 0 : index
    %20 = vector.load %arg16[%c8, %c0_16] : memref<18x32xf32, #tpu.memory_space<vmem>>, vector<1x32xf32>
    tpu.vector_store %arg16[%c8, %c0_16], %19 {strides = array<i32>} : memref<18x32xf32, #tpu.memory_space<vmem>>, vector<1x32xf32>,
    %21 = vector.extract_strided_slice %13 {offsets = [8, 0], sizes = [8, 32], strides = [1, 1]} : vector<16x32xf32> to vector<8x32xf32>
    %22 = arith.addf %21, %15 : vector<8x32xf32>
    %c9 = arith.constant 9 : index
    %c0_17 = arith.constant 0 : index
    %23 = vector.load %arg16[%c9, %c0_17] : memref<18x32xf32, #tpu.memory_space<vmem>>, vector<8x32xf32>
    tpu.vector_store %arg16[%c9, %c0_17], %22 {strides = array<i32>} : memref<18x32xf32, #tpu.memory_space<vmem>>, vector<8x32xf32>,
    %24 = vector.extract_strided_slice %14 {offsets = [8, 0], sizes = [1, 32], strides = [1, 1]} : vector<9x32xf32> to vector<1x32xf32>
    %c17 = arith.constant 17 : index
    %c0_18 = arith.constant 0 : index
    %25 = vector.load %arg16[%c17, %c0_18] : memref<18x32xf32, #tpu.memory_space<vmem>>, vector<1x32xf32>
    tpu.vector_store %arg16[%c17, %c0_18], %24 {strides = array<i32>} : memref<18x32xf32, #tpu.memory_space<vmem>>, vector<1x32xf32>,
    %c0_19 = arith.constant 0 : index
    %c0_20 = arith.constant 0 : index
    %26 = vector.load %arg16[%c0_19, %c0_20] : memref<18x32xf32, #tpu.memory_space<vmem>>, vector<18x32xf32>
    %27 = tpu.iota {dimensions = array<i32: 0>} : vector<9x9xi32>
    %28 = tpu.iota {dimensions = array<i32: 1>} : vector<9x9xi32>
    %29 = arith.cmpi sle, %28, %27 : vector<9x9xi32>
    %cst_21 = arith.constant 0.000000e+00 : f32
    %cst_22 = arith.constant -1.000000e+09 : f32
    %30 = vector.broadcast %cst_21 : f32 to vector<9x9xf32>
    %31 = vector.broadcast %cst_22 : f32 to vector<9x9xf32>
    %32 = arith.select %29, %30, %31 : vector<9x9xi1>, vector<9x9xf32>
    %c0_23 = arith.constant 0 : index
    %c0_24 = arith.constant 0 : index
    %c0_25 = arith.constant 0 : index
    %33 = vector.load %arg7[%c0_23, %c0_24, %c0_25] : memref<2x32x96xf32, #tpu.memory_space<vmem>>, vector<1x32x96xf32>
    %34 = vector.shape_cast %33 : vector<1x32x96xf32> to vector<32x96xf32>
    %c0_26 = arith.constant 0 : index
    %c0_27 = arith.constant 0 : index
    %c0_28 = arith.constant 0 : index
    %35 = vector.load %arg9[%c0_26, %c0_27, %c0_28] : memref<2x32x32xf32, #tpu.memory_space<vmem>>, vector<1x32x32xf32>
    %36 = vector.shape_cast %35 : vector<1x32x32xf32> to vector<32x32xf32>
    %c0_29 = arith.constant 0 : index
    %c0_30 = arith.constant 0 : index
    %c0_31 = arith.constant 0 : index
    %37 = vector.load %arg11[%c0_29, %c0_30, %c0_31] : memref<2x32x64xf32, #tpu.memory_space<vmem>>, vector<1x32x64xf32>
    %38 = vector.shape_cast %37 : vector<1x32x64xf32> to vector<32x64xf32>
    %c0_32 = arith.constant 0 : index
    %c0_33 = arith.constant 0 : index
    %c0_34 = arith.constant 0 : index
    %39 = vector.load %arg12[%c0_32, %c0_33, %c0_34] : memref<2x64x32xf32, #tpu.memory_space<vmem>>, vector<1x64x32xf32>
    %40 = vector.shape_cast %39 : vector<1x64x32xf32> to vector<64x32xf32>
    %c0_35 = arith.constant 0 : index
    %c0_36 = arith.constant 0 : index
    %c0_37 = arith.constant 0 : index
    %41 = vector.load %arg8[%c0_35, %c0_36, %c0_37] : memref<2x2x96xf32, #tpu.memory_space<vmem>>, vector<1x2x96xf32>
    %42 = vector.shape_cast %41 : vector<1x2x96xf32> to vector<2x96xf32>
    %c0_38 = arith.constant 0 : index
    %c0_39 = arith.constant 0 : index
    %c0_40 = arith.constant 0 : index
    %43 = vector.load %arg10[%c0_38, %c0_39, %c0_40] : memref<2x6x32xf32, #tpu.memory_space<vmem>>, vector<1x6x32xf32>
    %44 = vector.shape_cast %43 : vector<1x6x32xf32> to vector<6x32xf32>
    %45 = vector.extract_strided_slice %42 {offsets = [0, 0], sizes = [1, 96], strides = [1, 1]} : vector<2x96xf32> to vector<1x96xf32>
    %46 = vector.extract_strided_slice %42 {offsets = [1, 0], sizes = [1, 64], strides = [1, 1]} : vector<2x96xf32> to vector<1x64xf32>
    %47 = vector.extract_strided_slice %44 {offsets = [0, 0], sizes = [1, 32], strides = [1, 1]} : vector<6x32xf32> to vector<1x32xf32>
    %48 = vector.extract_strided_slice %44 {offsets = [1, 0], sizes = [1, 32], strides = [1, 1]} : vector<6x32xf32> to vector<1x32xf32>
    %49 = vector.extract_strided_slice %44 {offsets = [2, 0], sizes = [1, 32], strides = [1, 1]} : vector<6x32xf32> to vector<1x32xf32>
    %50 = vector.extract_strided_slice %44 {offsets = [3, 0], sizes = [1, 32], strides = [1, 1]} : vector<6x32xf32> to vector<1x32xf32>
    %51 = vector.extract_strided_slice %44 {offsets = [4, 0], sizes = [1, 32], strides = [1, 1]} : vector<6x32xf32> to vector<1x32xf32>
    %52 = vector.extract_strided_slice %44 {offsets = [5, 0], sizes = [1, 32], strides = [1, 1]} : vector<6x32xf32> to vector<1x32xf32>
    %cst_41 = arith.constant dense<0.000000e+00> : vector<18x96xf32>
    %53 = tpu.matmul %26, %34, %cst_41 {dimension_numbers = #tpu.dot_dimension_numbers<[1], [0], [0], [1], [0, 0, 1, 1], [], []>} : vector<18x32xf32>, vector<32x96xf32>, vector<18x96xf32> -> vector<18x96xf32>
    %54 = vector.broadcast %45 : vector<1x96xf32> to vector<18x96xf32>
    %55 = arith.addf %53, %54 : vector<18x96xf32>
    %56 = vector.extract_strided_slice %55 {offsets = [0, 0], sizes = [9, 8], strides = [1, 1]} : vector<18x96xf32> to vector<9x8xf32>
    %57 = vector.extract_strided_slice %55 {offsets = [0, 32], sizes = [9, 8], strides = [1, 1]} : vector<18x96xf32> to vector<9x8xf32>
    %58 = vector.extract_strided_slice %55 {offsets = [0, 64], sizes = [9, 8], strides = [1, 1]} : vector<18x96xf32> to vector<9x8xf32>
    %cst_42 = arith.constant dense<0.000000e+00> : vector<9x9xf32>
    %59 = tpu.matmul %56, %57, %cst_42 {dimension_numbers = #tpu.dot_dimension_numbers<[1], [1], [0], [0], [0, 0, 1, 0], [], []>} : vector<9x8xf32>, vector<9x8xf32>, vector<9x9xf32> -> vector<9x9xf32>
    %60 = arith.addf %59, %32 : vector<9x9xf32>
    %cst_43 = arith.constant dense<0xFF800000> : vector<9xf32>
    %61 = vector.multi_reduction <maximumf>, %60, %cst_43 [1] : vector<9x9xf32> to vector<9xf32>
    %62 = vector.shape_cast %61 : vector<9xf32> to vector<9x1xf32>
    %63 = vector.broadcast %62 : vector<9x1xf32> to vector<9x9xf32>
    %64 = arith.subf %60, %63 : vector<9x9xf32>
    %65 = math.exp %64 : vector<9x9xf32>
    %cst_44 = arith.constant dense<0.000000e+00> : vector<9xf32>
    %66 = vector.multi_reduction <add>, %65, %cst_44 [1] : vector<9x9xf32> to vector<9xf32>
    %67 = vector.shape_cast %66 : vector<9xf32> to vector<9x1xf32>
    %68 = tpu.reciprocal %67 {approx = true} : vector<9x1xf32> -> vector<9x1xf32>
    %69 = vector.broadcast %68 : vector<9x1xf32> to vector<9x9xf32>
    %70 = arith.mulf %65, %69 : vector<9x9xf32>
    %cst_45 = arith.constant dense<0.000000e+00> : vector<9x8xf32>
    %71 = tpu.matmul %70, %58, %cst_45 {dimension_numbers = #tpu.dot_dimension_numbers<[1], [0], [0], [1], [0, 0, 1, 1], [], []>} : vector<9x9xf32>, vector<9x8xf32>, vector<9x8xf32> -> vector<9x8xf32>
    %c0_46 = arith.constant 0 : index
    %c0_47 = arith.constant 0 : index
    %72 = vector.load %arg17[%c0_46, %c0_47] : memref<18x32xf32, #tpu.memory_space<vmem>>, vector<9x8xf32>
    tpu.vector_store %arg17[%c0_46, %c0_47], %71 {strides = array<i32>} : memref<18x32xf32, #tpu.memory_space<vmem>>, vector<9x8xf32>,
    %73 = vector.extract_strided_slice %55 {offsets = [0, 8], sizes = [9, 8], strides = [1, 1]} : vector<18x96xf32> to vector<9x8xf32>
    %74 = vector.extract_strided_slice %55 {offsets = [0, 40], sizes = [9, 8], strides = [1, 1]} : vector<18x96xf32> to vector<9x8xf32>
    %75 = vector.extract_strided_slice %55 {offsets = [0, 72], sizes = [9, 8], strides = [1, 1]} : vector<18x96xf32> to vector<9x8xf32>
    %cst_48 = arith.constant dense<0.000000e+00> : vector<9x9xf32>
    %76 = tpu.matmul %73, %74, %cst_48 {dimension_numbers = #tpu.dot_dimension_numbers<[1], [1], [0], [0], [0, 0, 1, 0], [], []>} : vector<9x8xf32>, vector<9x8xf32>, vector<9x9xf32> -> vector<9x9xf32>
    %77 = arith.addf %76, %32 : vector<9x9xf32>
    %cst_49 = arith.constant dense<0xFF800000> : vector<9xf32>
    %78 = vector.multi_reduction <maximumf>, %77, %cst_49 [1] : vector<9x9xf32> to vector<9xf32>
    %79 = vector.shape_cast %78 : vector<9xf32> to vector<9x1xf32>
    %80 = vector.broadcast %79 : vector<9x1xf32> to vector<9x9xf32>
    %81 = arith.subf %77, %80 : vector<9x9xf32>
    %82 = math.exp %81 : vector<9x9xf32>
    %cst_50 = arith.constant dense<0.000000e+00> : vector<9xf32>
    %83 = vector.multi_reduction <add>, %82, %cst_50 [1] : vector<9x9xf32> to vector<9xf32>
    %84 = vector.shape_cast %83 : vector<9xf32> to vector<9x1xf32>
    %85 = tpu.reciprocal %84 {approx = true} : vector<9x1xf32> -> vector<9x1xf32>
    %86 = vector.broadcast %85 : vector<9x1xf32> to vector<9x9xf32>
    %87 = arith.mulf %82, %86 : vector<9x9xf32>
    %cst_51 = arith.constant dense<0.000000e+00> : vector<9x8xf32>
    %88 = tpu.matmul %87, %75, %cst_51 {dimension_numbers = #tpu.dot_dimension_numbers<[1], [0], [0], [1], [0, 0, 1, 1], [], []>} : vector<9x9xf32>, vector<9x8xf32>, vector<9x8xf32> -> vector<9x8xf32>
    %c0_52 = arith.constant 0 : index
    %c8_53 = arith.constant 8 : index
    %89 = vector.load %arg17[%c0_52, %c8_53] : memref<18x32xf32, #tpu.memory_space<vmem>>, vector<9x8xf32>
    tpu.vector_store %arg17[%c0_52, %c8_53], %88 {strides = array<i32>} : memref<18x32xf32, #tpu.memory_space<vmem>>, vector<9x8xf32>,
    %90 = vector.extract_strided_slice %55 {offsets = [0, 16], sizes = [9, 8], strides = [1, 1]} : vector<18x96xf32> to vector<9x8xf32>
    %91 = vector.extract_strided_slice %55 {offsets = [0, 48], sizes = [9, 8], strides = [1, 1]} : vector<18x96xf32> to vector<9x8xf32>
    %92 = vector.extract_strided_slice %55 {offsets = [0, 80], sizes = [9, 8], strides = [1, 1]} : vector<18x96xf32> to vector<9x8xf32>
    %cst_54 = arith.constant dense<0.000000e+00> : vector<9x9xf32>
    %93 = tpu.matmul %90, %91, %cst_54 {dimension_numbers = #tpu.dot_dimension_numbers<[1], [1], [0], [0], [0, 0, 1, 0], [], []>} : vector<9x8xf32>, vector<9x8xf32>, vector<9x9xf32> -> vector<9x9xf32>
    %94 = arith.addf %93, %32 : vector<9x9xf32>
    %cst_55 = arith.constant dense<0xFF800000> : vector<9xf32>
    %95 = vector.multi_reduction <maximumf>, %94, %cst_55 [1] : vector<9x9xf32> to vector<9xf32>
    %96 = vector.shape_cast %95 : vector<9xf32> to vector<9x1xf32>
    %97 = vector.broadcast %96 : vector<9x1xf32> to vector<9x9xf32>
    %98 = arith.subf %94, %97 : vector<9x9xf32>
    %99 = math.exp %98 : vector<9x9xf32>
    %cst_56 = arith.constant dense<0.000000e+00> : vector<9xf32>
    %100 = vector.multi_reduction <add>, %99, %cst_56 [1] : vector<9x9xf32> to vector<9xf32>
    %101 = vector.shape_cast %100 : vector<9xf32> to vector<9x1xf32>
    %102 = tpu.reciprocal %101 {approx = true} : vector<9x1xf32> -> vector<9x1xf32>
    %103 = vector.broadcast %102 : vector<9x1xf32> to vector<9x9xf32>
    %104 = arith.mulf %99, %103 : vector<9x9xf32>
    %cst_57 = arith.constant dense<0.000000e+00> : vector<9x8xf32>
    %105 = tpu.matmul %104, %92, %cst_57 {dimension_numbers = #tpu.dot_dimension_numbers<[1], [0], [0], [1], [0, 0, 1, 1], [], []>} : vector<9x9xf32>, vector<9x8xf32>, vector<9x8xf32> -> vector<9x8xf32>
    %c0_58 = arith.constant 0 : index
    %c16 = arith.constant 16 : index
    %106 = vector.load %arg17[%c0_58, %c16] : memref<18x32xf32, #tpu.memory_space<vmem>>, vector<9x8xf32>
    tpu.vector_store %arg17[%c0_58, %c16], %105 {strides = array<i32>} : memref<18x32xf32, #tpu.memory_space<vmem>>, vector<9x8xf32>,
    %107 = vector.extract_strided_slice %55 {offsets = [0, 24], sizes = [9, 8], strides = [1, 1]} : vector<18x96xf32> to vector<9x8xf32>
    %108 = vector.extract_strided_slice %55 {offsets = [0, 56], sizes = [9, 8], strides = [1, 1]} : vector<18x96xf32> to vector<9x8xf32>
    %109 = vector.extract_strided_slice %55 {offsets = [0, 88], sizes = [9, 8], strides = [1, 1]} : vector<18x96xf32> to vector<9x8xf32>
    %cst_59 = arith.constant dense<0.000000e+00> : vector<9x9xf32>
    %110 = tpu.matmul %107, %108, %cst_59 {dimension_numbers = #tpu.dot_dimension_numbers<[1], [1], [0], [0], [0, 0, 1, 0], [], []>} : vector<9x8xf32>, vector<9x8xf32>, vector<9x9xf32> -> vector<9x9xf32>
    %111 = arith.addf %110, %32 : vector<9x9xf32>
    %cst_60 = arith.constant dense<0xFF800000> : vector<9xf32>
    %112 = vector.multi_reduction <maximumf>, %111, %cst_60 [1] : vector<9x9xf32> to vector<9xf32>
    %113 = vector.shape_cast %112 : vector<9xf32> to vector<9x1xf32>
    %114 = vector.broadcast %113 : vector<9x1xf32> to vector<9x9xf32>
    %115 = arith.subf %111, %114 : vector<9x9xf32>
    %116 = math.exp %115 : vector<9x9xf32>
    %cst_61 = arith.constant dense<0.000000e+00> : vector<9xf32>
    %117 = vector.multi_reduction <add>, %116, %cst_61 [1] : vector<9x9xf32> to vector<9xf32>
    %118 = vector.shape_cast %117 : vector<9xf32> to vector<9x1xf32>
    %119 = tpu.reciprocal %118 {approx = true} : vector<9x1xf32> -> vector<9x1xf32>
    %120 = vector.broadcast %119 : vector<9x1xf32> to vector<9x9xf32>
    %121 = arith.mulf %116, %120 : vector<9x9xf32>
    %cst_62 = arith.constant dense<0.000000e+00> : vector<9x8xf32>
    %122 = tpu.matmul %121, %109, %cst_62 {dimension_numbers = #tpu.dot_dimension_numbers<[1], [0], [0], [1], [0, 0, 1, 1], [], []>} : vector<9x9xf32>, vector<9x8xf32>, vector<9x8xf32> -> vector<9x8xf32>
    %c0_63 = arith.constant 0 : index
    %c24 = arith.constant 24 : index
    %123 = vector.load %arg17[%c0_63, %c24] : memref<18x32xf32, #tpu.memory_space<vmem>>, vector<9x8xf32>
    tpu.vector_store %arg17[%c0_63, %c24], %122 {strides = array<i32>} : memref<18x32xf32, #tpu.memory_space<vmem>>, vector<9x8xf32>,
    %124 = vector.extract_strided_slice %55 {offsets = [9, 0], sizes = [9, 8], strides = [1, 1]} : vector<18x96xf32> to vector<9x8xf32>
    %125 = vector.extract_strided_slice %55 {offsets = [9, 32], sizes = [9, 8], strides = [1, 1]} : vector<18x96xf32> to vector<9x8xf32>
    %126 = vector.extract_strided_slice %55 {offsets = [9, 64], sizes = [9, 8], strides = [1, 1]} : vector<18x96xf32> to vector<9x8xf32>
    %cst_64 = arith.constant dense<0.000000e+00> : vector<9x9xf32>
    %127 = tpu.matmul %124, %125, %cst_64 {dimension_numbers = #tpu.dot_dimension_numbers<[1], [1], [0], [0], [0, 0, 1, 0], [], []>} : vector<9x8xf32>, vector<9x8xf32>, vector<9x9xf32> -> vector<9x9xf32>
    %128 = arith.addf %127, %32 : vector<9x9xf32>
    %cst_65 = arith.constant dense<0xFF800000> : vector<9xf32>
    %129 = vector.multi_reduction <maximumf>, %128, %cst_65 [1] : vector<9x9xf32> to vector<9xf32>
    %130 = vector.shape_cast %129 : vector<9xf32> to vector<9x1xf32>
    %131 = vector.broadcast %130 : vector<9x1xf32> to vector<9x9xf32>
    %132 = arith.subf %128, %131 : vector<9x9xf32>
    %133 = math.exp %132 : vector<9x9xf32>
    %cst_66 = arith.constant dense<0.000000e+00> : vector<9xf32>
    %134 = vector.multi_reduction <add>, %133, %cst_66 [1] : vector<9x9xf32> to vector<9xf32>
    %135 = vector.shape_cast %134 : vector<9xf32> to vector<9x1xf32>
    %136 = tpu.reciprocal %135 {approx = true} : vector<9x1xf32> -> vector<9x1xf32>
    %137 = vector.broadcast %136 : vector<9x1xf32> to vector<9x9xf32>
    %138 = arith.mulf %133, %137 : vector<9x9xf32>
    %cst_67 = arith.constant dense<0.000000e+00> : vector<9x8xf32>
    %139 = tpu.matmul %138, %126, %cst_67 {dimension_numbers = #tpu.dot_dimension_numbers<[1], [0], [0], [1], [0, 0, 1, 1], [], []>} : vector<9x9xf32>, vector<9x8xf32>, vector<9x8xf32> -> vector<9x8xf32>
    %c9_68 = arith.constant 9 : index
    %c0_69 = arith.constant 0 : index
    %140 = vector.load %arg17[%c9_68, %c0_69] : memref<18x32xf32, #tpu.memory_space<vmem>>, vector<9x8xf32>
    tpu.vector_store %arg17[%c9_68, %c0_69], %139 {strides = array<i32>} : memref<18x32xf32, #tpu.memory_space<vmem>>, vector<9x8xf32>,
    %141 = vector.extract_strided_slice %55 {offsets = [9, 8], sizes = [9, 8], strides = [1, 1]} : vector<18x96xf32> to vector<9x8xf32>
    %142 = vector.extract_strided_slice %55 {offsets = [9, 40], sizes = [9, 8], strides = [1, 1]} : vector<18x96xf32> to vector<9x8xf32>
    %143 = vector.extract_strided_slice %55 {offsets = [9, 72], sizes = [9, 8], strides = [1, 1]} : vector<18x96xf32> to vector<9x8xf32>
    %cst_70 = arith.constant dense<0.000000e+00> : vector<9x9xf32>
    %144 = tpu.matmul %141, %142, %cst_70 {dimension_numbers = #tpu.dot_dimension_numbers<[1], [1], [0], [0], [0, 0, 1, 0], [], []>} : vector<9x8xf32>, vector<9x8xf32>, vector<9x9xf32> -> vector<9x9xf32>
    %145 = arith.addf %144, %32 : vector<9x9xf32>
    %cst_71 = arith.constant dense<0xFF800000> : vector<9xf32>
    %146 = vector.multi_reduction <maximumf>, %145, %cst_71 [1] : vector<9x9xf32> to vector<9xf32>
    %147 = vector.shape_cast %146 : vector<9xf32> to vector<9x1xf32>
    %148 = vector.broadcast %147 : vector<9x1xf32> to vector<9x9xf32>
    %149 = arith.subf %145, %148 : vector<9x9xf32>
    %150 = math.exp %149 : vector<9x9xf32>
    %cst_72 = arith.constant dense<0.000000e+00> : vector<9xf32>
    %151 = vector.multi_reduction <add>, %150, %cst_72 [1] : vector<9x9xf32> to vector<9xf32>
    %152 = vector.shape_cast %151 : vector<9xf32> to vector<9x1xf32>
    %153 = tpu.reciprocal %152 {approx = true} : vector<9x1xf32> -> vector<9x1xf32>
    %154 = vector.broadcast %153 : vector<9x1xf32> to vector<9x9xf32>
    %155 = arith.mulf %150, %154 : vector<9x9xf32>
    %cst_73 = arith.constant dense<0.000000e+00> : vector<9x8xf32>
    %156 = tpu.matmul %155, %143, %cst_73 {dimension_numbers = #tpu.dot_dimension_numbers<[1], [0], [0], [1], [0, 0, 1, 1], [], []>} : vector<9x9xf32>, vector<9x8xf32>, vector<9x8xf32> -> vector<9x8xf32>
    %c9_74 = arith.constant 9 : index
    %c8_75 = arith.constant 8 : index
    %157 = vector.load %arg17[%c9_74, %c8_75] : memref<18x32xf32, #tpu.memory_space<vmem>>, vector<9x8xf32>
    tpu.vector_store %arg17[%c9_74, %c8_75], %156 {strides = array<i32>} : memref<18x32xf32, #tpu.memory_space<vmem>>, vector<9x8xf32>,
    %158 = vector.extract_strided_slice %55 {offsets = [9, 16], sizes = [9, 8], strides = [1, 1]} : vector<18x96xf32> to vector<9x8xf32>
    %159 = vector.extract_strided_slice %55 {offsets = [9, 48], sizes = [9, 8], strides = [1, 1]} : vector<18x96xf32> to vector<9x8xf32>
    %160 = vector.extract_strided_slice %55 {offsets = [9, 80], sizes = [9, 8], strides = [1, 1]} : vector<18x96xf32> to vector<9x8xf32>
    %cst_76 = arith.constant dense<0.000000e+00> : vector<9x9xf32>
    %161 = tpu.matmul %158, %159, %cst_76 {dimension_numbers = #tpu.dot_dimension_numbers<[1], [1], [0], [0], [0, 0, 1, 0], [], []>} : vector<9x8xf32>, vector<9x8xf32>, vector<9x9xf32> -> vector<9x9xf32>
    %162 = arith.addf %161, %32 : vector<9x9xf32>
    %cst_77 = arith.constant dense<0xFF800000> : vector<9xf32>
    %163 = vector.multi_reduction <maximumf>, %162, %cst_77 [1] : vector<9x9xf32> to vector<9xf32>
    %164 = vector.shape_cast %163 : vector<9xf32> to vector<9x1xf32>
    %165 = vector.broadcast %164 : vector<9x1xf32> to vector<9x9xf32>
    %166 = arith.subf %162, %165 : vector<9x9xf32>
    %167 = math.exp %166 : vector<9x9xf32>
    %cst_78 = arith.constant dense<0.000000e+00> : vector<9xf32>
    %168 = vector.multi_reduction <add>, %167, %cst_78 [1] : vector<9x9xf32> to vector<9xf32>
    %169 = vector.shape_cast %168 : vector<9xf32> to vector<9x1xf32>
    %170 = tpu.reciprocal %169 {approx = true} : vector<9x1xf32> -> vector<9x1xf32>
    %171 = vector.broadcast %170 : vector<9x1xf32> to vector<9x9xf32>
    %172 = arith.mulf %167, %171 : vector<9x9xf32>
    %cst_79 = arith.constant dense<0.000000e+00> : vector<9x8xf32>
    %173 = tpu.matmul %172, %160, %cst_79 {dimension_numbers = #tpu.dot_dimension_numbers<[1], [0], [0], [1], [0, 0, 1, 1], [], []>} : vector<9x9xf32>, vector<9x8xf32>, vector<9x8xf32> -> vector<9x8xf32>
    %c9_80 = arith.constant 9 : index
    %c16_81 = arith.constant 16 : index
    %174 = vector.load %arg17[%c9_80, %c16_81] : memref<18x32xf32, #tpu.memory_space<vmem>>, vector<9x8xf32>
    tpu.vector_store %arg17[%c9_80, %c16_81], %173 {strides = array<i32>} : memref<18x32xf32, #tpu.memory_space<vmem>>, vector<9x8xf32>,
    %175 = vector.extract_strided_slice %55 {offsets = [9, 24], sizes = [9, 8], strides = [1, 1]} : vector<18x96xf32> to vector<9x8xf32>
    %176 = vector.extract_strided_slice %55 {offsets = [9, 56], sizes = [9, 8], strides = [1, 1]} : vector<18x96xf32> to vector<9x8xf32>
    %177 = vector.extract_strided_slice %55 {offsets = [9, 88], sizes = [9, 8], strides = [1, 1]} : vector<18x96xf32> to vector<9x8xf32>
    %cst_82 = arith.constant dense<0.000000e+00> : vector<9x9xf32>
    %178 = tpu.matmul %175, %176, %cst_82 {dimension_numbers = #tpu.dot_dimension_numbers<[1], [1], [0], [0], [0, 0, 1, 0], [], []>} : vector<9x8xf32>, vector<9x8xf32>, vector<9x9xf32> -> vector<9x9xf32>
    %179 = arith.addf %178, %32 : vector<9x9xf32>
    %cst_83 = arith.constant dense<0xFF800000> : vector<9xf32>
    %180 = vector.multi_reduction <maximumf>, %179, %cst_83 [1] : vector<9x9xf32> to vector<9xf32>
    %181 = vector.shape_cast %180 : vector<9xf32> to vector<9x1xf32>
    %182 = vector.broadcast %181 : vector<9x1xf32> to vector<9x9xf32>
    %183 = arith.subf %179, %182 : vector<9x9xf32>
    %184 = math.exp %183 : vector<9x9xf32>
    %cst_84 = arith.constant dense<0.000000e+00> : vector<9xf32>
    %185 = vector.multi_reduction <add>, %184, %cst_84 [1] : vector<9x9xf32> to vector<9xf32>
    %186 = vector.shape_cast %185 : vector<9xf32> to vector<9x1xf32>
    %187 = tpu.reciprocal %186 {approx = true} : vector<9x1xf32> -> vector<9x1xf32>
    %188 = vector.broadcast %187 : vector<9x1xf32> to vector<9x9xf32>
    %189 = arith.mulf %184, %188 : vector<9x9xf32>
    %cst_85 = arith.constant dense<0.000000e+00> : vector<9x8xf32>
    %190 = tpu.matmul %189, %177, %cst_85 {dimension_numbers = #tpu.dot_dimension_numbers<[1], [0], [0], [1], [0, 0, 1, 1], [], []>} : vector<9x9xf32>, vector<9x8xf32>, vector<9x8xf32> -> vector<9x8xf32>
    %c9_86 = arith.constant 9 : index
    %c24_87 = arith.constant 24 : index
    %191 = vector.load %arg17[%c9_86, %c24_87] : memref<18x32xf32, #tpu.memory_space<vmem>>, vector<9x8xf32>
    tpu.vector_store %arg17[%c9_86, %c24_87], %190 {strides = array<i32>} : memref<18x32xf32, #tpu.memory_space<vmem>>, vector<9x8xf32>,
    %c0_88 = arith.constant 0 : index
    %c0_89 = arith.constant 0 : index
    %192 = vector.load %arg17[%c0_88, %c0_89] : memref<18x32xf32, #tpu.memory_space<vmem>>, vector<18x32xf32>
    %cst_90 = arith.constant dense<0.000000e+00> : vector<18x32xf32>
    %193 = tpu.matmul %192, %36, %cst_90 {dimension_numbers = #tpu.dot_dimension_numbers<[1], [0], [0], [1], [0, 0, 1, 1], [], []>} : vector<18x32xf32>, vector<32x32xf32>, vector<18x32xf32> -> vector<18x32xf32>
    %194 = vector.broadcast %47 : vector<1x32xf32> to vector<18x32xf32>
    %195 = arith.addf %193, %194 : vector<18x32xf32>
    %196 = arith.addf %26, %195 : vector<18x32xf32>
    %cst_91 = arith.constant dense<0.000000e+00> : vector<18xf32>
    %197 = vector.multi_reduction <add>, %196, %cst_91 [1] : vector<18x32xf32> to vector<18xf32>
    %198 = vector.shape_cast %197 : vector<18xf32> to vector<18x1xf32>
    %cst_92 = arith.constant 3.200000e+01 : f32
    %199 = vector.broadcast %cst_92 : f32 to vector<18x1xf32>
    %200 = arith.divf %198, %199 : vector<18x1xf32>
    %201 = vector.broadcast %200 : vector<18x1xf32> to vector<18x32xf32>
    %202 = arith.subf %196, %201 : vector<18x32xf32>
    %203 = arith.mulf %202, %202 : vector<18x32xf32>
    %cst_93 = arith.constant dense<0.000000e+00> : vector<18xf32>
    %204 = vector.multi_reduction <add>, %203, %cst_93 [1] : vector<18x32xf32> to vector<18xf32>
    %205 = vector.shape_cast %204 : vector<18xf32> to vector<18x1xf32>
    %cst_94 = arith.constant 3.200000e+01 : f32
    %206 = vector.broadcast %cst_94 : f32 to vector<18x1xf32>
    %207 = arith.divf %205, %206 : vector<18x1xf32>
    %208 = vector.broadcast %200 : vector<18x1xf32> to vector<18x32xf32>
    %209 = arith.subf %196, %208 : vector<18x32xf32>
    %cst_95 = arith.constant 9.99999974E-6 : f32
    %210 = vector.broadcast %cst_95 : f32 to vector<18x1xf32>
    %211 = arith.addf %207, %210 : vector<18x1xf32>
    %212 = math.rsqrt %211 : vector<18x1xf32>
    %213 = vector.broadcast %212 : vector<18x1xf32> to vector<18x32xf32>
    %214 = arith.mulf %209, %213 : vector<18x32xf32>
    %215 = vector.broadcast %48 : vector<1x32xf32> to vector<18x32xf32>
    %216 = arith.mulf %214, %215 : vector<18x32xf32>
    %217 = vector.broadcast %49 : vector<1x32xf32> to vector<18x32xf32>
    %218 = arith.addf %216, %217 : vector<18x32xf32>
    %cst_96 = arith.constant dense<0.000000e+00> : vector<18x64xf32>
    %219 = tpu.matmul %218, %38, %cst_96 {dimension_numbers = #tpu.dot_dimension_numbers<[1], [0], [0], [1], [0, 0, 1, 1], [], []>} : vector<18x32xf32>, vector<32x64xf32>, vector<18x64xf32> -> vector<18x64xf32>
    %220 = vector.broadcast %46 : vector<1x64xf32> to vector<18x64xf32>
    %221 = arith.addf %219, %220 : vector<18x64xf32>
    %cst_97 = arith.constant 0.000000e+00 : f32
    %222 = vector.broadcast %cst_97 : f32 to vector<18x64xf32>
    %223 = arith.maximumf %221, %222 : vector<18x64xf32>
    %cst_98 = arith.constant dense<0.000000e+00> : vector<18x32xf32>
    %224 = tpu.matmul %223, %40, %cst_98 {dimension_numbers = #tpu.dot_dimension_numbers<[1], [0], [0], [1], [0, 0, 1, 1], [], []>} : vector<18x64xf32>, vector<64x32xf32>, vector<18x32xf32> -> vector<18x32xf32>
    %225 = vector.broadcast %50 : vector<1x32xf32> to vector<18x32xf32>
    %226 = arith.addf %224, %225 : vector<18x32xf32>
    %227 = arith.addf %218, %226 : vector<18x32xf32>
    %cst_99 = arith.constant dense<0.000000e+00> : vector<18xf32>
    %228 = vector.multi_reduction <add>, %227, %cst_99 [1] : vector<18x32xf32> to vector<18xf32>
    %229 = vector.shape_cast %228 : vector<18xf32> to vector<18x1xf32>
    %cst_100 = arith.constant 3.200000e+01 : f32
    %230 = vector.broadcast %cst_100 : f32 to vector<18x1xf32>
    %231 = arith.divf %229, %230 : vector<18x1xf32>
    %232 = vector.broadcast %231 : vector<18x1xf32> to vector<18x32xf32>
    %233 = arith.subf %227, %232 : vector<18x32xf32>
    %234 = arith.mulf %233, %233 : vector<18x32xf32>
    %cst_101 = arith.constant dense<0.000000e+00> : vector<18xf32>
    %235 = vector.multi_reduction <add>, %234, %cst_101 [1] : vector<18x32xf32> to vector<18xf32>
    %236 = vector.shape_cast %235 : vector<18xf32> to vector<18x1xf32>
    %cst_102 = arith.constant 3.200000e+01 : f32
    %237 = vector.broadcast %cst_102 : f32 to vector<18x1xf32>
    %238 = arith.divf %236, %237 : vector<18x1xf32>
    %239 = vector.broadcast %231 : vector<18x1xf32> to vector<18x32xf32>
    %240 = arith.subf %227, %239 : vector<18x32xf32>
    %cst_103 = arith.constant 9.99999974E-6 : f32
    %241 = vector.broadcast %cst_103 : f32 to vector<18x1xf32>
    %242 = arith.addf %238, %241 : vector<18x1xf32>
    %243 = math.rsqrt %242 : vector<18x1xf32>
    %244 = vector.broadcast %243 : vector<18x1xf32> to vector<18x32xf32>
    %245 = arith.mulf %240, %244 : vector<18x32xf32>
    %246 = vector.broadcast %51 : vector<1x32xf32> to vector<18x32xf32>
    %247 = arith.mulf %245, %246 : vector<18x32xf32>
    %248 = vector.broadcast %52 : vector<1x32xf32> to vector<18x32xf32>
    %249 = arith.addf %247, %248 : vector<18x32xf32>
    %c1 = arith.constant 1 : index
    %c0_104 = arith.constant 0 : index
    %c0_105 = arith.constant 0 : index
    %250 = vector.load %arg7[%c1, %c0_104, %c0_105] : memref<2x32x96xf32, #tpu.memory_space<vmem>>, vector<1x32x96xf32>
    %251 = vector.shape_cast %250 : vector<1x32x96xf32> to vector<32x96xf32>
    %c1_106 = arith.constant 1 : index
    %c0_107 = arith.constant 0 : index
    %c0_108 = arith.constant 0 : index
    %252 = vector.load %arg9[%c1_106, %c0_107, %c0_108] : memref<2x32x32xf32, #tpu.memory_space<vmem>>, vector<1x32x32xf32>
    %253 = vector.shape_cast %252 : vector<1x32x32xf32> to vector<32x32xf32>
    %c1_109 = arith.constant 1 : index
    %c0_110 = arith.constant 0 : index
    %c0_111 = arith.constant 0 : index
    %254 = vector.load %arg11[%c1_109, %c0_110, %c0_111] : memref<2x32x64xf32, #tpu.memory_space<vmem>>, vector<1x32x64xf32>
    %255 = vector.shape_cast %254 : vector<1x32x64xf32> to vector<32x64xf32>
    %c1_112 = arith.constant 1 : index
    %c0_113 = arith.constant 0 : index
    %c0_114 = arith.constant 0 : index
    %256 = vector.load %arg12[%c1_112, %c0_113, %c0_114] : memref<2x64x32xf32, #tpu.memory_space<vmem>>, vector<1x64x32xf32>
    %257 = vector.shape_cast %256 : vector<1x64x32xf32> to vector<64x32xf32>
    %c1_115 = arith.constant 1 : index
    %c0_116 = arith.constant 0 : index
    %c0_117 = arith.constant 0 : index
    %258 = vector.load %arg8[%c1_115, %c0_116, %c0_117] : memref<2x2x96xf32, #tpu.memory_space<vmem>>, vector<1x2x96xf32>
    %259 = vector.shape_cast %258 : vector<1x2x96xf32> to vector<2x96xf32>
    %c1_118 = arith.constant 1 : index
    %c0_119 = arith.constant 0 : index
    %c0_120 = arith.constant 0 : index
    %260 = vector.load %arg10[%c1_118, %c0_119, %c0_120] : memref<2x6x32xf32, #tpu.memory_space<vmem>>, vector<1x6x32xf32>
    %261 = vector.shape_cast %260 : vector<1x6x32xf32> to vector<6x32xf32>
    %262 = vector.extract_strided_slice %259 {offsets = [0, 0], sizes = [1, 96], strides = [1, 1]} : vector<2x96xf32> to vector<1x96xf32>
    %263 = vector.extract_strided_slice %259 {offsets = [1, 0], sizes = [1, 64], strides = [1, 1]} : vector<2x96xf32> to vector<1x64xf32>
    %264 = vector.extract_strided_slice %261 {offsets = [0, 0], sizes = [1, 32], strides = [1, 1]} : vector<6x32xf32> to vector<1x32xf32>
    %265 = vector.extract_strided_slice %261 {offsets = [1, 0], sizes = [1, 32], strides = [1, 1]} : vector<6x32xf32> to vector<1x32xf32>
    %266 = vector.extract_strided_slice %261 {offsets = [2, 0], sizes = [1, 32], strides = [1, 1]} : vector<6x32xf32> to vector<1x32xf32>
    %267 = vector.extract_strided_slice %261 {offsets = [3, 0], sizes = [1, 32], strides = [1, 1]} : vector<6x32xf32> to vector<1x32xf32>
    %268 = vector.extract_strided_slice %261 {offsets = [4, 0], sizes = [1, 32], strides = [1, 1]} : vector<6x32xf32> to vector<1x32xf32>
    %269 = vector.extract_strided_slice %261 {offsets = [5, 0], sizes = [1, 32], strides = [1, 1]} : vector<6x32xf32> to vector<1x32xf32>
    %cst_121 = arith.constant dense<0.000000e+00> : vector<18x96xf32>
    %270 = tpu.matmul %249, %251, %cst_121 {dimension_numbers = #tpu.dot_dimension_numbers<[1], [0], [0], [1], [0, 0, 1, 1], [], []>} : vector<18x32xf32>, vector<32x96xf32>, vector<18x96xf32> -> vector<18x96xf32>
    %271 = vector.broadcast %262 : vector<1x96xf32> to vector<18x96xf32>
    %272 = arith.addf %270, %271 : vector<18x96xf32>
    %273 = vector.extract_strided_slice %272 {offsets = [0, 0], sizes = [9, 8], strides = [1, 1]} : vector<18x96xf32> to vector<9x8xf32>
    %274 = vector.extract_strided_slice %272 {offsets = [0, 32], sizes = [9, 8], strides = [1, 1]} : vector<18x96xf32> to vector<9x8xf32>
    %275 = vector.extract_strided_slice %272 {offsets = [0, 64], sizes = [9, 8], strides = [1, 1]} : vector<18x96xf32> to vector<9x8xf32>
    %cst_122 = arith.constant dense<0.000000e+00> : vector<9x9xf32>
    %276 = tpu.matmul %273, %274, %cst_122 {dimension_numbers = #tpu.dot_dimension_numbers<[1], [1], [0], [0], [0, 0, 1, 0], [], []>} : vector<9x8xf32>, vector<9x8xf32>, vector<9x9xf32> -> vector<9x9xf32>
    %277 = arith.addf %276, %32 : vector<9x9xf32>
    %cst_123 = arith.constant dense<0xFF800000> : vector<9xf32>
    %278 = vector.multi_reduction <maximumf>, %277, %cst_123 [1] : vector<9x9xf32> to vector<9xf32>
    %279 = vector.shape_cast %278 : vector<9xf32> to vector<9x1xf32>
    %280 = vector.broadcast %279 : vector<9x1xf32> to vector<9x9xf32>
    %281 = arith.subf %277, %280 : vector<9x9xf32>
    %282 = math.exp %281 : vector<9x9xf32>
    %cst_124 = arith.constant dense<0.000000e+00> : vector<9xf32>
    %283 = vector.multi_reduction <add>, %282, %cst_124 [1] : vector<9x9xf32> to vector<9xf32>
    %284 = vector.shape_cast %283 : vector<9xf32> to vector<9x1xf32>
    %285 = tpu.reciprocal %284 {approx = true} : vector<9x1xf32> -> vector<9x1xf32>
    %286 = vector.broadcast %285 : vector<9x1xf32> to vector<9x9xf32>
    %287 = arith.mulf %282, %286 : vector<9x9xf32>
    %cst_125 = arith.constant dense<0.000000e+00> : vector<9x8xf32>
    %288 = tpu.matmul %287, %275, %cst_125 {dimension_numbers = #tpu.dot_dimension_numbers<[1], [0], [0], [1], [0, 0, 1, 1], [], []>} : vector<9x9xf32>, vector<9x8xf32>, vector<9x8xf32> -> vector<9x8xf32>
    %c0_126 = arith.constant 0 : index
    %c0_127 = arith.constant 0 : index
    %289 = vector.load %arg17[%c0_126, %c0_127] : memref<18x32xf32, #tpu.memory_space<vmem>>, vector<9x8xf32>
    tpu.vector_store %arg17[%c0_126, %c0_127], %288 {strides = array<i32>} : memref<18x32xf32, #tpu.memory_space<vmem>>, vector<9x8xf32>,
    %290 = vector.extract_strided_slice %272 {offsets = [0, 8], sizes = [9, 8], strides = [1, 1]} : vector<18x96xf32> to vector<9x8xf32>
    %291 = vector.extract_strided_slice %272 {offsets = [0, 40], sizes = [9, 8], strides = [1, 1]} : vector<18x96xf32> to vector<9x8xf32>
    %292 = vector.extract_strided_slice %272 {offsets = [0, 72], sizes = [9, 8], strides = [1, 1]} : vector<18x96xf32> to vector<9x8xf32>
    %cst_128 = arith.constant dense<0.000000e+00> : vector<9x9xf32>
    %293 = tpu.matmul %290, %291, %cst_128 {dimension_numbers = #tpu.dot_dimension_numbers<[1], [1], [0], [0], [0, 0, 1, 0], [], []>} : vector<9x8xf32>, vector<9x8xf32>, vector<9x9xf32> -> vector<9x9xf32>
    %294 = arith.addf %293, %32 : vector<9x9xf32>
    %cst_129 = arith.constant dense<0xFF800000> : vector<9xf32>
    %295 = vector.multi_reduction <maximumf>, %294, %cst_129 [1] : vector<9x9xf32> to vector<9xf32>
    %296 = vector.shape_cast %295 : vector<9xf32> to vector<9x1xf32>
    %297 = vector.broadcast %296 : vector<9x1xf32> to vector<9x9xf32>
    %298 = arith.subf %294, %297 : vector<9x9xf32>
    %299 = math.exp %298 : vector<9x9xf32>
    %cst_130 = arith.constant dense<0.000000e+00> : vector<9xf32>
    %300 = vector.multi_reduction <add>, %299, %cst_130 [1] : vector<9x9xf32> to vector<9xf32>
    %301 = vector.shape_cast %300 : vector<9xf32> to vector<9x1xf32>
    %302 = tpu.reciprocal %301 {approx = true} : vector<9x1xf32> -> vector<9x1xf32>
    %303 = vector.broadcast %302 : vector<9x1xf32> to vector<9x9xf32>
    %304 = arith.mulf %299, %303 : vector<9x9xf32>
    %cst_131 = arith.constant dense<0.000000e+00> : vector<9x8xf32>
    %305 = tpu.matmul %304, %292, %cst_131 {dimension_numbers = #tpu.dot_dimension_numbers<[1], [0], [0], [1], [0, 0, 1, 1], [], []>} : vector<9x9xf32>, vector<9x8xf32>, vector<9x8xf32> -> vector<9x8xf32>
    %c0_132 = arith.constant 0 : index
    %c8_133 = arith.constant 8 : index
    %306 = vector.load %arg17[%c0_132, %c8_133] : memref<18x32xf32, #tpu.memory_space<vmem>>, vector<9x8xf32>
    tpu.vector_store %arg17[%c0_132, %c8_133], %305 {strides = array<i32>} : memref<18x32xf32, #tpu.memory_space<vmem>>, vector<9x8xf32>,
    %307 = vector.extract_strided_slice %272 {offsets = [0, 16], sizes = [9, 8], strides = [1, 1]} : vector<18x96xf32> to vector<9x8xf32>
    %308 = vector.extract_strided_slice %272 {offsets = [0, 48], sizes = [9, 8], strides = [1, 1]} : vector<18x96xf32> to vector<9x8xf32>
    %309 = vector.extract_strided_slice %272 {offsets = [0, 80], sizes = [9, 8], strides = [1, 1]} : vector<18x96xf32> to vector<9x8xf32>
    %cst_134 = arith.constant dense<0.000000e+00> : vector<9x9xf32>
    %310 = tpu.matmul %307, %308, %cst_134 {dimension_numbers = #tpu.dot_dimension_numbers<[1], [1], [0], [0], [0, 0, 1, 0], [], []>} : vector<9x8xf32>, vector<9x8xf32>, vector<9x9xf32> -> vector<9x9xf32>
    %311 = arith.addf %310, %32 : vector<9x9xf32>
    %cst_135 = arith.constant dense<0xFF800000> : vector<9xf32>
    %312 = vector.multi_reduction <maximumf>, %311, %cst_135 [1] : vector<9x9xf32> to vector<9xf32>
    %313 = vector.shape_cast %312 : vector<9xf32> to vector<9x1xf32>
    %314 = vector.broadcast %313 : vector<9x1xf32> to vector<9x9xf32>
    %315 = arith.subf %311, %314 : vector<9x9xf32>
    %316 = math.exp %315 : vector<9x9xf32>
    %cst_136 = arith.constant dense<0.000000e+00> : vector<9xf32>
    %317 = vector.multi_reduction <add>, %316, %cst_136 [1] : vector<9x9xf32> to vector<9xf32>
    %318 = vector.shape_cast %317 : vector<9xf32> to vector<9x1xf32>
    %319 = tpu.reciprocal %318 {approx = true} : vector<9x1xf32> -> vector<9x1xf32>
    %320 = vector.broadcast %319 : vector<9x1xf32> to vector<9x9xf32>
    %321 = arith.mulf %316, %320 : vector<9x9xf32>
    %cst_137 = arith.constant dense<0.000000e+00> : vector<9x8xf32>
    %322 = tpu.matmul %321, %309, %cst_137 {dimension_numbers = #tpu.dot_dimension_numbers<[1], [0], [0], [1], [0, 0, 1, 1], [], []>} : vector<9x9xf32>, vector<9x8xf32>, vector<9x8xf32> -> vector<9x8xf32>
    %c0_138 = arith.constant 0 : index
    %c16_139 = arith.constant 16 : index
    %323 = vector.load %arg17[%c0_138, %c16_139] : memref<18x32xf32, #tpu.memory_space<vmem>>, vector<9x8xf32>
    tpu.vector_store %arg17[%c0_138, %c16_139], %322 {strides = array<i32>} : memref<18x32xf32, #tpu.memory_space<vmem>>, vector<9x8xf32>,
    %324 = vector.extract_strided_slice %272 {offsets = [0, 24], sizes = [9, 8], strides = [1, 1]} : vector<18x96xf32> to vector<9x8xf32>
    %325 = vector.extract_strided_slice %272 {offsets = [0, 56], sizes = [9, 8], strides = [1, 1]} : vector<18x96xf32> to vector<9x8xf32>
    %326 = vector.extract_strided_slice %272 {offsets = [0, 88], sizes = [9, 8], strides = [1, 1]} : vector<18x96xf32> to vector<9x8xf32>
    %cst_140 = arith.constant dense<0.000000e+00> : vector<9x9xf32>
    %327 = tpu.matmul %324, %325, %cst_140 {dimension_numbers = #tpu.dot_dimension_numbers<[1], [1], [0], [0], [0, 0, 1, 0], [], []>} : vector<9x8xf32>, vector<9x8xf32>, vector<9x9xf32> -> vector<9x9xf32>
    %328 = arith.addf %327, %32 : vector<9x9xf32>
    %cst_141 = arith.constant dense<0xFF800000> : vector<9xf32>
    %329 = vector.multi_reduction <maximumf>, %328, %cst_141 [1] : vector<9x9xf32> to vector<9xf32>
    %330 = vector.shape_cast %329 : vector<9xf32> to vector<9x1xf32>
    %331 = vector.broadcast %330 : vector<9x1xf32> to vector<9x9xf32>
    %332 = arith.subf %328, %331 : vector<9x9xf32>
    %333 = math.exp %332 : vector<9x9xf32>
    %cst_142 = arith.constant dense<0.000000e+00> : vector<9xf32>
    %334 = vector.multi_reduction <add>, %333, %cst_142 [1] : vector<9x9xf32> to vector<9xf32>
    %335 = vector.shape_cast %334 : vector<9xf32> to vector<9x1xf32>
    %336 = tpu.reciprocal %335 {approx = true} : vector<9x1xf32> -> vector<9x1xf32>
    %337 = vector.broadcast %336 : vector<9x1xf32> to vector<9x9xf32>
    %338 = arith.mulf %333, %337 : vector<9x9xf32>
    %cst_143 = arith.constant dense<0.000000e+00> : vector<9x8xf32>
    %339 = tpu.matmul %338, %326, %cst_143 {dimension_numbers = #tpu.dot_dimension_numbers<[1], [0], [0], [1], [0, 0, 1, 1], [], []>} : vector<9x9xf32>, vector<9x8xf32>, vector<9x8xf32> -> vector<9x8xf32>
    %c0_144 = arith.constant 0 : index
    %c24_145 = arith.constant 24 : index
    %340 = vector.load %arg17[%c0_144, %c24_145] : memref<18x32xf32, #tpu.memory_space<vmem>>, vector<9x8xf32>
    tpu.vector_store %arg17[%c0_144, %c24_145], %339 {strides = array<i32>} : memref<18x32xf32, #tpu.memory_space<vmem>>, vector<9x8xf32>,
    %341 = vector.extract_strided_slice %272 {offsets = [9, 0], sizes = [9, 8], strides = [1, 1]} : vector<18x96xf32> to vector<9x8xf32>
    %342 = vector.extract_strided_slice %272 {offsets = [9, 32], sizes = [9, 8], strides = [1, 1]} : vector<18x96xf32> to vector<9x8xf32>
    %343 = vector.extract_strided_slice %272 {offsets = [9, 64], sizes = [9, 8], strides = [1, 1]} : vector<18x96xf32> to vector<9x8xf32>
    %cst_146 = arith.constant dense<0.000000e+00> : vector<9x9xf32>
    %344 = tpu.matmul %341, %342, %cst_146 {dimension_numbers = #tpu.dot_dimension_numbers<[1], [1], [0], [0], [0, 0, 1, 0], [], []>} : vector<9x8xf32>, vector<9x8xf32>, vector<9x9xf32> -> vector<9x9xf32>
    %345 = arith.addf %344, %32 : vector<9x9xf32>
    %cst_147 = arith.constant dense<0xFF800000> : vector<9xf32>
    %346 = vector.multi_reduction <maximumf>, %345, %cst_147 [1] : vector<9x9xf32> to vector<9xf32>
    %347 = vector.shape_cast %346 : vector<9xf32> to vector<9x1xf32>
    %348 = vector.broadcast %347 : vector<9x1xf32> to vector<9x9xf32>
    %349 = arith.subf %345, %348 : vector<9x9xf32>
    %350 = math.exp %349 : vector<9x9xf32>
    %cst_148 = arith.constant dense<0.000000e+00> : vector<9xf32>
    %351 = vector.multi_reduction <add>, %350, %cst_148 [1] : vector<9x9xf32> to vector<9xf32>
    %352 = vector.shape_cast %351 : vector<9xf32> to vector<9x1xf32>
    %353 = tpu.reciprocal %352 {approx = true} : vector<9x1xf32> -> vector<9x1xf32>
    %354 = vector.broadcast %353 : vector<9x1xf32> to vector<9x9xf32>
    %355 = arith.mulf %350, %354 : vector<9x9xf32>
    %cst_149 = arith.constant dense<0.000000e+00> : vector<9x8xf32>
    %356 = tpu.matmul %355, %343, %cst_149 {dimension_numbers = #tpu.dot_dimension_numbers<[1], [0], [0], [1], [0, 0, 1, 1], [], []>} : vector<9x9xf32>, vector<9x8xf32>, vector<9x8xf32> -> vector<9x8xf32>
    %c9_150 = arith.constant 9 : index
    %c0_151 = arith.constant 0 : index
    %357 = vector.load %arg17[%c9_150, %c0_151] : memref<18x32xf32, #tpu.memory_space<vmem>>, vector<9x8xf32>
    tpu.vector_store %arg17[%c9_150, %c0_151], %356 {strides = array<i32>} : memref<18x32xf32, #tpu.memory_space<vmem>>, vector<9x8xf32>,
    %358 = vector.extract_strided_slice %272 {offsets = [9, 8], sizes = [9, 8], strides = [1, 1]} : vector<18x96xf32> to vector<9x8xf32>
    %359 = vector.extract_strided_slice %272 {offsets = [9, 40], sizes = [9, 8], strides = [1, 1]} : vector<18x96xf32> to vector<9x8xf32>
    %360 = vector.extract_strided_slice %272 {offsets = [9, 72], sizes = [9, 8], strides = [1, 1]} : vector<18x96xf32> to vector<9x8xf32>
    %cst_152 = arith.constant dense<0.000000e+00> : vector<9x9xf32>
    %361 = tpu.matmul %358, %359, %cst_152 {dimension_numbers = #tpu.dot_dimension_numbers<[1], [1], [0], [0], [0, 0, 1, 0], [], []>} : vector<9x8xf32>, vector<9x8xf32>, vector<9x9xf32> -> vector<9x9xf32>
    %362 = arith.addf %361, %32 : vector<9x9xf32>
    %cst_153 = arith.constant dense<0xFF800000> : vector<9xf32>
    %363 = vector.multi_reduction <maximumf>, %362, %cst_153 [1] : vector<9x9xf32> to vector<9xf32>
    %364 = vector.shape_cast %363 : vector<9xf32> to vector<9x1xf32>
    %365 = vector.broadcast %364 : vector<9x1xf32> to vector<9x9xf32>
    %366 = arith.subf %362, %365 : vector<9x9xf32>
    %367 = math.exp %366 : vector<9x9xf32>
    %cst_154 = arith.constant dense<0.000000e+00> : vector<9xf32>
    %368 = vector.multi_reduction <add>, %367, %cst_154 [1] : vector<9x9xf32> to vector<9xf32>
    %369 = vector.shape_cast %368 : vector<9xf32> to vector<9x1xf32>
    %370 = tpu.reciprocal %369 {approx = true} : vector<9x1xf32> -> vector<9x1xf32>
    %371 = vector.broadcast %370 : vector<9x1xf32> to vector<9x9xf32>
    %372 = arith.mulf %367, %371 : vector<9x9xf32>
    %cst_155 = arith.constant dense<0.000000e+00> : vector<9x8xf32>
    %373 = tpu.matmul %372, %360, %cst_155 {dimension_numbers = #tpu.dot_dimension_numbers<[1], [0], [0], [1], [0, 0, 1, 1], [], []>} : vector<9x9xf32>, vector<9x8xf32>, vector<9x8xf32> -> vector<9x8xf32>
    %c9_156 = arith.constant 9 : index
    %c8_157 = arith.constant 8 : index
    %374 = vector.load %arg17[%c9_156, %c8_157] : memref<18x32xf32, #tpu.memory_space<vmem>>, vector<9x8xf32>
    tpu.vector_store %arg17[%c9_156, %c8_157], %373 {strides = array<i32>} : memref<18x32xf32, #tpu.memory_space<vmem>>, vector<9x8xf32>,
    %375 = vector.extract_strided_slice %272 {offsets = [9, 16], sizes = [9, 8], strides = [1, 1]} : vector<18x96xf32> to vector<9x8xf32>
    %376 = vector.extract_strided_slice %272 {offsets = [9, 48], sizes = [9, 8], strides = [1, 1]} : vector<18x96xf32> to vector<9x8xf32>
    %377 = vector.extract_strided_slice %272 {offsets = [9, 80], sizes = [9, 8], strides = [1, 1]} : vector<18x96xf32> to vector<9x8xf32>
    %cst_158 = arith.constant dense<0.000000e+00> : vector<9x9xf32>
    %378 = tpu.matmul %375, %376, %cst_158 {dimension_numbers = #tpu.dot_dimension_numbers<[1], [1], [0], [0], [0, 0, 1, 0], [], []>} : vector<9x8xf32>, vector<9x8xf32>, vector<9x9xf32> -> vector<9x9xf32>
    %379 = arith.addf %378, %32 : vector<9x9xf32>
    %cst_159 = arith.constant dense<0xFF800000> : vector<9xf32>
    %380 = vector.multi_reduction <maximumf>, %379, %cst_159 [1] : vector<9x9xf32> to vector<9xf32>
    %381 = vector.shape_cast %380 : vector<9xf32> to vector<9x1xf32>
    %382 = vector.broadcast %381 : vector<9x1xf32> to vector<9x9xf32>
    %383 = arith.subf %379, %382 : vector<9x9xf32>
    %384 = math.exp %383 : vector<9x9xf32>
    %cst_160 = arith.constant dense<0.000000e+00> : vector<9xf32>
    %385 = vector.multi_reduction <add>, %384, %cst_160 [1] : vector<9x9xf32> to vector<9xf32>
    %386 = vector.shape_cast %385 : vector<9xf32> to vector<9x1xf32>
    %387 = tpu.reciprocal %386 {approx = true} : vector<9x1xf32> -> vector<9x1xf32>
    %388 = vector.broadcast %387 : vector<9x1xf32> to vector<9x9xf32>
    %389 = arith.mulf %384, %388 : vector<9x9xf32>
    %cst_161 = arith.constant dense<0.000000e+00> : vector<9x8xf32>
    %390 = tpu.matmul %389, %377, %cst_161 {dimension_numbers = #tpu.dot_dimension_numbers<[1], [0], [0], [1], [0, 0, 1, 1], [], []>} : vector<9x9xf32>, vector<9x8xf32>, vector<9x8xf32> -> vector<9x8xf32>
    %c9_162 = arith.constant 9 : index
    %c16_163 = arith.constant 16 : index
    %391 = vector.load %arg17[%c9_162, %c16_163] : memref<18x32xf32, #tpu.memory_space<vmem>>, vector<9x8xf32>
    tpu.vector_store %arg17[%c9_162, %c16_163], %390 {strides = array<i32>} : memref<18x32xf32, #tpu.memory_space<vmem>>, vector<9x8xf32>,
    %392 = vector.extract_strided_slice %272 {offsets = [9, 24], sizes = [9, 8], strides = [1, 1]} : vector<18x96xf32> to vector<9x8xf32>
    %393 = vector.extract_strided_slice %272 {offsets = [9, 56], sizes = [9, 8], strides = [1, 1]} : vector<18x96xf32> to vector<9x8xf32>
    %394 = vector.extract_strided_slice %272 {offsets = [9, 88], sizes = [9, 8], strides = [1, 1]} : vector<18x96xf32> to vector<9x8xf32>
    %cst_164 = arith.constant dense<0.000000e+00> : vector<9x9xf32>
    %395 = tpu.matmul %392, %393, %cst_164 {dimension_numbers = #tpu.dot_dimension_numbers<[1], [1], [0], [0], [0, 0, 1, 0], [], []>} : vector<9x8xf32>, vector<9x8xf32>, vector<9x9xf32> -> vector<9x9xf32>
    %396 = arith.addf %395, %32 : vector<9x9xf32>
    %cst_165 = arith.constant dense<0xFF800000> : vector<9xf32>
    %397 = vector.multi_reduction <maximumf>, %396, %cst_165 [1] : vector<9x9xf32> to vector<9xf32>
    %398 = vector.shape_cast %397 : vector<9xf32> to vector<9x1xf32>
    %399 = vector.broadcast %398 : vector<9x1xf32> to vector<9x9xf32>
    %400 = arith.subf %396, %399 : vector<9x9xf32>
    %401 = math.exp %400 : vector<9x9xf32>
    %cst_166 = arith.constant dense<0.000000e+00> : vector<9xf32>
    %402 = vector.multi_reduction <add>, %401, %cst_166 [1] : vector<9x9xf32> to vector<9xf32>
    %403 = vector.shape_cast %402 : vector<9xf32> to vector<9x1xf32>
    %404 = tpu.reciprocal %403 {approx = true} : vector<9x1xf32> -> vector<9x1xf32>
    %405 = vector.broadcast %404 : vector<9x1xf32> to vector<9x9xf32>
    %406 = arith.mulf %401, %405 : vector<9x9xf32>
    %cst_167 = arith.constant dense<0.000000e+00> : vector<9x8xf32>
    %407 = tpu.matmul %406, %394, %cst_167 {dimension_numbers = #tpu.dot_dimension_numbers<[1], [0], [0], [1], [0, 0, 1, 1], [], []>} : vector<9x9xf32>, vector<9x8xf32>, vector<9x8xf32> -> vector<9x8xf32>
    %c9_168 = arith.constant 9 : index
    %c24_169 = arith.constant 24 : index
    %408 = vector.load %arg17[%c9_168, %c24_169] : memref<18x32xf32, #tpu.memory_space<vmem>>, vector<9x8xf32>
    tpu.vector_store %arg17[%c9_168, %c24_169], %407 {strides = array<i32>} : memref<18x32xf32, #tpu.memory_space<vmem>>, vector<9x8xf32>,
    %c0_170 = arith.constant 0 : index
    %c0_171 = arith.constant 0 : index
    %409 = vector.load %arg17[%c0_170, %c0_171] : memref<18x32xf32, #tpu.memory_space<vmem>>, vector<18x32xf32>
    %cst_172 = arith.constant dense<0.000000e+00> : vector<18x32xf32>
    %410 = tpu.matmul %409, %253, %cst_172 {dimension_numbers = #tpu.dot_dimension_numbers<[1], [0], [0], [1], [0, 0, 1, 1], [], []>} : vector<18x32xf32>, vector<32x32xf32>, vector<18x32xf32> -> vector<18x32xf32>
    %411 = vector.broadcast %264 : vector<1x32xf32> to vector<18x32xf32>
    %412 = arith.addf %410, %411 : vector<18x32xf32>
    %413 = arith.addf %249, %412 : vector<18x32xf32>
    %cst_173 = arith.constant dense<0.000000e+00> : vector<18xf32>
    %414 = vector.multi_reduction <add>, %413, %cst_173 [1] : vector<18x32xf32> to vector<18xf32>
    %415 = vector.shape_cast %414 : vector<18xf32> to vector<18x1xf32>
    %cst_174 = arith.constant 3.200000e+01 : f32
    %416 = vector.broadcast %cst_174 : f32 to vector<18x1xf32>
    %417 = arith.divf %415, %416 : vector<18x1xf32>
    %418 = vector.broadcast %417 : vector<18x1xf32> to vector<18x32xf32>
    %419 = arith.subf %413, %418 : vector<18x32xf32>
    %420 = arith.mulf %419, %419 : vector<18x32xf32>
    %cst_175 = arith.constant dense<0.000000e+00> : vector<18xf32>
    %421 = vector.multi_reduction <add>, %420, %cst_175 [1] : vector<18x32xf32> to vector<18xf32>
    %422 = vector.shape_cast %421 : vector<18xf32> to vector<18x1xf32>
    %cst_176 = arith.constant 3.200000e+01 : f32
    %423 = vector.broadcast %cst_176 : f32 to vector<18x1xf32>
    %424 = arith.divf %422, %423 : vector<18x1xf32>
    %425 = vector.broadcast %417 : vector<18x1xf32> to vector<18x32xf32>
    %426 = arith.subf %413, %425 : vector<18x32xf32>
    %cst_177 = arith.constant 9.99999974E-6 : f32
    %427 = vector.broadcast %cst_177 : f32 to vector<18x1xf32>
    %428 = arith.addf %424, %427 : vector<18x1xf32>
    %429 = math.rsqrt %428 : vector<18x1xf32>
    %430 = vector.broadcast %429 : vector<18x1xf32> to vector<18x32xf32>
    %431 = arith.mulf %426, %430 : vector<18x32xf32>
    %432 = vector.broadcast %265 : vector<1x32xf32> to vector<18x32xf32>
    %433 = arith.mulf %431, %432 : vector<18x32xf32>
    %434 = vector.broadcast %266 : vector<1x32xf32> to vector<18x32xf32>
    %435 = arith.addf %433, %434 : vector<18x32xf32>
    %cst_178 = arith.constant dense<0.000000e+00> : vector<18x64xf32>
    %436 = tpu.matmul %435, %255, %cst_178 {dimension_numbers = #tpu.dot_dimension_numbers<[1], [0], [0], [1], [0, 0, 1, 1], [], []>} : vector<18x32xf32>, vector<32x64xf32>, vector<18x64xf32> -> vector<18x64xf32>
    %437 = vector.broadcast %263 : vector<1x64xf32> to vector<18x64xf32>
    %438 = arith.addf %436, %437 : vector<18x64xf32>
    %cst_179 = arith.constant 0.000000e+00 : f32
    %439 = vector.broadcast %cst_179 : f32 to vector<18x64xf32>
    %440 = arith.maximumf %438, %439 : vector<18x64xf32>
    %cst_180 = arith.constant dense<0.000000e+00> : vector<18x32xf32>
    %441 = tpu.matmul %440, %257, %cst_180 {dimension_numbers = #tpu.dot_dimension_numbers<[1], [0], [0], [1], [0, 0, 1, 1], [], []>} : vector<18x64xf32>, vector<64x32xf32>, vector<18x32xf32> -> vector<18x32xf32>
    %442 = vector.broadcast %267 : vector<1x32xf32> to vector<18x32xf32>
    %443 = arith.addf %441, %442 : vector<18x32xf32>
    %444 = arith.addf %435, %443 : vector<18x32xf32>
    %cst_181 = arith.constant dense<0.000000e+00> : vector<18xf32>
    %445 = vector.multi_reduction <add>, %444, %cst_181 [1] : vector<18x32xf32> to vector<18xf32>
    %446 = vector.shape_cast %445 : vector<18xf32> to vector<18x1xf32>
    %cst_182 = arith.constant 3.200000e+01 : f32
    %447 = vector.broadcast %cst_182 : f32 to vector<18x1xf32>
    %448 = arith.divf %446, %447 : vector<18x1xf32>
    %449 = vector.broadcast %448 : vector<18x1xf32> to vector<18x32xf32>
    %450 = arith.subf %444, %449 : vector<18x32xf32>
    %451 = arith.mulf %450, %450 : vector<18x32xf32>
    %cst_183 = arith.constant dense<0.000000e+00> : vector<18xf32>
    %452 = vector.multi_reduction <add>, %451, %cst_183 [1] : vector<18x32xf32> to vector<18xf32>
    %453 = vector.shape_cast %452 : vector<18xf32> to vector<18x1xf32>
    %cst_184 = arith.constant 3.200000e+01 : f32
    %454 = vector.broadcast %cst_184 : f32 to vector<18x1xf32>
    %455 = arith.divf %453, %454 : vector<18x1xf32>
    %456 = vector.broadcast %448 : vector<18x1xf32> to vector<18x32xf32>
    %457 = arith.subf %444, %456 : vector<18x32xf32>
    %cst_185 = arith.constant 9.99999974E-6 : f32
    %458 = vector.broadcast %cst_185 : f32 to vector<18x1xf32>
    %459 = arith.addf %455, %458 : vector<18x1xf32>
    %460 = math.rsqrt %459 : vector<18x1xf32>
    %461 = vector.broadcast %460 : vector<18x1xf32> to vector<18x32xf32>
    %462 = arith.mulf %457, %461 : vector<18x32xf32>
    %463 = vector.broadcast %268 : vector<1x32xf32> to vector<18x32xf32>
    %464 = arith.mulf %462, %463 : vector<18x32xf32>
    %465 = vector.broadcast %269 : vector<1x32xf32> to vector<18x32xf32>
    %466 = arith.addf %464, %465 : vector<18x32xf32>
    %c0_186 = arith.constant 0 : index
    %c0_187 = arith.constant 0 : index
    %467 = vector.load %arg13[%c0_186, %c0_187] : memref<32x16xf32, #tpu.memory_space<vmem>>, vector<32x16xf32>
    %cst_188 = arith.constant dense<0.000000e+00> : vector<18x16xf32>
    %468 = tpu.matmul %466, %467, %cst_188 {dimension_numbers = #tpu.dot_dimension_numbers<[1], [0], [0], [1], [0, 0, 1, 1], [], []>} : vector<18x32xf32>, vector<32x16xf32>, vector<18x16xf32> -> vector<18x16xf32>
    %c0_189 = arith.constant 0 : index
    %c0_190 = arith.constant 0 : index
    %469 = vector.load %arg14[%c0_189, %c0_190] : memref<1x16xf32, #tpu.memory_space<vmem>>, vector<1x16xf32>
    %470 = vector.broadcast %469 : vector<1x16xf32> to vector<18x16xf32>
    %471 = arith.addf %468, %470 : vector<18x16xf32>
    %472 = vector.extract_strided_slice %471 {offsets = [0, 0], sizes = [9, 16], strides = [1, 1]} : vector<18x16xf32> to vector<9x16xf32>
    %c0_191 = arith.constant 0 : index
    %c0_192 = arith.constant 0 : index
    %c0_193 = arith.constant 0 : index
    %473 = vector.load %arg15[%c0_191, %c0_192, %c0_193] : memref<2x9x16xf32, #tpu.memory_space<vmem>>, vector<1x9x16xf32>
    %474 = vector.shape_cast %473 : vector<1x9x16xf32> to vector<9x16xf32>
    %475 = vector.shape_cast %472 : vector<9x16xf32> to vector<1x9x16xf32>
    tpu.vector_store %arg15[%c0_191, %c0_192, %c0_193], %475 {strides = array<i32>} : memref<2x9x16xf32, #tpu.memory_space<vmem>>, vector<1x9x16xf32>,
    %476 = vector.extract_strided_slice %471 {offsets = [9, 0], sizes = [9, 16], strides = [1, 1]} : vector<18x16xf32> to vector<9x16xf32>
    %c1_194 = arith.constant 1 : index
    %c0_195 = arith.constant 0 : index
    %c0_196 = arith.constant 0 : index
    %477 = vector.load %arg15[%c1_194, %c0_195, %c0_196] : memref<2x9x16xf32, #tpu.memory_space<vmem>>, vector<1x9x16xf32>
    %478 = vector.shape_cast %477 : vector<1x9x16xf32> to vector<9x16xf32>
    %479 = vector.shape_cast %476 : vector<9x16xf32> to vector<1x9x16xf32>
    tpu.vector_store %arg15[%c1_194, %c0_195, %c0_196], %479 {strides = array<i32>} : memref<2x9x16xf32, #tpu.memory_space<vmem>>, vector<1x9x16xf32>,
    return
  }
  func.func @transform_0(%arg0: i32) -> (i32, i32, i32) {
    %c0_i32 = arith.constant 0 : i32
    %c0_i32_0 = arith.constant 0 : i32
    %c0_i32_1 = arith.constant 0 : i32
    return %arg0, %c0_i32, %c0_i32_0 : i32, i32, i32
  }
  func.func @transform_1(%arg0: i32) -> (i32, i32) {
    %c0_i32 = arith.constant 0 : i32
    %c0_i32_0 = arith.constant 0 : i32
    %c0_i32_1 = arith.constant 0 : i32
    return %c0_i32, %c0_i32_0 : i32, i32
  }
  func.func @transform_2(%arg0: i32) -> (i32, i32) {
    %c0_i32 = arith.constant 0 : i32
    %c0_i32_0 = arith.constant 0 : i32
    %c0_i32_1 = arith.constant 0 : i32
    return %c0_i32, %c0_i32_0 : i32, i32
  }
  func.func @transform_3(%arg0: i32) -> (i32, i32) {
    %c0_i32 = arith.constant 0 : i32
    %c0_i32_0 = arith.constant 0 : i32
    %c0_i32_1 = arith.constant 0 : i32
    return %c0_i32, %c0_i32_0 : i32, i32
  }
  func.func @transform_4(%arg0: i32) -> (i32, i32) {
    %c0_i32 = arith.constant 0 : i32
    %c0_i32_0 = arith.constant 0 : i32
    %c0_i32_1 = arith.constant 0 : i32
    return %c0_i32, %c0_i32_0 : i32, i32
  }
  func.func @transform_5(%arg0: i32) -> (i32, i32) {
    %c0_i32 = arith.constant 0 : i32
    %c0_i32_0 = arith.constant 0 : i32
    %c0_i32_1 = arith.constant 0 : i32
    return %c0_i32, %c0_i32_0 : i32, i32
  }
  func.func @transform_6(%arg0: i32) -> (i32, i32, i32) {
    %c0_i32 = arith.constant 0 : i32
    %c0_i32_0 = arith.constant 0 : i32
    %c0_i32_1 = arith.constant 0 : i32
    %c0_i32_2 = arith.constant 0 : i32
    return %c0_i32, %c0_i32_0, %c0_i32_1 : i32, i32, i32
  }
  func.func @transform_7(%arg0: i32) -> (i32, i32, i32) {
    %c0_i32 = arith.constant 0 : i32
    %c0_i32_0 = arith.constant 0 : i32
    %c0_i32_1 = arith.constant 0 : i32
    %c0_i32_2 = arith.constant 0 : i32
    return %c0_i32, %c0_i32_0, %c0_i32_1 : i32, i32, i32
  }
  func.func @transform_8(%arg0: i32) -> (i32, i32, i32) {
    %c0_i32 = arith.constant 0 : i32
    %c0_i32_0 = arith.constant 0 : i32
    %c0_i32_1 = arith.constant 0 : i32
    %c0_i32_2 = arith.constant 0 : i32
    return %c0_i32, %c0_i32_0, %c0_i32_1 : i32, i32, i32
  }
  func.func @transform_9(%arg0: i32) -> (i32, i32, i32) {
    %c0_i32 = arith.constant 0 : i32
    %c0_i32_0 = arith.constant 0 : i32
    %c0_i32_1 = arith.constant 0 : i32
    %c0_i32_2 = arith.constant 0 : i32
    return %c0_i32, %c0_i32_0, %c0_i32_1 : i32, i32, i32
  }
  func.func @transform_10(%arg0: i32) -> (i32, i32, i32) {
    %c0_i32 = arith.constant 0 : i32
    %c0_i32_0 = arith.constant 0 : i32
    %c0_i32_1 = arith.constant 0 : i32
    %c0_i32_2 = arith.constant 0 : i32
    return %c0_i32, %c0_i32_0, %c0_i32_1 : i32, i32, i32
  }
  func.func @transform_11(%arg0: i32) -> (i32, i32, i32) {
    %c0_i32 = arith.constant 0 : i32
    %c0_i32_0 = arith.constant 0 : i32
    %c0_i32_1 = arith.constant 0 : i32
    %c0_i32_2 = arith.constant 0 : i32
    return %c0_i32, %c0_i32_0, %c0_i32_1 : i32, i32, i32
  }
  func.func @transform_12(%arg0: i32) -> (i32, i32) {
    %c0_i32 = arith.constant 0 : i32
    %c0_i32_0 = arith.constant 0 : i32
    %c0_i32_1 = arith.constant 0 : i32
    return %c0_i32, %c0_i32_0 : i32, i32
  }
  func.func @transform_13(%arg0: i32) -> (i32, i32) {
    %c0_i32 = arith.constant 0 : i32
    %c0_i32_0 = arith.constant 0 : i32
    %c0_i32_1 = arith.constant 0 : i32
    return %c0_i32, %c0_i32_0 : i32, i32
  }
  func.func @transform_14(%arg0: i32) -> (i32, i32, i32) {
    %c0_i32 = arith.constant 0 : i32
    %c0_i32_0 = arith.constant 0 : i32
    %c0_i32_1 = arith.constant 0 : i32
    return %arg0, %c0_i32, %c0_i32_0 : i32, i32, i32
  }
}

</mosaic_0001>

<llo_original>
// kernel: tpu_custom_call.1
$region0: #{tpu_custom_call.1}
  #allocation0 [shape = 'u32[]', space=smem, size = 0x4, offset = 0x4, fixed_abs, tag = 'smem constant byte address 0x4 - core index']
  #allocation1 [shape = 'u32[144,128]{1,0:T(1,128)}', space=vmem, size = 0x12000, scoped, tag = 'internal scratch']
  #allocation2 [shape = 'f32[18,32]{1,0:T(8,128)}', space=vmem, size = 0x3000, scoped, tag = 'scratch operand']
  #allocation3 [shape = 'f32[18,32]{1,0:T(8,128)}', space=vmem, size = 0x3000, scoped, tag = 'scratch operand']
  %s0 = inlined_call_operand.vmem [shape: f32[2,8,16], index: 0, kind: input, shape index: {}]
  %s1 = inlined_call_operand.vmem [shape: f32[16,2048], index: 1, kind: input, shape index: {}]
  %s2 = inlined_call_operand.vmem [shape: f32[1,2048], index: 2, kind: input, shape index: {}]
  %s3 = inlined_call_operand.vmem [shape: f32[2048,32], index: 3, kind: input, shape index: {}]
  %s4 = inlined_call_operand.vmem [shape: f32[1,32], index: 4, kind: input, shape index: {}]
  %s5 = inlined_call_operand.vmem [shape: f32[9,32], index: 5, kind: input, shape index: {}]
  %s6 = inlined_call_operand.vmem [shape: f32[2,32,96], index: 6, kind: input, shape index: {}]
  %s7 = inlined_call_operand.vmem [shape: f32[2,2,96], index: 7, kind: input, shape index: {}]
  %s8 = inlined_call_operand.vmem [shape: f32[2,32,32], index: 8, kind: input, shape index: {}]
  %s9 = inlined_call_operand.vmem [shape: f32[2,6,32], index: 9, kind: input, shape index: {}]
  %s10 = inlined_call_operand.vmem [shape: f32[2,32,64], index: 10, kind: input, shape index: {}]
  %s11 = inlined_call_operand.vmem [shape: f32[2,64,32], index: 11, kind: input, shape index: {}]
  %s12 = inlined_call_operand.vmem [shape: f32[32,16], index: 12, kind: input, shape index: {}]
  %s13 = inlined_call_operand.vmem [shape: f32[1,16], index: 13, kind: input, shape index: {}]
  %s14 = inlined_call_operand.vmem [shape: f32[2,9,16], index: 14, kind: output, shape index: {}]
  %s15 = sld [smem:[#allocation0]]
  $region66: #{tpu_custom_call.1} parent=0
    _
  %s17 = ssub.s32 1, %s15
  %s18 = scalar_select 0, %s17, %s15
  // Predicated region
  $region2: #{tpu_custom_call.1} parent=0 // pred_check
    _
  $region3: #{tpu_custom_call.1} parent=0 // pred_check_branch
    %20 = sbr.rel (0) target = $region5
  $region4: #{tpu_custom_call.1} parent=0 // pred_region
    _
  $region5: #{tpu_custom_call.1} parent=0 // pred_fallthru
    _
  // Predicated region
  $region6: #{tpu_custom_call.1} parent=0 // pred_check
    _
  $region7: #{tpu_custom_call.1} parent=0 // pred_check_branch
    %22 = sbr.rel (0) target = $region9
  $region8: #{tpu_custom_call.1} parent=0 // pred_region
    _
  $region9: #{tpu_custom_call.1} parent=0 // pred_fallthru
    _
  // Predicated region
  $region10: #{tpu_custom_call.1} parent=0 // pred_check
    _
  $region11: #{tpu_custom_call.1} parent=0 // pred_check_branch
    %24 = sbr.rel (0) target = $region13
  $region12: #{tpu_custom_call.1} parent=0 // pred_region
    _
  $region13: #{tpu_custom_call.1} parent=0 // pred_fallthru
    _
  // Predicated region
  $region14: #{tpu_custom_call.1} parent=0 // pred_check
    _
  $region15: #{tpu_custom_call.1} parent=0 // pred_check_branch
    %26 = sbr.rel (0) target = $region17
  $region16: #{tpu_custom_call.1} parent=0 // pred_region
    _
  $region17: #{tpu_custom_call.1} parent=0 // pred_fallthru
    _
  // Predicated region
  $region18: #{tpu_custom_call.1} parent=0 // pred_check
    _
  $region19: #{tpu_custom_call.1} parent=0 // pred_check_branch
    %28 = sbr.rel (0) target = $region21
  $region20: #{tpu_custom_call.1} parent=0 // pred_region
    _
  $region21: #{tpu_custom_call.1} parent=0 // pred_fallthru
    _
  // Predicated region
  $region22: #{tpu_custom_call.1} parent=0 // pred_check
    _
  $region23: #{tpu_custom_call.1} parent=0 // pred_check_branch
    %30 = sbr.rel (0) target = $region25
  $region24: #{tpu_custom_call.1} parent=0 // pred_region
    _
  $region25: #{tpu_custom_call.1} parent=0 // pred_fallthru
    _
  // Predicated region
  $region26: #{tpu_custom_call.1} parent=0 // pred_check
    _
  $region27: #{tpu_custom_call.1} parent=0 // pred_check_branch
    %32 = sbr.rel (0) target = $region29
  $region28: #{tpu_custom_call.1} parent=0 // pred_region
    _
  $region29: #{tpu_custom_call.1} parent=0 // pred_fallthru
    _
  // Predicated region
  $region30: #{tpu_custom_call.1} parent=0 // pred_check
    _
  $region31: #{tpu_custom_call.1} parent=0 // pred_check_branch
    %34 = sbr.rel (0) target = $region33
  $region32: #{tpu_custom_call.1} parent=0 // pred_region
    _
  $region33: #{tpu_custom_call.1} parent=0 // pred_fallthru
    _
  // Predicated region
  $region34: #{tpu_custom_call.1} parent=0 // pred_check
    _
  $region35: #{tpu_custom_call.1} parent=0 // pred_check_branch
    %36 = sbr.rel (0) target = $region37
  $region36: #{tpu_custom_call.1} parent=0 // pred_region
    _
  $region37: #{tpu_custom_call.1} parent=0 // pred_fallthru
    _
  // Predicated region
  $region38: #{tpu_custom_call.1} parent=0 // pred_check
    _
  $region39: #{tpu_custom_call.1} parent=0 // pred_check_branch
    %38 = sbr.rel (0) target = $region41
  $region40: #{tpu_custom_call.1} parent=0 // pred_region
    _
  $region41: #{tpu_custom_call.1} parent=0 // pred_fallthru
    _
  // Predicated region
  $region42: #{tpu_custom_call.1} parent=0 // pred_check
    _
  $region43: #{tpu_custom_call.1} parent=0 // pred_check_branch
    %40 = sbr.rel (0) target = $region45
  $region44: #{tpu_custom_call.1} parent=0 // pred_region
    _
  $region45: #{tpu_custom_call.1} parent=0 // pred_fallthru
    _
  // Predicated region
  $region46: #{tpu_custom_call.1} parent=0 // pred_check
    _
  $region47: #{tpu_custom_call.1} parent=0 // pred_check_branch
    %42 = sbr.rel (0) target = $region49
  $region48: #{tpu_custom_call.1} parent=0 // pred_region
    _
  $region49: #{tpu_custom_call.1} parent=0 // pred_fallthru
    _
  // Predicated region
  $region50: #{tpu_custom_call.1} parent=0 // pred_check
    _
  $region51: #{tpu_custom_call.1} parent=0 // pred_check_branch
    %44 = sbr.rel (0) target = $region53
  $region52: #{tpu_custom_call.1} parent=0 // pred_region
    _
  $region53: #{tpu_custom_call.1} parent=0 // pred_fallthru
    _
  // Predicated region
  $region54: #{tpu_custom_call.1} parent=0 // pred_check
    _
  $region55: #{tpu_custom_call.1} parent=0 // pred_check_branch
    %46 = sbr.rel (0) target = $region57
  $region56: #{tpu_custom_call.1} parent=0 // pred_region
    _
  $region57: #{tpu_custom_call.1} parent=0 // pred_fallthru
    _
  %v47 = vld [vmem:[%s0] sm:$0xff]
  %v48 = vld [vmem:[%s0 + $0x8] sm:$0xff]
  %v49 = vld [vmem:[%s1] sm:$0xff]
  %v50 = vld [vmem:[%s1 + $0x8] sm:$0xff]
  %v51 = vld [vmem:[%s1 + $0x10] sm:$0xff]
  %v52 = vld [vmem:[%s1 + $0x18] sm:$0xff]
  %v53 = vld [vmem:[%s1 + $0x20] sm:$0xff]
  %v54 = vld [vmem:[%s1 + $0x28] sm:$0xff]
  %v55 = vld [vmem:[%s1 + $0x30] sm:$0xff]
  %v56 = vld [vmem:[%s1 + $0x38] sm:$0xff]
  %v57 = vld [vmem:[%s1 + $0x40] sm:$0xff]
  %v58 = vld [vmem:[%s1 + $0x48] sm:$0xff]
  %v59 = vld [vmem:[%s1 + $0x50] sm:$0xff]
  %v60 = vld [vmem:[%s1 + $0x58] sm:$0xff]
  %v61 = vld [vmem:[%s1 + $0x60] sm:$0xff]
  %v62 = vld [vmem:[%s1 + $0x68] sm:$0xff]
  %v63 = vld [vmem:[%s1 + $0x70] sm:$0xff]
  %v64 = vld [vmem:[%s1 + $0x78] sm:$0xff]
  %v65 = vld [vmem:[%s1 + $0x80] sm:$0xff]
  %v66 = vld [vmem:[%s1 + $0x88] sm:$0xff]
  %v67 = vld [vmem:[%s1 + $0x90] sm:$0xff]
  %v68 = vld [vmem:[%s1 + $0x98] sm:$0xff]
  %v69 = vld [vmem:[%s1 + $0xa0] sm:$0xff]
  %v70 = vld [vmem:[%s1 + $0xa8] sm:$0xff]
  %v71 = vld [vmem:[%s1 + $0xb0] sm:$0xff]
  %v72 = vld [vmem:[%s1 + $0xb8] sm:$0xff]
  %v73 = vld [vmem:[%s1 + $0xc0] sm:$0xff]
  %v74 = vld [vmem:[%s1 + $0xc8] sm:$0xff]
  %v75 = vld [vmem:[%s1 + $0xd0] sm:$0xff]
  %v76 = vld [vmem:[%s1 + $0xd8] sm:$0xff]
  %v77 = vld [vmem:[%s1 + $0xe0] sm:$0xff]
  %v78 = vld [vmem:[%s1 + $0xe8] sm:$0xff]
  %v79 = vld [vmem:[%s1 + $0xf0] sm:$0xff]
  %v80 = vld [vmem:[%s1 + $0xf8] sm:$0xff]
  %v81 = vld [vmem:[%s2] sm:$0xff]
  %v82 = vld [vmem:[%s2 + $0x8] sm:$0xff]
  %v85 = vlaneseq
  %v86 = vshrl.u32 %v85, 7
  %v87 = vsub.s32 0, %v86
  %v88 = vrot.slane %v81, %v87
  %v89 = vlaneseq
  %v90 = vshrl.u32 %v89, 7
  %v91 = vsub.s32 1, %v90
  %v92 = vrot.slane %v81, %v91
  %v93 = vlaneseq
  %v94 = vshrl.u32 %v93, 7
  %v95 = vsub.s32 2, %v94
  %v96 = vrot.slane %v81, %v95
  %v97 = vlaneseq
  %v98 = vshrl.u32 %v97, 7
  %v99 = vsub.s32 3, %v98
  %v100 = vrot.slane %v81, %v99
  %v101 = vlaneseq
  %v102 = vshrl.u32 %v101, 7
  %v103 = vsub.s32 4, %v102
  %v104 = vrot.slane %v81, %v103
  %v105 = vlaneseq
  %v106 = vshrl.u32 %v105, 7
  %v107 = vsub.s32 5, %v106
  %v108 = vrot.slane %v81, %v107
  %v109 = vlaneseq
  %v110 = vshrl.u32 %v109, 7
  %v111 = vsub.s32 6, %v110
  %v112 = vrot.slane %v81, %v111
  %v113 = vlaneseq
  %v114 = vshrl.u32 %v113, 7
  %v115 = vsub.s32 7, %v114
  %v116 = vrot.slane %v81, %v115
  %v117 = vlaneseq
  %v118 = vshrl.u32 %v117, 7
  %v119 = vsub.s32 0, %v118
  %v120 = vrot.slane %v82, %v119
  %v121 = vlaneseq
  %v122 = vshrl.u32 %v121, 7
  %v123 = vsub.s32 1, %v122
  %v124 = vrot.slane %v82, %v123
  %v125 = vlaneseq
  %v126 = vshrl.u32 %v125, 7
  %v127 = vsub.s32 2, %v126
  %v128 = vrot.slane %v82, %v127
  %v129 = vlaneseq
  %v130 = vshrl.u32 %v129, 7
  %v131 = vsub.s32 3, %v130
  %v132 = vrot.slane %v82, %v131
  %v133 = vlaneseq
  %v134 = vshrl.u32 %v133, 7
  %v135 = vsub.s32 4, %v134
  %v136 = vrot.slane %v82, %v135
  %v137 = vlaneseq
  %v138 = vshrl.u32 %v137, 7
  %v139 = vsub.s32 5, %v138
  %v140 = vrot.slane %v82, %v139
  %v141 = vlaneseq
  %v142 = vshrl.u32 %v141, 7
  %v143 = vsub.s32 6, %v142
  %v144 = vrot.slane %v82, %v143
  %v145 = vlaneseq
  %v146 = vshrl.u32 %v145, 7
  %v147 = vsub.s32 7, %v146
  %v148 = vrot.slane %v82, %v147
  %vm165 = vcmask 130048
  %v167 = vsel %vm165, %v47, 0
  %v170 = vsel %vm165, %v48, 0
  %172 = vmatprep.subr.mxu0 %v50
  %173 = vmatpush1.msra.mxu0 %v49
  %174 = vmatprep.subr.mxu0 %v66
  %175 = vmatpush1.msra.mxu0 %v65
  %176 = vmatprep.subr.mxu0 0.0
  %177 = vmatpush1.msra.mxu0 0.0
  %178 = vmatprep.subr.mxu0 0.0
  %179 = vmatpush1.msra.mxu0 0.0
  %180 = vmatprep.subr.mxu0 0.0
  %181 = vmatpush1.msra.mxu0 0.0
  %182 = vmatprep.subr.mxu0 0.0
  %183 = vmatpush1.msra.mxu0 0.0
  %184 = vmatprep.subr.mxu0 0.0
  %185 = vmatpush1.msra.mxu0 0.0
  %186 = vmatprep.subr.mxu0 0.0
  %187 = vmatpush1.msra.mxu0 0.0
  %188 = vmatprep.subr.mxu0 0.0
  %189 = vmatpush1.msra.mxu0 0.0
  %190 = vmatprep.subr.mxu0 0.0
  %191 = vmatpush1.msra.mxu0 0.0
  %192 = vmatprep.subr.mxu0 0.0
  %193 = vmatpush1.msra.mxu0 0.0
  %194 = vmatprep.subr.mxu0 0.0
  %195 = vmatpush1.msra.mxu0 0.0
  %196 = vmatprep.subr.mxu0 0.0
  %197 = vmatpush1.msra.mxu0 0.0
  %198 = vmatprep.subr.mxu0 0.0
  %199 = vmatpush1.msra.mxu0 0.0
  %200 = vmatprep.subr.mxu0 0.0
  %201 = vmatpush1.msra.mxu0 0.0
  %202 = vmatprep.subr.mxu0 0.0
  %203 = vmatpush1.msra.mxu0 0.0
  %204 = vmatprep.subr.mxu0 0.0
  %205 = vmatpush1.msra.mxu0 0.0
  %206 = vmatprep.subr.mxu0 0.0
  %207 = vmatpush1.msra.mxu0 0.0
  %208 = vmatprep.subr.mxu0 0.0
  %209 = vmatpush1.msra.mxu0 0.0
  %210 = vmatprep.subr.mxu0 0.0
  %211 = vmatpush1.msra.mxu0 0.0
  %212 = vmatprep.subr.mxu0 0.0
  %213 = vmatpush1.msra.mxu0 0.0
  %214 = vmatprep.subr.mxu0 0.0
  %215 = vmatpush1.msra.mxu0 0.0
  %216 = vmatprep.subr.mxu0 0.0
  %217 = vmatpush1.msra.mxu0 0.0
  %218 = vmatprep.subr.mxu0 0.0
  %219 = vmatpush1.msra.mxu0 0.0
  %220 = vmatprep.subr.mxu0 0.0
  %221 = vmatpush1.msra.mxu0 0.0
  %222 = vmatprep.subr.mxu0 0.0
  %223 = vmatpush1.msra.mxu0 0.0
  %224 = vmatprep.subr.mxu0 0.0
  %225 = vmatpush1.msra.mxu0 0.0
  %226 = vmatprep.subr.mxu0 0.0
  %227 = vmatpush1.msra.mxu0 0.0
  %228 = vmatprep.subr.mxu0 0.0
  %229 = vmatpush1.msra.mxu0 0.0
  %230 = vmatprep.subr.mxu0 0.0
  %231 = vmatpush1.msra.mxu0 0.0
  %232 = vmatprep.subr.mxu0 0.0
  %233 = vmatpush1.msra.mxu0 0.0
  %234 = vmatprep.subr.mxu0 0.0
  %235 = vmatpush1.msra.mxu0 0.0
  %236 = vmatprep.mubr.f32.mxu0 0.0
  %237 = vmatmul.mubr.f32.gmra.mrb[0].mxu0 %v167
  %v238 = vpop.f32.mrb[0].mxu0
  %v239 = vadd.f32 %v88, %v238
  %v240 = vpop.f32.mrb[0].mxu0
  %v241 = vadd.f32 %v92, %v240
  %242 = vmatprep.mubr.f32.mxu0 0.0
  %243 = vmatmul.mubr.f32.gmra.mrb[0].mxu0 %v170
  %v244 = vpop.f32.mrb[0].mxu0
  %v245 = vadd.f32 %v88, %v244
  %v246 = vpop.f32.mrb[0].mxu0
  %v247 = vadd.f32 %v92, %v246
  %248 = vdwg.mxu0
  %249 = vmatprep.subr.mxu0 %v52
  %250 = vmatpush1.msra.mxu0 %v51
  %251 = vmatprep.subr.mxu0 %v68
  %252 = vmatpush1.msra.mxu0 %v67
  %253 = vmatprep.subr.mxu0 0.0
  %254 = vmatpush1.msra.mxu0 0.0
  %255 = vmatprep.subr.mxu0 0.0
  %256 = vmatpush1.msra.mxu0 0.0
  %257 = vmatprep.subr.mxu0 0.0
  %258 = vmatpush1.msra.mxu0 0.0
  %259 = vmatprep.subr.mxu0 0.0
  %260 = vmatpush1.msra.mxu0 0.0
  %261 = vmatprep.subr.mxu0 0.0
  %262 = vmatpush1.msra.mxu0 0.0
  %263 = vmatprep.subr.mxu0 0.0
  %264 = vmatpush1.msra.mxu0 0.0
  %265 = vmatprep.subr.mxu0 0.0
  %266 = vmatpush1.msra.mxu0 0.0
  %267 = vmatprep.subr.mxu0 0.0
  %268 = vmatpush1.msra.mxu0 0.0
  %269 = vmatprep.subr.mxu0 0.0
  %270 = vmatpush1.msra.mxu0 0.0
  %271 = vmatprep.subr.mxu0 0.0
  %272 = vmatpush1.msra.mxu0 0.0
  %273 = vmatprep.subr.mxu0 0.0
  %274 = vmatpush1.msra.mxu0 0.0
  %275 = vmatprep.subr.mxu0 0.0
  %276 = vmatpush1.msra.mxu0 0.0
  %277 = vmatprep.subr.mxu0 0.0
  %278 = vmatpush1.msra.mxu0 0.0
  %279 = vmatprep.subr.mxu0 0.0
  %280 = vmatpush1.msra.mxu0 0.0
  %281 = vmatprep.subr.mxu0 0.0
  %282 = vmatpush1.msra.mxu0 0.0
  %283 = vmatprep.subr.mxu0 0.0
  %284 = vmatpush1.msra.mxu0 0.0
  %285 = vmatprep.subr.mxu0 0.0
  %286 = vmatpush1.msra.mxu0 0.0
  %287 = vmatprep.subr.mxu0 0.0
  %288 = vmatpush1.msra.mxu0 0.0
  %289 = vmatprep.subr.mxu0 0.0
  %290 = vmatpush1.msra.mxu0 0.0
  %291 = vmatprep.subr.mxu0 0.0
  %292 = vmatpush1.msra.mxu0 0.0
  %293 = vmatprep.subr.mxu0 0.0
  %294 = vmatpush1.msra.mxu0 0.0
  %295 = vmatprep.subr.mxu0 0.0
  %296 = vmatpush1.msra.mxu0 0.0
  %297 = vmatprep.subr.mxu0 0.0
  %298 = vmatpush1.msra.mxu0 0.0
  %299 = vmatprep.subr.mxu0 0.0
  %300 = vmatpush1.msra.mxu0 0.0
  %301 = vmatprep.subr.mxu0 0.0
  %302 = vmatpush1.msra.mxu0 0.0
  %303 = vmatprep.subr.mxu0 0.0
  %304 = vmatpush1.msra.mxu0 0.0
  %305 = vmatprep.subr.mxu0 0.0
  %306 = vmatpush1.msra.mxu0 0.0
  %307 = vmatprep.subr.mxu0 0.0
  %308 = vmatpush1.msra.mxu0 0.0
  %309 = vmatprep.subr.mxu0 0.0
  %310 = vmatpush1.msra.mxu0 0.0
  %311 = vmatprep.subr.mxu0 0.0
  %312 = vmatpush1.msra.mxu0 0.0
  %313 = vmatprep.mubr.f32.mxu0 0.0
  %314 = vmatmul.mubr.f32.gmra.mrb[0].mxu0 %v167
  %v315 = vpop.f32.mrb[0].mxu0
  %v316 = vadd.f32 %v96, %v315
  %v317 = vpop.f32.mrb[0].mxu0
  %v318 = vadd.f32 %v100, %v317
  %319 = vmatprep.mubr.f32.mxu0 0.0
  %320 = vmatmul.mubr.f32.gmra.mrb[0].mxu0 %v170
  %v321 = vpop.f32.mrb[0].mxu0
  %v322 = vadd.f32 %v96, %v321
  %v323 = vpop.f32.mrb[0].mxu0
  %v324 = vadd.f32 %v100, %v323
  %325 = vdwg.mxu0
  %326 = vmatprep.subr.mxu0 %v54
  %327 = vmatpush1.msra.mxu0 %v53
  %328 = vmatprep.subr.mxu0 %v70
  %329 = vmatpush1.msra.mxu0 %v69
  %330 = vmatprep.subr.mxu0 0.0
  %331 = vmatpush1.msra.mxu0 0.0
  %332 = vmatprep.subr.mxu0 0.0
  %333 = vmatpush1.msra.mxu0 0.0
  %334 = vmatprep.subr.mxu0 0.0
  %335 = vmatpush1.msra.mxu0 0.0
  %336 = vmatprep.subr.mxu0 0.0
  %337 = vmatpush1.msra.mxu0 0.0
  %338 = vmatprep.subr.mxu0 0.0
  %339 = vmatpush1.msra.mxu0 0.0
  %340 = vmatprep.subr.mxu0 0.0
  %341 = vmatpush1.msra.mxu0 0.0
  %342 = vmatprep.subr.mxu0 0.0
  %343 = vmatpush1.msra.mxu0 0.0
  %344 = vmatprep.subr.mxu0 0.0
  %345 = vmatpush1.msra.mxu0 0.0
  %346 = vmatprep.subr.mxu0 0.0
  %347 = vmatpush1.msra.mxu0 0.0
  %348 = vmatprep.subr.mxu0 0.0
  %349 = vmatpush1.msra.mxu0 0.0
  %350 = vmatprep.subr.mxu0 0.0
  %351 = vmatpush1.msra.mxu0 0.0
  %352 = vmatprep.subr.mxu0 0.0
  %353 = vmatpush1.msra.mxu0 0.0
  %354 = vmatprep.subr.mxu0 0.0
  %355 = vmatpush1.msra.mxu0 0.0
  %356 = vmatprep.subr.mxu0 0.0
  %357 = vmatpush1.msra.mxu0 0.0
  %358 = vmatprep.subr.mxu0 0.0
  %359 = vmatpush1.msra.mxu0 0.0
  %360 = vmatprep.subr.mxu0 0.0
  %361 = vmatpush1.msra.mxu0 0.0
  %362 = vmatprep.subr.mxu0 0.0
  %363 = vmatpush1.msra.mxu0 0.0
  %364 = vmatprep.subr.mxu0 0.0
  %365 = vmatpush1.msra.mxu0 0.0
  %366 = vmatprep.subr.mxu0 0.0
  %367 = vmatpush1.msra.mxu0 0.0
  %368 = vmatprep.subr.mxu0 0.0
  %369 = vmatpush1.msra.mxu0 0.0
  %370 = vmatprep.subr.mxu0 0.0
  %371 = vmatpush1.msra.mxu0 0.0
  %372 = vmatprep.subr.mxu0 0.0
  %373 = vmatpush1.msra.mxu0 0.0
  %374 = vmatprep.subr.mxu0 0.0
  %375 = vmatpush1.msra.mxu0 0.0
  %376 = vmatprep.subr.mxu0 0.0
  %377 = vmatpush1.msra.mxu0 0.0
  %378 = vmatprep.subr.mxu0 0.0
  %379 = vmatpush1.msra.mxu0 0.0
  %380 = vmatprep.subr.mxu0 0.0
  %381 = vmatpush1.msra.mxu0 0.0
  %382 = vmatprep.subr.mxu0 0.0
  %383 = vmatpush1.msra.mxu0 0.0
  %384 = vmatprep.subr.mxu0 0.0
  %385 = vmatpush1.msra.mxu0 0.0
  %386 = vmatprep.subr.mxu0 0.0
  %387 = vmatpush1.msra.mxu0 0.0
  %388 = vmatprep.subr.mxu0 0.0
  %389 = vmatpush1.msra.mxu0 0.0
  %390 = vmatprep.mubr.f32.mxu0 0.0
  %391 = vmatmul.mubr.f32.gmra.mrb[0].mxu0 %v167
  %v392 = vpop.f32.mrb[0].mxu0
  %v393 = vadd.f32 %v104, %v392
  %v394 = vpop.f32.mrb[0].mxu0
  %v395 = vadd.f32 %v108, %v394
  %396 = vmatprep.mubr.f32.mxu0 0.0
  %397 = vmatmul.mubr.f32.gmra.mrb[0].mxu0 %v170
  %v398 = vpop.f32.mrb[0].mxu0
  %v399 = vadd.f32 %v104, %v398
  %v400 = vpop.f32.mrb[0].mxu0
  %v401 = vadd.f32 %v108, %v400
  %402 = vdwg.mxu0
  %403 = vmatprep.subr.mxu0 %v56
  %404 = vmatpush1.msra.mxu0 %v55
  %405 = vmatprep.subr.mxu0 %v72
  %406 = vmatpush1.msra.mxu0 %v71
  %407 = vmatprep.subr.mxu0 0.0
  %408 = vmatpush1.msra.mxu0 0.0
  %409 = vmatprep.subr.mxu0 0.0
  %410 = vmatpush1.msra.mxu0 0.0
  %411 = vmatprep.subr.mxu0 0.0
  %412 = vmatpush1.msra.mxu0 0.0
  %413 = vmatprep.subr.mxu0 0.0
  %414 = vmatpush1.msra.mxu0 0.0
  %415 = vmatprep.subr.mxu0 0.0
  %416 = vmatpush1.msra.mxu0 0.0
  %417 = vmatprep.subr.mxu0 0.0
  %418 = vmatpush1.msra.mxu0 0.0
  %419 = vmatprep.subr.mxu0 0.0
  %420 = vmatpush1.msra.mxu0 0.0
  %421 = vmatprep.subr.mxu0 0.0
  %422 = vmatpush1.msra.mxu0 0.0
  %423 = vmatprep.subr.mxu0 0.0
  %424 = vmatpush1.msra.mxu0 0.0
  %425 = vmatprep.subr.mxu0 0.0
  %426 = vmatpush1.msra.mxu0 0.0
  %427 = vmatprep.subr.mxu0 0.0
  %428 = vmatpush1.msra.mxu0 0.0
  %429 = vmatprep.subr.mxu0 0.0
  %430 = vmatpush1.msra.mxu0 0.0
  %431 = vmatprep.subr.mxu0 0.0
  %432 = vmatpush1.msra.mxu0 0.0
  %433 = vmatprep.subr.mxu0 0.0
  %434 = vmatpush1.msra.mxu0 0.0
  %435 = vmatprep.subr.mxu0 0.0
  %436 = vmatpush1.msra.mxu0 0.0
  %437 = vmatprep.subr.mxu0 0.0
  %438 = vmatpush1.msra.mxu0 0.0
  %439 = vmatprep.subr.mxu0 0.0
  %440 = vmatpush1.msra.mxu0 0.0
  %441 = vmatprep.subr.mxu0 0.0
  %442 = vmatpush1.msra.mxu0 0.0
  %443 = vmatprep.subr.mxu0 0.0
  %444 = vmatpush1.msra.mxu0 0.0
  %445 = vmatprep.subr.mxu0 0.0
  %446 = vmatpush1.msra.mxu0 0.0
  %447 = vmatprep.subr.mxu0 0.0
  %448 = vmatpush1.msra.mxu0 0.0
  %449 = vmatprep.subr.mxu0 0.0
  %450 = vmatpush1.msra.mxu0 0.0
  %451 = vmatprep.subr.mxu0 0.0
  %452 = vmatpush1.msra.mxu0 0.0
  %453 = vmatprep.subr.mxu0 0.0
  %454 = vmatpush1.msra.mxu0 0.0
  %455 = vmatprep.subr.mxu0 0.0
  %456 = vmatpush1.msra.mxu0 0.0
  %457 = vmatprep.subr.mxu0 0.0
  %458 = vmatpush1.msra.mxu0 0.0
  %459 = vmatprep.subr.mxu0 0.0
  %460 = vmatpush1.msra.mxu0 0.0
  %461 = vmatprep.subr.mxu0 0.0
  %462 = vmatpush1.msra.mxu0 0.0
  %463 = vmatprep.subr.mxu0 0.0
  %464 = vmatpush1.msra.mxu0 0.0
  %465 = vmatprep.subr.mxu0 0.0
  %466 = vmatpush1.msra.mxu0 0.0
  %467 = vmatprep.mubr.f32.mxu0 0.0
  %468 = vmatmul.mubr.f32.gmra.mrb[0].mxu0 %v167
  %v469 = vpop.f32.mrb[0].mxu0
  %v470 = vadd.f32 %v112, %v469
  %v471 = vpop.f32.mrb[0].mxu0
  %v472 = vadd.f32 %v116, %v471
  %473 = vmatprep.mubr.f32.mxu0 0.0
  %474 = vmatmul.mubr.f32.gmra.mrb[0].mxu0 %v170
  %v475 = vpop.f32.mrb[0].mxu0
  %v476 = vadd.f32 %v112, %v475
  %v477 = vpop.f32.mrb[0].mxu0
  %v478 = vadd.f32 %v116, %v477
  %479 = vdwg.mxu0
  %480 = vmatprep.subr.mxu0 %v58
  %481 = vmatpush1.msra.mxu0 %v57
  %482 = vmatprep.subr.mxu0 %v74
  %483 = vmatpush1.msra.mxu0 %v73
  %484 = vmatprep.subr.mxu0 0.0
  %485 = vmatpush1.msra.mxu0 0.0
  %486 = vmatprep.subr.mxu0 0.0
  %487 = vmatpush1.msra.mxu0 0.0
  %488 = vmatprep.subr.mxu0 0.0
  %489 = vmatpush1.msra.mxu0 0.0
  %490 = vmatprep.subr.mxu0 0.0
  %491 = vmatpush1.msra.mxu0 0.0
  %492 = vmatprep.subr.mxu0 0.0
  %493 = vmatpush1.msra.mxu0 0.0
  %494 = vmatprep.subr.mxu0 0.0
  %495 = vmatpush1.msra.mxu0 0.0
  %496 = vmatprep.subr.mxu0 0.0
  %497 = vmatpush1.msra.mxu0 0.0
  %498 = vmatprep.subr.mxu0 0.0
  %499 = vmatpush1.msra.mxu0 0.0
  %500 = vmatprep.subr.mxu0 0.0
  %501 = vmatpush1.msra.mxu0 0.0
  %502 = vmatprep.subr.mxu0 0.0
  %503 = vmatpush1.msra.mxu0 0.0
  %504 = vmatprep.subr.mxu0 0.0
  %505 = vmatpush1.msra.mxu0 0.0
  %506 = vmatprep.subr.mxu0 0.0
  %507 = vmatpush1.msra.mxu0 0.0
  %508 = vmatprep.subr.mxu0 0.0
  %509 = vmatpush1.msra.mxu0 0.0
  %510 = vmatprep.subr.mxu0 0.0
  %511 = vmatpush1.msra.mxu0 0.0
  %512 = vmatprep.subr.mxu0 0.0
  %513 = vmatpush1.msra.mxu0 0.0
  %514 = vmatprep.subr.mxu0 0.0
  %515 = vmatpush1.msra.mxu0 0.0
  %516 = vmatprep.subr.mxu0 0.0
  %517 = vmatpush1.msra.mxu0 0.0
  %518 = vmatprep.subr.mxu0 0.0
  %519 = vmatpush1.msra.mxu0 0.0
  %520 = vmatprep.subr.mxu0 0.0
  %521 = vmatpush1.msra.mxu0 0.0
  %522 = vmatprep.subr.mxu0 0.0
  %523 = vmatpush1.msra.mxu0 0.0
  %524 = vmatprep.subr.mxu0 0.0
  %525 = vmatpush1.msra.mxu0 0.0
  %526 = vmatprep.subr.mxu0 0.0
  %527 = vmatpush1.msra.mxu0 0.0
  %528 = vmatprep.subr.mxu0 0.0
  %529 = vmatpush1.msra.mxu0 0.0
  %530 = vmatprep.subr.mxu0 0.0
  %531 = vmatpush1.msra.mxu0 0.0
  %532 = vmatprep.subr.mxu0 0.0
  %533 = vmatpush1.msra.mxu0 0.0
  %534 = vmatprep.subr.mxu0 0.0
  %535 = vmatpush1.msra.mxu0 0.0
  %536 = vmatprep.subr.mxu0 0.0
  %537 = vmatpush1.msra.mxu0 0.0
  %538 = vmatprep.subr.mxu0 0.0
  %539 = vmatpush1.msra.mxu0 0.0
  %540 = vmatprep.subr.mxu0 0.0
  %541 = vmatpush1.msra.mxu0 0.0
  %542 = vmatprep.subr.mxu0 0.0
  %543 = vmatpush1.msra.mxu0 0.0
  %544 = vmatprep.mubr.f32.mxu0 0.0
  %545 = vmatmul.mubr.f32.gmra.mrb[0].mxu0 %v167
  %v546 = vpop.f32.mrb[0].mxu0
  %v547 = vadd.f32 %v120, %v546
  %v548 = vpop.f32.mrb[0].mxu0
  %v549 = vadd.f32 %v124, %v548
  %550 = vmatprep.mubr.f32.mxu0 0.0
  %551 = vmatmul.mubr.f32.gmra.mrb[0].mxu0 %v170
  %v552 = vpop.f32.mrb[0].mxu0
  %v553 = vadd.f32 %v120, %v552
  %v554 = vpop.f32.mrb[0].mxu0
  %v555 = vadd.f32 %v124, %v554
  %556 = vdwg.mxu0
  %557 = vmatprep.subr.mxu0 %v60
  %558 = vmatpush1.msra.mxu0 %v59
  %559 = vmatprep.subr.mxu0 %v76
  %560 = vmatpush1.msra.mxu0 %v75
  %561 = vmatprep.subr.mxu0 0.0
  %562 = vmatpush1.msra.mxu0 0.0
  %563 = vmatprep.subr.mxu0 0.0
  %564 = vmatpush1.msra.mxu0 0.0
  %565 = vmatprep.subr.mxu0 0.0
  %566 = vmatpush1.msra.mxu0 0.0
  %567 = vmatprep.subr.mxu0 0.0
  %568 = vmatpush1.msra.mxu0 0.0
  %569 = vmatprep.subr.mxu0 0.0
  %570 = vmatpush1.msra.mxu0 0.0
  %571 = vmatprep.subr.mxu0 0.0
  %572 = vmatpush1.msra.mxu0 0.0
  %573 = vmatprep.subr.mxu0 0.0
  %574 = vmatpush1.msra.mxu0 0.0
  %575 = vmatprep.subr.mxu0 0.0
  %576 = vmatpush1.msra.mxu0 0.0
  %577 = vmatprep.subr.mxu0 0.0
  %578 = vmatpush1.msra.mxu0 0.0
  %579 = vmatprep.subr.mxu0 0.0
  %580 = vmatpush1.msra.mxu0 0.0
  %581 = vmatprep.subr.mxu0 0.0
  %582 = vmatpush1.msra.mxu0 0.0
  %583 = vmatprep.subr.mxu0 0.0
  %584 = vmatpush1.msra.mxu0 0.0
  %585 = vmatprep.subr.mxu0 0.0
  %586 = vmatpush1.msra.mxu0 0.0
  %587 = vmatprep.subr.mxu0 0.0
  %588 = vmatpush1.msra.mxu0 0.0
  %589 = vmatprep.subr.mxu0 0.0
  %590 = vmatpush1.msra.mxu0 0.0
  %591 = vmatprep.subr.mxu0 0.0
  %592 = vmatpush1.msra.mxu0 0.0
  %593 = vmatprep.subr.mxu0 0.0
  %594 = vmatpush1.msra.mxu0 0.0
  %595 = vmatprep.subr.mxu0 0.0
  %596 = vmatpush1.msra.mxu0 0.0
  %597 = vmatprep.subr.mxu0 0.0
  %598 = vmatpush1.msra.mxu0 0.0
  %599 = vmatprep.subr.mxu0 0.0
  %600 = vmatpush1.msra.mxu0 0.0
  %601 = vmatprep.subr.mxu0 0.0
  %602 = vmatpush1.msra.mxu0 0.0
  %603 = vmatprep.subr.mxu0 0.0
  %604 = vmatpush1.msra.mxu0 0.0
  %605 = vmatprep.subr.mxu0 0.0
  %606 = vmatpush1.msra.mxu0 0.0
  %607 = vmatprep.subr.mxu0 0.0
  %608 = vmatpush1.msra.mxu0 0.0
  %609 = vmatprep.subr.mxu0 0.0
  %610 = vmatpush1.msra.mxu0 0.0
  %611 = vmatprep.subr.mxu0 0.0
  %612 = vmatpush1.msra.mxu0 0.0
  %613 = vmatprep.subr.mxu0 0.0
  %614 = vmatpush1.msra.mxu0 0.0
  %615 = vmatprep.subr.mxu0 0.0
  %616 = vmatpush1.msra.mxu0 0.0
  %617 = vmatprep.subr.mxu0 0.0
  %618 = vmatpush1.msra.mxu0 0.0
  %619 = vmatprep.subr.mxu0 0.0
  %620 = vmatpush1.msra.mxu0 0.0
  %621 = vmatprep.mubr.f32.mxu0 0.0
  %622 = vmatmul.mubr.f32.gmra.mrb[0].mxu0 %v167
  %v623 = vpop.f32.mrb[0].mxu0
  %v624 = vadd.f32 %v128, %v623
  %v625 = vpop.f32.mrb[0].mxu0
  %v626 = vadd.f32 %v132, %v625
  %627 = vmatprep.mubr.f32.mxu0 0.0
  %628 = vmatmul.mubr.f32.gmra.mrb[0].mxu0 %v170
  %v629 = vpop.f32.mrb[0].mxu0
  %v630 = vadd.f32 %v128, %v629
  %v631 = vpop.f32.mrb[0].mxu0
  %v632 = vadd.f32 %v132, %v631
  %633 = vdwg.mxu0
  %634 = vmatprep.subr.mxu0 %v62
  %635 = vmatpush1.msra.mxu0 %v61
  %636 = vmatprep.subr.mxu0 %v78
  %637 = vmatpush1.msra.mxu0 %v77
  %638 = vmatprep.subr.mxu0 0.0
  %639 = vmatpush1.msra.mxu0 0.0
  %640 = vmatprep.subr.mxu0 0.0
  %641 = vmatpush1.msra.mxu0 0.0
  %642 = vmatprep.subr.mxu0 0.0
  %643 = vmatpush1.msra.mxu0 0.0
  %644 = vmatprep.subr.mxu0 0.0
  %645 = vmatpush1.msra.mxu0 0.0
  %646 = vmatprep.subr.mxu0 0.0
  %647 = vmatpush1.msra.mxu0 0.0
  %648 = vmatprep.subr.mxu0 0.0
  %649 = vmatpush1.msra.mxu0 0.0
  %650 = vmatprep.subr.mxu0 0.0
  %651 = vmatpush1.msra.mxu0 0.0
  %652 = vmatprep.subr.mxu0 0.0
  %653 = vmatpush1.msra.mxu0 0.0
  %654 = vmatprep.subr.mxu0 0.0
  %655 = vmatpush1.msra.mxu0 0.0
  %656 = vmatprep.subr.mxu0 0.0
  %657 = vmatpush1.msra.mxu0 0.0
  %658 = vmatprep.subr.mxu0 0.0
  %659 = vmatpush1.msra.mxu0 0.0
  %660 = vmatprep.subr.mxu0 0.0
  %661 = vmatpush1.msra.mxu0 0.0
  %662 = vmatprep.subr.mxu0 0.0
  %663 = vmatpush1.msra.mxu0 0.0
  %664 = vmatprep.subr.mxu0 0.0
  %665 = vmatpush1.msra.mxu0 0.0
  %666 = vmatprep.subr.mxu0 0.0
  %667 = vmatpush1.msra.mxu0 0.0
  %668 = vmatprep.subr.mxu0 0.0
  %669 = vmatpush1.msra.mxu0 0.0
  %670 = vmatprep.subr.mxu0 0.0
  %671 = vmatpush1.msra.mxu0 0.0
  %672 = vmatprep.subr.mxu0 0.0
  %673 = vmatpush1.msra.mxu0 0.0
  %674 = vmatprep.subr.mxu0 0.0
  %675 = vmatpush1.msra.mxu0 0.0
  %676 = vmatprep.subr.mxu0 0.0
  %677 = vmatpush1.msra.mxu0 0.0
  %678 = vmatprep.subr.mxu0 0.0
  %679 = vmatpush1.msra.mxu0 0.0
  %680 = vmatprep.subr.mxu0 0.0
  %681 = vmatpush1.msra.mxu0 0.0
  %682 = vmatprep.subr.mxu0 0.0
  %683 = vmatpush1.msra.mxu0 0.0
  %684 = vmatprep.subr.mxu0 0.0
  %685 = vmatpush1.msra.mxu0 0.0
  %686 = vmatprep.subr.mxu0 0.0
  %687 = vmatpush1.msra.mxu0 0.0
  %688 = vmatprep.subr.mxu0 0.0
  %689 = vmatpush1.msra.mxu0 0.0
  %690 = vmatprep.subr.mxu0 0.0
  %691 = vmatpush1.msra.mxu0 0.0
  %692 = vmatprep.subr.mxu0 0.0
  %693 = vmatpush1.msra.mxu0 0.0
  %694 = vmatprep.subr.mxu0 0.0
  %695 = vmatpush1.msra.mxu0 0.0
  %696 = vmatprep.subr.mxu0 0.0
  %697 = vmatpush1.msra.mxu0 0.0
  %698 = vmatprep.mubr.f32.mxu0 0.0
  %699 = vmatmul.mubr.f32.gmra.mrb[0].mxu0 %v167
  %v700 = vpop.f32.mrb[0].mxu0
  %v701 = vadd.f32 %v136, %v700
  %v702 = vpop.f32.mrb[0].mxu0
  %v703 = vadd.f32 %v140, %v702
  %704 = vmatprep.mubr.f32.mxu0 0.0
  %705 = vmatmul.mubr.f32.gmra.mrb[0].mxu0 %v170
  %v706 = vpop.f32.mrb[0].mxu0
  %v707 = vadd.f32 %v136, %v706
  %v708 = vpop.f32.mrb[0].mxu0
  %v709 = vadd.f32 %v140, %v708
  %710 = vdwg.mxu0
  %711 = vmatprep.subr.mxu0 %v64
  %712 = vmatpush1.msra.mxu0 %v63
  %713 = vmatprep.subr.mxu0 %v80
  %714 = vmatpush1.msra.mxu0 %v79
  %715 = vmatprep.subr.mxu0 0.0
  %716 = vmatpush1.msra.mxu0 0.0
  %717 = vmatprep.subr.mxu0 0.0
  %718 = vmatpush1.msra.mxu0 0.0
  %719 = vmatprep.subr.mxu0 0.0
  %720 = vmatpush1.msra.mxu0 0.0
  %721 = vmatprep.subr.mxu0 0.0
  %722 = vmatpush1.msra.mxu0 0.0
  %723 = vmatprep.subr.mxu0 0.0
  %724 = vmatpush1.msra.mxu0 0.0
  %725 = vmatprep.subr.mxu0 0.0
  %726 = vmatpush1.msra.mxu0 0.0
  %727 = vmatprep.subr.mxu0 0.0
  %728 = vmatpush1.msra.mxu0 0.0
  %729 = vmatprep.subr.mxu0 0.0
  %730 = vmatpush1.msra.mxu0 0.0
  %731 = vmatprep.subr.mxu0 0.0
  %732 = vmatpush1.msra.mxu0 0.0
  %733 = vmatprep.subr.mxu0 0.0
  %734 = vmatpush1.msra.mxu0 0.0
  %735 = vmatprep.subr.mxu0 0.0
  %736 = vmatpush1.msra.mxu0 0.0
  %737 = vmatprep.subr.mxu0 0.0
  %738 = vmatpush1.msra.mxu0 0.0
  %739 = vmatprep.subr.mxu0 0.0
  %740 = vmatpush1.msra.mxu0 0.0
  %741 = vmatprep.subr.mxu0 0.0
  %742 = vmatpush1.msra.mxu0 0.0
  %743 = vmatprep.subr.mxu0 0.0
  %744 = vmatpush1.msra.mxu0 0.0
  %745 = vmatprep.subr.mxu0 0.0
  %746 = vmatpush1.msra.mxu0 0.0
  %747 = vmatprep.subr.mxu0 0.0
  %748 = vmatpush1.msra.mxu0 0.0
  %749 = vmatprep.subr.mxu0 0.0
  %750 = vmatpush1.msra.mxu0 0.0
  %751 = vmatprep.subr.mxu0 0.0
  %752 = vmatpush1.msra.mxu0 0.0
  %753 = vmatprep.subr.mxu0 0.0
  %754 = vmatpush1.msra.mxu0 0.0
  %755 = vmatprep.subr.mxu0 0.0
  %756 = vmatpush1.msra.mxu0 0.0
  %757 = vmatprep.subr.mxu0 0.0
  %758 = vmatpush1.msra.mxu0 0.0
  %759 = vmatprep.subr.mxu0 0.0
  %760 = vmatpush1.msra.mxu0 0.0
  %761 = vmatprep.subr.mxu0 0.0
  %762 = vmatpush1.msra.mxu0 0.0
  %763 = vmatprep.subr.mxu0 0.0
  %764 = vmatpush1.msra.mxu0 0.0
  %765 = vmatprep.subr.mxu0 0.0
  %766 = vmatpush1.msra.mxu0 0.0
  %767 = vmatprep.subr.mxu0 0.0
  %768 = vmatpush1.msra.mxu0 0.0
  %769 = vmatprep.subr.mxu0 0.0
  %770 = vmatpush1.msra.mxu0 0.0
  %771 = vmatprep.subr.mxu0 0.0
  %772 = vmatpush1.msra.mxu0 0.0
  %773 = vmatprep.subr.mxu0 0.0
  %774 = vmatpush1.msra.mxu0 0.0
  %775 = vmatprep.mubr.f32.mxu0 0.0
  %776 = vmatmul.mubr.f32.gmra.mrb[0].mxu0 %v167
  %v777 = vpop.f32.mrb[0].mxu0
  %v778 = vadd.f32 %v144, %v777
  %v779 = vpop.f32.mrb[0].mxu0
  %v780 = vadd.f32 %v148, %v779
  %781 = vmatprep.mubr.f32.mxu0 0.0
  %782 = vmatmul.mubr.f32.gmra.mrb[0].mxu0 %v170
  %v783 = vpop.f32.mrb[0].mxu0
  %v784 = vadd.f32 %v144, %v783
  %v785 = vpop.f32.mrb[0].mxu0
  %v786 = vadd.f32 %v148, %v785
  %787 = vdwg.mxu0
  %v788 = vmax.f32 %v239, 0.0
  %v789 = vmax.f32 %v241, 0.0
  %v790 = vmax.f32 %v316, 0.0
  %v791 = vmax.f32 %v318, 0.0
  %v792 = vmax.f32 %v393, 0.0
  %v793 = vmax.f32 %v395, 0.0
  %v794 = vmax.f32 %v470, 0.0
  %v795 = vmax.f32 %v472, 0.0
  %v796 = vmax.f32 %v547, 0.0
  %v797 = vmax.f32 %v549, 0.0
  %v798 = vmax.f32 %v624, 0.0
  %v799 = vmax.f32 %v626, 0.0
  %v800 = vmax.f32 %v701, 0.0
  %v801 = vmax.f32 %v703, 0.0
  %v802 = vmax.f32 %v778, 0.0
  %v803 = vmax.f32 %v780, 0.0
  %v804 = vmax.f32 %v245, 0.0
  %v805 = vmax.f32 %v247, 0.0
  %v806 = vmax.f32 %v322, 0.0
  %v807 = vmax.f32 %v324, 0.0
  %v808 = vmax.f32 %v399, 0.0
  %v809 = vmax.f32 %v401, 0.0
  %v810 = vmax.f32 %v476, 0.0
  %v811 = vmax.f32 %v478, 0.0
  %v812 = vmax.f32 %v553, 0.0
  %v813 = vmax.f32 %v555, 0.0
  %v814 = vmax.f32 %v630, 0.0
  %v815 = vmax.f32 %v632, 0.0
  %v816 = vmax.f32 %v707, 0.0
  %v817 = vmax.f32 %v709, 0.0
  %v818 = vmax.f32 %v784, 0.0
  %v819 = vmax.f32 %v786, 0.0
  %v820 = vld [vmem:[%s3] sm:$0xff]
  %v821 = vld [vmem:[%s3 + $0x8] sm:$0xff]
  %v822 = vld [vmem:[%s3 + $0x10] sm:$0xff]
  %v823 = vld [vmem:[%s3 + $0x18] sm:$0xff]
  %v824 = vld [vmem:[%s3 + $0x20] sm:$0xff]
  %v825 = vld [vmem:[%s3 + $0x28] sm:$0xff]
  %v826 = vld [vmem:[%s3 + $0x30] sm:$0xff]
  %v827 = vld [vmem:[%s3 + $0x38] sm:$0xff]
  %v828 = vld [vmem:[%s3 + $0x40] sm:$0xff]
  %v829 = vld [vmem:[%s3 + $0x48] sm:$0xff]
  %v830 = vld [vmem:[%s3 + $0x50] sm:$0xff]
  %v831 = vld [vmem:[%s3 + $0x58] sm:$0xff]
  %v832 = vld [vmem:[%s3 + $0x60] sm:$0xff]
  %v833 = vld [vmem:[%s3 + $0x68] sm:$0xff]
  %v834 = vld [vmem:[%s3 + $0x70] sm:$0xff]
  %v835 = vld [vmem:[%s3 + $0x78] sm:$0xff]
  %v836 = vld [vmem:[%s3 + $0x80] sm:$0xff]
  %v837 = vld [vmem:[%s3 + $0x88] sm:$0xff]
  %v838 = vld [vmem:[%s3 + $0x90] sm:$0xff]
  %v839 = vld [vmem:[%s3 + $0x98] sm:$0xff]
  %v840 = vld [vmem:[%s3 + $0xa0] sm:$0xff]
  %v841 = vld [vmem:[%s3 + $0xa8] sm:$0xff]
  %v842 = vld [vmem:[%s3 + $0xb0] sm:$0xff]
  %v843 = vld [vmem:[%s3 + $0xb8] sm:$0xff]
  %v844 = vld [vmem:[%s3 + $0xc0] sm:$0xff]
  %v845 = vld [vmem:[%s3 + $0xc8] sm:$0xff]
  %v846 = vld [vmem:[%s3 + $0xd0] sm:$0xff]
  %v847 = vld [vmem:[%s3 + $0xd8] sm:$0xff]
  %v848 = vld [vmem:[%s3 + $0xe0] sm:$0xff]
  %v849 = vld [vmem:[%s3 + $0xe8] sm:$0xff]
  %v850 = vld [vmem:[%s3 + $0xf0] sm:$0xff]
  %v851 = vld [vmem:[%s3 + $0xf8] sm:$0xff]
  %v852 = vld [vmem:[%s3 + $0x100] sm:$0xff]
  %v853 = vld [vmem:[%s3 + $0x108] sm:$0xff]
  %v854 = vld [vmem:[%s3 + $0x110] sm:$0xff]
  %v855 = vld [vmem:[%s3 + $0x118] sm:$0xff]
  %v856 = vld [vmem:[%s3 + $0x120] sm:$0xff]
  %v857 = vld [vmem:[%s3 + $0x128] sm:$0xff]
  %v858 = vld [vmem:[%s3 + $0x130] sm:$0xff]
  %v859 = vld [vmem:[%s3 + $0x138] sm:$0xff]
  %v860 = vld [vmem:[%s3 + $0x140] sm:$0xff]
  %v861 = vld [vmem:[%s3 + $0x148] sm:$0xff]
  %v862 = vld [vmem:[%s3 + $0x150] sm:$0xff]
  %v863 = vld [vmem:[%s3 + $0x158] sm:$0xff]
  %v864 = vld [vmem:[%s3 + $0x160] sm:$0xff]
  %v865 = vld [vmem:[%s3 + $0x168] sm:$0xff]
  %v866 = vld [vmem:[%s3 + $0x170] sm:$0xff]
  %v867 = vld [vmem:[%s3 + $0x178] sm:$0xff]
  %v868 = vld [vmem:[%s3 + $0x180] sm:$0xff]
  %v869 = vld [vmem:[%s3 + $0x188] sm:$0xff]
  %v870 = vld [vmem:[%s3 + $0x190] sm:$0xff]
  %v871 = vld [vmem:[%s3 + $0x198] sm:$0xff]
  %v872 = vld [vmem:[%s3 + $0x1a0] sm:$0xff]
  %v873 = vld [vmem:[%s3 + $0x1a8] sm:$0xff]
  %v874 = vld [vmem:[%s3 + $0x1b0] sm:$0xff]
  %v875 = vld [vmem:[%s3 + $0x1b8] sm:$0xff]
  %v876 = vld [vmem:[%s3 + $0x1c0] sm:$0xff]
  %v877 = vld [vmem:[%s3 + $0x1c8] sm:$0xff]
  %v878 = vld [vmem:[%s3 + $0x1d0] sm:$0xff]
  %v879 = vld [vmem:[%s3 + $0x1d8] sm:$0xff]
  %v880 = vld [vmem:[%s3 + $0x1e0] sm:$0xff]
  %v881 = vld [vmem:[%s3 + $0x1e8] sm:$0xff]
  %v882 = vld [vmem:[%s3 + $0x1f0] sm:$0xff]
  %v883 = vld [vmem:[%s3 + $0x1f8] sm:$0xff]
  %v884 = vld [vmem:[%s3 + $0x200] sm:$0xff]
  %v885 = vld [vmem:[%s3 + $0x208] sm:$0xff]
  %v886 = vld [vmem:[%s3 + $0x210] sm:$0xff]
  %v887 = vld [vmem:[%s3 + $0x218] sm:$0xff]
  %v888 = vld [vmem:[%s3 + $0x220] sm:$0xff]
  %v889 = vld [vmem:[%s3 + $0x228] sm:$0xff]
  %v890 = vld [vmem:[%s3 + $0x230] sm:$0xff]
  %v891 = vld [vmem:[%s3 + $0x238] sm:$0xff]
  %v892 = vld [vmem:[%s3 + $0x240] sm:$0xff]
  %v893 = vld [vmem:[%s3 + $0x248] sm:$0xff]
  %v894 = vld [vmem:[%s3 + $0x250] sm:$0xff]
  %v895 = vld [vmem:[%s3 + $0x258] sm:$0xff]
  %v896 = vld [vmem:[%s3 + $0x260] sm:$0xff]
  %v897 = vld [vmem:[%s3 + $0x268] sm:$0xff]
  %v898 = vld [vmem:[%s3 + $0x270] sm:$0xff]
  %v899 = vld [vmem:[%s3 + $0x278] sm:$0xff]
  %v900 = vld [vmem:[%s3 + $0x280] sm:$0xff]
  %v901 = vld [vmem:[%s3 + $0x288] sm:$0xff]
  %v902 = vld [vmem:[%s3 + $0x290] sm:$0xff]
  %v903 = vld [vmem:[%s3 + $0x298] sm:$0xff]
  %v904 = vld [vmem:[%s3 + $0x2a0] sm:$0xff]
  %v905 = vld [vmem:[%s3 + $0x2a8] sm:$0xff]
  %v906 = vld [vmem:[%s3 + $0x2b0] sm:$0xff]
  %v907 = vld [vmem:[%s3 + $0x2b8] sm:$0xff]
  %v908 = vld [vmem:[%s3 + $0x2c0] sm:$0xff]
  %v909 = vld [vmem:[%s3 + $0x2c8] sm:$0xff]
  %v910 = vld [vmem:[%s3 + $0x2d0] sm:$0xff]
  %v911 = vld [vmem:[%s3 + $0x2d8] sm:$0xff]
  %v912 = vld [vmem:[%s3 + $0x2e0] sm:$0xff]
  %v913 = vld [vmem:[%s3 + $0x2e8] sm:$0xff]
  %v914 = vld [vmem:[%s3 + $0x2f0] sm:$0xff]
  %v915 = vld [vmem:[%s3 + $0x2f8] sm:$0xff]
  %v916 = vld [vmem:[%s3 + $0x300] sm:$0xff]
  %v917 = vld [vmem:[%s3 + $0x308] sm:$0xff]
  %v918 = vld [vmem:[%s3 + $0x310] sm:$0xff]
  %v919 = vld [vmem:[%s3 + $0x318] sm:$0xff]
  %v920 = vld [vmem:[%s3 + $0x320] sm:$0xff]
  %v921 = vld [vmem:[%s3 + $0x328] sm:$0xff]
  %v922 = vld [vmem:[%s3 + $0x330] sm:$0xff]
  %v923 = vld [vmem:[%s3 + $0x338] sm:$0xff]
  %v924 = vld [vmem:[%s3 + $0x340] sm:$0xff]
  %v925 = vld [vmem:[%s3 + $0x348] sm:$0xff]
  %v926 = vld [vmem:[%s3 + $0x350] sm:$0xff]
  %v927 = vld [vmem:[%s3 + $0x358] sm:$0xff]
  %v928 = vld [vmem:[%s3 + $0x360] sm:$0xff]
  %v929 = vld [vmem:[%s3 + $0x368] sm:$0xff]
  %v930 = vld [vmem:[%s3 + $0x370] sm:$0xff]
  %v931 = vld [vmem:[%s3 + $0x378] sm:$0xff]
  %v932 = vld [vmem:[%s3 + $0x380] sm:$0xff]
  %v933 = vld [vmem:[%s3 + $0x388] sm:$0xff]
  %v934 = vld [vmem:[%s3 + $0x390] sm:$0xff]
  %v935 = vld [vmem:[%s3 + $0x398] sm:$0xff]
  %v936 = vld [vmem:[%s3 + $0x3a0] sm:$0xff]
  %v937 = vld [vmem:[%s3 + $0x3a8] sm:$0xff]
  %v938 = vld [vmem:[%s3 + $0x3b0] sm:$0xff]
  %v939 = vld [vmem:[%s3 + $0x3b8] sm:$0xff]
  %v940 = vld [vmem:[%s3 + $0x3c0] sm:$0xff]
  %v941 = vld [vmem:[%s3 + $0x3c8] sm:$0xff]
  %v942 = vld [vmem:[%s3 + $0x3d0] sm:$0xff]
  %v943 = vld [vmem:[%s3 + $0x3d8] sm:$0xff]
  %v944 = vld [vmem:[%s3 + $0x3e0] sm:$0xff]
  %v945 = vld [vmem:[%s3 + $0x3e8] sm:$0xff]
  %v946 = vld [vmem:[%s3 + $0x3f0] sm:$0xff]
  %v947 = vld [vmem:[%s3 + $0x3f8] sm:$0xff]
  %v948 = vld [vmem:[%s3 + $0x400] sm:$0xff]
  %v949 = vld [vmem:[%s3 + $0x408] sm:$0xff]
  %v950 = vld [vmem:[%s3 + $0x410] sm:$0xff]
  %v951 = vld [vmem:[%s3 + $0x418] sm:$0xff]
  %v952 = vld [vmem:[%s3 + $0x420] sm:$0xff]
  %v953 = vld [vmem:[%s3 + $0x428] sm:$0xff]
  %v954 = vld [vmem:[%s3 + $0x430] sm:$0xff]
  %v955 = vld [vmem:[%s3 + $0x438] sm:$0xff]
  %v956 = vld [vmem:[%s3 + $0x440] sm:$0xff]
  %v957 = vld [vmem:[%s3 + $0x448] sm:$0xff]
  %v958 = vld [vmem:[%s3 + $0x450] sm:$0xff]
  %v959 = vld [vmem:[%s3 + $0x458] sm:$0xff]
  %v960 = vld [vmem:[%s3 + $0x460] sm:$0xff]
  %v961 = vld [vmem:[%s3 + $0x468] sm:$0xff]
  %v962 = vld [vmem:[%s3 + $0x470] sm:$0xff]
  %v963 = vld [vmem:[%s3 + $0x478] sm:$0xff]
  %v964 = vld [vmem:[%s3 + $0x480] sm:$0xff]
  %v965 = vld [vmem:[%s3 + $0x488] sm:$0xff]
  %v966 = vld [vmem:[%s3 + $0x490] sm:$0xff]
  %v967 = vld [vmem:[%s3 + $0x498] sm:$0xff]
  %v968 = vld [vmem:[%s3 + $0x4a0] sm:$0xff]
  %v969 = vld [vmem:[%s3 + $0x4a8] sm:$0xff]
  %v970 = vld [vmem:[%s3 + $0x4b0] sm:$0xff]
  %v971 = vld [vmem:[%s3 + $0x4b8] sm:$0xff]
  %v972 = vld [vmem:[%s3 + $0x4c0] sm:$0xff]
  %v973 = vld [vmem:[%s3 + $0x4c8] sm:$0xff]
  %v974 = vld [vmem:[%s3 + $0x4d0] sm:$0xff]
  %v975 = vld [vmem:[%s3 + $0x4d8] sm:$0xff]
  %v976 = vld [vmem:[%s3 + $0x4e0] sm:$0xff]
  %v977 = vld [vmem:[%s3 + $0x4e8] sm:$0xff]
  %v978 = vld [vmem:[%s3 + $0x4f0] sm:$0xff]
  %v979 = vld [vmem:[%s3 + $0x4f8] sm:$0xff]
  %v980 = vld [vmem:[%s3 + $0x500] sm:$0xff]
  %v981 = vld [vmem:[%s3 + $0x508] sm:$0xff]
  %v982 = vld [vmem:[%s3 + $0x510] sm:$0xff]
  %v983 = vld [vmem:[%s3 + $0x518] sm:$0xff]
  %v984 = vld [vmem:[%s3 + $0x520] sm:$0xff]
  %v985 = vld [vmem:[%s3 + $0x528] sm:$0xff]
  %v986 = vld [vmem:[%s3 + $0x530] sm:$0xff]
  %v987 = vld [vmem:[%s3 + $0x538] sm:$0xff]
  %v988 = vld [vmem:[%s3 + $0x540] sm:$0xff]
  %v989 = vld [vmem:[%s3 + $0x548] sm:$0xff]
  %v990 = vld [vmem:[%s3 + $0x550] sm:$0xff]
  %v991 = vld [vmem:[%s3 + $0x558] sm:$0xff]
  %v992 = vld [vmem:[%s3 + $0x560] sm:$0xff]
  %v993 = vld [vmem:[%s3 + $0x568] sm:$0xff]
  %v994 = vld [vmem:[%s3 + $0x570] sm:$0xff]
  %v995 = vld [vmem:[%s3 + $0x578] sm:$0xff]
  %v996 = vld [vmem:[%s3 + $0x580] sm:$0xff]
  %v997 = vld [vmem:[%s3 + $0x588] sm:$0xff]
  %v998 = vld [vmem:[%s3 + $0x590] sm:$0xff]
  %v999 = vld [vmem:[%s3 + $0x598] sm:$0xff]
  %v1000 = vld [vmem:[%s3 + $0x5a0] sm:$0xff]
  %v1001 = vld [vmem:[%s3 + $0x5a8] sm:$0xff]
  %v1002 = vld [vmem:[%s3 + $0x5b0] sm:$0xff]
  %v1003 = vld [vmem:[%s3 + $0x5b8] sm:$0xff]
  %v1004 = vld [vmem:[%s3 + $0x5c0] sm:$0xff]
  %v1005 = vld [vmem:[%s3 + $0x5c8] sm:$0xff]
  %v1006 = vld [vmem:[%s3 + $0x5d0] sm:$0xff]
  %v1007 = vld [vmem:[%s3 + $0x5d8] sm:$0xff]
  %v1008 = vld [vmem:[%s3 + $0x5e0] sm:$0xff]
  %v1009 = vld [vmem:[%s3 + $0x5e8] sm:$0xff]
  %v1010 = vld [vmem:[%s3 + $0x5f0] sm:$0xff]
  %v1011 = vld [vmem:[%s3 + $0x5f8] sm:$0xff]
  %v1012 = vld [vmem:[%s3 + $0x600] sm:$0xff]
  %v1013 = vld [vmem:[%s3 + $0x608] sm:$0xff]
  %v1014 = vld [vmem:[%s3 + $0x610] sm:$0xff]
  %v1015 = vld [vmem:[%s3 + $0x618] sm:$0xff]
  %v1016 = vld [vmem:[%s3 + $0x620] sm:$0xff]
  %v1017 = vld [vmem:[%s3 + $0x628] sm:$0xff]
  %v1018 = vld [vmem:[%s3 + $0x630] sm:$0xff]
  %v1019 = vld [vmem:[%s3 + $0x638] sm:$0xff]
  %v1020 = vld [vmem:[%s3 + $0x640] sm:$0xff]
  %v1021 = vld [vmem:[%s3 + $0x648] sm:$0xff]
  %v1022 = vld [vmem:[%s3 + $0x650] sm:$0xff]
  %v1023 = vld [vmem:[%s3 + $0x658] sm:$0xff]
  %v1024 = vld [vmem:[%s3 + $0x660] sm:$0xff]
  %v1025 = vld [vmem:[%s3 + $0x668] sm:$0xff]
  %v1026 = vld [vmem:[%s3 + $0x670] sm:$0xff]
  %v1027 = vld [vmem:[%s3 + $0x678] sm:$0xff]
  %v1028 = vld [vmem:[%s3 + $0x680] sm:$0xff]
  %v1029 = vld [vmem:[%s3 + $0x688] sm:$0xff]
  %v1030 = vld [vmem:[%s3 + $0x690] sm:$0xff]
  %v1031 = vld [vmem:[%s3 + $0x698] sm:$0xff]
  %v1032 = vld [vmem:[%s3 + $0x6a0] sm:$0xff]
  %v1033 = vld [vmem:[%s3 + $0x6a8] sm:$0xff]
  %v1034 = vld [vmem:[%s3 + $0x6b0] sm:$0xff]
  %v1035 = vld [vmem:[%s3 + $0x6b8] sm:$0xff]
  %v1036 = vld [vmem:[%s3 + $0x6c0] sm:$0xff]
  %v1037 = vld [vmem:[%s3 + $0x6c8] sm:$0xff]
  %v1038 = vld [vmem:[%s3 + $0x6d0] sm:$0xff]
  %v1039 = vld [vmem:[%s3 + $0x6d8] sm:$0xff]
  %v1040 = vld [vmem:[%s3 + $0x6e0] sm:$0xff]
  %v1041 = vld [vmem:[%s3 + $0x6e8] sm:$0xff]
  %v1042 = vld [vmem:[%s3 + $0x6f0] sm:$0xff]
  %v1043 = vld [vmem:[%s3 + $0x6f8] sm:$0xff]
  %v1044 = vld [vmem:[%s3 + $0x700] sm:$0xff]
  %v1045 = vld [vmem:[%s3 + $0x708] sm:$0xff]
  %v1046 = vld [vmem:[%s3 + $0x710] sm:$0xff]
  %v1047 = vld [vmem:[%s3 + $0x718] sm:$0xff]
  %v1048 = vld [vmem:[%s3 + $0x720] sm:$0xff]
  %v1049 = vld [vmem:[%s3 + $0x728] sm:$0xff]
  %v1050 = vld [vmem:[%s3 + $0x730] sm:$0xff]
  %v1051 = vld [vmem:[%s3 + $0x738] sm:$0xff]
  %v1052 = vld [vmem:[%s3 + $0x740] sm:$0xff]
  %v1053 = vld [vmem:[%s3 + $0x748] sm:$0xff]
  %v1054 = vld [vmem:[%s3 + $0x750] sm:$0xff]
  %v1055 = vld [vmem:[%s3 + $0x758] sm:$0xff]
  %v1056 = vld [vmem:[%s3 + $0x760] sm:$0xff]
  %v1057 = vld [vmem:[%s3 + $0x768] sm:$0xff]
  %v1058 = vld [vmem:[%s3 + $0x770] sm:$0xff]
  %v1059 = vld [vmem:[%s3 + $0x778] sm:$0xff]
  %v1060 = vld [vmem:[%s3 + $0x780] sm:$0xff]
  %v1061 = vld [vmem:[%s3 + $0x788] sm:$0xff]
  %v1062 = vld [vmem:[%s3 + $0x790] sm:$0xff]
  %v1063 = vld [vmem:[%s3 + $0x798] sm:$0xff]
  %v1064 = vld [vmem:[%s3 + $0x7a0] sm:$0xff]
  %v1065 = vld [vmem:[%s3 + $0x7a8] sm:$0xff]
  %v1066 = vld [vmem:[%s3 + $0x7b0] sm:$0xff]
  %v1067 = vld [vmem:[%s3 + $0x7b8] sm:$0xff]
  %v1068 = vld [vmem:[%s3 + $0x7c0] sm:$0xff]
  %v1069 = vld [vmem:[%s3 + $0x7c8] sm:$0xff]
  %v1070 = vld [vmem:[%s3 + $0x7d0] sm:$0xff]
  %v1071 = vld [vmem:[%s3 + $0x7d8] sm:$0xff]
  %v1072 = vld [vmem:[%s3 + $0x7e0] sm:$0xff]
  %v1073 = vld [vmem:[%s3 + $0x7e8] sm:$0xff]
  %v1074 = vld [vmem:[%s3 + $0x7f0] sm:$0xff]
  %v1075 = vld [vmem:[%s3 + $0x7f8] sm:$0xff]
  %v1076 = vld [vmem:[%s4] sm:$0x1]
  %v1078 = vlaneseq
  %v1079 = vshrl.u32 %v1078, 7
  %v1080 = vsub.s32 0, %v1079
  %v1081 = vrot.slane %v1076, %v1080
  %1083 = vmatprep.subr.mxu0 0.0
  %1084 = vmatpush1.msra.mxu0 %v820
  %1085 = vmatprep.subr.mxu0 0.0
  %1086 = vmatpush1.msra.mxu0 %v821
  %1087 = vmatprep.subr.mxu0 0.0
  %1088 = vmatpush1.msra.mxu0 %v822
  %1089 = vmatprep.subr.mxu0 0.0
  %1090 = vmatpush1.msra.mxu0 %v823
  %1091 = vmatprep.subr.mxu0 0.0
  %1092 = vmatpush1.msra.mxu0 %v824
  %1093 = vmatprep.subr.mxu0 0.0
  %1094 = vmatpush1.msra.mxu0 %v825
  %1095 = vmatprep.subr.mxu0 0.0
  %1096 = vmatpush1.msra.mxu0 %v826
  %1097 = vmatprep.subr.mxu0 0.0
  %1098 = vmatpush1.msra.mxu0 %v827
  %1099 = vmatprep.subr.mxu0 0.0
  %1100 = vmatpush1.msra.mxu0 %v828
  %1101 = vmatprep.subr.mxu0 0.0
  %1102 = vmatpush1.msra.mxu0 %v829
  %1103 = vmatprep.subr.mxu0 0.0
  %1104 = vmatpush1.msra.mxu0 %v830
  %1105 = vmatprep.subr.mxu0 0.0
  %1106 = vmatpush1.msra.mxu0 %v831
  %1107 = vmatprep.subr.mxu0 0.0
  %1108 = vmatpush1.msra.mxu0 %v832
  %1109 = vmatprep.subr.mxu0 0.0
  %1110 = vmatpush1.msra.mxu0 %v833
  %1111 = vmatprep.subr.mxu0 0.0
  %1112 = vmatpush1.msra.mxu0 %v834
  %1113 = vmatprep.subr.mxu0 0.0
  %1114 = vmatpush1.msra.mxu0 %v835
  %1115 = vmatprep.subr.mxu0 0.0
  %1116 = vmatpush1.msra.mxu0 %v836
  %1117 = vmatprep.subr.mxu0 0.0
  %1118 = vmatpush1.msra.mxu0 %v837
  %1119 = vmatprep.subr.mxu0 0.0
  %1120 = vmatpush1.msra.mxu0 %v838
  %1121 = vmatprep.subr.mxu0 0.0
  %1122 = vmatpush1.msra.mxu0 %v839
  %1123 = vmatprep.subr.mxu0 0.0
  %1124 = vmatpush1.msra.mxu0 %v840
  %1125 = vmatprep.subr.mxu0 0.0
  %1126 = vmatpush1.msra.mxu0 %v841
  %1127 = vmatprep.subr.mxu0 0.0
  %1128 = vmatpush1.msra.mxu0 %v842
  %1129 = vmatprep.subr.mxu0 0.0
  %1130 = vmatpush1.msra.mxu0 %v843
  %1131 = vmatprep.subr.mxu0 0.0
  %1132 = vmatpush1.msra.mxu0 %v844
  %1133 = vmatprep.subr.mxu0 0.0
  %1134 = vmatpush1.msra.mxu0 %v845
  %1135 = vmatprep.subr.mxu0 0.0
  %1136 = vmatpush1.msra.mxu0 %v846
  %1137 = vmatprep.subr.mxu0 0.0
  %1138 = vmatpush1.msra.mxu0 %v847
  %1139 = vmatprep.subr.mxu0 0.0
  %1140 = vmatpush1.msra.mxu0 %v848
  %1141 = vmatprep.subr.mxu0 0.0
  %1142 = vmatpush1.msra.mxu0 %v849
  %1143 = vmatprep.subr.mxu0 0.0
  %1144 = vmatpush1.msra.mxu0 %v850
  %1145 = vmatprep.subr.mxu0 0.0
  %1146 = vmatpush1.msra.mxu0 %v851
  %1147 = vmatprep.mubr.f32.mxu0 %v789
  %1148 = vmatmul.mubr.f32.gmra.mrb[0].mxu0 %v788
  %v1149 = vpop.f32.mrb[0].mxu0
  %v1150 = vadd.f32 %v1081, %v1149
  %v1151 = vpop.f32.mrb[0].mxu0
  %1152 = vmatprep.mubr.f32.mxu0 %v805
  %1153 = vmatmul.mubr.f32.gmra.mrb[0].mxu0 %v804
  %v1154 = vpop.f32.mrb[0].mxu0
  %v1155 = vadd.f32 %v1081, %v1154
  %v1156 = vpop.f32.mrb[0].mxu0
  %1157 = vdwg.mxu0
  %1158 = vmatprep.subr.mxu0 0.0
  %1159 = vmatpush1.msra.mxu0 %v852
  %1160 = vmatprep.subr.mxu0 0.0
  %1161 = vmatpush1.msra.mxu0 %v853
  %1162 = vmatprep.subr.mxu0 0.0
  %1163 = vmatpush1.msra.mxu0 %v854
  %1164 = vmatprep.subr.mxu0 0.0
  %1165 = vmatpush1.msra.mxu0 %v855
  %1166 = vmatprep.subr.mxu0 0.0
  %1167 = vmatpush1.msra.mxu0 %v856
  %1168 = vmatprep.subr.mxu0 0.0
  %1169 = vmatpush1.msra.mxu0 %v857
  %1170 = vmatprep.subr.mxu0 0.0
  %1171 = vmatpush1.msra.mxu0 %v858
  %1172 = vmatprep.subr.mxu0 0.0
  %1173 = vmatpush1.msra.mxu0 %v859
  %1174 = vmatprep.subr.mxu0 0.0
  %1175 = vmatpush1.msra.mxu0 %v860
  %1176 = vmatprep.subr.mxu0 0.0
  %1177 = vmatpush1.msra.mxu0 %v861
  %1178 = vmatprep.subr.mxu0 0.0
  %1179 = vmatpush1.msra.mxu0 %v862
  %1180 = vmatprep.subr.mxu0 0.0
  %1181 = vmatpush1.msra.mxu0 %v863
  %1182 = vmatprep.subr.mxu0 0.0
  %1183 = vmatpush1.msra.mxu0 %v864
  %1184 = vmatprep.subr.mxu0 0.0
  %1185 = vmatpush1.msra.mxu0 %v865
  %1186 = vmatprep.subr.mxu0 0.0
  %1187 = vmatpush1.msra.mxu0 %v866
  %1188 = vmatprep.subr.mxu0 0.0
  %1189 = vmatpush1.msra.mxu0 %v867
  %1190 = vmatprep.subr.mxu0 0.0
  %1191 = vmatpush1.msra.mxu0 %v868
  %1192 = vmatprep.subr.mxu0 0.0
  %1193 = vmatpush1.msra.mxu0 %v869
  %1194 = vmatprep.subr.mxu0 0.0
  %1195 = vmatpush1.msra.mxu0 %v870
  %1196 = vmatprep.subr.mxu0 0.0
  %1197 = vmatpush1.msra.mxu0 %v871
  %1198 = vmatprep.subr.mxu0 0.0
  %1199 = vmatpush1.msra.mxu0 %v872
  %1200 = vmatprep.subr.mxu0 0.0
  %1201 = vmatpush1.msra.mxu0 %v873
  %1202 = vmatprep.subr.mxu0 0.0
  %1203 = vmatpush1.msra.mxu0 %v874
  %1204 = vmatprep.subr.mxu0 0.0
  %1205 = vmatpush1.msra.mxu0 %v875
  %1206 = vmatprep.subr.mxu0 0.0
  %1207 = vmatpush1.msra.mxu0 %v876
  %1208 = vmatprep.subr.mxu0 0.0
  %1209 = vmatpush1.msra.mxu0 %v877
  %1210 = vmatprep.subr.mxu0 0.0
  %1211 = vmatpush1.msra.mxu0 %v878
  %1212 = vmatprep.subr.mxu0 0.0
  %1213 = vmatpush1.msra.mxu0 %v879
  %1214 = vmatprep.subr.mxu0 0.0
  %1215 = vmatpush1.msra.mxu0 %v880
  %1216 = vmatprep.subr.mxu0 0.0
  %1217 = vmatpush1.msra.mxu0 %v881
  %1218 = vmatprep.subr.mxu0 0.0
  %1219 = vmatpush1.msra.mxu0 %v882
  %1220 = vmatprep.subr.mxu0 0.0
  %1221 = vmatpush1.msra.mxu0 %v883
  %1222 = vmatprep.mubr.f32.mxu0 %v791
  %1223 = vmatmul.mubr.f32.gmra.mrb[0].mxu0 %v790
  %v1224 = vpop.f32.mrb[0].mxu0
  %v1225 = vadd.f32 %v1150, %v1224
  %v1226 = vpop.f32.mrb[0].mxu0
  %1227 = vmatprep.mubr.f32.mxu0 %v807
  %1228 = vmatmul.mubr.f32.gmra.mrb[0].mxu0 %v806
  %v1229 = vpop.f32.mrb[0].mxu0
  %v1230 = vadd.f32 %v1155, %v1229
  %v1231 = vpop.f32.mrb[0].mxu0
  %1232 = vdwg.mxu0
  %1233 = vmatprep.subr.mxu0 0.0
  %1234 = vmatpush1.msra.mxu0 %v884
  %1235 = vmatprep.subr.mxu0 0.0
  %1236 = vmatpush1.msra.mxu0 %v885
  %1237 = vmatprep.subr.mxu0 0.0
  %1238 = vmatpush1.msra.mxu0 %v886
  %1239 = vmatprep.subr.mxu0 0.0
  %1240 = vmatpush1.msra.mxu0 %v887
  %1241 = vmatprep.subr.mxu0 0.0
  %1242 = vmatpush1.msra.mxu0 %v888
  %1243 = vmatprep.subr.mxu0 0.0
  %1244 = vmatpush1.msra.mxu0 %v889
  %1245 = vmatprep.subr.mxu0 0.0
  %1246 = vmatpush1.msra.mxu0 %v890
  %1247 = vmatprep.subr.mxu0 0.0
  %1248 = vmatpush1.msra.mxu0 %v891
  %1249 = vmatprep.subr.mxu0 0.0
  %1250 = vmatpush1.msra.mxu0 %v892
  %1251 = vmatprep.subr.mxu0 0.0
  %1252 = vmatpush1.msra.mxu0 %v893
  %1253 = vmatprep.subr.mxu0 0.0
  %1254 = vmatpush1.msra.mxu0 %v894
  %1255 = vmatprep.subr.mxu0 0.0
  %1256 = vmatpush1.msra.mxu0 %v895
  %1257 = vmatprep.subr.mxu0 0.0
  %1258 = vmatpush1.msra.mxu0 %v896
  %1259 = vmatprep.subr.mxu0 0.0
  %1260 = vmatpush1.msra.mxu0 %v897
  %1261 = vmatprep.subr.mxu0 0.0
  %1262 = vmatpush1.msra.mxu0 %v898
  %1263 = vmatprep.subr.mxu0 0.0
  %1264 = vmatpush1.msra.mxu0 %v899
  %1265 = vmatprep.subr.mxu0 0.0
  %1266 = vmatpush1.msra.mxu0 %v900
  %1267 = vmatprep.subr.mxu0 0.0
  %1268 = vmatpush1.msra.mxu0 %v901
  %1269 = vmatprep.subr.mxu0 0.0
  %1270 = vmatpush1.msra.mxu0 %v902
  %1271 = vmatprep.subr.mxu0 0.0
  %1272 = vmatpush1.msra.mxu0 %v903
  %1273 = vmatprep.subr.mxu0 0.0
  %1274 = vmatpush1.msra.mxu0 %v904
  %1275 = vmatprep.subr.mxu0 0.0
  %1276 = vmatpush1.msra.mxu0 %v905
  %1277 = vmatprep.subr.mxu0 0.0
  %1278 = vmatpush1.msra.mxu0 %v906
  %1279 = vmatprep.subr.mxu0 0.0
  %1280 = vmatpush1.msra.mxu0 %v907
  %1281 = vmatprep.subr.mxu0 0.0
  %1282 = vmatpush1.msra.mxu0 %v908
  %1283 = vmatprep.subr.mxu0 0.0
  %1284 = vmatpush1.msra.mxu0 %v909
  %1285 = vmatprep.subr.mxu0 0.0
  %1286 = vmatpush1.msra.mxu0 %v910
  %1287 = vmatprep.subr.mxu0 0.0
  %1288 = vmatpush1.msra.mxu0 %v911
  %1289 = vmatprep.subr.mxu0 0.0
  %1290 = vmatpush1.msra.mxu0 %v912
  %1291 = vmatprep.subr.mxu0 0.0
  %1292 = vmatpush1.msra.mxu0 %v913
  %1293 = vmatprep.subr.mxu0 0.0
  %1294 = vmatpush1.msra.mxu0 %v914
  %1295 = vmatprep.subr.mxu0 0.0
  %1296 = vmatpush1.msra.mxu0 %v915
  %1297 = vmatprep.mubr.f32.mxu0 %v793
  %1298 = vmatmul.mubr.f32.gmra.mrb[0].mxu0 %v792
  %v1299 = vpop.f32.mrb[0].mxu0
  %v1300 = vadd.f32 %v1225, %v1299
  %v1301 = vpop.f32.mrb[0].mxu0
  %1302 = vmatprep.mubr.f32.mxu0 %v809
  %1303 = vmatmul.mubr.f32.gmra.mrb[0].mxu0 %v808
  %v1304 = vpop.f32.mrb[0].mxu0
  %v1305 = vadd.f32 %v1230, %v1304
  %v1306 = vpop.f32.mrb[0].mxu0
  %1307 = vdwg.mxu0
  %1308 = vmatprep.subr.mxu0 0.0
  %1309 = vmatpush1.msra.mxu0 %v916
  %1310 = vmatprep.subr.mxu0 0.0
  %1311 = vmatpush1.msra.mxu0 %v917
  %1312 = vmatprep.subr.mxu0 0.0
  %1313 = vmatpush1.msra.mxu0 %v918
  %1314 = vmatprep.subr.mxu0 0.0
  %1315 = vmatpush1.msra.mxu0 %v919
  %1316 = vmatprep.subr.mxu0 0.0
  %1317 = vmatpush1.msra.mxu0 %v920
  %1318 = vmatprep.subr.mxu0 0.0
  %1319 = vmatpush1.msra.mxu0 %v921
  %1320 = vmatprep.subr.mxu0 0.0
  %1321 = vmatpush1.msra.mxu0 %v922
  %1322 = vmatprep.subr.mxu0 0.0
  %1323 = vmatpush1.msra.mxu0 %v923
  %1324 = vmatprep.subr.mxu0 0.0
  %1325 = vmatpush1.msra.mxu0 %v924
  %1326 = vmatprep.subr.mxu0 0.0
  %1327 = vmatpush1.msra.mxu0 %v925
  %1328 = vmatprep.subr.mxu0 0.0
  %1329 = vmatpush1.msra.mxu0 %v926
  %1330 = vmatprep.subr.mxu0 0.0
  %1331 = vmatpush1.msra.mxu0 %v927
  %1332 = vmatprep.subr.mxu0 0.0
  %1333 = vmatpush1.msra.mxu0 %v928
  %1334 = vmatprep.subr.mxu0 0.0
  %1335 = vmatpush1.msra.mxu0 %v929
  %1336 = vmatprep.subr.mxu0 0.0
  %1337 = vmatpush1.msra.mxu0 %v930
  %1338 = vmatprep.subr.mxu0 0.0
  %1339 = vmatpush1.msra.mxu0 %v931
  %1340 = vmatprep.subr.mxu0 0.0
  %1341 = vmatpush1.msra.mxu0 %v932
  %1342 = vmatprep.subr.mxu0 0.0
  %1343 = vmatpush1.msra.mxu0 %v933
  %1344 = vmatprep.subr.mxu0 0.0
  %1345 = vmatpush1.msra.mxu0 %v934
  %1346 = vmatprep.subr.mxu0 0.0
  %1347 = vmatpush1.msra.mxu0 %v935
  %1348 = vmatprep.subr.mxu0 0.0
  %1349 = vmatpush1.msra.mxu0 %v936
  %1350 = vmatprep.subr.mxu0 0.0
  %1351 = vmatpush1.msra.mxu0 %v937
  %1352 = vmatprep.subr.mxu0 0.0
  %1353 = vmatpush1.msra.mxu0 %v938
  %1354 = vmatprep.subr.mxu0 0.0
  %1355 = vmatpush1.msra.mxu0 %v939
  %1356 = vmatprep.subr.mxu0 0.0
  %1357 = vmatpush1.msra.mxu0 %v940
  %1358 = vmatprep.subr.mxu0 0.0
  %1359 = vmatpush1.msra.mxu0 %v941
  %1360 = vmatprep.subr.mxu0 0.0
  %1361 = vmatpush1.msra.mxu0 %v942
  %1362 = vmatprep.subr.mxu0 0.0
  %1363 = vmatpush1.msra.mxu0 %v943
  %1364 = vmatprep.subr.mxu0 0.0
  %1365 = vmatpush1.msra.mxu0 %v944
  %1366 = vmatprep.subr.mxu0 0.0
  %1367 = vmatpush1.msra.mxu0 %v945
  %1368 = vmatprep.subr.mxu0 0.0
  %1369 = vmatpush1.msra.mxu0 %v946
  %1370 = vmatprep.subr.mxu0 0.0
  %1371 = vmatpush1.msra.mxu0 %v947
  %1372 = vmatprep.mubr.f32.mxu0 %v795
  %1373 = vmatmul.mubr.f32.gmra.mrb[0].mxu0 %v794
  %v1374 = vpop.f32.mrb[0].mxu0
  %v1375 = vadd.f32 %v1300, %v1374
  %v1376 = vpop.f32.mrb[0].mxu0
  %1377 = vmatprep.mubr.f32.mxu0 %v811
  %1378 = vmatmul.mubr.f32.gmra.mrb[0].mxu0 %v810
  %v1379 = vpop.f32.mrb[0].mxu0
  %v1380 = vadd.f32 %v1305, %v1379
  %v1381 = vpop.f32.mrb[0].mxu0
  %1382 = vdwg.mxu0
  %1383 = vmatprep.subr.mxu0 0.0
  %1384 = vmatpush1.msra.mxu0 %v948
  %1385 = vmatprep.subr.mxu0 0.0
  %1386 = vmatpush1.msra.mxu0 %v949
  %1387 = vmatprep.subr.mxu0 0.0
  %1388 = vmatpush1.msra.mxu0 %v950
  %1389 = vmatprep.subr.mxu0 0.0
  %1390 = vmatpush1.msra.mxu0 %v951
  %1391 = vmatprep.subr.mxu0 0.0
  %1392 = vmatpush1.msra.mxu0 %v952
  %1393 = vmatprep.subr.mxu0 0.0
  %1394 = vmatpush1.msra.mxu0 %v953
  %1395 = vmatprep.subr.mxu0 0.0
  %1396 = vmatpush1.msra.mxu0 %v954
  %1397 = vmatprep.subr.mxu0 0.0
  %1398 = vmatpush1.msra.mxu0 %v955
  %1399 = vmatprep.subr.mxu0 0.0
  %1400 = vmatpush1.msra.mxu0 %v956
  %1401 = vmatprep.subr.mxu0 0.0
  %1402 = vmatpush1.msra.mxu0 %v957
  %1403 = vmatprep.subr.mxu0 0.0
  %1404 = vmatpush1.msra.mxu0 %v958
  %1405 = vmatprep.subr.mxu0 0.0
  %1406 = vmatpush1.msra.mxu0 %v959
  %1407 = vmatprep.subr.mxu0 0.0
  %1408 = vmatpush1.msra.mxu0 %v960
  %1409 = vmatprep.subr.mxu0 0.0
  %1410 = vmatpush1.msra.mxu0 %v961
  %1411 = vmatprep.subr.mxu0 0.0
  %1412 = vmatpush1.msra.mxu0 %v962
  %1413 = vmatprep.subr.mxu0 0.0
  %1414 = vmatpush1.msra.mxu0 %v963
  %1415 = vmatprep.subr.mxu0 0.0
  %1416 = vmatpush1.msra.mxu0 %v964
  %1417 = vmatprep.subr.mxu0 0.0
  %1418 = vmatpush1.msra.mxu0 %v965
  %1419 = vmatprep.subr.mxu0 0.0
  %1420 = vmatpush1.msra.mxu0 %v966
  %1421 = vmatprep.subr.mxu0 0.0
  %1422 = vmatpush1.msra.mxu0 %v967
  %1423 = vmatprep.subr.mxu0 0.0
  %1424 = vmatpush1.msra.mxu0 %v968
  %1425 = vmatprep.subr.mxu0 0.0
  %1426 = vmatpush1.msra.mxu0 %v969
  %1427 = vmatprep.subr.mxu0 0.0
  %1428 = vmatpush1.msra.mxu0 %v970
  %1429 = vmatprep.subr.mxu0 0.0
  %1430 = vmatpush1.msra.mxu0 %v971
  %1431 = vmatprep.subr.mxu0 0.0
  %1432 = vmatpush1.msra.mxu0 %v972
  %1433 = vmatprep.subr.mxu0 0.0
  %1434 = vmatpush1.msra.mxu0 %v973
  %1435 = vmatprep.subr.mxu0 0.0
  %1436 = vmatpush1.msra.mxu0 %v974
  %1437 = vmatprep.subr.mxu0 0.0
  %1438 = vmatpush1.msra.mxu0 %v975
  %1439 = vmatprep.subr.mxu0 0.0
  %1440 = vmatpush1.msra.mxu0 %v976
  %1441 = vmatprep.subr.mxu0 0.0
  %1442 = vmatpush1.msra.mxu0 %v977
  %1443 = vmatprep.subr.mxu0 0.0
  %1444 = vmatpush1.msra.mxu0 %v978
  %1445 = vmatprep.subr.mxu0 0.0
  %1446 = vmatpush1.msra.mxu0 %v979
  %1447 = vmatprep.mubr.f32.mxu0 %v797
  %1448 = vmatmul.mubr.f32.gmra.mrb[0].mxu0 %v796
  %v1449 = vpop.f32.mrb[0].mxu0
  %v1450 = vadd.f32 %v1375, %v1449
  %v1451 = vpop.f32.mrb[0].mxu0
  %1452 = vmatprep.mubr.f32.mxu0 %v813
  %1453 = vmatmul.mubr.f32.gmra.mrb[0].mxu0 %v812
  %v1454 = vpop.f32.mrb[0].mxu0
  %v1455 = vadd.f32 %v1380, %v1454
  %v1456 = vpop.f32.mrb[0].mxu0
  %1457 = vdwg.mxu0
  %1458 = vmatprep.subr.mxu0 0.0
  %1459 = vmatpush1.msra.mxu0 %v980
  %1460 = vmatprep.subr.mxu0 0.0
  %1461 = vmatpush1.msra.mxu0 %v981
  %1462 = vmatprep.subr.mxu0 0.0
  %1463 = vmatpush1.msra.mxu0 %v982
  %1464 = vmatprep.subr.mxu0 0.0
  %1465 = vmatpush1.msra.mxu0 %v983
  %1466 = vmatprep.subr.mxu0 0.0
  %1467 = vmatpush1.msra.mxu0 %v984
  %1468 = vmatprep.subr.mxu0 0.0
  %1469 = vmatpush1.msra.mxu0 %v985
  %1470 = vmatprep.subr.mxu0 0.0
  %1471 = vmatpush1.msra.mxu0 %v986
  %1472 = vmatprep.subr.mxu0 0.0
  %1473 = vmatpush1.msra.mxu0 %v987
  %1474 = vmatprep.subr.mxu0 0.0
  %1475 = vmatpush1.msra.mxu0 %v988
  %1476 = vmatprep.subr.mxu0 0.0
  %1477 = vmatpush1.msra.mxu0 %v989
  %1478 = vmatprep.subr.mxu0 0.0
  %1479 = vmatpush1.msra.mxu0 %v990
  %1480 = vmatprep.subr.mxu0 0.0
  %1481 = vmatpush1.msra.mxu0 %v991
  %1482 = vmatprep.subr.mxu0 0.0
  %1483 = vmatpush1.msra.mxu0 %v992
  %1484 = vmatprep.subr.mxu0 0.0
  %1485 = vmatpush1.msra.mxu0 %v993
  %1486 = vmatprep.subr.mxu0 0.0
  %1487 = vmatpush1.msra.mxu0 %v994
  %1488 = vmatprep.subr.mxu0 0.0
  %1489 = vmatpush1.msra.mxu0 %v995
  %1490 = vmatprep.subr.mxu0 0.0
  %1491 = vmatpush1.msra.mxu0 %v996
  %1492 = vmatprep.subr.mxu0 0.0
  %1493 = vmatpush1.msra.mxu0 %v997
  %1494 = vmatprep.subr.mxu0 0.0
  %1495 = vmatpush1.msra.mxu0 %v998
  %1496 = vmatprep.subr.mxu0 0.0
  %1497 = vmatpush1.msra.mxu0 %v999
  %1498 = vmatprep.subr.mxu0 0.0
  %1499 = vmatpush1.msra.mxu0 %v1000
  %1500 = vmatprep.subr.mxu0 0.0
  %1501 = vmatpush1.msra.mxu0 %v1001
  %1502 = vmatprep.subr.mxu0 0.0
  %1503 = vmatpush1.msra.mxu0 %v1002
  %1504 = vmatprep.subr.mxu0 0.0
  %1505 = vmatpush1.msra.mxu0 %v1003
  %1506 = vmatprep.subr.mxu0 0.0
  %1507 = vmatpush1.msra.mxu0 %v1004
  %1508 = vmatprep.subr.mxu0 0.0
  %1509 = vmatpush1.msra.mxu0 %v1005
  %1510 = vmatprep.subr.mxu0 0.0
  %1511 = vmatpush1.msra.mxu0 %v1006
  %1512 = vmatprep.subr.mxu0 0.0
  %1513 = vmatpush1.msra.mxu0 %v1007
  %1514 = vmatprep.subr.mxu0 0.0
  %1515 = vmatpush1.msra.mxu0 %v1008
  %1516 = vmatprep.subr.mxu0 0.0
  %1517 = vmatpush1.msra.mxu0 %v1009
  %1518 = vmatprep.subr.mxu0 0.0
  %1519 = vmatpush1.msra.mxu0 %v1010
  %1520 = vmatprep.subr.mxu0 0.0
  %1521 = vmatpush1.msra.mxu0 %v1011
  %1522 = vmatprep.mubr.f32.mxu0 %v799
  %1523 = vmatmul.mubr.f32.gmra.mrb[0].mxu0 %v798
  %v1524 = vpop.f32.mrb[0].mxu0
  %v1525 = vadd.f32 %v1450, %v1524
  %v1526 = vpop.f32.mrb[0].mxu0
  %1527 = vmatprep.mubr.f32.mxu0 %v815
  %1528 = vmatmul.mubr.f32.gmra.mrb[0].mxu0 %v814
  %v1529 = vpop.f32.mrb[0].mxu0
  %v1530 = vadd.f32 %v1455, %v1529
  %v1531 = vpop.f32.mrb[0].mxu0
  %1532 = vdwg.mxu0
  %1533 = vmatprep.subr.mxu0 0.0
  %1534 = vmatpush1.msra.mxu0 %v1012
  %1535 = vmatprep.subr.mxu0 0.0
  %1536 = vmatpush1.msra.mxu0 %v1013
  %1537 = vmatprep.subr.mxu0 0.0
  %1538 = vmatpush1.msra.mxu0 %v1014
  %1539 = vmatprep.subr.mxu0 0.0
  %1540 = vmatpush1.msra.mxu0 %v1015
  %1541 = vmatprep.subr.mxu0 0.0
  %1542 = vmatpush1.msra.mxu0 %v1016
  %1543 = vmatprep.subr.mxu0 0.0
  %1544 = vmatpush1.msra.mxu0 %v1017
  %1545 = vmatprep.subr.mxu0 0.0
  %1546 = vmatpush1.msra.mxu0 %v1018
  %1547 = vmatprep.subr.mxu0 0.0
  %1548 = vmatpush1.msra.mxu0 %v1019
  %1549 = vmatprep.subr.mxu0 0.0
  %1550 = vmatpush1.msra.mxu0 %v1020
  %1551 = vmatprep.subr.mxu0 0.0
  %1552 = vmatpush1.msra.mxu0 %v1021
  %1553 = vmatprep.subr.mxu0 0.0
  %1554 = vmatpush1.msra.mxu0 %v1022
  %1555 = vmatprep.subr.mxu0 0.0
  %1556 = vmatpush1.msra.mxu0 %v1023
  %1557 = vmatprep.subr.mxu0 0.0
  %1558 = vmatpush1.msra.mxu0 %v1024
  %1559 = vmatprep.subr.mxu0 0.0
  %1560 = vmatpush1.msra.mxu0 %v1025
  %1561 = vmatprep.subr.mxu0 0.0
  %1562 = vmatpush1.msra.mxu0 %v1026
  %1563 = vmatprep.subr.mxu0 0.0
  %1564 = vmatpush1.msra.mxu0 %v1027
  %1565 = vmatprep.subr.mxu0 0.0
  %1566 = vmatpush1.msra.mxu0 %v1028
  %1567 = vmatprep.subr.mxu0 0.0
  %1568 = vmatpush1.msra.mxu0 %v1029
  %1569 = vmatprep.subr.mxu0 0.0
  %1570 = vmatpush1.msra.mxu0 %v1030
  %1571 = vmatprep.subr.mxu0 0.0
  %1572 = vmatpush1.msra.mxu0 %v1031
  %1573 = vmatprep.subr.mxu0 0.0
  %1574 = vmatpush1.msra.mxu0 %v1032
  %1575 = vmatprep.subr.mxu0 0.0
  %1576 = vmatpush1.msra.mxu0 %v1033
  %1577 = vmatprep.subr.mxu0 0.0
  %1578 = vmatpush1.msra.mxu0 %v1034
  %1579 = vmatprep.subr.mxu0 0.0
  %1580 = vmatpush1.msra.mxu0 %v1035
  %1581 = vmatprep.subr.mxu0 0.0
  %1582 = vmatpush1.msra.mxu0 %v1036
  %1583 = vmatprep.subr.mxu0 0.0
  %1584 = vmatpush1.msra.mxu0 %v1037
  %1585 = vmatprep.subr.mxu0 0.0
  %1586 = vmatpush1.msra.mxu0 %v1038
  %1587 = vmatprep.subr.mxu0 0.0
  %1588 = vmatpush1.msra.mxu0 %v1039
  %1589 = vmatprep.subr.mxu0 0.0
  %1590 = vmatpush1.msra.mxu0 %v1040
  %1591 = vmatprep.subr.mxu0 0.0
  %1592 = vmatpush1.msra.mxu0 %v1041
  %1593 = vmatprep.subr.mxu0 0.0
  %1594 = vmatpush1.msra.mxu0 %v1042
  %1595 = vmatprep.subr.mxu0 0.0
  %1596 = vmatpush1.msra.mxu0 %v1043
  %1597 = vmatprep.mubr.f32.mxu0 %v801
  %1598 = vmatmul.mubr.f32.gmra.mrb[0].mxu0 %v800
  %v1599 = vpop.f32.mrb[0].mxu0
  %v1600 = vadd.f32 %v1525, %v1599
  %v1601 = vpop.f32.mrb[0].mxu0
  %1602 = vmatprep.mubr.f32.mxu0 %v817
  %1603 = vmatmul.mubr.f32.gmra.mrb[0].mxu0 %v816
  %v1604 = vpop.f32.mrb[0].mxu0
  %v1605 = vadd.f32 %v1530, %v1604
  %v1606 = vpop.f32.mrb[0].mxu0
  %1607 = vdwg.mxu0
  %1608 = vmatprep.subr.mxu0 0.0
  %1609 = vmatpush1.msra.mxu0 %v1044
  %1610 = vmatprep.subr.mxu0 0.0
  %1611 = vmatpush1.msra.mxu0 %v1045
  %1612 = vmatprep.subr.mxu0 0.0
  %1613 = vmatpush1.msra.mxu0 %v1046
  %1614 = vmatprep.subr.mxu0 0.0
  %1615 = vmatpush1.msra.mxu0 %v1047
  %1616 = vmatprep.subr.mxu0 0.0
  %1617 = vmatpush1.msra.mxu0 %v1048
  %1618 = vmatprep.subr.mxu0 0.0
  %1619 = vmatpush1.msra.mxu0 %v1049
  %1620 = vmatprep.subr.mxu0 0.0
  %1621 = vmatpush1.msra.mxu0 %v1050
  %1622 = vmatprep.subr.mxu0 0.0
  %1623 = vmatpush1.msra.mxu0 %v1051
  %1624 = vmatprep.subr.mxu0 0.0
  %1625 = vmatpush1.msra.mxu0 %v1052
  %1626 = vmatprep.subr.mxu0 0.0
  %1627 = vmatpush1.msra.mxu0 %v1053
  %1628 = vmatprep.subr.mxu0 0.0
  %1629 = vmatpush1.msra.mxu0 %v1054
  %1630 = vmatprep.subr.mxu0 0.0
  %1631 = vmatpush1.msra.mxu0 %v1055
  %1632 = vmatprep.subr.mxu0 0.0
  %1633 = vmatpush1.msra.mxu0 %v1056
  %1634 = vmatprep.subr.mxu0 0.0
  %1635 = vmatpush1.msra.mxu0 %v1057
  %1636 = vmatprep.subr.mxu0 0.0
  %1637 = vmatpush1.msra.mxu0 %v1058
  %1638 = vmatprep.subr.mxu0 0.0
  %1639 = vmatpush1.msra.mxu0 %v1059
  %1640 = vmatprep.subr.mxu0 0.0
  %1641 = vmatpush1.msra.mxu0 %v1060
  %1642 = vmatprep.subr.mxu0 0.0
  %1643 = vmatpush1.msra.mxu0 %v1061
  %1644 = vmatprep.subr.mxu0 0.0
  %1645 = vmatpush1.msra.mxu0 %v1062
  %1646 = vmatprep.subr.mxu0 0.0
  %1647 = vmatpush1.msra.mxu0 %v1063
  %1648 = vmatprep.subr.mxu0 0.0
  %1649 = vmatpush1.msra.mxu0 %v1064
  %1650 = vmatprep.subr.mxu0 0.0
  %1651 = vmatpush1.msra.mxu0 %v1065
  %1652 = vmatprep.subr.mxu0 0.0
  %1653 = vmatpush1.msra.mxu0 %v1066
  %1654 = vmatprep.subr.mxu0 0.0
  %1655 = vmatpush1.msra.mxu0 %v1067
  %1656 = vmatprep.subr.mxu0 0.0
  %1657 = vmatpush1.msra.mxu0 %v1068
  %1658 = vmatprep.subr.mxu0 0.0
  %1659 = vmatpush1.msra.mxu0 %v1069
  %1660 = vmatprep.subr.mxu0 0.0
  %1661 = vmatpush1.msra.mxu0 %v1070
  %1662 = vmatprep.subr.mxu0 0.0
  %1663 = vmatpush1.msra.mxu0 %v1071
  %1664 = vmatprep.subr.mxu0 0.0
  %1665 = vmatpush1.msra.mxu0 %v1072
  %1666 = vmatprep.subr.mxu0 0.0
  %1667 = vmatpush1.msra.mxu0 %v1073
  %1668 = vmatprep.subr.mxu0 0.0
  %1669 = vmatpush1.msra.mxu0 %v1074
  %1670 = vmatprep.subr.mxu0 0.0
  %1671 = vmatpush1.msra.mxu0 %v1075
  %1672 = vmatprep.mubr.f32.mxu0 %v803
  %1673 = vmatmul.mubr.f32.gmra.mrb[0].mxu0 %v802
  %v1674 = vpop.f32.mrb[0].mxu0
  %v1675 = vadd.f32 %v1600, %v1674
  %v1676 = vpop.f32.mrb[0].mxu0
  %1677 = vmatprep.mubr.f32.mxu0 %v819
  %1678 = vmatmul.mubr.f32.gmra.mrb[0].mxu0 %v818
  %v1679 = vpop.f32.mrb[0].mxu0
  %v1680 = vadd.f32 %v1605, %v1679
  %v1681 = vpop.f32.mrb[0].mxu0
  %1682 = vdwg.mxu0
  %v1683 = vld [vmem:[%s5] sm:$0xff]
  %v1684 = vld [vmem:[%s5 + $0x8] sm:$0x1]
  %v1685 = vadd.f32 %v1675, %v1683
  %vm1686 = vcmask 261120
  %1687 = vst.msk [vmem:[#allocation2] sm:$0xff] %vm1686, %v1685
  %vm1688 = vcmask 253952
  %1689 = vst.msk [vmem:[#allocation2 + $0x8] sm:$0x1] %vm1688, %v1684
  %v1690 = vadd.f32 %v1680, %v1683
  %1691 = vst.msk [vmem:[#allocation2 + $0x9] sm:$0xff] %vm1686, %v1690
  %1692 = vst.msk [vmem:[#allocation2 + $0x11] sm:$0x1] %vm1688, %v1684
  %v1693 = vld [vmem:[#allocation2] sm:$0xff]
  %v1694 = vld [vmem:[#allocation2 + $0x8] sm:$0xff]
  %v1695 = vld [vmem:[#allocation2 + $0x10] sm:$0x3]
  %v1696 = vlaneseq
  %v1697 = vshrl.u32 %v1696, 7
  %v1698 = vadd.s32 %v1697, 8
  %v1699 = vlaneseq
  %v1700 = vand.u32 %v1699, 127
  %vm1701 = vcmp.le.s32.totalorder %v1700, %v1697
  %vm1702 = vcmp.le.s32.totalorder %v1700, %v1698
  %v1703 = vsel %vm1701, 0.0, -1e+09
  %v1704 = vsel %vm1702, 0.0, -1e+09
  %v1705 = vld [vmem:[%s6] sm:$0xff]
  %v1706 = vld [vmem:[%s6 + $0x8] sm:$0xff]
  %v1707 = vld [vmem:[%s6 + $0x10] sm:$0xff]
  %v1708 = vld [vmem:[%s6 + $0x18] sm:$0xff]
  %v1709 = vld [vmem:[%s8] sm:$0xff]
  %v1710 = vld [vmem:[%s8 + $0x8] sm:$0xff]
  %v1711 = vld [vmem:[%s8 + $0x10] sm:$0xff]
  %v1712 = vld [vmem:[%s8 + $0x18] sm:$0xff]
  %v1713 = vld [vmem:[%s10] sm:$0xff]
  %v1714 = vld [vmem:[%s10 + $0x8] sm:$0xff]
  %v1715 = vld [vmem:[%s10 + $0x10] sm:$0xff]
  %v1716 = vld [vmem:[%s10 + $0x18] sm:$0xff]
  %v1717 = vld [vmem:[%s11] sm:$0xff]
  %v1718 = vld [vmem:[%s11 + $0x8] sm:$0xff]
  %v1719 = vld [vmem:[%s11 + $0x10] sm:$0xff]
  %v1720 = vld [vmem:[%s11 + $0x18] sm:$0xff]
  %v1721 = vld [vmem:[%s11 + $0x20] sm:$0xff]
  %v1722 = vld [vmem:[%s11 + $0x28] sm:$0xff]
  %v1723 = vld [vmem:[%s11 + $0x30] sm:$0xff]
  %v1724 = vld [vmem:[%s11 + $0x38] sm:$0xff]
  %v1725 = vld [vmem:[%s7] sm:$0x3]
  %v1726 = vld [vmem:[%s9] sm:$0x3f]
  %v1727 = vlaneseq
  %v1728 = vshrl.u32 %v1727, 7
  %v1729 = vsub.s32 0, %v1728
  %v1730 = vrot.slane %v1725, %v1729
  %v1732 = vsel %vm1686, %v1693, 0
  %v1735 = vsel %vm1686, %v1694, 0
  %v1738 = vsel %vm1686, %v1695, 0
  %1740 = vmatprep.subr.mxu0 0.0
  %1741 = vmatpush1.msra.mxu0 %v1705
  %1742 = vmatprep.subr.mxu0 0.0
  %1743 = vmatpush1.msra.mxu0 %v1706
  %1744 = vmatprep.subr.mxu0 0.0
  %1745 = vmatpush1.msra.mxu0 %v1707
  %1746 = vmatprep.subr.mxu0 0.0
  %1747 = vmatpush1.msra.mxu0 %v1708
  %1748 = vmatprep.subr.mxu0 0.0
  %1749 = vmatpush1.msra.mxu0 0.0
  %1750 = vmatprep.subr.mxu0 0.0
  %1751 = vmatpush1.msra.mxu0 0.0
  %1752 = vmatprep.subr.mxu0 0.0
  %1753 = vmatpush1.msra.mxu0 0.0
  %1754 = vmatprep.subr.mxu0 0.0
  %1755 = vmatpush1.msra.mxu0 0.0
  %1756 = vmatprep.subr.mxu0 0.0
  %1757 = vmatpush1.msra.mxu0 0.0
  %1758 = vmatprep.subr.mxu0 0.0
  %1759 = vmatpush1.msra.mxu0 0.0
  %1760 = vmatprep.subr.mxu0 0.0
  %1761 = vmatpush1.msra.mxu0 0.0
  %1762 = vmatprep.subr.mxu0 0.0
  %1763 = vmatpush1.msra.mxu0 0.0
  %1764 = vmatprep.subr.mxu0 0.0
  %1765 = vmatpush1.msra.mxu0 0.0
  %1766 = vmatprep.subr.mxu0 0.0
  %1767 = vmatpush1.msra.mxu0 0.0
  %1768 = vmatprep.subr.mxu0 0.0
  %1769 = vmatpush1.msra.mxu0 0.0
  %1770 = vmatprep.subr.mxu0 0.0
  %1771 = vmatpush1.msra.mxu0 0.0
  %1772 = vmatprep.subr.mxu0 0.0
  %1773 = vmatpush1.msra.mxu0 0.0
  %1774 = vmatprep.subr.mxu0 0.0
  %1775 = vmatpush1.msra.mxu0 0.0
  %1776 = vmatprep.subr.mxu0 0.0
  %1777 = vmatpush1.msra.mxu0 0.0
  %1778 = vmatprep.subr.mxu0 0.0
  %1779 = vmatpush1.msra.mxu0 0.0
  %1780 = vmatprep.subr.mxu0 0.0
  %1781 = vmatpush1.msra.mxu0 0.0
  %1782 = vmatprep.subr.mxu0 0.0
  %1783 = vmatpush1.msra.mxu0 0.0
  %1784 = vmatprep.subr.mxu0 0.0
  %1785 = vmatpush1.msra.mxu0 0.0
  %1786 = vmatprep.subr.mxu0 0.0
  %1787 = vmatpush1.msra.mxu0 0.0
  %1788 = vmatprep.subr.mxu0 0.0
  %1789 = vmatpush1.msra.mxu0 0.0
  %1790 = vmatprep.subr.mxu0 0.0
  %1791 = vmatpush1.msra.mxu0 0.0
  %1792 = vmatprep.subr.mxu0 0.0
  %1793 = vmatpush1.msra.mxu0 0.0
  %1794 = vmatprep.subr.mxu0 0.0
  %1795 = vmatpush1.msra.mxu0 0.0
  %1796 = vmatprep.subr.mxu0 0.0
  %1797 = vmatpush1.msra.mxu0 0.0
  %1798 = vmatprep.subr.mxu0 0.0
  %1799 = vmatpush1.msra.mxu0 0.0
  %1800 = vmatprep.subr.mxu0 0.0
  %1801 = vmatpush1.msra.mxu0 0.0
  %1802 = vmatprep.subr.mxu0 0.0
  %1803 = vmatpush1.msra.mxu0 0.0
  %1804 = vmatprep.mubr.f32.mxu0 0.0
  %1805 = vmatmul.mubr.f32.gmra.mrb[0].mxu0 %v1732
  %v1806 = vpop.f32.mrb[0].mxu0
  %v1807 = vadd.f32 %v1730, %v1806
  %v1808 = vpop.f32.mrb[0].mxu0
  %1809 = vmatprep.mubr.f32.mxu0 0.0
  %1810 = vmatmul.mubr.f32.gmra.mrb[0].mxu0 %v1735
  %v1811 = vpop.f32.mrb[0].mxu0
  %v1812 = vadd.f32 %v1730, %v1811
  %v1813 = vpop.f32.mrb[0].mxu0
  %1814 = vmatprep.mubr.f32.mxu0 0.0
  %1815 = vmatmul.mubr.f32.gmra.mrb[0].mxu0 %v1738
  %v1816 = vpop.f32.mrb[0].mxu0
  %v1817 = vadd.f32 %v1730, %v1816
  %v1818 = vpop.f32.mrb[0].mxu0
  %1819 = vdwg.mxu0
  %1822 = vrot.lane.b32.xlu0 %v1807, 96
  %v1823 = vpop.permute.xlu0 %1822
  %1824 = vrot.lane.b32.xlu0 %v1812, 96
  %v1825 = vpop.permute.xlu0 %1824
  %vm1826 = vcmask 64512
  %v1827 = vsel %vm1826, %v1807, 0
  %v1829 = vsel %vm1826, %v1812, 0
  %v1831 = vsel %vm1826, %v1823, 0
  %v1833 = vsel %vm1826, %v1825, 0
  %1835 = vmatprep.subr.mxu0 0.0
  %1836 = vmatpush1.xpose.msra.mxu0 %v1831
  %1837 = vmatprep.subr.mxu0 0.0
  %1838 = vmatpush1.xpose.msra.mxu0 %v1833
  %1839 = vmatprep.subr.mxu0 0.0
  %1840 = vmatpush1.xpose.msra.mxu0 0.0
  %1841 = vmatprep.subr.mxu0 0.0
  %1842 = vmatpush1.xpose.msra.mxu0 0.0
  %1843 = vmatprep.subr.mxu0 0.0
  %1844 = vmatpush1.xpose.msra.mxu0 0.0
  %1845 = vmatprep.subr.mxu0 0.0
  %1846 = vmatpush1.xpose.msra.mxu0 0.0
  %1847 = vmatprep.subr.mxu0 0.0
  %1848 = vmatpush1.xpose.msra.mxu0 0.0
  %1849 = vmatprep.subr.mxu0 0.0
  %1850 = vmatpush1.xpose.msra.mxu0 0.0
  %1851 = vmatprep.subr.mxu0 0.0
  %1852 = vmatpush1.xpose.msra.mxu0 0.0
  %1853 = vmatprep.subr.mxu0 0.0
  %1854 = vmatpush1.xpose.msra.mxu0 0.0
  %1855 = vmatprep.subr.mxu0 0.0
  %1856 = vmatpush1.xpose.msra.mxu0 0.0
  %1857 = vmatprep.subr.mxu0 0.0
  %1858 = vmatpush1.xpose.msra.mxu0 0.0
  %1859 = vmatprep.subr.mxu0 0.0
  %1860 = vmatpush1.xpose.msra.mxu0 0.0
  %1861 = vmatprep.subr.mxu0 0.0
  %1862 = vmatpush1.xpose.msra.mxu0 0.0
  %1863 = vmatprep.subr.mxu0 0.0
  %1864 = vmatpush1.xpose.msra.mxu0 0.0
  %1865 = vmatprep.subr.mxu0 0.0
  %1866 = vmatpush1.xpose.msra.mxu0 0.0
  %1867 = vmatprep.subr.mxu0 0.0
  %1868 = vmatpush1.xpose.msra.mxu0 0.0
  %1869 = vmatprep.subr.mxu0 0.0
  %1870 = vmatpush1.xpose.msra.mxu0 0.0
  %1871 = vmatprep.subr.mxu0 0.0
  %1872 = vmatpush1.xpose.msra.mxu0 0.0
  %1873 = vmatprep.subr.mxu0 0.0
  %1874 = vmatpush1.xpose.msra.mxu0 0.0
  %1875 = vmatprep.subr.mxu0 0.0
  %1876 = vmatpush1.xpose.msra.mxu0 0.0
  %1877 = vmatprep.subr.mxu0 0.0
  %1878 = vmatpush1.xpose.msra.mxu0 0.0
  %1879 = vmatprep.subr.mxu0 0.0
  %1880 = vmatpush1.xpose.msra.mxu0 0.0
  %1881 = vmatprep.subr.mxu0 0.0
  %1882 = vmatpush1.xpose.msra.mxu0 0.0
  %1883 = vmatprep.subr.mxu0 0.0
  %1884 = vmatpush1.xpose.msra.mxu0 0.0
  %1885 = vmatprep.subr.mxu0 0.0
  %1886 = vmatpush1.xpose.msra.mxu0 0.0
  %1887 = vmatprep.subr.mxu0 0.0
  %1888 = vmatpush1.xpose.msra.mxu0 0.0
  %1889 = vmatprep.subr.mxu0 0.0
  %1890 = vmatpush1.xpose.msra.mxu0 0.0
  %1891 = vmatprep.subr.mxu0 0.0
  %1892 = vmatpush1.xpose.msra.mxu0 0.0
  %1893 = vmatprep.subr.mxu0 0.0
  %1894 = vmatpush1.xpose.msra.mxu0 0.0
  %1895 = vmatprep.subr.mxu0 0.0
  %1896 = vmatpush1.xpose.msra.mxu0 0.0
  %1897 = vmatprep.subr.mxu0 0.0
  %1898 = vmatpush1.xpose.msra.mxu0 0.0
  %1899 = vmatprep.mubr.f32.mxu0 0.0
  %1900 = vmatmul.mubr.f32.gmra.mrb[0].mxu0 %v1827
  %v1901 = vpop.f32.mrb[0].mxu0
  %v1902 = vadd.f32 %v1703, %v1901
  %v1903 = vpop.f32.mrb[0].mxu0
  %1904 = vmatprep.mubr.f32.mxu0 0.0
  %1905 = vmatmul.mubr.f32.gmra.mrb[0].mxu0 %v1829
  %v1906 = vpop.f32.mrb[0].mxu0
  %v1907 = vadd.f32 %v1704, %v1906
  %v1908 = vpop.f32.mrb[0].mxu0
  %1909 = vdwg.mxu0
  %vm1910 = vcmask 72704
  %v1911 = vsel %vm1910, %v1902, -inf
  %1912 = vmax.xlane.f32.xlu0 %v1911
  %v1913 = vpop.xlane.xlu0 %1912
  %vm1914 = vcmask 65536
  %v1915 = vsel %vm1914, %v1907, -inf
  %1916 = vmax.xlane.f32.xlu0 %v1915
  %v1917 = vpop.xlane.xlu0 %1916
  %v1918 = vsub.f32 %v1902, %v1913
  %v1919 = vsub.f32 %v1907, %v1917
  %v1920 = vmul.f32 %v1918, 1.442695
  %v1921 = vpow.pop %v1920
  %v1922 = vmul.f32 %v1919, 1.442695
  %v1923 = vpow.pop %v1922
  %v1924 = vsel %vm1910, %v1921, 0.0
  %1925 = vadd.xlane.f32.xlu0 %v1924
  %v1926 = vpop.xlane.xlu0 %1925
  %v1927 = vsel %vm1914, %v1923, 0.0
  %1928 = vadd.xlane.f32.xlu0 %v1927
  %v1929 = vpop.xlane.xlu0 %1928
  %v1930 = vrcp.pop %v1926
  %v1931 = vrcp.pop %v1929
  %v1932 = vmul.f32 %v1921, %v1930
  %v1933 = vmul.f32 %v1923, %v1931
  %1934 = vrot.lane.b32.xlu0 %v1807, 64
  %v1935 = vpop.permute.xlu0 %1934
  %1936 = vrot.lane.b32.xlu0 %v1812, 64
  %v1937 = vpop.permute.xlu0 %1936
  %v1940 = vsel %vm1910, %v1932, 0
  %v1943 = vsel %vm1910, %v1933, 0
  %vm1945 = vcmask 1040384
  %v1946 = vsel %vm1945, %v1937, 0
  %1948 = vmatprep.subr.mxu0 0.0
  %1949 = vmatpush1.msra.mxu0 %v1935
  %1950 = vmatprep.subr.mxu0 0.0
  %1951 = vmatpush1.msra.mxu0 %v1946
  %1952 = vmatprep.subr.mxu0 0.0
  %1953 = vmatpush1.msra.mxu0 0.0
  %1954 = vmatprep.subr.mxu0 0.0
  %1955 = vmatpush1.msra.mxu0 0.0
  %1956 = vmatprep.subr.mxu0 0.0
  %1957 = vmatpush1.msra.mxu0 0.0
  %1958 = vmatprep.subr.mxu0 0.0
  %1959 = vmatpush1.msra.mxu0 0.0
  %1960 = vmatprep.subr.mxu0 0.0
  %1961 = vmatpush1.msra.mxu0 0.0
  %1962 = vmatprep.subr.mxu0 0.0
  %1963 = vmatpush1.msra.mxu0 0.0
  %1964 = vmatprep.subr.mxu0 0.0
  %1965 = vmatpush1.msra.mxu0 0.0
  %1966 = vmatprep.subr.mxu0 0.0
  %1967 = vmatpush1.msra.mxu0 0.0
  %1968 = vmatprep.subr.mxu0 0.0
  %1969 = vmatpush1.msra.mxu0 0.0
  %1970 = vmatprep.subr.mxu0 0.0
  %1971 = vmatpush1.msra.mxu0 0.0
  %1972 = vmatprep.subr.mxu0 0.0
  %1973 = vmatpush1.msra.mxu0 0.0
  %1974 = vmatprep.subr.mxu0 0.0
  %1975 = vmatpush1.msra.mxu0 0.0
  %1976 = vmatprep.subr.mxu0 0.0
  %1977 = vmatpush1.msra.mxu0 0.0
  %1978 = vmatprep.subr.mxu0 0.0
  %1979 = vmatpush1.msra.mxu0 0.0
  %1980 = vmatprep.subr.mxu0 0.0
  %1981 = vmatpush1.msra.mxu0 0.0
  %1982 = vmatprep.subr.mxu0 0.0
  %1983 = vmatpush1.msra.mxu0 0.0
  %1984 = vmatprep.subr.mxu0 0.0
  %1985 = vmatpush1.msra.mxu0 0.0
  %1986 = vmatprep.subr.mxu0 0.0
  %1987 = vmatpush1.msra.mxu0 0.0
  %1988 = vmatprep.subr.mxu0 0.0
  %1989 = vmatpush1.msra.mxu0 0.0
  %1990 = vmatprep.subr.mxu0 0.0
  %1991 = vmatpush1.msra.mxu0 0.0
  %1992 = vmatprep.subr.mxu0 0.0
  %1993 = vmatpush1.msra.mxu0 0.0
  %1994 = vmatprep.subr.mxu0 0.0
  %1995 = vmatpush1.msra.mxu0 0.0
  %1996 = vmatprep.subr.mxu0 0.0
  %1997 = vmatpush1.msra.mxu0 0.0
  %1998 = vmatprep.subr.mxu0 0.0
  %1999 = vmatpush1.msra.mxu0 0.0
  %2000 = vmatprep.subr.mxu0 0.0
  %2001 = vmatpush1.msra.mxu0 0.0
  %2002 = vmatprep.subr.mxu0 0.0
  %2003 = vmatpush1.msra.mxu0 0.0
  %2004 = vmatprep.subr.mxu0 0.0
  %2005 = vmatpush1.msra.mxu0 0.0
  %2006 = vmatprep.subr.mxu0 0.0
  %2007 = vmatpush1.msra.mxu0 0.0
  %2008 = vmatprep.subr.mxu0 0.0
  %2009 = vmatpush1.msra.mxu0 0.0
  %2010 = vmatprep.subr.mxu0 0.0
  %2011 = vmatpush1.msra.mxu0 0.0
  %2012 = vmatprep.mubr.f32.mxu0 0.0
  %2013 = vmatmul.mubr.f32.gmra.mrb[0].mxu0 %v1940
  %v2014 = vpop.f32.mrb[0].mxu0
  %v2015 = vadd.f32 0.0, %v2014
  %v2016 = vpop.f32.mrb[0].mxu0
  %2017 = vmatprep.mubr.f32.mxu0 0.0
  %2018 = vmatmul.mubr.f32.gmra.mrb[0].mxu0 %v1943
  %v2019 = vpop.f32.mrb[0].mxu0
  %v2020 = vadd.f32 0.0, %v2019
  %v2021 = vpop.f32.mrb[0].mxu0
  %2022 = vdwg.mxu0
  %2023 = vst.msk [vmem:[#allocation3] sm:$0xff] %vm1826, %v2015
  %vm2024 = vcmask 57344
  %2025 = vst.msk [vmem:[#allocation3 + $0x8] sm:$0x1] %vm2024, %v2020
  %2026 = vrot.lane.b32.xlu0 %v1807, 120
  %v2027 = vpop.permute.xlu0 %2026
  %2028 = vrot.lane.b32.xlu0 %v1812, 120
  %v2029 = vpop.permute.xlu0 %2028
  %2030 = vrot.lane.b32.xlu0 %v1807, 88
  %v2031 = vpop.permute.xlu0 %2030
  %2032 = vrot.lane.b32.xlu0 %v1812, 88
  %v2033 = vpop.permute.xlu0 %2032
  %v2034 = vsel %vm1826, %v2027, 0
  %v2036 = vsel %vm1826, %v2029, 0
  %v2038 = vsel %vm1826, %v2031, 0
  %v2040 = vsel %vm1826, %v2033, 0
  %2042 = vmatprep.subr.mxu0 0.0
  %2043 = vmatpush1.xpose.msra.mxu0 %v2038
  %2044 = vmatprep.subr.mxu0 0.0
  %2045 = vmatpush1.xpose.msra.mxu0 %v2040
  %2046 = vmatprep.subr.mxu0 0.0
  %2047 = vmatpush1.xpose.msra.mxu0 0.0
  %2048 = vmatprep.subr.mxu0 0.0
  %2049 = vmatpush1.xpose.msra.mxu0 0.0
  %2050 = vmatprep.subr.mxu0 0.0
  %2051 = vmatpush1.xpose.msra.mxu0 0.0
  %2052 = vmatprep.subr.mxu0 0.0
  %2053 = vmatpush1.xpose.msra.mxu0 0.0
  %2054 = vmatprep.subr.mxu0 0.0
  %2055 = vmatpush1.xpose.msra.mxu0 0.0
  %2056 = vmatprep.subr.mxu0 0.0
  %2057 = vmatpush1.xpose.msra.mxu0 0.0
  %2058 = vmatprep.subr.mxu0 0.0
  %2059 = vmatpush1.xpose.msra.mxu0 0.0
  %2060 = vmatprep.subr.mxu0 0.0
  %2061 = vmatpush1.xpose.msra.mxu0 0.0
  %2062 = vmatprep.subr.mxu0 0.0
  %2063 = vmatpush1.xpose.msra.mxu0 0.0
  %2064 = vmatprep.subr.mxu0 0.0
  %2065 = vmatpush1.xpose.msra.mxu0 0.0
  %2066 = vmatprep.subr.mxu0 0.0
  %2067 = vmatpush1.xpose.msra.mxu0 0.0
  %2068 = vmatprep.subr.mxu0 0.0
  %2069 = vmatpush1.xpose.msra.mxu0 0.0
  %2070 = vmatprep.subr.mxu0 0.0
  %2071 = vmatpush1.xpose.msra.mxu0 0.0
  %2072 = vmatprep.subr.mxu0 0.0
  %2073 = vmatpush1.xpose.msra.mxu0 0.0
  %2074 = vmatprep.subr.mxu0 0.0
  %2075 = vmatpush1.xpose.msra.mxu0 0.0
  %2076 = vmatprep.subr.mxu0 0.0
  %2077 = vmatpush1.xpose.msra.mxu0 0.0
  %2078 = vmatprep.subr.mxu0 0.0
  %2079 = vmatpush1.xpose.msra.mxu0 0.0
  %2080 = vmatprep.subr.mxu0 0.0
  %2081 = vmatpush1.xpose.msra.mxu0 0.0
  %2082 = vmatprep.subr.mxu0 0.0
  %2083 = vmatpush1.xpose.msra.mxu0 0.0
  %2084 = vmatprep.subr.mxu0 0.0
  %2085 = vmatpush1.xpose.msra.mxu0 0.0
  %2086 = vmatprep.subr.mxu0 0.0
  %2087 = vmatpush1.xpose.msra.mxu0 0.0
  %2088 = vmatprep.subr.mxu0 0.0
  %2089 = vmatpush1.xpose.msra.mxu0 0.0
  %2090 = vmatprep.subr.mxu0 0.0
  %2091 = vmatpush1.xpose.msra.mxu0 0.0
  %2092 = vmatprep.subr.mxu0 0.0
  %2093 = vmatpush1.xpose.msra.mxu0 0.0
  %2094 = vmatprep.subr.mxu0 0.0
  %2095 = vmatpush1.xpose.msra.mxu0 0.0
  %2096 = vmatprep.subr.mxu0 0.0
  %2097 = vmatpush1.xpose.msra.mxu0 0.0
  %2098 = vmatprep.subr.mxu0 0.0
  %2099 = vmatpush1.xpose.msra.mxu0 0.0
  %2100 = vmatprep.subr.mxu0 0.0
  %2101 = vmatpush1.xpose.msra.mxu0 0.0
  %2102 = vmatprep.subr.mxu0 0.0
  %2103 = vmatpush1.xpose.msra.mxu0 0.0
  %2104 = vmatprep.subr.mxu0 0.0
  %2105 = vmatpush1.xpose.msra.mxu0 0.0
  %2106 = vmatprep.mubr.f32.mxu0 0.0
  %2107 = vmatmul.mubr.f32.gmra.mrb[0].mxu0 %v2034
  %v2108 = vpop.f32.mrb[0].mxu0
  %v2109 = vadd.f32 %v1703, %v2108
  %v2110 = vpop.f32.mrb[0].mxu0
  %2111 = vmatprep.mubr.f32.mxu0 0.0
  %2112 = vmatmul.mubr.f32.gmra.mrb[0].mxu0 %v2036
  %v2113 = vpop.f32.mrb[0].mxu0
  %v2114 = vadd.f32 %v1704, %v2113
  %v2115 = vpop.f32.mrb[0].mxu0
  %2116 = vdwg.mxu0
  %v2117 = vsel %vm1910, %v2109, -inf
  %2118 = vmax.xlane.f32.xlu0 %v2117
  %v2119 = vpop.xlane.xlu0 %2118
  %v2120 = vsel %vm1914, %v2114, -inf
  %2121 = vmax.xlane.f32.xlu0 %v2120
  %v2122 = vpop.xlane.xlu0 %2121
  %v2123 = vsub.f32 %v2109, %v2119
  %v2124 = vsub.f32 %v2114, %v2122
  %v2125 = vmul.f32 %v2123, 1.442695
  %v2126 = vpow.pop %v2125
  %v2127 = vmul.f32 %v2124, 1.442695
  %v2128 = vpow.pop %v2127
  %v2129 = vsel %vm1910, %v2126, 0.0
  %2130 = vadd.xlane.f32.xlu0 %v2129
  %v2131 = vpop.xlane.xlu0 %2130
  %v2132 = vsel %vm1914, %v2128, 0.0
  %2133 = vadd.xlane.f32.xlu0 %v2132
  %v2134 = vpop.xlane.xlu0 %2133
  %v2135 = vrcp.pop %v2131
  %v2136 = vrcp.pop %v2134
  %v2137 = vmul.f32 %v2126, %v2135
  %v2138 = vmul.f32 %v2128, %v2136
  %2139 = vrot.lane.b32.xlu0 %v1807, 56
  %v2140 = vpop.permute.xlu0 %2139
  %2141 = vrot.lane.b32.xlu0 %v1812, 56
  %v2142 = vpop.permute.xlu0 %2141
  %v2145 = vsel %vm1910, %v2137, 0
  %v2148 = vsel %vm1910, %v2138, 0
  %v2150 = vsel %vm1945, %v2142, 0
  %2152 = vmatprep.subr.mxu0 0.0
  %2153 = vmatpush1.msra.mxu0 %v2140
  %2154 = vmatprep.subr.mxu0 0.0
  %2155 = vmatpush1.msra.mxu0 %v2150
  %2156 = vmatprep.subr.mxu0 0.0
  %2157 = vmatpush1.msra.mxu0 0.0
  %2158 = vmatprep.subr.mxu0 0.0
  %2159 = vmatpush1.msra.mxu0 0.0
  %2160 = vmatprep.subr.mxu0 0.0
  %2161 = vmatpush1.msra.mxu0 0.0
  %2162 = vmatprep.subr.mxu0 0.0
  %2163 = vmatpush1.msra.mxu0 0.0
  %2164 = vmatprep.subr.mxu0 0.0
  %2165 = vmatpush1.msra.mxu0 0.0
  %2166 = vmatprep.subr.mxu0 0.0
  %2167 = vmatpush1.msra.mxu0 0.0
  %2168 = vmatprep.subr.mxu0 0.0
  %2169 = vmatpush1.msra.mxu0 0.0
  %2170 = vmatprep.subr.mxu0 0.0
  %2171 = vmatpush1.msra.mxu0 0.0
  %2172 = vmatprep.subr.mxu0 0.0
  %2173 = vmatpush1.msra.mxu0 0.0
  %2174 = vmatprep.subr.mxu0 0.0
  %2175 = vmatpush1.msra.mxu0 0.0
  %2176 = vmatprep.subr.mxu0 0.0
  %2177 = vmatpush1.msra.mxu0 0.0
  %2178 = vmatprep.subr.mxu0 0.0
  %2179 = vmatpush1.msra.mxu0 0.0
  %2180 = vmatprep.subr.mxu0 0.0
  %2181 = vmatpush1.msra.mxu0 0.0
  %2182 = vmatprep.subr.mxu0 0.0
  %2183 = vmatpush1.msra.mxu0 0.0
  %2184 = vmatprep.subr.mxu0 0.0
  %2185 = vmatpush1.msra.mxu0 0.0
  %2186 = vmatprep.subr.mxu0 0.0
  %2187 = vmatpush1.msra.mxu0 0.0
  %2188 = vmatprep.subr.mxu0 0.0
  %2189 = vmatpush1.msra.mxu0 0.0
  %2190 = vmatprep.subr.mxu0 0.0
  %2191 = vmatpush1.msra.mxu0 0.0
  %2192 = vmatprep.subr.mxu0 0.0
  %2193 = vmatpush1.msra.mxu0 0.0
  %2194 = vmatprep.subr.mxu0 0.0
  %2195 = vmatpush1.msra.mxu0 0.0
  %2196 = vmatprep.subr.mxu0 0.0
  %2197 = vmatpush1.msra.mxu0 0.0
  %2198 = vmatprep.subr.mxu0 0.0
  %2199 = vmatpush1.msra.mxu0 0.0
  %2200 = vmatprep.subr.mxu0 0.0
  %2201 = vmatpush1.msra.mxu0 0.0
  %2202 = vmatprep.subr.mxu0 0.0
  %2203 = vmatpush1.msra.mxu0 0.0
  %2204 = vmatprep.subr.mxu0 0.0
  %2205 = vmatpush1.msra.mxu0 0.0
  %2206 = vmatprep.subr.mxu0 0.0
  %2207 = vmatpush1.msra.mxu0 0.0
  %2208 = vmatprep.subr.mxu0 0.0
  %2209 = vmatpush1.msra.mxu0 0.0
  %2210 = vmatprep.subr.mxu0 0.0
  %2211 = vmatpush1.msra.mxu0 0.0
  %2212 = vmatprep.subr.mxu0 0.0
  %2213 = vmatpush1.msra.mxu0 0.0
  %2214 = vmatprep.subr.mxu0 0.0
  %2215 = vmatpush1.msra.mxu0 0.0
  %2216 = vmatprep.mubr.f32.mxu0 0.0
  %2217 = vmatmul.mubr.f32.gmra.mrb[0].mxu0 %v2145
  %v2218 = vpop.f32.mrb[0].mxu0
  %v2219 = vadd.f32 0.0, %v2218
  %v2220 = vpop.f32.mrb[0].mxu0
  %2221 = vmatprep.mubr.f32.mxu0 0.0
  %2222 = vmatmul.mubr.f32.gmra.mrb[0].mxu0 %v2148
  %v2223 = vpop.f32.mrb[0].mxu0
  %v2224 = vadd.f32 0.0, %v2223
  %v2225 = vpop.f32.mrb[0].mxu0
  %2226 = vdwg.mxu0
  %2229 = vrot.lane.b32.xlu0 %v2219, 8
  %v2230 = vpop.permute.xlu0 %2229
  %2231 = vrot.lane.b32.xlu0 %v2224, 8
  %v2232 = vpop.permute.xlu0 %2231
  %vm2235 = vcmask 130112
  %2236 = vst.msk [vmem:[#allocation3] sm:$0xff] %vm2235, %v2230
  %vm2237 = vcmask 122944
  %2238 = vst.msk [vmem:[#allocation3 + $0x8] sm:$0x1] %vm2237, %v2232
  %2239 = vrot.lane.b32.xlu0 %v1807, 112
  %v2240 = vpop.permute.xlu0 %2239
  %2241 = vrot.lane.b32.xlu0 %v1812, 112
  %v2242 = vpop.permute.xlu0 %2241
  %2243 = vrot.lane.b32.xlu0 %v1807, 80
  %v2244 = vpop.permute.xlu0 %2243
  %2245 = vrot.lane.b32.xlu0 %v1812, 80
  %v2246 = vpop.permute.xlu0 %2245
  %v2247 = vsel %vm1826, %v2240, 0
  %v2249 = vsel %vm1826, %v2242, 0
  %v2251 = vsel %vm1826, %v2244, 0
  %v2253 = vsel %vm1826, %v2246, 0
  %2255 = vmatprep.subr.mxu0 0.0
  %2256 = vmatpush1.xpose.msra.mxu0 %v2251
  %2257 = vmatprep.subr.mxu0 0.0
  %2258 = vmatpush1.xpose.msra.mxu0 %v2253
  %2259 = vmatprep.subr.mxu0 0.0
  %2260 = vmatpush1.xpose.msra.mxu0 0.0
  %2261 = vmatprep.subr.mxu0 0.0
  %2262 = vmatpush1.xpose.msra.mxu0 0.0
  %2263 = vmatprep.subr.mxu0 0.0
  %2264 = vmatpush1.xpose.msra.mxu0 0.0
  %2265 = vmatprep.subr.mxu0 0.0
  %2266 = vmatpush1.xpose.msra.mxu0 0.0
  %2267 = vmatprep.subr.mxu0 0.0
  %2268 = vmatpush1.xpose.msra.mxu0 0.0
  %2269 = vmatprep.subr.mxu0 0.0
  %2270 = vmatpush1.xpose.msra.mxu0 0.0
  %2271 = vmatprep.subr.mxu0 0.0
  %2272 = vmatpush1.xpose.msra.mxu0 0.0
  %2273 = vmatprep.subr.mxu0 0.0
  %2274 = vmatpush1.xpose.msra.mxu0 0.0
  %2275 = vmatprep.subr.mxu0 0.0
  %2276 = vmatpush1.xpose.msra.mxu0 0.0
  %2277 = vmatprep.subr.mxu0 0.0
  %2278 = vmatpush1.xpose.msra.mxu0 0.0
  %2279 = vmatprep.subr.mxu0 0.0
  %2280 = vmatpush1.xpose.msra.mxu0 0.0
  %2281 = vmatprep.subr.mxu0 0.0
  %2282 = vmatpush1.xpose.msra.mxu0 0.0
  %2283 = vmatprep.subr.mxu0 0.0
  %2284 = vmatpush1.xpose.msra.mxu0 0.0
  %2285 = vmatprep.subr.mxu0 0.0
  %2286 = vmatpush1.xpose.msra.mxu0 0.0
  %2287 = vmatprep.subr.mxu0 0.0
  %2288 = vmatpush1.xpose.msra.mxu0 0.0
  %2289 = vmatprep.subr.mxu0 0.0
  %2290 = vmatpush1.xpose.msra.mxu0 0.0
  %2291 = vmatprep.subr.mxu0 0.0
  %2292 = vmatpush1.xpose.msra.mxu0 0.0
  %2293 = vmatprep.subr.mxu0 0.0
  %2294 = vmatpush1.xpose.msra.mxu0 0.0
  %2295 = vmatprep.subr.mxu0 0.0
  %2296 = vmatpush1.xpose.msra.mxu0 0.0
  %2297 = vmatprep.subr.mxu0 0.0
  %2298 = vmatpush1.xpose.msra.mxu0 0.0
  %2299 = vmatprep.subr.mxu0 0.0
  %2300 = vmatpush1.xpose.msra.mxu0 0.0
  %2301 = vmatprep.subr.mxu0 0.0
  %2302 = vmatpush1.xpose.msra.mxu0 0.0
  %2303 = vmatprep.subr.mxu0 0.0
  %2304 = vmatpush1.xpose.msra.mxu0 0.0
  %2305 = vmatprep.subr.mxu0 0.0
  %2306 = vmatpush1.xpose.msra.mxu0 0.0
  %2307 = vmatprep.subr.mxu0 0.0
  %2308 = vmatpush1.xpose.msra.mxu0 0.0
  %2309 = vmatprep.subr.mxu0 0.0
  %2310 = vmatpush1.xpose.msra.mxu0 0.0
  %2311 = vmatprep.subr.mxu0 0.0
  %2312 = vmatpush1.xpose.msra.mxu0 0.0
  %2313 = vmatprep.subr.mxu0 0.0
  %2314 = vmatpush1.xpose.msra.mxu0 0.0
  %2315 = vmatprep.subr.mxu0 0.0
  %2316 = vmatpush1.xpose.msra.mxu0 0.0
  %2317 = vmatprep.subr.mxu0 0.0
  %2318 = vmatpush1.xpose.msra.mxu0 0.0
  %2319 = vmatprep.mubr.f32.mxu0 0.0
  %2320 = vmatmul.mubr.f32.gmra.mrb[0].mxu0 %v2247
  %v2321 = vpop.f32.mrb[0].mxu0
  %v2322 = vadd.f32 %v1703, %v2321
  %v2323 = vpop.f32.mrb[0].mxu0
  %2324 = vmatprep.mubr.f32.mxu0 0.0
  %2325 = vmatmul.mubr.f32.gmra.mrb[0].mxu0 %v2249
  %v2326 = vpop.f32.mrb[0].mxu0
  %v2327 = vadd.f32 %v1704, %v2326
  %v2328 = vpop.f32.mrb[0].mxu0
  %2329 = vdwg.mxu0
  %v2330 = vsel %vm1910, %v2322, -inf
  %2331 = vmax.xlane.f32.xlu0 %v2330
  %v2332 = vpop.xlane.xlu0 %2331
  %v2333 = vsel %vm1914, %v2327, -inf
  %2334 = vmax.xlane.f32.xlu0 %v2333
  %v2335 = vpop.xlane.xlu0 %2334
  %v2336 = vsub.f32 %v2322, %v2332
  %v2337 = vsub.f32 %v2327, %v2335
  %v2338 = vmul.f32 %v2336, 1.442695
  %v2339 = vpow.pop %v2338
  %v2340 = vmul.f32 %v2337, 1.442695
  %v2341 = vpow.pop %v2340
  %v2342 = vsel %vm1910, %v2339, 0.0
  %2343 = vadd.xlane.f32.xlu0 %v2342
  %v2344 = vpop.xlane.xlu0 %2343
  %v2345 = vsel %vm1914, %v2341, 0.0
  %2346 = vadd.xlane.f32.xlu0 %v2345
  %v2347 = vpop.xlane.xlu0 %2346
  %v2348 = vrcp.pop %v2344
  %v2349 = vrcp.pop %v2347
  %v2350 = vmul.f32 %v2339, %v2348
  %v2351 = vmul.f32 %v2341, %v2349
  %2352 = vrot.lane.b32.xlu0 %v1807, 48
  %v2353 = vpop.permute.xlu0 %2352
  %2354 = vrot.lane.b32.xlu0 %v1812, 48
  %v2355 = vpop.permute.xlu0 %2354
  %v2358 = vsel %vm1910, %v2350, 0
  %v2361 = vsel %vm1910, %v2351, 0
  %v2363 = vsel %vm1945, %v2355, 0
  %2365 = vmatprep.subr.mxu0 0.0
  %2366 = vmatpush1.msra.mxu0 %v2353
  %2367 = vmatprep.subr.mxu0 0.0
  %2368 = vmatpush1.msra.mxu0 %v2363
  %2369 = vmatprep.subr.mxu0 0.0
  %2370 = vmatpush1.msra.mxu0 0.0
  %2371 = vmatprep.subr.mxu0 0.0
  %2372 = vmatpush1.msra.mxu0 0.0
  %2373 = vmatprep.subr.mxu0 0.0
  %2374 = vmatpush1.msra.mxu0 0.0
  %2375 = vmatprep.subr.mxu0 0.0
  %2376 = vmatpush1.msra.mxu0 0.0
  %2377 = vmatprep.subr.mxu0 0.0
  %2378 = vmatpush1.msra.mxu0 0.0
  %2379 = vmatprep.subr.mxu0 0.0
  %2380 = vmatpush1.msra.mxu0 0.0
  %2381 = vmatprep.subr.mxu0 0.0
  %2382 = vmatpush1.msra.mxu0 0.0
  %2383 = vmatprep.subr.mxu0 0.0
  %2384 = vmatpush1.msra.mxu0 0.0
  %2385 = vmatprep.subr.mxu0 0.0
  %2386 = vmatpush1.msra.mxu0 0.0
  %2387 = vmatprep.subr.mxu0 0.0
  %2388 = vmatpush1.msra.mxu0 0.0
  %2389 = vmatprep.subr.mxu0 0.0
  %2390 = vmatpush1.msra.mxu0 0.0
  %2391 = vmatprep.subr.mxu0 0.0
  %2392 = vmatpush1.msra.mxu0 0.0
  %2393 = vmatprep.subr.mxu0 0.0
  %2394 = vmatpush1.msra.mxu0 0.0
  %2395 = vmatprep.subr.mxu0 0.0
  %2396 = vmatpush1.msra.mxu0 0.0
  %2397 = vmatprep.subr.mxu0 0.0
  %2398 = vmatpush1.msra.mxu0 0.0
  %2399 = vmatprep.subr.mxu0 0.0
  %2400 = vmatpush1.msra.mxu0 0.0
  %2401 = vmatprep.subr.mxu0 0.0
  %2402 = vmatpush1.msra.mxu0 0.0
  %2403 = vmatprep.subr.mxu0 0.0
  %2404 = vmatpush1.msra.mxu0 0.0
  %2405 = vmatprep.subr.mxu0 0.0
  %2406 = vmatpush1.msra.mxu0 0.0
  %2407 = vmatprep.subr.mxu0 0.0
  %2408 = vmatpush1.msra.mxu0 0.0
  %2409 = vmatprep.subr.mxu0 0.0
  %2410 = vmatpush1.msra.mxu0 0.0
  %2411 = vmatprep.subr.mxu0 0.0
  %2412 = vmatpush1.msra.mxu0 0.0
  %2413 = vmatprep.subr.mxu0 0.0
  %2414 = vmatpush1.msra.mxu0 0.0
  %2415 = vmatprep.subr.mxu0 0.0
  %2416 = vmatpush1.msra.mxu0 0.0
  %2417 = vmatprep.subr.mxu0 0.0
  %2418 = vmatpush1.msra.mxu0 0.0
  %2419 = vmatprep.subr.mxu0 0.0
  %2420 = vmatpush1.msra.mxu0 0.0
  %2421 = vmatprep.subr.mxu0 0.0
  %2422 = vmatpush1.msra.mxu0 0.0
  %2423 = vmatprep.subr.mxu0 0.0
  %2424 = vmatpush1.msra.mxu0 0.0
  %2425 = vmatprep.subr.mxu0 0.0
  %2426 = vmatpush1.msra.mxu0 0.0
  %2427 = vmatprep.subr.mxu0 0.0
  %2428 = vmatpush1.msra.mxu0 0.0
  %2429 = vmatprep.mubr.f32.mxu0 0.0
  %2430 = vmatmul.mubr.f32.gmra.mrb[0].mxu0 %v2358
  %v2431 = vpop.f32.mrb[0].mxu0
  %v2432 = vadd.f32 0.0, %v2431
  %v2433 = vpop.f32.mrb[0].mxu0
  %2434 = vmatprep.mubr.f32.mxu0 0.0
  %2435 = vmatmul.mubr.f32.gmra.mrb[0].mxu0 %v2361
  %v2436 = vpop.f32.mrb[0].mxu0
  %v2437 = vadd.f32 0.0, %v2436
  %v2438 = vpop.f32.mrb[0].mxu0
  %2439 = vdwg.mxu0
  %2442 = vrot.lane.b32.xlu0 %v2432, 16
  %v2443 = vpop.permute.xlu0 %2442
  %2444 = vrot.lane.b32.xlu0 %v2437, 16
  %v2445 = vpop.permute.xlu0 %2444
  %vm2448 = vcmask 195712
  %2449 = vst.msk [vmem:[#allocation3] sm:$0xff] %vm2448, %v2443
  %vm2450 = vcmask 188544
  %2451 = vst.msk [vmem:[#allocation3 + $0x8] sm:$0x1] %vm2450, %v2445
  %2452 = vrot.lane.b32.xlu0 %v1807, 104
  %v2453 = vpop.permute.xlu0 %2452
  %2454 = vrot.lane.b32.xlu0 %v1812, 104
  %v2455 = vpop.permute.xlu0 %2454
  %2456 = vrot.lane.b32.xlu0 %v1807, 72
  %v2457 = vpop.permute.xlu0 %2456
  %2458 = vrot.lane.b32.xlu0 %v1812, 72
  %v2459 = vpop.permute.xlu0 %2458
  %v2460 = vsel %vm1826, %v2453, 0
  %v2462 = vsel %vm1826, %v2455, 0
  %v2464 = vsel %vm1826, %v2457, 0
  %v2466 = vsel %vm1826, %v2459, 0
  %2468 = vmatprep.subr.mxu0 0.0
  %2469 = vmatpush1.xpose.msra.mxu0 %v2464
  %2470 = vmatprep.subr.mxu0 0.0
  %2471 = vmatpush1.xpose.msra.mxu0 %v2466
  %2472 = vmatprep.subr.mxu0 0.0
  %2473 = vmatpush1.xpose.msra.mxu0 0.0
  %2474 = vmatprep.subr.mxu0 0.0
  %2475 = vmatpush1.xpose.msra.mxu0 0.0
  %2476 = vmatprep.subr.mxu0 0.0
  %2477 = vmatpush1.xpose.msra.mxu0 0.0
  %2478 = vmatprep.subr.mxu0 0.0
  %2479 = vmatpush1.xpose.msra.mxu0 0.0
  %2480 = vmatprep.subr.mxu0 0.0
  %2481 = vmatpush1.xpose.msra.mxu0 0.0
  %2482 = vmatprep.subr.mxu0 0.0
  %2483 = vmatpush1.xpose.msra.mxu0 0.0
  %2484 = vmatprep.subr.mxu0 0.0
  %2485 = vmatpush1.xpose.msra.mxu0 0.0
  %2486 = vmatprep.subr.mxu0 0.0
  %2487 = vmatpush1.xpose.msra.mxu0 0.0
  %2488 = vmatprep.subr.mxu0 0.0
  %2489 = vmatpush1.xpose.msra.mxu0 0.0
  %2490 = vmatprep.subr.mxu0 0.0
  %2491 = vmatpush1.xpose.msra.mxu0 0.0
  %2492 = vmatprep.subr.mxu0 0.0
  %2493 = vmatpush1.xpose.msra.mxu0 0.0
  %2494 = vmatprep.subr.mxu0 0.0
  %2495 = vmatpush1.xpose.msra.mxu0 0.0
  %2496 = vmatprep.subr.mxu0 0.0
  %2497 = vmatpush1.xpose.msra.mxu0 0.0
  %2498 = vmatprep.subr.mxu0 0.0
  %2499 = vmatpush1.xpose.msra.mxu0 0.0
  %2500 = vmatprep.subr.mxu0 0.0
  %2501 = vmatpush1.xpose.msra.mxu0 0.0
  %2502 = vmatprep.subr.mxu0 0.0
  %2503 = vmatpush1.xpose.msra.mxu0 0.0
  %2504 = vmatprep.subr.mxu0 0.0
  %2505 = vmatpush1.xpose.msra.mxu0 0.0
  %2506 = vmatprep.subr.mxu0 0.0
  %2507 = vmatpush1.xpose.msra.mxu0 0.0
  %2508 = vmatprep.subr.mxu0 0.0
  %2509 = vmatpush1.xpose.msra.mxu0 0.0
  %2510 = vmatprep.subr.mxu0 0.0
  %2511 = vmatpush1.xpose.msra.mxu0 0.0
  %2512 = vmatprep.subr.mxu0 0.0
  %2513 = vmatpush1.xpose.msra.mxu0 0.0
  %2514 = vmatprep.subr.mxu0 0.0
  %2515 = vmatpush1.xpose.msra.mxu0 0.0
  %2516 = vmatprep.subr.mxu0 0.0
  %2517 = vmatpush1.xpose.msra.mxu0 0.0
  %2518 = vmatprep.subr.mxu0 0.0
  %2519 = vmatpush1.xpose.msra.mxu0 0.0
  %2520 = vmatprep.subr.mxu0 0.0
  %2521 = vmatpush1.xpose.msra.mxu0 0.0
  %2522 = vmatprep.subr.mxu0 0.0
  %2523 = vmatpush1.xpose.msra.mxu0 0.0
  %2524 = vmatprep.subr.mxu0 0.0
  %2525 = vmatpush1.xpose.msra.mxu0 0.0
  %2526 = vmatprep.subr.mxu0 0.0
  %2527 = vmatpush1.xpose.msra.mxu0 0.0
  %2528 = vmatprep.subr.mxu0 0.0
  %2529 = vmatpush1.xpose.msra.mxu0 0.0
  %2530 = vmatprep.subr.mxu0 0.0
  %2531 = vmatpush1.xpose.msra.mxu0 0.0
  %2532 = vmatprep.mubr.f32.mxu0 0.0
  %2533 = vmatmul.mubr.f32.gmra.mrb[0].mxu0 %v2460
  %v2534 = vpop.f32.mrb[0].mxu0
  %v2535 = vadd.f32 %v1703, %v2534
  %v2536 = vpop.f32.mrb[0].mxu0
  %2537 = vmatprep.mubr.f32.mxu0 0.0
  %2538 = vmatmul.mubr.f32.gmra.mrb[0].mxu0 %v2462
  %v2539 = vpop.f32.mrb[0].mxu0
  %v2540 = vadd.f32 %v1704, %v2539
  %v2541 = vpop.f32.mrb[0].mxu0
  %2542 = vdwg.mxu0
  %v2543 = vsel %vm1910, %v2535, -inf
  %2544 = vmax.xlane.f32.xlu0 %v2543
  %v2545 = vpop.xlane.xlu0 %2544
  %v2546 = vsel %vm1914, %v2540, -inf
  %2547 = vmax.xlane.f32.xlu0 %v2546
  %v2548 = vpop.xlane.xlu0 %2547
  %v2549 = vsub.f32 %v2535, %v2545
  %v2550 = vsub.f32 %v2540, %v2548
  %v2551 = vmul.f32 %v2549, 1.442695
  %v2552 = vpow.pop %v2551
  %v2553 = vmul.f32 %v2550, 1.442695
  %v2554 = vpow.pop %v2553
  %v2555 = vsel %vm1910, %v2552, 0.0
  %2556 = vadd.xlane.f32.xlu0 %v2555
  %v2557 = vpop.xlane.xlu0 %2556
  %v2558 = vsel %vm1914, %v2554, 0.0
  %2559 = vadd.xlane.f32.xlu0 %v2558
  %v2560 = vpop.xlane.xlu0 %2559
  %v2561 = vrcp.pop %v2557
  %v2562 = vrcp.pop %v2560
  %v2563 = vmul.f32 %v2552, %v2561
  %v2564 = vmul.f32 %v2554, %v2562
  %2565 = vrot.lane.b32.xlu0 %v1807, 40
  %v2566 = vpop.permute.xlu0 %2565
  %2567 = vrot.lane.b32.xlu0 %v1812, 40
  %v2568 = vpop.permute.xlu0 %2567
  %v2571 = vsel %vm1910, %v2563, 0
  %v2574 = vsel %vm1910, %v2564, 0
  %v2576 = vsel %vm1945, %v2568, 0
  %2578 = vmatprep.subr.mxu0 0.0
  %2579 = vmatpush1.msra.mxu0 %v2566
  %2580 = vmatprep.subr.mxu0 0.0
  %2581 = vmatpush1.msra.mxu0 %v2576
  %2582 = vmatprep.subr.mxu0 0.0
  %2583 = vmatpush1.msra.mxu0 0.0
  %2584 = vmatprep.subr.mxu0 0.0
  %2585 = vmatpush1.msra.mxu0 0.0
  %2586 = vmatprep.subr.mxu0 0.0
  %2587 = vmatpush1.msra.mxu0 0.0
  %2588 = vmatprep.subr.mxu0 0.0
  %2589 = vmatpush1.msra.mxu0 0.0
  %2590 = vmatprep.subr.mxu0 0.0
  %2591 = vmatpush1.msra.mxu0 0.0
  %2592 = vmatprep.subr.mxu0 0.0
  %2593 = vmatpush1.msra.mxu0 0.0
  %2594 = vmatprep.subr.mxu0 0.0
  %2595 = vmatpush1.msra.mxu0 0.0
  %2596 = vmatprep.subr.mxu0 0.0
  %2597 = vmatpush1.msra.mxu0 0.0
  %2598 = vmatprep.subr.mxu0 0.0
  %2599 = vmatpush1.msra.mxu0 0.0
  %2600 = vmatprep.subr.mxu0 0.0
  %2601 = vmatpush1.msra.mxu0 0.0
  %2602 = vmatprep.subr.mxu0 0.0
  %2603 = vmatpush1.msra.mxu0 0.0
  %2604 = vmatprep.subr.mxu0 0.0
  %2605 = vmatpush1.msra.mxu0 0.0
  %2606 = vmatprep.subr.mxu0 0.0
  %2607 = vmatpush1.msra.mxu0 0.0
  %2608 = vmatprep.subr.mxu0 0.0
  %2609 = vmatpush1.msra.mxu0 0.0
  %2610 = vmatprep.subr.mxu0 0.0
  %2611 = vmatpush1.msra.mxu0 0.0
  %2612 = vmatprep.subr.mxu0 0.0
  %2613 = vmatpush1.msra.mxu0 0.0
  %2614 = vmatprep.subr.mxu0 0.0
  %2615 = vmatpush1.msra.mxu0 0.0
  %2616 = vmatprep.subr.mxu0 0.0
  %2617 = vmatpush1.msra.mxu0 0.0
  %2618 = vmatprep.subr.mxu0 0.0
  %2619 = vmatpush1.msra.mxu0 0.0
  %2620 = vmatprep.subr.mxu0 0.0
  %2621 = vmatpush1.msra.mxu0 0.0
  %2622 = vmatprep.subr.mxu0 0.0
  %2623 = vmatpush1.msra.mxu0 0.0
  %2624 = vmatprep.subr.mxu0 0.0
  %2625 = vmatpush1.msra.mxu0 0.0
  %2626 = vmatprep.subr.mxu0 0.0
  %2627 = vmatpush1.msra.mxu0 0.0
  %2628 = vmatprep.subr.mxu0 0.0
  %2629 = vmatpush1.msra.mxu0 0.0
  %2630 = vmatprep.subr.mxu0 0.0
  %2631 = vmatpush1.msra.mxu0 0.0
  %2632 = vmatprep.subr.mxu0 0.0
  %2633 = vmatpush1.msra.mxu0 0.0
  %2634 = vmatprep.subr.mxu0 0.0
  %2635 = vmatpush1.msra.mxu0 0.0
  %2636 = vmatprep.subr.mxu0 0.0
  %2637 = vmatpush1.msra.mxu0 0.0
  %2638 = vmatprep.subr.mxu0 0.0
  %2639 = vmatpush1.msra.mxu0 0.0
  %2640 = vmatprep.subr.mxu0 0.0
  %2641 = vmatpush1.msra.mxu0 0.0
  %2642 = vmatprep.mubr.f32.mxu0 0.0
  %2643 = vmatmul.mubr.f32.gmra.mrb[0].mxu0 %v2571
  %v2644 = vpop.f32.mrb[0].mxu0
  %v2645 = vadd.f32 0.0, %v2644
  %v2646 = vpop.f32.mrb[0].mxu0
  %2647 = vmatprep.mubr.f32.mxu0 0.0
  %2648 = vmatmul.mubr.f32.gmra.mrb[0].mxu0 %v2574
  %v2649 = vpop.f32.mrb[0].mxu0
  %v2650 = vadd.f32 0.0, %v2649
  %v2651 = vpop.f32.mrb[0].mxu0
  %2652 = vdwg.mxu0
  %2655 = vrot.lane.b32.xlu0 %v2645, 24
  %v2656 = vpop.permute.xlu0 %2655
  %2657 = vrot.lane.b32.xlu0 %v2650, 24
  %v2658 = vpop.permute.xlu0 %2657
  %vm2661 = vcmask 261312
  %2662 = vst.msk [vmem:[#allocation3] sm:$0xff] %vm2661, %v2656
  %vm2663 = vcmask 254144
  %2664 = vst.msk [vmem:[#allocation3 + $0x8] sm:$0x1] %vm2663, %v2658
  %vm2666 = vcmask 1046528
  %v2667 = vrot.slane %v1812, 1
  %v2668 = vrot.slane %v1817, 1
  %v2669 = vsel %vm2666, %v2667, %v2668
  %2670 = vrot.lane.b32.xlu0 %v2669, 96
  %v2671 = vpop.permute.xlu0 %2670
  %2672 = vrot.lane.b32.xlu0 %v2668, 96
  %v2673 = vpop.permute.xlu0 %2672
  %v2674 = vsel %vm1826, %v2669, 0
  %v2676 = vsel %vm1826, %v2668, 0
  %v2678 = vsel %vm1826, %v2671, 0
  %v2680 = vsel %vm1826, %v2673, 0
  %2682 = vmatprep.subr.mxu0 0.0
  %2683 = vmatpush1.xpose.msra.mxu0 %v2678
  %2684 = vmatprep.subr.mxu0 0.0
  %2685 = vmatpush1.xpose.msra.mxu0 %v2680
  %2686 = vmatprep.subr.mxu0 0.0
  %2687 = vmatpush1.xpose.msra.mxu0 0.0
  %2688 = vmatprep.subr.mxu0 0.0
  %2689 = vmatpush1.xpose.msra.mxu0 0.0
  %2690 = vmatprep.subr.mxu0 0.0
  %2691 = vmatpush1.xpose.msra.mxu0 0.0
  %2692 = vmatprep.subr.mxu0 0.0
  %2693 = vmatpush1.xpose.msra.mxu0 0.0
  %2694 = vmatprep.subr.mxu0 0.0
  %2695 = vmatpush1.xpose.msra.mxu0 0.0
  %2696 = vmatprep.subr.mxu0 0.0
  %2697 = vmatpush1.xpose.msra.mxu0 0.0
  %2698 = vmatprep.subr.mxu0 0.0
  %2699 = vmatpush1.xpose.msra.mxu0 0.0
  %2700 = vmatprep.subr.mxu0 0.0
  %2701 = vmatpush1.xpose.msra.mxu0 0.0
  %2702 = vmatprep.subr.mxu0 0.0
  %2703 = vmatpush1.xpose.msra.mxu0 0.0
  %2704 = vmatprep.subr.mxu0 0.0
  %2705 = vmatpush1.xpose.msra.mxu0 0.0
  %2706 = vmatprep.subr.mxu0 0.0
  %2707 = vmatpush1.xpose.msra.mxu0 0.0
  %2708 = vmatprep.subr.mxu0 0.0
  %2709 = vmatpush1.xpose.msra.mxu0 0.0
  %2710 = vmatprep.subr.mxu0 0.0
  %2711 = vmatpush1.xpose.msra.mxu0 0.0
  %2712 = vmatprep.subr.mxu0 0.0
  %2713 = vmatpush1.xpose.msra.mxu0 0.0
  %2714 = vmatprep.subr.mxu0 0.0
  %2715 = vmatpush1.xpose.msra.mxu0 0.0
  %2716 = vmatprep.subr.mxu0 0.0
  %2717 = vmatpush1.xpose.msra.mxu0 0.0
  %2718 = vmatprep.subr.mxu0 0.0
  %2719 = vmatpush1.xpose.msra.mxu0 0.0
  %2720 = vmatprep.subr.mxu0 0.0
  %2721 = vmatpush1.xpose.msra.mxu0 0.0
  %2722 = vmatprep.subr.mxu0 0.0
  %2723 = vmatpush1.xpose.msra.mxu0 0.0
  %2724 = vmatprep.subr.mxu0 0.0
  %2725 = vmatpush1.xpose.msra.mxu0 0.0
  %2726 = vmatprep.subr.mxu0 0.0
  %2727 = vmatpush1.xpose.msra.mxu0 0.0
  %2728 = vmatprep.subr.mxu0 0.0
  %2729 = vmatpush1.xpose.msra.mxu0 0.0
  %2730 = vmatprep.subr.mxu0 0.0
  %2731 = vmatpush1.xpose.msra.mxu0 0.0
  %2732 = vmatprep.subr.mxu0 0.0
  %2733 = vmatpush1.xpose.msra.mxu0 0.0
  %2734 = vmatprep.subr.mxu0 0.0
  %2735 = vmatpush1.xpose.msra.mxu0 0.0
  %2736 = vmatprep.subr.mxu0 0.0
  %2737 = vmatpush1.xpose.msra.mxu0 0.0
  %2738 = vmatprep.subr.mxu0 0.0
  %2739 = vmatpush1.xpose.msra.mxu0 0.0
  %2740 = vmatprep.subr.mxu0 0.0
  %2741 = vmatpush1.xpose.msra.mxu0 0.0
  %2742 = vmatprep.subr.mxu0 0.0
  %2743 = vmatpush1.xpose.msra.mxu0 0.0
  %2744 = vmatprep.subr.mxu0 0.0
  %2745 = vmatpush1.xpose.msra.mxu0 0.0
  %2746 = vmatprep.mubr.f32.mxu0 0.0
  %2747 = vmatmul.mubr.f32.gmra.mrb[0].mxu0 %v2674
  %v2748 = vpop.f32.mrb[0].mxu0
  %v2749 = vadd.f32 %v1703, %v2748
  %v2750 = vpop.f32.mrb[0].mxu0
  %2751 = vmatprep.mubr.f32.mxu0 0.0
  %2752 = vmatmul.mubr.f32.gmra.mrb[0].mxu0 %v2676
  %v2753 = vpop.f32.mrb[0].mxu0
  %v2754 = vadd.f32 %v1704, %v2753
  %v2755 = vpop.f32.mrb[0].mxu0
  %2756 = vdwg.mxu0
  %v2757 = vsel %vm1910, %v2749, -inf
  %2758 = vmax.xlane.f32.xlu0 %v2757
  %v2759 = vpop.xlane.xlu0 %2758
  %v2760 = vsel %vm1914, %v2754, -inf
  %2761 = vmax.xlane.f32.xlu0 %v2760
  %v2762 = vpop.xlane.xlu0 %2761
  %v2763 = vsub.f32 %v2749, %v2759
  %v2764 = vsub.f32 %v2754, %v2762
  %v2765 = vmul.f32 %v2763, 1.442695
  %v2766 = vpow.pop %v2765
  %v2767 = vmul.f32 %v2764, 1.442695
  %v2768 = vpow.pop %v2767
  %v2769 = vsel %vm1910, %v2766, 0.0
  %2770 = vadd.xlane.f32.xlu0 %v2769
  %v2771 = vpop.xlane.xlu0 %2770
  %v2772 = vsel %vm1914, %v2768, 0.0
  %2773 = vadd.xlane.f32.xlu0 %v2772
  %v2774 = vpop.xlane.xlu0 %2773
  %v2775 = vrcp.pop %v2771
  %v2776 = vrcp.pop %v2774
  %v2777 = vmul.f32 %v2766, %v2775
  %v2778 = vmul.f32 %v2768, %v2776
  %2779 = vrot.lane.b32.xlu0 %v2669, 64
  %v2780 = vpop.permute.xlu0 %2779
  %2781 = vrot.lane.b32.xlu0 %v2668, 64
  %v2782 = vpop.permute.xlu0 %2781
  %v2785 = vsel %vm1910, %v2777, 0
  %v2788 = vsel %vm1910, %v2778, 0
  %v2790 = vsel %vm1945, %v2782, 0
  %2792 = vmatprep.subr.mxu0 0.0
  %2793 = vmatpush1.msra.mxu0 %v2780
  %2794 = vmatprep.subr.mxu0 0.0
  %2795 = vmatpush1.msra.mxu0 %v2790
  %2796 = vmatprep.subr.mxu0 0.0
  %2797 = vmatpush1.msra.mxu0 0.0
  %2798 = vmatprep.subr.mxu0 0.0
  %2799 = vmatpush1.msra.mxu0 0.0
  %2800 = vmatprep.subr.mxu0 0.0
  %2801 = vmatpush1.msra.mxu0 0.0
  %2802 = vmatprep.subr.mxu0 0.0
  %2803 = vmatpush1.msra.mxu0 0.0
  %2804 = vmatprep.subr.mxu0 0.0
  %2805 = vmatpush1.msra.mxu0 0.0
  %2806 = vmatprep.subr.mxu0 0.0
  %2807 = vmatpush1.msra.mxu0 0.0
  %2808 = vmatprep.subr.mxu0 0.0
  %2809 = vmatpush1.msra.mxu0 0.0
  %2810 = vmatprep.subr.mxu0 0.0
  %2811 = vmatpush1.msra.mxu0 0.0
  %2812 = vmatprep.subr.mxu0 0.0
  %2813 = vmatpush1.msra.mxu0 0.0
  %2814 = vmatprep.subr.mxu0 0.0
  %2815 = vmatpush1.msra.mxu0 0.0
  %2816 = vmatprep.subr.mxu0 0.0
  %2817 = vmatpush1.msra.mxu0 0.0
  %2818 = vmatprep.subr.mxu0 0.0
  %2819 = vmatpush1.msra.mxu0 0.0
  %2820 = vmatprep.subr.mxu0 0.0
  %2821 = vmatpush1.msra.mxu0 0.0
  %2822 = vmatprep.subr.mxu0 0.0
  %2823 = vmatpush1.msra.mxu0 0.0
  %2824 = vmatprep.subr.mxu0 0.0
  %2825 = vmatpush1.msra.mxu0 0.0
  %2826 = vmatprep.subr.mxu0 0.0
  %2827 = vmatpush1.msra.mxu0 0.0
  %2828 = vmatprep.subr.mxu0 0.0
  %2829 = vmatpush1.msra.mxu0 0.0
  %2830 = vmatprep.subr.mxu0 0.0
  %2831 = vmatpush1.msra.mxu0 0.0
  %2832 = vmatprep.subr.mxu0 0.0
  %2833 = vmatpush1.msra.mxu0 0.0
  %2834 = vmatprep.subr.mxu0 0.0
  %2835 = vmatpush1.msra.mxu0 0.0
  %2836 = vmatprep.subr.mxu0 0.0
  %2837 = vmatpush1.msra.mxu0 0.0
  %2838 = vmatprep.subr.mxu0 0.0
  %2839 = vmatpush1.msra.mxu0 0.0
  %2840 = vmatprep.subr.mxu0 0.0
  %2841 = vmatpush1.msra.mxu0 0.0
  %2842 = vmatprep.subr.mxu0 0.0
  %2843 = vmatpush1.msra.mxu0 0.0
  %2844 = vmatprep.subr.mxu0 0.0
  %2845 = vmatpush1.msra.mxu0 0.0
  %2846 = vmatprep.subr.mxu0 0.0
  %2847 = vmatpush1.msra.mxu0 0.0
  %2848 = vmatprep.subr.mxu0 0.0
  %2849 = vmatpush1.msra.mxu0 0.0
  %2850 = vmatprep.subr.mxu0 0.0
  %2851 = vmatpush1.msra.mxu0 0.0
  %2852 = vmatprep.subr.mxu0 0.0
  %2853 = vmatpush1.msra.mxu0 0.0
  %2854 = vmatprep.subr.mxu0 0.0
  %2855 = vmatpush1.msra.mxu0 0.0
  %2856 = vmatprep.mubr.f32.mxu0 0.0
  %2857 = vmatmul.mubr.f32.gmra.mrb[0].mxu0 %v2785
  %v2858 = vpop.f32.mrb[0].mxu0
  %v2859 = vadd.f32 0.0, %v2858
  %v2860 = vpop.f32.mrb[0].mxu0
  %2861 = vmatprep.mubr.f32.mxu0 0.0
  %2862 = vmatmul.mubr.f32.gmra.mrb[0].mxu0 %v2788
  %v2863 = vpop.f32.mrb[0].mxu0
  %v2864 = vadd.f32 0.0, %v2863
  %v2865 = vpop.f32.mrb[0].mxu0
  %2866 = vdwg.mxu0
  %2867 = vst.msk [vmem:[#allocation3 + $0x9] sm:$0xff] %vm1826, %v2859
  %2868 = vst.msk [vmem:[#allocation3 + $0x11] sm:$0x1] %vm2024, %v2864
  %2869 = vrot.lane.b32.xlu0 %v2669, 120
  %v2870 = vpop.permute.xlu0 %2869
  %2871 = vrot.lane.b32.xlu0 %v2668, 120
  %v2872 = vpop.permute.xlu0 %2871
  %2873 = vrot.lane.b32.xlu0 %v2669, 88
  %v2874 = vpop.permute.xlu0 %2873
  %2875 = vrot.lane.b32.xlu0 %v2668, 88
  %v2876 = vpop.permute.xlu0 %2875
  %v2877 = vsel %vm1826, %v2870, 0
  %v2879 = vsel %vm1826, %v2872, 0
  %v2881 = vsel %vm1826, %v2874, 0
  %v2883 = vsel %vm1826, %v2876, 0
  %2885 = vmatprep.subr.mxu0 0.0
  %2886 = vmatpush1.xpose.msra.mxu0 %v2881
  %2887 = vmatprep.subr.mxu0 0.0
  %2888 = vmatpush1.xpose.msra.mxu0 %v2883
  %2889 = vmatprep.subr.mxu0 0.0
  %2890 = vmatpush1.xpose.msra.mxu0 0.0
  %2891 = vmatprep.subr.mxu0 0.0
  %2892 = vmatpush1.xpose.msra.mxu0 0.0
  %2893 = vmatprep.subr.mxu0 0.0
  %2894 = vmatpush1.xpose.msra.mxu0 0.0
  %2895 = vmatprep.subr.mxu0 0.0
  %2896 = vmatpush1.xpose.msra.mxu0 0.0
  %2897 = vmatprep.subr.mxu0 0.0
  %2898 = vmatpush1.xpose.msra.mxu0 0.0
  %2899 = vmatprep.subr.mxu0 0.0
  %2900 = vmatpush1.xpose.msra.mxu0 0.0
  %2901 = vmatprep.subr.mxu0 0.0
  %2902 = vmatpush1.xpose.msra.mxu0 0.0
  %2903 = vmatprep.subr.mxu0 0.0
  %2904 = vmatpush1.xpose.msra.mxu0 0.0
  %2905 = vmatprep.subr.mxu0 0.0
  %2906 = vmatpush1.xpose.msra.mxu0 0.0
  %2907 = vmatprep.subr.mxu0 0.0
  %2908 = vmatpush1.xpose.msra.mxu0 0.0
  %2909 = vmatprep.subr.mxu0 0.0
  %2910 = vmatpush1.xpose.msra.mxu0 0.0
  %2911 = vmatprep.subr.mxu0 0.0
  %2912 = vmatpush1.xpose.msra.mxu0 0.0
  %2913 = vmatprep.subr.mxu0 0.0
  %2914 = vmatpush1.xpose.msra.mxu0 0.0
  %2915 = vmatprep.subr.mxu0 0.0
  %2916 = vmatpush1.xpose.msra.mxu0 0.0
  %2917 = vmatprep.subr.mxu0 0.0
  %2918 = vmatpush1.xpose.msra.mxu0 0.0
  %2919 = vmatprep.subr.mxu0 0.0
  %2920 = vmatpush1.xpose.msra.mxu0 0.0
  %2921 = vmatprep.subr.mxu0 0.0
  %2922 = vmatpush1.xpose.msra.mxu0 0.0
  %2923 = vmatprep.subr.mxu0 0.0
  %2924 = vmatpush1.xpose.msra.mxu0 0.0
  %2925 = vmatprep.subr.mxu0 0.0
  %2926 = vmatpush1.xpose.msra.mxu0 0.0
  %2927 = vmatprep.subr.mxu0 0.0
  %2928 = vmatpush1.xpose.msra.mxu0 0.0
  %2929 = vmatprep.subr.mxu0 0.0
  %2930 = vmatpush1.xpose.msra.mxu0 0.0
  %2931 = vmatprep.subr.mxu0 0.0
  %2932 = vmatpush1.xpose.msra.mxu0 0.0
  %2933 = vmatprep.subr.mxu0 0.0
  %2934 = vmatpush1.xpose.msra.mxu0 0.0
  %2935 = vmatprep.subr.mxu0 0.0
  %2936 = vmatpush1.xpose.msra.mxu0 0.0
  %2937 = vmatprep.subr.mxu0 0.0
  %2938 = vmatpush1.xpose.msra.mxu0 0.0
  %2939 = vmatprep.subr.mxu0 0.0
  %2940 = vmatpush1.xpose.msra.mxu0 0.0
  %2941 = vmatprep.subr.mxu0 0.0
  %2942 = vmatpush1.xpose.msra.mxu0 0.0
  %2943 = vmatprep.subr.mxu0 0.0
  %2944 = vmatpush1.xpose.msra.mxu0 0.0
  %2945 = vmatprep.subr.mxu0 0.0
  %2946 = vmatpush1.xpose.msra.mxu0 0.0
  %2947 = vmatprep.subr.mxu0 0.0
  %2948 = vmatpush1.xpose.msra.mxu0 0.0
  %2949 = vmatprep.mubr.f32.mxu0 0.0
  %2950 = vmatmul.mubr.f32.gmra.mrb[0].mxu0 %v2877
  %v2951 = vpop.f32.mrb[0].mxu0
  %v2952 = vadd.f32 %v1703, %v2951
  %v2953 = vpop.f32.mrb[0].mxu0
  %2954 = vmatprep.mubr.f32.mxu0 0.0
  %2955 = vmatmul.mubr.f32.gmra.mrb[0].mxu0 %v2879
  %v2956 = vpop.f32.mrb[0].mxu0
  %v2957 = vadd.f32 %v1704, %v2956
  %v2958 = vpop.f32.mrb[0].mxu0
  %2959 = vdwg.mxu0
  %v2960 = vsel %vm1910, %v2952, -inf
  %2961 = vmax.xlane.f32.xlu0 %v2960
  %v2962 = vpop.xlane.xlu0 %2961
  %v2963 = vsel %vm1914, %v2957, -inf
  %2964 = vmax.xlane.f32.xlu0 %v2963
  %v2965 = vpop.xlane.xlu0 %2964
  %v2966 = vsub.f32 %v2952, %v2962
  %v2967 = vsub.f32 %v2957, %v2965
  %v2968 = vmul.f32 %v2966, 1.442695
  %v2969 = vpow.pop %v2968
  %v2970 = vmul.f32 %v2967, 1.442695
  %v2971 = vpow.pop %v2970
  %v2972 = vsel %vm1910, %v2969, 0.0
  %2973 = vadd.xlane.f32.xlu0 %v2972
  %v2974 = vpop.xlane.xlu0 %2973
  %v2975 = vsel %vm1914, %v2971, 0.0
  %2976 = vadd.xlane.f32.xlu0 %v2975
  %v2977 = vpop.xlane.xlu0 %2976
  %v2978 = vrcp.pop %v2974
  %v2979 = vrcp.pop %v2977
  %v2980 = vmul.f32 %v2969, %v2978
  %v2981 = vmul.f32 %v2971, %v2979
  %2982 = vrot.lane.b32.xlu0 %v2669, 56
  %v2983 = vpop.permute.xlu0 %2982
  %2984 = vrot.lane.b32.xlu0 %v2668, 56
  %v2985 = vpop.permute.xlu0 %2984
  %v2988 = vsel %vm1910, %v2980, 0
  %v2991 = vsel %vm1910, %v2981, 0
  %v2993 = vsel %vm1945, %v2985, 0
  %2995 = vmatprep.subr.mxu0 0.0
  %2996 = vmatpush1.msra.mxu0 %v2983
  %2997 = vmatprep.subr.mxu0 0.0
  %2998 = vmatpush1.msra.mxu0 %v2993
  %2999 = vmatprep.subr.mxu0 0.0
  %3000 = vmatpush1.msra.mxu0 0.0
  %3001 = vmatprep.subr.mxu0 0.0
  %3002 = vmatpush1.msra.mxu0 0.0
  %3003 = vmatprep.subr.mxu0 0.0
  %3004 = vmatpush1.msra.mxu0 0.0
  %3005 = vmatprep.subr.mxu0 0.0
  %3006 = vmatpush1.msra.mxu0 0.0
  %3007 = vmatprep.subr.mxu0 0.0
  %3008 = vmatpush1.msra.mxu0 0.0
  %3009 = vmatprep.subr.mxu0 0.0
  %3010 = vmatpush1.msra.mxu0 0.0
  %3011 = vmatprep.subr.mxu0 0.0
  %3012 = vmatpush1.msra.mxu0 0.0
  %3013 = vmatprep.subr.mxu0 0.0
  %3014 = vmatpush1.msra.mxu0 0.0
  %3015 = vmatprep.subr.mxu0 0.0
  %3016 = vmatpush1.msra.mxu0 0.0
  %3017 = vmatprep.subr.mxu0 0.0
  %3018 = vmatpush1.msra.mxu0 0.0
  %3019 = vmatprep.subr.mxu0 0.0
  %3020 = vmatpush1.msra.mxu0 0.0
  %3021 = vmatprep.subr.mxu0 0.0
  %3022 = vmatpush1.msra.mxu0 0.0
  %3023 = vmatprep.subr.mxu0 0.0
  %3024 = vmatpush1.msra.mxu0 0.0
  %3025 = vmatprep.subr.mxu0 0.0
  %3026 = vmatpush1.msra.mxu0 0.0
  %3027 = vmatprep.subr.mxu0 0.0
  %3028 = vmatpush1.msra.mxu0 0.0
  %3029 = vmatprep.subr.mxu0 0.0
  %3030 = vmatpush1.msra.mxu0 0.0
  %3031 = vmatprep.subr.mxu0 0.0
  %3032 = vmatpush1.msra.mxu0 0.0
  %3033 = vmatprep.subr.mxu0 0.0
  %3034 = vmatpush1.msra.mxu0 0.0
  %3035 = vmatprep.subr.mxu0 0.0
  %3036 = vmatpush1.msra.mxu0 0.0
  %3037 = vmatprep.subr.mxu0 0.0
  %3038 = vmatpush1.msra.mxu0 0.0
  %3039 = vmatprep.subr.mxu0 0.0
  %3040 = vmatpush1.msra.mxu0 0.0
  %3041 = vmatprep.subr.mxu0 0.0
  %3042 = vmatpush1.msra.mxu0 0.0
  %3043 = vmatprep.subr.mxu0 0.0
  %3044 = vmatpush1.msra.mxu0 0.0
  %3045 = vmatprep.subr.mxu0 0.0
  %3046 = vmatpush1.msra.mxu0 0.0
  %3047 = vmatprep.subr.mxu0 0.0
  %3048 = vmatpush1.msra.mxu0 0.0
  %3049 = vmatprep.subr.mxu0 0.0
  %3050 = vmatpush1.msra.mxu0 0.0
  %3051 = vmatprep.subr.mxu0 0.0
  %3052 = vmatpush1.msra.mxu0 0.0
  %3053 = vmatprep.subr.mxu0 0.0
  %3054 = vmatpush1.msra.mxu0 0.0
  %3055 = vmatprep.subr.mxu0 0.0
  %3056 = vmatpush1.msra.mxu0 0.0
  %3057 = vmatprep.subr.mxu0 0.0
  %3058 = vmatpush1.msra.mxu0 0.0
  %3059 = vmatprep.mubr.f32.mxu0 0.0
  %3060 = vmatmul.mubr.f32.gmra.mrb[0].mxu0 %v2988
  %v3061 = vpop.f32.mrb[0].mxu0
  %v3062 = vadd.f32 0.0, %v3061
  %v3063 = vpop.f32.mrb[0].mxu0
  %3064 = vmatprep.mubr.f32.mxu0 0.0
  %3065 = vmatmul.mubr.f32.gmra.mrb[0].mxu0 %v2991
  %v3066 = vpop.f32.mrb[0].mxu0
  %v3067 = vadd.f32 0.0, %v3066
  %v3068 = vpop.f32.mrb[0].mxu0
  %3069 = vdwg.mxu0
  %3072 = vrot.lane.b32.xlu0 %v3062, 8
  %v3073 = vpop.permute.xlu0 %3072
  %3074 = vrot.lane.b32.xlu0 %v3067, 8
  %v3075 = vpop.permute.xlu0 %3074
  %3078 = vst.msk [vmem:[#allocation3 + $0x9] sm:$0xff] %vm2235, %v3073
  %3079 = vst.msk [vmem:[#allocation3 + $0x11] sm:$0x1] %vm2237, %v3075
  %3080 = vrot.lane.b32.xlu0 %v2669, 112
  %v3081 = vpop.permute.xlu0 %3080
  %3082 = vrot.lane.b32.xlu0 %v2668, 112
  %v3083 = vpop.permute.xlu0 %3082
  %3084 = vrot.lane.b32.xlu0 %v2669, 80
  %v3085 = vpop.permute.xlu0 %3084
  %3086 = vrot.lane.b32.xlu0 %v2668, 80
  %v3087 = vpop.permute.xlu0 %3086
  %v3088 = vsel %vm1826, %v3081, 0
  %v3090 = vsel %vm1826, %v3083, 0
  %v3092 = vsel %vm1826, %v3085, 0
  %v3094 = vsel %vm1826, %v3087, 0
  %3096 = vmatprep.subr.mxu0 0.0
  %3097 = vmatpush1.xpose.msra.mxu0 %v3092
  %3098 = vmatprep.subr.mxu0 0.0
  %3099 = vmatpush1.xpose.msra.mxu0 %v3094
  %3100 = vmatprep.subr.mxu0 0.0
  %3101 = vmatpush1.xpose.msra.mxu0 0.0
  %3102 = vmatprep.subr.mxu0 0.0
  %3103 = vmatpush1.xpose.msra.mxu0 0.0
  %3104 = vmatprep.subr.mxu0 0.0
  %3105 = vmatpush1.xpose.msra.mxu0 0.0
  %3106 = vmatprep.subr.mxu0 0.0
  %3107 = vmatpush1.xpose.msra.mxu0 0.0
  %3108 = vmatprep.subr.mxu0 0.0
  %3109 = vmatpush1.xpose.msra.mxu0 0.0
  %3110 = vmatprep.subr.mxu0 0.0
  %3111 = vmatpush1.xpose.msra.mxu0 0.0
  %3112 = vmatprep.subr.mxu0 0.0
  %3113 = vmatpush1.xpose.msra.mxu0 0.0
  %3114 = vmatprep.subr.mxu0 0.0
  %3115 = vmatpush1.xpose.msra.mxu0 0.0
  %3116 = vmatprep.subr.mxu0 0.0
  %3117 = vmatpush1.xpose.msra.mxu0 0.0
  %3118 = vmatprep.subr.mxu0 0.0
  %3119 = vmatpush1.xpose.msra.mxu0 0.0
  %3120 = vmatprep.subr.mxu0 0.0
  %3121 = vmatpush1.xpose.msra.mxu0 0.0
  %3122 = vmatprep.subr.mxu0 0.0
  %3123 = vmatpush1.xpose.msra.mxu0 0.0
  %3124 = vmatprep.subr.mxu0 0.0
  %3125 = vmatpush1.xpose.msra.mxu0 0.0
  %3126 = vmatprep.subr.mxu0 0.0
  %3127 = vmatpush1.xpose.msra.mxu0 0.0
  %3128 = vmatprep.subr.mxu0 0.0
  %3129 = vmatpush1.xpose.msra.mxu0 0.0
  %3130 = vmatprep.subr.mxu0 0.0
  %3131 = vmatpush1.xpose.msra.mxu0 0.0
  %3132 = vmatprep.subr.mxu0 0.0
  %3133 = vmatpush1.xpose.msra.mxu0 0.0
  %3134 = vmatprep.subr.mxu0 0.0
  %3135 = vmatpush1.xpose.msra.mxu0 0.0
  %3136 = vmatprep.subr.mxu0 0.0
  %3137 = vmatpush1.xpose.msra.mxu0 0.0
  %3138 = vmatprep.subr.mxu0 0.0
  %3139 = vmatpush1.xpose.msra.mxu0 0.0
  %3140 = vmatprep.subr.mxu0 0.0
  %3141 = vmatpush1.xpose.msra.mxu0 0.0
  %3142 = vmatprep.subr.mxu0 0.0
  %3143 = vmatpush1.xpose.msra.mxu0 0.0
  %3144 = vmatprep.subr.mxu0 0.0
  %3145 = vmatpush1.xpose.msra.mxu0 0.0
  %3146 = vmatprep.subr.mxu0 0.0
  %3147 = vmatpush1.xpose.msra.mxu0 0.0
  %3148 = vmatprep.subr.mxu0 0.0
  %3149 = vmatpush1.xpose.msra.mxu0 0.0
  %3150 = vmatprep.subr.mxu0 0.0
  %3151 = vmatpush1.xpose.msra.mxu0 0.0
  %3152 = vmatprep.subr.mxu0 0.0
  %3153 = vmatpush1.xpose.msra.mxu0 0.0
  %3154 = vmatprep.subr.mxu0 0.0
  %3155 = vmatpush1.xpose.msra.mxu0 0.0
  %3156 = vmatprep.subr.mxu0 0.0
  %3157 = vmatpush1.xpose.msra.mxu0 0.0
  %3158 = vmatprep.subr.mxu0 0.0
  %3159 = vmatpush1.xpose.msra.mxu0 0.0
  %3160 = vmatprep.mubr.f32.mxu0 0.0
  %3161 = vmatmul.mubr.f32.gmra.mrb[0].mxu0 %v3088
  %v3162 = vpop.f32.mrb[0].mxu0
  %v3163 = vadd.f32 %v1703, %v3162
  %v3164 = vpop.f32.mrb[0].mxu0
  %3165 = vmatprep.mubr.f32.mxu0 0.0
  %3166 = vmatmul.mubr.f32.gmra.mrb[0].mxu0 %v3090
  %v3167 = vpop.f32.mrb[0].mxu0
  %v3168 = vadd.f32 %v1704, %v3167
  %v3169 = vpop.f32.mrb[0].mxu0
  %3170 = vdwg.mxu0
  %v3171 = vsel %vm1910, %v3163, -inf
  %3172 = vmax.xlane.f32.xlu0 %v3171
  %v3173 = vpop.xlane.xlu0 %3172
  %v3174 = vsel %vm1914, %v3168, -inf
  %3175 = vmax.xlane.f32.xlu0 %v3174
  %v3176 = vpop.xlane.xlu0 %3175
  %v3177 = vsub.f32 %v3163, %v3173
  %v3178 = vsub.f32 %v3168, %v3176
  %v3179 = vmul.f32 %v3177, 1.442695
  %v3180 = vpow.pop %v3179
  %v3181 = vmul.f32 %v3178, 1.442695
  %v3182 = vpow.pop %v3181
  %v3183 = vsel %vm1910, %v3180, 0.0
  %3184 = vadd.xlane.f32.xlu0 %v3183
  %v3185 = vpop.xlane.xlu0 %3184
  %v3186 = vsel %vm1914, %v3182, 0.0
  %3187 = vadd.xlane.f32.xlu0 %v3186
  %v3188 = vpop.xlane.xlu0 %3187
  %v3189 = vrcp.pop %v3185
  %v3190 = vrcp.pop %v3188
  %v3191 = vmul.f32 %v3180, %v3189
  %v3192 = vmul.f32 %v3182, %v3190
  %3193 = vrot.lane.b32.xlu0 %v2669, 48
  %v3194 = vpop.permute.xlu0 %3193
  %3195 = vrot.lane.b32.xlu0 %v2668, 48
  %v3196 = vpop.permute.xlu0 %3195
  %v3199 = vsel %vm1910, %v3191, 0
  %v3202 = vsel %vm1910, %v3192, 0
  %v3204 = vsel %vm1945, %v3196, 0
  %3206 = vmatprep.subr.mxu0 0.0
  %3207 = vmatpush1.msra.mxu0 %v3194
  %3208 = vmatprep.subr.mxu0 0.0
  %3209 = vmatpush1.msra.mxu0 %v3204
  %3210 = vmatprep.subr.mxu0 0.0
  %3211 = vmatpush1.msra.mxu0 0.0
  %3212 = vmatprep.subr.mxu0 0.0
  %3213 = vmatpush1.msra.mxu0 0.0
  %3214 = vmatprep.subr.mxu0 0.0
  %3215 = vmatpush1.msra.mxu0 0.0
  %3216 = vmatprep.subr.mxu0 0.0
  %3217 = vmatpush1.msra.mxu0 0.0
  %3218 = vmatprep.subr.mxu0 0.0
  %3219 = vmatpush1.msra.mxu0 0.0
  %3220 = vmatprep.subr.mxu0 0.0
  %3221 = vmatpush1.msra.mxu0 0.0
  %3222 = vmatprep.subr.mxu0 0.0
  %3223 = vmatpush1.msra.mxu0 0.0
  %3224 = vmatprep.subr.mxu0 0.0
  %3225 = vmatpush1.msra.mxu0 0.0
  %3226 = vmatprep.subr.mxu0 0.0
  %3227 = vmatpush1.msra.mxu0 0.0
  %3228 = vmatprep.subr.mxu0 0.0
  %3229 = vmatpush1.msra.mxu0 0.0
  %3230 = vmatprep.subr.mxu0 0.0
  %3231 = vmatpush1.msra.mxu0 0.0
  %3232 = vmatprep.subr.mxu0 0.0
  %3233 = vmatpush1.msra.mxu0 0.0
  %3234 = vmatprep.subr.mxu0 0.0
  %3235 = vmatpush1.msra.mxu0 0.0
  %3236 = vmatprep.subr.mxu0 0.0
  %3237 = vmatpush1.msra.mxu0 0.0
  %3238 = vmatprep.subr.mxu0 0.0
  %3239 = vmatpush1.msra.mxu0 0.0
  %3240 = vmatprep.subr.mxu0 0.0
  %3241 = vmatpush1.msra.mxu0 0.0
  %3242 = vmatprep.subr.mxu0 0.0
  %3243 = vmatpush1.msra.mxu0 0.0
  %3244 = vmatprep.subr.mxu0 0.0
  %3245 = vmatpush1.msra.mxu0 0.0
  %3246 = vmatprep.subr.mxu0 0.0
  %3247 = vmatpush1.msra.mxu0 0.0
  %3248 = vmatprep.subr.mxu0 0.0
  %3249 = vmatpush1.msra.mxu0 0.0
  %3250 = vmatprep.subr.mxu0 0.0
  %3251 = vmatpush1.msra.mxu0 0.0
  %3252 = vmatprep.subr.mxu0 0.0
  %3253 = vmatpush1.msra.mxu0 0.0
  %3254 = vmatprep.subr.mxu0 0.0
  %3255 = vmatpush1.msra.mxu0 0.0
  %3256 = vmatprep.subr.mxu0 0.0
  %3257 = vmatpush1.msra.mxu0 0.0
  %3258 = vmatprep.subr.mxu0 0.0
  %3259 = vmatpush1.msra.mxu0 0.0
  %3260 = vmatprep.subr.mxu0 0.0
  %3261 = vmatpush1.msra.mxu0 0.0
  %3262 = vmatprep.subr.mxu0 0.0
  %3263 = vmatpush1.msra.mxu0 0.0
  %3264 = vmatprep.subr.mxu0 0.0
  %3265 = vmatpush1.msra.mxu0 0.0
  %3266 = vmatprep.subr.mxu0 0.0
  %3267 = vmatpush1.msra.mxu0 0.0
  %3268 = vmatprep.subr.mxu0 0.0
  %3269 = vmatpush1.msra.mxu0 0.0
  %3270 = vmatprep.mubr.f32.mxu0 0.0
  %3271 = vmatmul.mubr.f32.gmra.mrb[0].mxu0 %v3199
  %v3272 = vpop.f32.mrb[0].mxu0
  %v3273 = vadd.f32 0.0, %v3272
  %v3274 = vpop.f32.mrb[0].mxu0
  %3275 = vmatprep.mubr.f32.mxu0 0.0
  %3276 = vmatmul.mubr.f32.gmra.mrb[0].mxu0 %v3202
  %v3277 = vpop.f32.mrb[0].mxu0
  %v3278 = vadd.f32 0.0, %v3277
  %v3279 = vpop.f32.mrb[0].mxu0
  %3280 = vdwg.mxu0
  %3283 = vrot.lane.b32.xlu0 %v3273, 16
  %v3284 = vpop.permute.xlu0 %3283
  %3285 = vrot.lane.b32.xlu0 %v3278, 16
  %v3286 = vpop.permute.xlu0 %3285
  %3289 = vst.msk [vmem:[#allocation3 + $0x9] sm:$0xff] %vm2448, %v3284
  %3290 = vst.msk [vmem:[#allocation3 + $0x11] sm:$0x1] %vm2450, %v3286
  %3291 = vrot.lane.b32.xlu0 %v2669, 104
  %v3292 = vpop.permute.xlu0 %3291
  %3293 = vrot.lane.b32.xlu0 %v2668, 104
  %v3294 = vpop.permute.xlu0 %3293
  %3295 = vrot.lane.b32.xlu0 %v2669, 72
  %v3296 = vpop.permute.xlu0 %3295
  %3297 = vrot.lane.b32.xlu0 %v2668, 72
  %v3298 = vpop.permute.xlu0 %3297
  %v3299 = vsel %vm1826, %v3292, 0
  %v3301 = vsel %vm1826, %v3294, 0
  %v3303 = vsel %vm1826, %v3296, 0
  %v3305 = vsel %vm1826, %v3298, 0
  %3307 = vmatprep.subr.mxu0 0.0
  %3308 = vmatpush1.xpose.msra.mxu0 %v3303
  %3309 = vmatprep.subr.mxu0 0.0
  %3310 = vmatpush1.xpose.msra.mxu0 %v3305
  %3311 = vmatprep.subr.mxu0 0.0
  %3312 = vmatpush1.xpose.msra.mxu0 0.0
  %3313 = vmatprep.subr.mxu0 0.0
  %3314 = vmatpush1.xpose.msra.mxu0 0.0
  %3315 = vmatprep.subr.mxu0 0.0
  %3316 = vmatpush1.xpose.msra.mxu0 0.0
  %3317 = vmatprep.subr.mxu0 0.0
  %3318 = vmatpush1.xpose.msra.mxu0 0.0
  %3319 = vmatprep.subr.mxu0 0.0
  %3320 = vmatpush1.xpose.msra.mxu0 0.0
  %3321 = vmatprep.subr.mxu0 0.0
  %3322 = vmatpush1.xpose.msra.mxu0 0.0
  %3323 = vmatprep.subr.mxu0 0.0
  %3324 = vmatpush1.xpose.msra.mxu0 0.0
  %3325 = vmatprep.subr.mxu0 0.0
  %3326 = vmatpush1.xpose.msra.mxu0 0.0
  %3327 = vmatprep.subr.mxu0 0.0
  %3328 = vmatpush1.xpose.msra.mxu0 0.0
  %3329 = vmatprep.subr.mxu0 0.0
  %3330 = vmatpush1.xpose.msra.mxu0 0.0
  %3331 = vmatprep.subr.mxu0 0.0
  %3332 = vmatpush1.xpose.msra.mxu0 0.0
  %3333 = vmatprep.subr.mxu0 0.0
  %3334 = vmatpush1.xpose.msra.mxu0 0.0
  %3335 = vmatprep.subr.mxu0 0.0
  %3336 = vmatpush1.xpose.msra.mxu0 0.0
  %3337 = vmatprep.subr.mxu0 0.0
  %3338 = vmatpush1.xpose.msra.mxu0 0.0
  %3339 = vmatprep.subr.mxu0 0.0
  %3340 = vmatpush1.xpose.msra.mxu0 0.0
  %3341 = vmatprep.subr.mxu0 0.0
  %3342 = vmatpush1.xpose.msra.mxu0 0.0
  %3343 = vmatprep.subr.mxu0 0.0
  %3344 = vmatpush1.xpose.msra.mxu0 0.0
  %3345 = vmatprep.subr.mxu0 0.0
  %3346 = vmatpush1.xpose.msra.mxu0 0.0
  %3347 = vmatprep.subr.mxu0 0.0
  %3348 = vmatpush1.xpose.msra.mxu0 0.0
  %3349 = vmatprep.subr.mxu0 0.0
  %3350 = vmatpush1.xpose.msra.mxu0 0.0
  %3351 = vmatprep.subr.mxu0 0.0
  %3352 = vmatpush1.xpose.msra.mxu0 0.0
  %3353 = vmatprep.subr.mxu0 0.0
  %3354 = vmatpush1.xpose.msra.mxu0 0.0
  %3355 = vmatprep.subr.mxu0 0.0
  %3356 = vmatpush1.xpose.msra.mxu0 0.0
  %3357 = vmatprep.subr.mxu0 0.0
  %3358 = vmatpush1.xpose.msra.mxu0 0.0
  %3359 = vmatprep.subr.mxu0 0.0
  %3360 = vmatpush1.xpose.msra.mxu0 0.0
  %3361 = vmatprep.subr.mxu0 0.0
  %3362 = vmatpush1.xpose.msra.mxu0 0.0
  %3363 = vmatprep.subr.mxu0 0.0
  %3364 = vmatpush1.xpose.msra.mxu0 0.0
  %3365 = vmatprep.subr.mxu0 0.0
  %3366 = vmatpush1.xpose.msra.mxu0 0.0
  %3367 = vmatprep.subr.mxu0 0.0
  %3368 = vmatpush1.xpose.msra.mxu0 0.0
  %3369 = vmatprep.subr.mxu0 0.0
  %3370 = vmatpush1.xpose.msra.mxu0 0.0
  %3371 = vmatprep.mubr.f32.mxu0 0.0
  %3372 = vmatmul.mubr.f32.gmra.mrb[0].mxu0 %v3299
  %v3373 = vpop.f32.mrb[0].mxu0
  %v3374 = vadd.f32 %v1703, %v3373
  %v3375 = vpop.f32.mrb[0].mxu0
  %3376 = vmatprep.mubr.f32.mxu0 0.0
  %3377 = vmatmul.mubr.f32.gmra.mrb[0].mxu0 %v3301
  %v3378 = vpop.f32.mrb[0].mxu0
  %v3379 = vadd.f32 %v1704, %v3378
  %v3380 = vpop.f32.mrb[0].mxu0
  %3381 = vdwg.mxu0
  %v3382 = vsel %vm1910, %v3374, -inf
  %3383 = vmax.xlane.f32.xlu0 %v3382
  %v3384 = vpop.xlane.xlu0 %3383
  %v3385 = vsel %vm1914, %v3379, -inf
  %3386 = vmax.xlane.f32.xlu0 %v3385
  %v3387 = vpop.xlane.xlu0 %3386
  %v3388 = vsub.f32 %v3374, %v3384
  %v3389 = vsub.f32 %v3379, %v3387
  %v3390 = vmul.f32 %v3388, 1.442695
  %v3391 = vpow.pop %v3390
  %v3392 = vmul.f32 %v3389, 1.442695
  %v3393 = vpow.pop %v3392
  %v3394 = vsel %vm1910, %v3391, 0.0
  %3395 = vadd.xlane.f32.xlu0 %v3394
  %v3396 = vpop.xlane.xlu0 %3395
  %v3397 = vsel %vm1914, %v3393, 0.0
  %3398 = vadd.xlane.f32.xlu0 %v3397
  %v3399 = vpop.xlane.xlu0 %3398
  %v3400 = vrcp.pop %v3396
  %v3401 = vrcp.pop %v3399
  %v3402 = vmul.f32 %v3391, %v3400
  %v3403 = vmul.f32 %v3393, %v3401
  %3404 = vrot.lane.b32.xlu0 %v2669, 40
  %v3405 = vpop.permute.xlu0 %3404
  %3406 = vrot.lane.b32.xlu0 %v2668, 40
  %v3407 = vpop.permute.xlu0 %3406
  %v3410 = vsel %vm1910, %v3402, 0
  %v3413 = vsel %vm1910, %v3403, 0
  %v3415 = vsel %vm1945, %v3407, 0
  %3417 = vmatprep.subr.mxu0 0.0
  %3418 = vmatpush1.msra.mxu0 %v3405
  %3419 = vmatprep.subr.mxu0 0.0
  %3420 = vmatpush1.msra.mxu0 %v3415
  %3421 = vmatprep.subr.mxu0 0.0
  %3422 = vmatpush1.msra.mxu0 0.0
  %3423 = vmatprep.subr.mxu0 0.0
  %3424 = vmatpush1.msra.mxu0 0.0
  %3425 = vmatprep.subr.mxu0 0.0
  %3426 = vmatpush1.msra.mxu0 0.0
  %3427 = vmatprep.subr.mxu0 0.0
  %3428 = vmatpush1.msra.mxu0 0.0
  %3429 = vmatprep.subr.mxu0 0.0
  %3430 = vmatpush1.msra.mxu0 0.0
  %3431 = vmatprep.subr.mxu0 0.0
  %3432 = vmatpush1.msra.mxu0 0.0
  %3433 = vmatprep.subr.mxu0 0.0
  %3434 = vmatpush1.msra.mxu0 0.0
  %3435 = vmatprep.subr.mxu0 0.0
  %3436 = vmatpush1.msra.mxu0 0.0
  %3437 = vmatprep.subr.mxu0 0.0
  %3438 = vmatpush1.msra.mxu0 0.0
  %3439 = vmatprep.subr.mxu0 0.0
  %3440 = vmatpush1.msra.mxu0 0.0
  %3441 = vmatprep.subr.mxu0 0.0
  %3442 = vmatpush1.msra.mxu0 0.0
  %3443 = vmatprep.subr.mxu0 0.0
  %3444 = vmatpush1.msra.mxu0 0.0
  %3445 = vmatprep.subr.mxu0 0.0
  %3446 = vmatpush1.msra.mxu0 0.0
  %3447 = vmatprep.subr.mxu0 0.0
  %3448 = vmatpush1.msra.mxu0 0.0
  %3449 = vmatprep.subr.mxu0 0.0
  %3450 = vmatpush1.msra.mxu0 0.0
  %3451 = vmatprep.subr.mxu0 0.0
  %3452 = vmatpush1.msra.mxu0 0.0
  %3453 = vmatprep.subr.mxu0 0.0
  %3454 = vmatpush1.msra.mxu0 0.0
  %3455 = vmatprep.subr.mxu0 0.0
  %3456 = vmatpush1.msra.mxu0 0.0
  %3457 = vmatprep.subr.mxu0 0.0
  %3458 = vmatpush1.msra.mxu0 0.0
  %3459 = vmatprep.subr.mxu0 0.0
  %3460 = vmatpush1.msra.mxu0 0.0
  %3461 = vmatprep.subr.mxu0 0.0
  %3462 = vmatpush1.msra.mxu0 0.0
  %3463 = vmatprep.subr.mxu0 0.0
  %3464 = vmatpush1.msra.mxu0 0.0
  %3465 = vmatprep.subr.mxu0 0.0
  %3466 = vmatpush1.msra.mxu0 0.0
  %3467 = vmatprep.subr.mxu0 0.0
  %3468 = vmatpush1.msra.mxu0 0.0
  %3469 = vmatprep.subr.mxu0 0.0
  %3470 = vmatpush1.msra.mxu0 0.0
  %3471 = vmatprep.subr.mxu0 0.0
  %3472 = vmatpush1.msra.mxu0 0.0
  %3473 = vmatprep.subr.mxu0 0.0
  %3474 = vmatpush1.msra.mxu0 0.0
  %3475 = vmatprep.subr.mxu0 0.0
  %3476 = vmatpush1.msra.mxu0 0.0
  %3477 = vmatprep.subr.mxu0 0.0
  %3478 = vmatpush1.msra.mxu0 0.0
  %3479 = vmatprep.subr.mxu0 0.0
  %3480 = vmatpush1.msra.mxu0 0.0
  %3481 = vmatprep.mubr.f32.mxu0 0.0
  %3482 = vmatmul.mubr.f32.gmra.mrb[0].mxu0 %v3410
  %v3483 = vpop.f32.mrb[0].mxu0
  %v3484 = vadd.f32 0.0, %v3483
  %v3485 = vpop.f32.mrb[0].mxu0
  %3486 = vmatprep.mubr.f32.mxu0 0.0
  %3487 = vmatmul.mubr.f32.gmra.mrb[0].mxu0 %v3413
  %v3488 = vpop.f32.mrb[0].mxu0
  %v3489 = vadd.f32 0.0, %v3488
  %v3490 = vpop.f32.mrb[0].mxu0
  %3491 = vdwg.mxu0
  %3494 = vrot.lane.b32.xlu0 %v3484, 24
  %v3495 = vpop.permute.xlu0 %3494
  %3496 = vrot.lane.b32.xlu0 %v3489, 24
  %v3497 = vpop.permute.xlu0 %3496
  %3500 = vst.msk [vmem:[#allocation3 + $0x9] sm:$0xff] %vm2661, %v3495
  %3501 = vst.msk [vmem:[#allocation3 + $0x11] sm:$0x1] %vm2663, %v3497
  %v3502 = vld [vmem:[#allocation3] sm:$0xff]
  %v3503 = vld [vmem:[#allocation3 + $0x8] sm:$0xff]
  %v3504 = vld [vmem:[#allocation3 + $0x10] sm:$0x3]
  %v3505 = vlaneseq
  %v3506 = vshrl.u32 %v3505, 7
  %v3507 = vsub.s32 0, %v3506
  %v3508 = vrot.slane %v1726, %v3507
  %v3510 = vsel %vm1686, %v3502, 0
  %v3513 = vsel %vm1686, %v3503, 0
  %v3516 = vsel %vm1686, %v3504, 0
  %3518 = vmatprep.subr.mxu0 0.0
  %3519 = vmatpush1.msra.mxu0 %v1709
  %3520 = vmatprep.subr.mxu0 0.0
  %3521 = vmatpush1.msra.mxu0 %v1710
  %3522 = vmatprep.subr.mxu0 0.0
  %3523 = vmatpush1.msra.mxu0 %v1711
  %3524 = vmatprep.subr.mxu0 0.0
  %3525 = vmatpush1.msra.mxu0 %v1712
  %3526 = vmatprep.subr.mxu0 0.0
  %3527 = vmatpush1.msra.mxu0 0.0
  %3528 = vmatprep.subr.mxu0 0.0
  %3529 = vmatpush1.msra.mxu0 0.0
  %3530 = vmatprep.subr.mxu0 0.0
  %3531 = vmatpush1.msra.mxu0 0.0
  %3532 = vmatprep.subr.mxu0 0.0
  %3533 = vmatpush1.msra.mxu0 0.0
  %3534 = vmatprep.subr.mxu0 0.0
  %3535 = vmatpush1.msra.mxu0 0.0
  %3536 = vmatprep.subr.mxu0 0.0
  %3537 = vmatpush1.msra.mxu0 0.0
  %3538 = vmatprep.subr.mxu0 0.0
  %3539 = vmatpush1.msra.mxu0 0.0
  %3540 = vmatprep.subr.mxu0 0.0
  %3541 = vmatpush1.msra.mxu0 0.0
  %3542 = vmatprep.subr.mxu0 0.0
  %3543 = vmatpush1.msra.mxu0 0.0
  %3544 = vmatprep.subr.mxu0 0.0
  %3545 = vmatpush1.msra.mxu0 0.0
  %3546 = vmatprep.subr.mxu0 0.0
  %3547 = vmatpush1.msra.mxu0 0.0
  %3548 = vmatprep.subr.mxu0 0.0
  %3549 = vmatpush1.msra.mxu0 0.0
  %3550 = vmatprep.subr.mxu0 0.0
  %3551 = vmatpush1.msra.mxu0 0.0
  %3552 = vmatprep.subr.mxu0 0.0
  %3553 = vmatpush1.msra.mxu0 0.0
  %3554 = vmatprep.subr.mxu0 0.0
  %3555 = vmatpush1.msra.mxu0 0.0
  %3556 = vmatprep.subr.mxu0 0.0
  %3557 = vmatpush1.msra.mxu0 0.0
  %3558 = vmatprep.subr.mxu0 0.0
  %3559 = vmatpush1.msra.mxu0 0.0
  %3560 = vmatprep.subr.mxu0 0.0
  %3561 = vmatpush1.msra.mxu0 0.0
  %3562 = vmatprep.subr.mxu0 0.0
  %3563 = vmatpush1.msra.mxu0 0.0
  %3564 = vmatprep.subr.mxu0 0.0
  %3565 = vmatpush1.msra.mxu0 0.0
  %3566 = vmatprep.subr.mxu0 0.0
  %3567 = vmatpush1.msra.mxu0 0.0
  %3568 = vmatprep.subr.mxu0 0.0
  %3569 = vmatpush1.msra.mxu0 0.0
  %3570 = vmatprep.subr.mxu0 0.0
  %3571 = vmatpush1.msra.mxu0 0.0
  %3572 = vmatprep.subr.mxu0 0.0
  %3573 = vmatpush1.msra.mxu0 0.0
  %3574 = vmatprep.subr.mxu0 0.0
  %3575 = vmatpush1.msra.mxu0 0.0
  %3576 = vmatprep.subr.mxu0 0.0
  %3577 = vmatpush1.msra.mxu0 0.0
  %3578 = vmatprep.subr.mxu0 0.0
  %3579 = vmatpush1.msra.mxu0 0.0
  %3580 = vmatprep.subr.mxu0 0.0
  %3581 = vmatpush1.msra.mxu0 0.0
  %3582 = vmatprep.mubr.f32.mxu0 0.0
  %3583 = vmatmul.mubr.f32.gmra.mrb[0].mxu0 %v3510
  %v3584 = vpop.f32.mrb[0].mxu0
  %v3585 = vadd.f32 %v3508, %v3584
  %v3586 = vpop.f32.mrb[0].mxu0
  %3587 = vmatprep.mubr.f32.mxu0 0.0
  %3588 = vmatmul.mubr.f32.gmra.mrb[0].mxu0 %v3513
  %v3589 = vpop.f32.mrb[0].mxu0
  %v3590 = vadd.f32 %v3508, %v3589
  %v3591 = vpop.f32.mrb[0].mxu0
  %3592 = vmatprep.mubr.f32.mxu0 0.0
  %3593 = vmatmul.mubr.f32.gmra.mrb[0].mxu0 %v3516
  %v3594 = vpop.f32.mrb[0].mxu0
  %v3595 = vadd.f32 %v3508, %v3594
  %v3596 = vpop.f32.mrb[0].mxu0
  %3597 = vdwg.mxu0
  %v3598 = vadd.f32 %v1693, %v3585
  %v3599 = vadd.f32 %v1694, %v3590
  %v3600 = vadd.f32 %v1695, %v3595
  %v3601 = vsel %vm1686, %v3598, 0.0
  %3602 = vadd.xlane.f32.xlu0 %v3601
  %v3603 = vpop.xlane.xlu0 %3602
  %v3604 = vsel %vm1686, %v3599, 0.0
  %3605 = vadd.xlane.f32.xlu0 %v3604
  %v3606 = vpop.xlane.xlu0 %3605
  %vm3607 = vcmask 254976
  %v3608 = vsel %vm3607, %v3600, 0.0
  %3609 = vadd.xlane.f32.xlu0 %v3608
  %v3610 = vpop.xlane.xlu0 %3609
  %v3611 = vrcp.pop 32.0
  %v3612 = vmul.f32 %v3603, %v3611
  %v3613 = vmul.f32 %v3606, %v3611
  %v3614 = vmul.f32 %v3610, %v3611
  %v3615 = vsub.f32 %v3598, %v3612
  %v3616 = vsub.f32 %v3599, %v3613
  %v3617 = vsub.f32 %v3600, %v3614
  %v3618 = vmul.f32 %v3615, %v3615
  %v3619 = vmul.f32 %v3616, %v3616
  %v3620 = vmul.f32 %v3617, %v3617
  %v3621 = vsel %vm1686, %v3618, 0.0
  %3622 = vadd.xlane.f32.xlu0 %v3621
  %v3623 = vpop.xlane.xlu0 %3622
  %v3624 = vsel %vm1686, %v3619, 0.0
  %3625 = vadd.xlane.f32.xlu0 %v3624
  %v3626 = vpop.xlane.xlu0 %3625
  %v3627 = vsel %vm3607, %v3620, 0.0
  %3628 = vadd.xlane.f32.xlu0 %v3627
  %v3629 = vpop.xlane.xlu0 %3628
  %v3630 = vmul.f32 %v3623, %v3611
  %v3631 = vmul.f32 %v3626, %v3611
  %v3632 = vmul.f32 %v3629, %v3611
  %v3633 = vadd.f32 %v3630, 1e-05
  %v3634 = vadd.f32 %v3631, 1e-05
  %v3635 = vadd.f32 %v3632, 1e-05
  %v3636 = vrsqrt.pop %v3633
  %v3637 = vrsqrt.pop %v3634
  %v3638 = vrsqrt.pop %v3635
  %v3639 = vmul.f32 %v3615, %v3636
  %v3640 = vmul.f32 %v3616, %v3637
  %v3641 = vmul.f32 %v3617, %v3638
  %v3642 = vlaneseq
  %v3643 = vshrl.u32 %v3642, 7
  %v3644 = vsub.s32 1, %v3643
  %v3645 = vrot.slane %v1726, %v3644
  %v3646 = vmul.f32 %v3639, %v3645
  %v3647 = vmul.f32 %v3640, %v3645
  %v3648 = vmul.f32 %v3641, %v3645
  %v3649 = vlaneseq
  %v3650 = vshrl.u32 %v3649, 7
  %v3651 = vsub.s32 2, %v3650
  %v3652 = vrot.slane %v1726, %v3651
  %v3653 = vadd.f32 %v3646, %v3652
  %v3654 = vadd.f32 %v3647, %v3652
  %v3655 = vadd.f32 %v3648, %v3652
  %v3656 = vlaneseq
  %v3657 = vshrl.u32 %v3656, 7
  %v3658 = vsub.s32 1, %v3657
  %v3659 = vrot.slane %v1725, %v3658
  %v3661 = vsel %vm1686, %v3653, 0
  %v3664 = vsel %vm1686, %v3654, 0
  %v3667 = vsel %vm1686, %v3655, 0
  %3669 = vmatprep.subr.mxu0 0.0
  %3670 = vmatpush1.msra.mxu0 %v1713
  %3671 = vmatprep.subr.mxu0 0.0
  %3672 = vmatpush1.msra.mxu0 %v1714
  %3673 = vmatprep.subr.mxu0 0.0
  %3674 = vmatpush1.msra.mxu0 %v1715
  %3675 = vmatprep.subr.mxu0 0.0
  %3676 = vmatpush1.msra.mxu0 %v1716
  %3677 = vmatprep.subr.mxu0 0.0
  %3678 = vmatpush1.msra.mxu0 0.0
  %3679 = vmatprep.subr.mxu0 0.0
  %3680 = vmatpush1.msra.mxu0 0.0
  %3681 = vmatprep.subr.mxu0 0.0
  %3682 = vmatpush1.msra.mxu0 0.0
  %3683 = vmatprep.subr.mxu0 0.0
  %3684 = vmatpush1.msra.mxu0 0.0
  %3685 = vmatprep.subr.mxu0 0.0
  %3686 = vmatpush1.msra.mxu0 0.0
  %3687 = vmatprep.subr.mxu0 0.0
  %3688 = vmatpush1.msra.mxu0 0.0
  %3689 = vmatprep.subr.mxu0 0.0
  %3690 = vmatpush1.msra.mxu0 0.0
  %3691 = vmatprep.subr.mxu0 0.0
  %3692 = vmatpush1.msra.mxu0 0.0
  %3693 = vmatprep.subr.mxu0 0.0
  %3694 = vmatpush1.msra.mxu0 0.0
  %3695 = vmatprep.subr.mxu0 0.0
  %3696 = vmatpush1.msra.mxu0 0.0
  %3697 = vmatprep.subr.mxu0 0.0
  %3698 = vmatpush1.msra.mxu0 0.0
  %3699 = vmatprep.subr.mxu0 0.0
  %3700 = vmatpush1.msra.mxu0 0.0
  %3701 = vmatprep.subr.mxu0 0.0
  %3702 = vmatpush1.msra.mxu0 0.0
  %3703 = vmatprep.subr.mxu0 0.0
  %3704 = vmatpush1.msra.mxu0 0.0
  %3705 = vmatprep.subr.mxu0 0.0
  %3706 = vmatpush1.msra.mxu0 0.0
  %3707 = vmatprep.subr.mxu0 0.0
  %3708 = vmatpush1.msra.mxu0 0.0
  %3709 = vmatprep.subr.mxu0 0.0
  %3710 = vmatpush1.msra.mxu0 0.0
  %3711 = vmatprep.subr.mxu0 0.0
  %3712 = vmatpush1.msra.mxu0 0.0
  %3713 = vmatprep.subr.mxu0 0.0
  %3714 = vmatpush1.msra.mxu0 0.0
  %3715 = vmatprep.subr.mxu0 0.0
  %3716 = vmatpush1.msra.mxu0 0.0
  %3717 = vmatprep.subr.mxu0 0.0
  %3718 = vmatpush1.msra.mxu0 0.0
  %3719 = vmatprep.subr.mxu0 0.0
  %3720 = vmatpush1.msra.mxu0 0.0
  %3721 = vmatprep.subr.mxu0 0.0
  %3722 = vmatpush1.msra.mxu0 0.0
  %3723 = vmatprep.subr.mxu0 0.0
  %3724 = vmatpush1.msra.mxu0 0.0
  %3725 = vmatprep.subr.mxu0 0.0
  %3726 = vmatpush1.msra.mxu0 0.0
  %3727 = vmatprep.subr.mxu0 0.0
  %3728 = vmatpush1.msra.mxu0 0.0
  %3729 = vmatprep.subr.mxu0 0.0
  %3730 = vmatpush1.msra.mxu0 0.0
  %3731 = vmatprep.subr.mxu0 0.0
  %3732 = vmatpush1.msra.mxu0 0.0
  %3733 = vmatprep.mubr.f32.mxu0 0.0
  %3734 = vmatmul.mubr.f32.gmra.mrb[0].mxu0 %v3661
  %v3735 = vpop.f32.mrb[0].mxu0
  %v3736 = vadd.f32 %v3659, %v3735
  %v3737 = vpop.f32.mrb[0].mxu0
  %3738 = vmatprep.mubr.f32.mxu0 0.0
  %3739 = vmatmul.mubr.f32.gmra.mrb[0].mxu0 %v3664
  %v3740 = vpop.f32.mrb[0].mxu0
  %v3741 = vadd.f32 %v3659, %v3740
  %v3742 = vpop.f32.mrb[0].mxu0
  %3743 = vmatprep.mubr.f32.mxu0 0.0
  %3744 = vmatmul.mubr.f32.gmra.mrb[0].mxu0 %v3667
  %v3745 = vpop.f32.mrb[0].mxu0
  %v3746 = vadd.f32 %v3659, %v3745
  %v3747 = vpop.f32.mrb[0].mxu0
  %3748 = vdwg.mxu0
  %v3749 = vmax.f32 %v3736, 0.0
  %v3750 = vmax.f32 %v3741, 0.0
  %v3751 = vmax.f32 %v3746, 0.0
  %v3752 = vlaneseq
  %v3753 = vshrl.u32 %v3752, 7
  %v3754 = vsub.s32 3, %v3753
  %v3755 = vrot.slane %v1726, %v3754
  %vm3756 = vcmask 523264
  %v3758 = vsel %vm3756, %v3749, 0
  %v3761 = vsel %vm3756, %v3750, 0
  %v3764 = vsel %vm3756, %v3751, 0
  %3766 = vmatprep.subr.mxu0 0.0
  %3767 = vmatpush1.msra.mxu0 %v1717
  %3768 = vmatprep.subr.mxu0 0.0
  %3769 = vmatpush1.msra.mxu0 %v1718
  %3770 = vmatprep.subr.mxu0 0.0
  %3771 = vmatpush1.msra.mxu0 %v1719
  %3772 = vmatprep.subr.mxu0 0.0
  %3773 = vmatpush1.msra.mxu0 %v1720
  %3774 = vmatprep.subr.mxu0 0.0
  %3775 = vmatpush1.msra.mxu0 %v1721
  %3776 = vmatprep.subr.mxu0 0.0
  %3777 = vmatpush1.msra.mxu0 %v1722
  %3778 = vmatprep.subr.mxu0 0.0
  %3779 = vmatpush1.msra.mxu0 %v1723
  %3780 = vmatprep.subr.mxu0 0.0
  %3781 = vmatpush1.msra.mxu0 %v1724
  %3782 = vmatprep.subr.mxu0 0.0
  %3783 = vmatpush1.msra.mxu0 0.0
  %3784 = vmatprep.subr.mxu0 0.0
  %3785 = vmatpush1.msra.mxu0 0.0
  %3786 = vmatprep.subr.mxu0 0.0
  %3787 = vmatpush1.msra.mxu0 0.0
  %3788 = vmatprep.subr.mxu0 0.0
  %3789 = vmatpush1.msra.mxu0 0.0
  %3790 = vmatprep.subr.mxu0 0.0
  %3791 = vmatpush1.msra.mxu0 0.0
  %3792 = vmatprep.subr.mxu0 0.0
  %3793 = vmatpush1.msra.mxu0 0.0
  %3794 = vmatprep.subr.mxu0 0.0
  %3795 = vmatpush1.msra.mxu0 0.0
  %3796 = vmatprep.subr.mxu0 0.0
  %3797 = vmatpush1.msra.mxu0 0.0
  %3798 = vmatprep.subr.mxu0 0.0
  %3799 = vmatpush1.msra.mxu0 0.0
  %3800 = vmatprep.subr.mxu0 0.0
  %3801 = vmatpush1.msra.mxu0 0.0
  %3802 = vmatprep.subr.mxu0 0.0
  %3803 = vmatpush1.msra.mxu0 0.0
  %3804 = vmatprep.subr.mxu0 0.0
  %3805 = vmatpush1.msra.mxu0 0.0
  %3806 = vmatprep.subr.mxu0 0.0
  %3807 = vmatpush1.msra.mxu0 0.0
  %3808 = vmatprep.subr.mxu0 0.0
  %3809 = vmatpush1.msra.mxu0 0.0
  %3810 = vmatprep.subr.mxu0 0.0
  %3811 = vmatpush1.msra.mxu0 0.0
  %3812 = vmatprep.subr.mxu0 0.0
  %3813 = vmatpush1.msra.mxu0 0.0
  %3814 = vmatprep.subr.mxu0 0.0
  %3815 = vmatpush1.msra.mxu0 0.0
  %3816 = vmatprep.subr.mxu0 0.0
  %3817 = vmatpush1.msra.mxu0 0.0
  %3818 = vmatprep.subr.mxu0 0.0
  %3819 = vmatpush1.msra.mxu0 0.0
  %3820 = vmatprep.subr.mxu0 0.0
  %3821 = vmatpush1.msra.mxu0 0.0
  %3822 = vmatprep.subr.mxu0 0.0
  %3823 = vmatpush1.msra.mxu0 0.0
  %3824 = vmatprep.subr.mxu0 0.0
  %3825 = vmatpush1.msra.mxu0 0.0
  %3826 = vmatprep.subr.mxu0 0.0
  %3827 = vmatpush1.msra.mxu0 0.0
  %3828 = vmatprep.subr.mxu0 0.0
  %3829 = vmatpush1.msra.mxu0 0.0
  %3830 = vmatprep.mubr.f32.mxu0 0.0
  %3831 = vmatmul.mubr.f32.gmra.mrb[0].mxu0 %v3758
  %v3832 = vpop.f32.mrb[0].mxu0
  %v3833 = vadd.f32 %v3755, %v3832
  %v3834 = vpop.f32.mrb[0].mxu0
  %3835 = vmatprep.mubr.f32.mxu0 0.0
  %3836 = vmatmul.mubr.f32.gmra.mrb[0].mxu0 %v3761
  %v3837 = vpop.f32.mrb[0].mxu0
  %v3838 = vadd.f32 %v3755, %v3837
  %v3839 = vpop.f32.mrb[0].mxu0
  %3840 = vmatprep.mubr.f32.mxu0 0.0
  %3841 = vmatmul.mubr.f32.gmra.mrb[0].mxu0 %v3764
  %v3842 = vpop.f32.mrb[0].mxu0
  %v3843 = vadd.f32 %v3755, %v3842
  %v3844 = vpop.f32.mrb[0].mxu0
  %3845 = vdwg.mxu0
  %v3846 = vadd.f32 %v3653, %v3833
  %v3847 = vadd.f32 %v3654, %v3838
  %v3848 = vadd.f32 %v3655, %v3843
  %v3849 = vsel %vm1686, %v3846, 0.0
  %3850 = vadd.xlane.f32.xlu0 %v3849
  %v3851 = vpop.xlane.xlu0 %3850
  %v3852 = vsel %vm1686, %v3847, 0.0
  %3853 = vadd.xlane.f32.xlu0 %v3852
  %v3854 = vpop.xlane.xlu0 %3853
  %v3855 = vsel %vm3607, %v3848, 0.0
  %3856 = vadd.xlane.f32.xlu0 %v3855
  %v3857 = vpop.xlane.xlu0 %3856
  %v3858 = vmul.f32 %v3851, %v3611
  %v3859 = vmul.f32 %v3854, %v3611
  %v3860 = vmul.f32 %v3857, %v3611
  %v3861 = vsub.f32 %v3846, %v3858
  %v3862 = vsub.f32 %v3847, %v3859
  %v3863 = vsub.f32 %v3848, %v3860
  %v3864 = vmul.f32 %v3861, %v3861
  %v3865 = vmul.f32 %v3862, %v3862
  %v3866 = vmul.f32 %v3863, %v3863
  %v3867 = vsel %vm1686, %v3864, 0.0
  %3868 = vadd.xlane.f32.xlu0 %v3867
  %v3869 = vpop.xlane.xlu0 %3868
  %v3870 = vsel %vm1686, %v3865, 0.0
  %3871 = vadd.xlane.f32.xlu0 %v3870
  %v3872 = vpop.xlane.xlu0 %3871
  %v3873 = vsel %vm3607, %v3866, 0.0
  %3874 = vadd.xlane.f32.xlu0 %v3873
  %v3875 = vpop.xlane.xlu0 %3874
  %v3876 = vmul.f32 %v3869, %v3611
  %v3877 = vmul.f32 %v3872, %v3611
  %v3878 = vmul.f32 %v3875, %v3611
  %v3879 = vadd.f32 %v3876, 1e-05
  %v3880 = vadd.f32 %v3877, 1e-05
  %v3881 = vadd.f32 %v3878, 1e-05
  %v3882 = vrsqrt.pop %v3879
  %v3883 = vrsqrt.pop %v3880
  %v3884 = vrsqrt.pop %v3881
  %v3885 = vmul.f32 %v3861, %v3882
  %v3886 = vmul.f32 %v3862, %v3883
  %v3887 = vmul.f32 %v3863, %v3884
  %v3888 = vlaneseq
  %v3889 = vshrl.u32 %v3888, 7
  %v3890 = vsub.s32 4, %v3889
  %v3891 = vrot.slane %v1726, %v3890
  %v3892 = vmul.f32 %v3885, %v3891
  %v3893 = vmul.f32 %v3886, %v3891
  %v3894 = vmul.f32 %v3887, %v3891
  %v3895 = vlaneseq
  %v3896 = vshrl.u32 %v3895, 7
  %v3897 = vsub.s32 5, %v3896
  %v3898 = vrot.slane %v1726, %v3897
  %v3899 = vadd.f32 %v3892, %v3898
  %v3900 = vadd.f32 %v3893, %v3898
  %v3901 = vadd.f32 %v3894, %v3898
  %s3902 = scalar_lea.vmem %s6, 32
  %v3903 = vld [vmem:[%s3902] sm:$0xff]
  %v3904 = vld [vmem:[%s3902 + $0x8] sm:$0xff]
  %v3905 = vld [vmem:[%s3902 + $0x10] sm:$0xff]
  %v3906 = vld [vmem:[%s3902 + $0x18] sm:$0xff]
  %s3907 = scalar_lea.vmem %s8, 32
  %v3908 = vld [vmem:[%s3907] sm:$0xff]
  %v3909 = vld [vmem:[%s3907 + $0x8] sm:$0xff]
  %v3910 = vld [vmem:[%s3907 + $0x10] sm:$0xff]
  %v3911 = vld [vmem:[%s3907 + $0x18] sm:$0xff]
  %s3912 = scalar_lea.vmem %s10, 32
  %v3913 = vld [vmem:[%s3912] sm:$0xff]
  %v3914 = vld [vmem:[%s3912 + $0x8] sm:$0xff]
  %v3915 = vld [vmem:[%s3912 + $0x10] sm:$0xff]
  %v3916 = vld [vmem:[%s3912 + $0x18] sm:$0xff]
  %s3917 = scalar_lea.vmem %s11, 64
  %v3918 = vld [vmem:[%s3917] sm:$0xff]
  %v3919 = vld [vmem:[%s3917 + $0x8] sm:$0xff]
  %v3920 = vld [vmem:[%s3917 + $0x10] sm:$0xff]
  %v3921 = vld [vmem:[%s3917 + $0x18] sm:$0xff]
  %v3922 = vld [vmem:[%s3917 + $0x20] sm:$0xff]
  %v3923 = vld [vmem:[%s3917 + $0x28] sm:$0xff]
  %v3924 = vld [vmem:[%s3917 + $0x30] sm:$0xff]
  %v3925 = vld [vmem:[%s3917 + $0x38] sm:$0xff]
  %s3926 = scalar_lea.vmem %s7, 2
  %v3927 = vld [vmem:[%s3926] sm:$0x3]
  %s3928 = scalar_lea.vmem %s9, 8
  %v3929 = vld [vmem:[%s3928] sm:$0x3f]
  %v3930 = vlaneseq
  %v3931 = vshrl.u32 %v3930, 7
  %v3932 = vsub.s32 0, %v3931
  %v3933 = vrot.slane %v3927, %v3932
  %v3935 = vsel %vm1686, %v3899, 0
  %v3938 = vsel %vm1686, %v3900, 0
  %v3941 = vsel %vm1686, %v3901, 0
  %3943 = vmatprep.subr.mxu0 0.0
  %3944 = vmatpush1.msra.mxu0 %v3903
  %3945 = vmatprep.subr.mxu0 0.0
  %3946 = vmatpush1.msra.mxu0 %v3904
  %3947 = vmatprep.subr.mxu0 0.0
  %3948 = vmatpush1.msra.mxu0 %v3905
  %3949 = vmatprep.subr.mxu0 0.0
  %3950 = vmatpush1.msra.mxu0 %v3906
  %3951 = vmatprep.subr.mxu0 0.0
  %3952 = vmatpush1.msra.mxu0 0.0
  %3953 = vmatprep.subr.mxu0 0.0
  %3954 = vmatpush1.msra.mxu0 0.0
  %3955 = vmatprep.subr.mxu0 0.0
  %3956 = vmatpush1.msra.mxu0 0.0
  %3957 = vmatprep.subr.mxu0 0.0
  %3958 = vmatpush1.msra.mxu0 0.0
  %3959 = vmatprep.subr.mxu0 0.0
  %3960 = vmatpush1.msra.mxu0 0.0
  %3961 = vmatprep.subr.mxu0 0.0
  %3962 = vmatpush1.msra.mxu0 0.0
  %3963 = vmatprep.subr.mxu0 0.0
  %3964 = vmatpush1.msra.mxu0 0.0
  %3965 = vmatprep.subr.mxu0 0.0
  %3966 = vmatpush1.msra.mxu0 0.0
  %3967 = vmatprep.subr.mxu0 0.0
  %3968 = vmatpush1.msra.mxu0 0.0
  %3969 = vmatprep.subr.mxu0 0.0
  %3970 = vmatpush1.msra.mxu0 0.0
  %3971 = vmatprep.subr.mxu0 0.0
  %3972 = vmatpush1.msra.mxu0 0.0
  %3973 = vmatprep.subr.mxu0 0.0
  %3974 = vmatpush1.msra.mxu0 0.0
  %3975 = vmatprep.subr.mxu0 0.0
  %3976 = vmatpush1.msra.mxu0 0.0
  %3977 = vmatprep.subr.mxu0 0.0
  %3978 = vmatpush1.msra.mxu0 0.0
  %3979 = vmatprep.subr.mxu0 0.0
  %3980 = vmatpush1.msra.mxu0 0.0
  %3981 = vmatprep.subr.mxu0 0.0
  %3982 = vmatpush1.msra.mxu0 0.0
  %3983 = vmatprep.subr.mxu0 0.0
  %3984 = vmatpush1.msra.mxu0 0.0
  %3985 = vmatprep.subr.mxu0 0.0
  %3986 = vmatpush1.msra.mxu0 0.0
  %3987 = vmatprep.subr.mxu0 0.0
  %3988 = vmatpush1.msra.mxu0 0.0
  %3989 = vmatprep.subr.mxu0 0.0
  %3990 = vmatpush1.msra.mxu0 0.0
  %3991 = vmatprep.subr.mxu0 0.0
  %3992 = vmatpush1.msra.mxu0 0.0
  %3993 = vmatprep.subr.mxu0 0.0
  %3994 = vmatpush1.msra.mxu0 0.0
  %3995 = vmatprep.subr.mxu0 0.0
  %3996 = vmatpush1.msra.mxu0 0.0
  %3997 = vmatprep.subr.mxu0 0.0
  %3998 = vmatpush1.msra.mxu0 0.0
  %3999 = vmatprep.subr.mxu0 0.0
  %4000 = vmatpush1.msra.mxu0 0.0
  %4001 = vmatprep.subr.mxu0 0.0
  %4002 = vmatpush1.msra.mxu0 0.0
  %4003 = vmatprep.subr.mxu0 0.0
  %4004 = vmatpush1.msra.mxu0 0.0
  %4005 = vmatprep.subr.mxu0 0.0
  %4006 = vmatpush1.msra.mxu0 0.0
  %4007 = vmatprep.mubr.f32.mxu0 0.0
  %4008 = vmatmul.mubr.f32.gmra.mrb[0].mxu0 %v3935
  %v4009 = vpop.f32.mrb[0].mxu0
  %v4010 = vadd.f32 %v3933, %v4009
  %v4011 = vpop.f32.mrb[0].mxu0
  %4012 = vmatprep.mubr.f32.mxu0 0.0
  %4013 = vmatmul.mubr.f32.gmra.mrb[0].mxu0 %v3938
  %v4014 = vpop.f32.mrb[0].mxu0
  %v4015 = vadd.f32 %v3933, %v4014
  %v4016 = vpop.f32.mrb[0].mxu0
  %4017 = vmatprep.mubr.f32.mxu0 0.0
  %4018 = vmatmul.mubr.f32.gmra.mrb[0].mxu0 %v3941
  %v4019 = vpop.f32.mrb[0].mxu0
  %v4020 = vadd.f32 %v3933, %v4019
  %v4021 = vpop.f32.mrb[0].mxu0
  %4022 = vdwg.mxu0
  %4025 = vrot.lane.b32.xlu0 %v4010, 96
  %v4026 = vpop.permute.xlu0 %4025
  %4027 = vrot.lane.b32.xlu0 %v4015, 96
  %v4028 = vpop.permute.xlu0 %4027
  %v4029 = vsel %vm1826, %v4010, 0
  %v4031 = vsel %vm1826, %v4015, 0
  %v4033 = vsel %vm1826, %v4026, 0
  %v4035 = vsel %vm1826, %v4028, 0
  %4037 = vmatprep.subr.mxu0 0.0
  %4038 = vmatpush1.xpose.msra.mxu0 %v4033
  %4039 = vmatprep.subr.mxu0 0.0
  %4040 = vmatpush1.xpose.msra.mxu0 %v4035
  %4041 = vmatprep.subr.mxu0 0.0
  %4042 = vmatpush1.xpose.msra.mxu0 0.0
  %4043 = vmatprep.subr.mxu0 0.0
  %4044 = vmatpush1.xpose.msra.mxu0 0.0
  %4045 = vmatprep.subr.mxu0 0.0
  %4046 = vmatpush1.xpose.msra.mxu0 0.0
  %4047 = vmatprep.subr.mxu0 0.0
  %4048 = vmatpush1.xpose.msra.mxu0 0.0
  %4049 = vmatprep.subr.mxu0 0.0
  %4050 = vmatpush1.xpose.msra.mxu0 0.0
  %4051 = vmatprep.subr.mxu0 0.0
  %4052 = vmatpush1.xpose.msra.mxu0 0.0
  %4053 = vmatprep.subr.mxu0 0.0
  %4054 = vmatpush1.xpose.msra.mxu0 0.0
  %4055 = vmatprep.subr.mxu0 0.0
  %4056 = vmatpush1.xpose.msra.mxu0 0.0
  %4057 = vmatprep.subr.mxu0 0.0
  %4058 = vmatpush1.xpose.msra.mxu0 0.0
  %4059 = vmatprep.subr.mxu0 0.0
  %4060 = vmatpush1.xpose.msra.mxu0 0.0
  %4061 = vmatprep.subr.mxu0 0.0
  %4062 = vmatpush1.xpose.msra.mxu0 0.0
  %4063 = vmatprep.subr.mxu0 0.0
  %4064 = vmatpush1.xpose.msra.mxu0 0.0
  %4065 = vmatprep.subr.mxu0 0.0
  %4066 = vmatpush1.xpose.msra.mxu0 0.0
  %4067 = vmatprep.subr.mxu0 0.0
  %4068 = vmatpush1.xpose.msra.mxu0 0.0
  %4069 = vmatprep.subr.mxu0 0.0
  %4070 = vmatpush1.xpose.msra.mxu0 0.0
  %4071 = vmatprep.subr.mxu0 0.0
  %4072 = vmatpush1.xpose.msra.mxu0 0.0
  %4073 = vmatprep.subr.mxu0 0.0
  %4074 = vmatpush1.xpose.msra.mxu0 0.0
  %4075 = vmatprep.subr.mxu0 0.0
  %4076 = vmatpush1.xpose.msra.mxu0 0.0
  %4077 = vmatprep.subr.mxu0 0.0
  %4078 = vmatpush1.xpose.msra.mxu0 0.0
  %4079 = vmatprep.subr.mxu0 0.0
  %4080 = vmatpush1.xpose.msra.mxu0 0.0
  %4081 = vmatprep.subr.mxu0 0.0
  %4082 = vmatpush1.xpose.msra.mxu0 0.0
  %4083 = vmatprep.subr.mxu0 0.0
  %4084 = vmatpush1.xpose.msra.mxu0 0.0
  %4085 = vmatprep.subr.mxu0 0.0
  %4086 = vmatpush1.xpose.msra.mxu0 0.0
  %4087 = vmatprep.subr.mxu0 0.0
  %4088 = vmatpush1.xpose.msra.mxu0 0.0
  %4089 = vmatprep.subr.mxu0 0.0
  %4090 = vmatpush1.xpose.msra.mxu0 0.0
  %4091 = vmatprep.subr.mxu0 0.0
  %4092 = vmatpush1.xpose.msra.mxu0 0.0
  %4093 = vmatprep.subr.mxu0 0.0
  %4094 = vmatpush1.xpose.msra.mxu0 0.0
  %4095 = vmatprep.subr.mxu0 0.0
  %4096 = vmatpush1.xpose.msra.mxu0 0.0
  %4097 = vmatprep.subr.mxu0 0.0
  %4098 = vmatpush1.xpose.msra.mxu0 0.0
  %4099 = vmatprep.subr.mxu0 0.0
  %4100 = vmatpush1.xpose.msra.mxu0 0.0
  %4101 = vmatprep.mubr.f32.mxu0 0.0
  %4102 = vmatmul.mubr.f32.gmra.mrb[0].mxu0 %v4029
  %v4103 = vpop.f32.mrb[0].mxu0
  %v4104 = vadd.f32 %v1703, %v4103
  %v4105 = vpop.f32.mrb[0].mxu0
  %4106 = vmatprep.mubr.f32.mxu0 0.0
  %4107 = vmatmul.mubr.f32.gmra.mrb[0].mxu0 %v4031
  %v4108 = vpop.f32.mrb[0].mxu0
  %v4109 = vadd.f32 %v1704, %v4108
  %v4110 = vpop.f32.mrb[0].mxu0
  %4111 = vdwg.mxu0
  %v4112 = vsel %vm1910, %v4104, -inf
  %4113 = vmax.xlane.f32.xlu0 %v4112
  %v4114 = vpop.xlane.xlu0 %4113
  %v4115 = vsel %vm1914, %v4109, -inf
  %4116 = vmax.xlane.f32.xlu0 %v4115
  %v4117 = vpop.xlane.xlu0 %4116
  %v4118 = vsub.f32 %v4104, %v4114
  %v4119 = vsub.f32 %v4109, %v4117
  %v4120 = vmul.f32 %v4118, 1.442695
  %v4121 = vpow.pop %v4120
  %v4122 = vmul.f32 %v4119, 1.442695
  %v4123 = vpow.pop %v4122
  %v4124 = vsel %vm1910, %v4121, 0.0
  %4125 = vadd.xlane.f32.xlu0 %v4124
  %v4126 = vpop.xlane.xlu0 %4125
  %v4127 = vsel %vm1914, %v4123, 0.0
  %4128 = vadd.xlane.f32.xlu0 %v4127
  %v4129 = vpop.xlane.xlu0 %4128
  %v4130 = vrcp.pop %v4126
  %v4131 = vrcp.pop %v4129
  %v4132 = vmul.f32 %v4121, %v4130
  %v4133 = vmul.f32 %v4123, %v4131
  %4134 = vrot.lane.b32.xlu0 %v4010, 64
  %v4135 = vpop.permute.xlu0 %4134
  %4136 = vrot.lane.b32.xlu0 %v4015, 64
  %v4137 = vpop.permute.xlu0 %4136
  %v4140 = vsel %vm1910, %v4132, 0
  %v4143 = vsel %vm1910, %v4133, 0
  %v4145 = vsel %vm1945, %v4137, 0
  %4147 = vmatprep.subr.mxu0 0.0
  %4148 = vmatpush1.msra.mxu0 %v4135
  %4149 = vmatprep.subr.mxu0 0.0
  %4150 = vmatpush1.msra.mxu0 %v4145
  %4151 = vmatprep.subr.mxu0 0.0
  %4152 = vmatpush1.msra.mxu0 0.0
  %4153 = vmatprep.subr.mxu0 0.0
  %4154 = vmatpush1.msra.mxu0 0.0
  %4155 = vmatprep.subr.mxu0 0.0
  %4156 = vmatpush1.msra.mxu0 0.0
  %4157 = vmatprep.subr.mxu0 0.0
  %4158 = vmatpush1.msra.mxu0 0.0
  %4159 = vmatprep.subr.mxu0 0.0
  %4160 = vmatpush1.msra.mxu0 0.0
  %4161 = vmatprep.subr.mxu0 0.0
  %4162 = vmatpush1.msra.mxu0 0.0
  %4163 = vmatprep.subr.mxu0 0.0
  %4164 = vmatpush1.msra.mxu0 0.0
  %4165 = vmatprep.subr.mxu0 0.0
  %4166 = vmatpush1.msra.mxu0 0.0
  %4167 = vmatprep.subr.mxu0 0.0
  %4168 = vmatpush1.msra.mxu0 0.0
  %4169 = vmatprep.subr.mxu0 0.0
  %4170 = vmatpush1.msra.mxu0 0.0
  %4171 = vmatprep.subr.mxu0 0.0
  %4172 = vmatpush1.msra.mxu0 0.0
  %4173 = vmatprep.subr.mxu0 0.0
  %4174 = vmatpush1.msra.mxu0 0.0
  %4175 = vmatprep.subr.mxu0 0.0
  %4176 = vmatpush1.msra.mxu0 0.0
  %4177 = vmatprep.subr.mxu0 0.0
  %4178 = vmatpush1.msra.mxu0 0.0
  %4179 = vmatprep.subr.mxu0 0.0
  %4180 = vmatpush1.msra.mxu0 0.0
  %4181 = vmatprep.subr.mxu0 0.0
  %4182 = vmatpush1.msra.mxu0 0.0
  %4183 = vmatprep.subr.mxu0 0.0
  %4184 = vmatpush1.msra.mxu0 0.0
  %4185 = vmatprep.subr.mxu0 0.0
  %4186 = vmatpush1.msra.mxu0 0.0
  %4187 = vmatprep.subr.mxu0 0.0
  %4188 = vmatpush1.msra.mxu0 0.0
  %4189 = vmatprep.subr.mxu0 0.0
  %4190 = vmatpush1.msra.mxu0 0.0
  %4191 = vmatprep.subr.mxu0 0.0
  %4192 = vmatpush1.msra.mxu0 0.0
  %4193 = vmatprep.subr.mxu0 0.0
  %4194 = vmatpush1.msra.mxu0 0.0
  %4195 = vmatprep.subr.mxu0 0.0
  %4196 = vmatpush1.msra.mxu0 0.0
  %4197 = vmatprep.subr.mxu0 0.0
  %4198 = vmatpush1.msra.mxu0 0.0
  %4199 = vmatprep.subr.mxu0 0.0
  %4200 = vmatpush1.msra.mxu0 0.0
  %4201 = vmatprep.subr.mxu0 0.0
  %4202 = vmatpush1.msra.mxu0 0.0
  %4203 = vmatprep.subr.mxu0 0.0
  %4204 = vmatpush1.msra.mxu0 0.0
  %4205 = vmatprep.subr.mxu0 0.0
  %4206 = vmatpush1.msra.mxu0 0.0
  %4207 = vmatprep.subr.mxu0 0.0
  %4208 = vmatpush1.msra.mxu0 0.0
  %4209 = vmatprep.subr.mxu0 0.0
  %4210 = vmatpush1.msra.mxu0 0.0
  %4211 = vmatprep.mubr.f32.mxu0 0.0
  %4212 = vmatmul.mubr.f32.gmra.mrb[0].mxu0 %v4140
  %v4213 = vpop.f32.mrb[0].mxu0
  %v4214 = vadd.f32 0.0, %v4213
  %v4215 = vpop.f32.mrb[0].mxu0
  %4216 = vmatprep.mubr.f32.mxu0 0.0
  %4217 = vmatmul.mubr.f32.gmra.mrb[0].mxu0 %v4143
  %v4218 = vpop.f32.mrb[0].mxu0
  %v4219 = vadd.f32 0.0, %v4218
  %v4220 = vpop.f32.mrb[0].mxu0
  %4221 = vdwg.mxu0
  %4222 = vst.msk [vmem:[#allocation3] sm:$0xff] %vm1826, %v4214
  %4223 = vst.msk [vmem:[#allocation3 + $0x8] sm:$0x1] %vm2024, %v4219
  %4224 = vrot.lane.b32.xlu0 %v4010, 120
  %v4225 = vpop.permute.xlu0 %4224
  %4226 = vrot.lane.b32.xlu0 %v4015, 120
  %v4227 = vpop.permute.xlu0 %4226
  %4228 = vrot.lane.b32.xlu0 %v4010, 88
  %v4229 = vpop.permute.xlu0 %4228
  %4230 = vrot.lane.b32.xlu0 %v4015, 88
  %v4231 = vpop.permute.xlu0 %4230
  %v4232 = vsel %vm1826, %v4225, 0
  %v4234 = vsel %vm1826, %v4227, 0
  %v4236 = vsel %vm1826, %v4229, 0
  %v4238 = vsel %vm1826, %v4231, 0
  %4240 = vmatprep.subr.mxu0 0.0
  %4241 = vmatpush1.xpose.msra.mxu0 %v4236
  %4242 = vmatprep.subr.mxu0 0.0
  %4243 = vmatpush1.xpose.msra.mxu0 %v4238
  %4244 = vmatprep.subr.mxu0 0.0
  %4245 = vmatpush1.xpose.msra.mxu0 0.0
  %4246 = vmatprep.subr.mxu0 0.0
  %4247 = vmatpush1.xpose.msra.mxu0 0.0
  %4248 = vmatprep.subr.mxu0 0.0
  %4249 = vmatpush1.xpose.msra.mxu0 0.0
  %4250 = vmatprep.subr.mxu0 0.0
  %4251 = vmatpush1.xpose.msra.mxu0 0.0
  %4252 = vmatprep.subr.mxu0 0.0
  %4253 = vmatpush1.xpose.msra.mxu0 0.0
  %4254 = vmatprep.subr.mxu0 0.0
  %4255 = vmatpush1.xpose.msra.mxu0 0.0
  %4256 = vmatprep.subr.mxu0 0.0
  %4257 = vmatpush1.xpose.msra.mxu0 0.0
  %4258 = vmatprep.subr.mxu0 0.0
  %4259 = vmatpush1.xpose.msra.mxu0 0.0
  %4260 = vmatprep.subr.mxu0 0.0
  %4261 = vmatpush1.xpose.msra.mxu0 0.0
  %4262 = vmatprep.subr.mxu0 0.0
  %4263 = vmatpush1.xpose.msra.mxu0 0.0
  %4264 = vmatprep.subr.mxu0 0.0
  %4265 = vmatpush1.xpose.msra.mxu0 0.0
  %4266 = vmatprep.subr.mxu0 0.0
  %4267 = vmatpush1.xpose.msra.mxu0 0.0
  %4268 = vmatprep.subr.mxu0 0.0
  %4269 = vmatpush1.xpose.msra.mxu0 0.0
  %4270 = vmatprep.subr.mxu0 0.0
  %4271 = vmatpush1.xpose.msra.mxu0 0.0
  %4272 = vmatprep.subr.mxu0 0.0
  %4273 = vmatpush1.xpose.msra.mxu0 0.0
  %4274 = vmatprep.subr.mxu0 0.0
  %4275 = vmatpush1.xpose.msra.mxu0 0.0
  %4276 = vmatprep.subr.mxu0 0.0
  %4277 = vmatpush1.xpose.msra.mxu0 0.0
  %4278 = vmatprep.subr.mxu0 0.0
  %4279 = vmatpush1.xpose.msra.mxu0 0.0
  %4280 = vmatprep.subr.mxu0 0.0
  %4281 = vmatpush1.xpose.msra.mxu0 0.0
  %4282 = vmatprep.subr.mxu0 0.0
  %4283 = vmatpush1.xpose.msra.mxu0 0.0
  %4284 = vmatprep.subr.mxu0 0.0
  %4285 = vmatpush1.xpose.msra.mxu0 0.0
  %4286 = vmatprep.subr.mxu0 0.0
  %4287 = vmatpush1.xpose.msra.mxu0 0.0
  %4288 = vmatprep.subr.mxu0 0.0
  %4289 = vmatpush1.xpose.msra.mxu0 0.0
  %4290 = vmatprep.subr.mxu0 0.0
  %4291 = vmatpush1.xpose.msra.mxu0 0.0
  %4292 = vmatprep.subr.mxu0 0.0
  %4293 = vmatpush1.xpose.msra.mxu0 0.0
  %4294 = vmatprep.subr.mxu0 0.0
  %4295 = vmatpush1.xpose.msra.mxu0 0.0
  %4296 = vmatprep.subr.mxu0 0.0
  %4297 = vmatpush1.xpose.msra.mxu0 0.0
  %4298 = vmatprep.subr.mxu0 0.0
  %4299 = vmatpush1.xpose.msra.mxu0 0.0
  %4300 = vmatprep.subr.mxu0 0.0
  %4301 = vmatpush1.xpose.msra.mxu0 0.0
  %4302 = vmatprep.subr.mxu0 0.0
  %4303 = vmatpush1.xpose.msra.mxu0 0.0
  %4304 = vmatprep.mubr.f32.mxu0 0.0
  %4305 = vmatmul.mubr.f32.gmra.mrb[0].mxu0 %v4232
  %v4306 = vpop.f32.mrb[0].mxu0
  %v4307 = vadd.f32 %v1703, %v4306
  %v4308 = vpop.f32.mrb[0].mxu0
  %4309 = vmatprep.mubr.f32.mxu0 0.0
  %4310 = vmatmul.mubr.f32.gmra.mrb[0].mxu0 %v4234
  %v4311 = vpop.f32.mrb[0].mxu0
  %v4312 = vadd.f32 %v1704, %v4311
  %v4313 = vpop.f32.mrb[0].mxu0
  %4314 = vdwg.mxu0
  %v4315 = vsel %vm1910, %v4307, -inf
  %4316 = vmax.xlane.f32.xlu0 %v4315
  %v4317 = vpop.xlane.xlu0 %4316
  %v4318 = vsel %vm1914, %v4312, -inf
  %4319 = vmax.xlane.f32.xlu0 %v4318
  %v4320 = vpop.xlane.xlu0 %4319
  %v4321 = vsub.f32 %v4307, %v4317
  %v4322 = vsub.f32 %v4312, %v4320
  %v4323 = vmul.f32 %v4321, 1.442695
  %v4324 = vpow.pop %v4323
  %v4325 = vmul.f32 %v4322, 1.442695
  %v4326 = vpow.pop %v4325
  %v4327 = vsel %vm1910, %v4324, 0.0
  %4328 = vadd.xlane.f32.xlu0 %v4327
  %v4329 = vpop.xlane.xlu0 %4328
  %v4330 = vsel %vm1914, %v4326, 0.0
  %4331 = vadd.xlane.f32.xlu0 %v4330
  %v4332 = vpop.xlane.xlu0 %4331
  %v4333 = vrcp.pop %v4329
  %v4334 = vrcp.pop %v4332
  %v4335 = vmul.f32 %v4324, %v4333
  %v4336 = vmul.f32 %v4326, %v4334
  %4337 = vrot.lane.b32.xlu0 %v4010, 56
  %v4338 = vpop.permute.xlu0 %4337
  %4339 = vrot.lane.b32.xlu0 %v4015, 56
  %v4340 = vpop.permute.xlu0 %4339
  %v4343 = vsel %vm1910, %v4335, 0
  %v4346 = vsel %vm1910, %v4336, 0
  %v4348 = vsel %vm1945, %v4340, 0
  %4350 = vmatprep.subr.mxu0 0.0
  %4351 = vmatpush1.msra.mxu0 %v4338
  %4352 = vmatprep.subr.mxu0 0.0
  %4353 = vmatpush1.msra.mxu0 %v4348
  %4354 = vmatprep.subr.mxu0 0.0
  %4355 = vmatpush1.msra.mxu0 0.0
  %4356 = vmatprep.subr.mxu0 0.0
  %4357 = vmatpush1.msra.mxu0 0.0
  %4358 = vmatprep.subr.mxu0 0.0
  %4359 = vmatpush1.msra.mxu0 0.0
  %4360 = vmatprep.subr.mxu0 0.0
  %4361 = vmatpush1.msra.mxu0 0.0
  %4362 = vmatprep.subr.mxu0 0.0
  %4363 = vmatpush1.msra.mxu0 0.0
  %4364 = vmatprep.subr.mxu0 0.0
  %4365 = vmatpush1.msra.mxu0 0.0
  %4366 = vmatprep.subr.mxu0 0.0
  %4367 = vmatpush1.msra.mxu0 0.0
  %4368 = vmatprep.subr.mxu0 0.0
  %4369 = vmatpush1.msra.mxu0 0.0
  %4370 = vmatprep.subr.mxu0 0.0
  %4371 = vmatpush1.msra.mxu0 0.0
  %4372 = vmatprep.subr.mxu0 0.0
  %4373 = vmatpush1.msra.mxu0 0.0
  %4374 = vmatprep.subr.mxu0 0.0
  %4375 = vmatpush1.msra.mxu0 0.0
  %4376 = vmatprep.subr.mxu0 0.0
  %4377 = vmatpush1.msra.mxu0 0.0
  %4378 = vmatprep.subr.mxu0 0.0
  %4379 = vmatpush1.msra.mxu0 0.0
  %4380 = vmatprep.subr.mxu0 0.0
  %4381 = vmatpush1.msra.mxu0 0.0
  %4382 = vmatprep.subr.mxu0 0.0
  %4383 = vmatpush1.msra.mxu0 0.0
  %4384 = vmatprep.subr.mxu0 0.0
  %4385 = vmatpush1.msra.mxu0 0.0
  %4386 = vmatprep.subr.mxu0 0.0
  %4387 = vmatpush1.msra.mxu0 0.0
  %4388 = vmatprep.subr.mxu0 0.0
  %4389 = vmatpush1.msra.mxu0 0.0
  %4390 = vmatprep.subr.mxu0 0.0
  %4391 = vmatpush1.msra.mxu0 0.0
  %4392 = vmatprep.subr.mxu0 0.0
  %4393 = vmatpush1.msra.mxu0 0.0
  %4394 = vmatprep.subr.mxu0 0.0
  %4395 = vmatpush1.msra.mxu0 0.0
  %4396 = vmatprep.subr.mxu0 0.0
  %4397 = vmatpush1.msra.mxu0 0.0
  %4398 = vmatprep.subr.mxu0 0.0
  %4399 = vmatpush1.msra.mxu0 0.0
  %4400 = vmatprep.subr.mxu0 0.0
  %4401 = vmatpush1.msra.mxu0 0.0
  %4402 = vmatprep.subr.mxu0 0.0
  %4403 = vmatpush1.msra.mxu0 0.0
  %4404 = vmatprep.subr.mxu0 0.0
  %4405 = vmatpush1.msra.mxu0 0.0
  %4406 = vmatprep.subr.mxu0 0.0
  %4407 = vmatpush1.msra.mxu0 0.0
  %4408 = vmatprep.subr.mxu0 0.0
  %4409 = vmatpush1.msra.mxu0 0.0
  %4410 = vmatprep.subr.mxu0 0.0
  %4411 = vmatpush1.msra.mxu0 0.0
  %4412 = vmatprep.subr.mxu0 0.0
  %4413 = vmatpush1.msra.mxu0 0.0
  %4414 = vmatprep.mubr.f32.mxu0 0.0
  %4415 = vmatmul.mubr.f32.gmra.mrb[0].mxu0 %v4343
  %v4416 = vpop.f32.mrb[0].mxu0
  %v4417 = vadd.f32 0.0, %v4416
  %v4418 = vpop.f32.mrb[0].mxu0
  %4419 = vmatprep.mubr.f32.mxu0 0.0
  %4420 = vmatmul.mubr.f32.gmra.mrb[0].mxu0 %v4346
  %v4421 = vpop.f32.mrb[0].mxu0
  %v4422 = vadd.f32 0.0, %v4421
  %v4423 = vpop.f32.mrb[0].mxu0
  %4424 = vdwg.mxu0
  %4427 = vrot.lane.b32.xlu0 %v4417, 8
  %v4428 = vpop.permute.xlu0 %4427
  %4429 = vrot.lane.b32.xlu0 %v4422, 8
  %v4430 = vpop.permute.xlu0 %4429
  %4433 = vst.msk [vmem:[#allocation3] sm:$0xff] %vm2235, %v4428
  %4434 = vst.msk [vmem:[#allocation3 + $0x8] sm:$0x1] %vm2237, %v4430
  %4435 = vrot.lane.b32.xlu0 %v4010, 112
  %v4436 = vpop.permute.xlu0 %4435
  %4437 = vrot.lane.b32.xlu0 %v4015, 112
  %v4438 = vpop.permute.xlu0 %4437
  %4439 = vrot.lane.b32.xlu0 %v4010, 80
  %v4440 = vpop.permute.xlu0 %4439
  %4441 = vrot.lane.b32.xlu0 %v4015, 80
  %v4442 = vpop.permute.xlu0 %4441
  %v4443 = vsel %vm1826, %v4436, 0
  %v4445 = vsel %vm1826, %v4438, 0
  %v4447 = vsel %vm1826, %v4440, 0
  %v4449 = vsel %vm1826, %v4442, 0
  %4451 = vmatprep.subr.mxu0 0.0
  %4452 = vmatpush1.xpose.msra.mxu0 %v4447
  %4453 = vmatprep.subr.mxu0 0.0
  %4454 = vmatpush1.xpose.msra.mxu0 %v4449
  %4455 = vmatprep.subr.mxu0 0.0
  %4456 = vmatpush1.xpose.msra.mxu0 0.0
  %4457 = vmatprep.subr.mxu0 0.0
  %4458 = vmatpush1.xpose.msra.mxu0 0.0
  %4459 = vmatprep.subr.mxu0 0.0
  %4460 = vmatpush1.xpose.msra.mxu0 0.0
  %4461 = vmatprep.subr.mxu0 0.0
  %4462 = vmatpush1.xpose.msra.mxu0 0.0
  %4463 = vmatprep.subr.mxu0 0.0
  %4464 = vmatpush1.xpose.msra.mxu0 0.0
  %4465 = vmatprep.subr.mxu0 0.0
  %4466 = vmatpush1.xpose.msra.mxu0 0.0
  %4467 = vmatprep.subr.mxu0 0.0
  %4468 = vmatpush1.xpose.msra.mxu0 0.0
  %4469 = vmatprep.subr.mxu0 0.0
  %4470 = vmatpush1.xpose.msra.mxu0 0.0
  %4471 = vmatprep.subr.mxu0 0.0
  %4472 = vmatpush1.xpose.msra.mxu0 0.0
  %4473 = vmatprep.subr.mxu0 0.0
  %4474 = vmatpush1.xpose.msra.mxu0 0.0
  %4475 = vmatprep.subr.mxu0 0.0
  %4476 = vmatpush1.xpose.msra.mxu0 0.0
  %4477 = vmatprep.subr.mxu0 0.0
  %4478 = vmatpush1.xpose.msra.mxu0 0.0
  %4479 = vmatprep.subr.mxu0 0.0
  %4480 = vmatpush1.xpose.msra.mxu0 0.0
  %4481 = vmatprep.subr.mxu0 0.0
  %4482 = vmatpush1.xpose.msra.mxu0 0.0
  %4483 = vmatprep.subr.mxu0 0.0
  %4484 = vmatpush1.xpose.msra.mxu0 0.0
  %4485 = vmatprep.subr.mxu0 0.0
  %4486 = vmatpush1.xpose.msra.mxu0 0.0
  %4487 = vmatprep.subr.mxu0 0.0
  %4488 = vmatpush1.xpose.msra.mxu0 0.0
  %4489 = vmatprep.subr.mxu0 0.0
  %4490 = vmatpush1.xpose.msra.mxu0 0.0
  %4491 = vmatprep.subr.mxu0 0.0
  %4492 = vmatpush1.xpose.msra.mxu0 0.0
  %4493 = vmatprep.subr.mxu0 0.0
  %4494 = vmatpush1.xpose.msra.mxu0 0.0
  %4495 = vmatprep.subr.mxu0 0.0
  %4496 = vmatpush1.xpose.msra.mxu0 0.0
  %4497 = vmatprep.subr.mxu0 0.0
  %4498 = vmatpush1.xpose.msra.mxu0 0.0
  %4499 = vmatprep.subr.mxu0 0.0
  %4500 = vmatpush1.xpose.msra.mxu0 0.0
  %4501 = vmatprep.subr.mxu0 0.0
  %4502 = vmatpush1.xpose.msra.mxu0 0.0
  %4503 = vmatprep.subr.mxu0 0.0
  %4504 = vmatpush1.xpose.msra.mxu0 0.0
  %4505 = vmatprep.subr.mxu0 0.0
  %4506 = vmatpush1.xpose.msra.mxu0 0.0
  %4507 = vmatprep.subr.mxu0 0.0
  %4508 = vmatpush1.xpose.msra.mxu0 0.0
  %4509 = vmatprep.subr.mxu0 0.0
  %4510 = vmatpush1.xpose.msra.mxu0 0.0
  %4511 = vmatprep.subr.mxu0 0.0
  %4512 = vmatpush1.xpose.msra.mxu0 0.0
  %4513 = vmatprep.subr.mxu0 0.0
  %4514 = vmatpush1.xpose.msra.mxu0 0.0
  %4515 = vmatprep.mubr.f32.mxu0 0.0
  %4516 = vmatmul.mubr.f32.gmra.mrb[0].mxu0 %v4443
  %v4517 = vpop.f32.mrb[0].mxu0
  %v4518 = vadd.f32 %v1703, %v4517
  %v4519 = vpop.f32.mrb[0].mxu0
  %4520 = vmatprep.mubr.f32.mxu0 0.0
  %4521 = vmatmul.mubr.f32.gmra.mrb[0].mxu0 %v4445
  %v4522 = vpop.f32.mrb[0].mxu0
  %v4523 = vadd.f32 %v1704, %v4522
  %v4524 = vpop.f32.mrb[0].mxu0
  %4525 = vdwg.mxu0
  %v4526 = vsel %vm1910, %v4518, -inf
  %4527 = vmax.xlane.f32.xlu0 %v4526
  %v4528 = vpop.xlane.xlu0 %4527
  %v4529 = vsel %vm1914, %v4523, -inf
  %4530 = vmax.xlane.f32.xlu0 %v4529
  %v4531 = vpop.xlane.xlu0 %4530
  %v4532 = vsub.f32 %v4518, %v4528
  %v4533 = vsub.f32 %v4523, %v4531
  %v4534 = vmul.f32 %v4532, 1.442695
  %v4535 = vpow.pop %v4534
  %v4536 = vmul.f32 %v4533, 1.442695
  %v4537 = vpow.pop %v4536
  %v4538 = vsel %vm1910, %v4535, 0.0
  %4539 = vadd.xlane.f32.xlu0 %v4538
  %v4540 = vpop.xlane.xlu0 %4539
  %v4541 = vsel %vm1914, %v4537, 0.0
  %4542 = vadd.xlane.f32.xlu0 %v4541
  %v4543 = vpop.xlane.xlu0 %4542
  %v4544 = vrcp.pop %v4540
  %v4545 = vrcp.pop %v4543
  %v4546 = vmul.f32 %v4535, %v4544
  %v4547 = vmul.f32 %v4537, %v4545
  %4548 = vrot.lane.b32.xlu0 %v4010, 48
  %v4549 = vpop.permute.xlu0 %4548
  %4550 = vrot.lane.b32.xlu0 %v4015, 48
  %v4551 = vpop.permute.xlu0 %4550
  %v4554 = vsel %vm1910, %v4546, 0
  %v4557 = vsel %vm1910, %v4547, 0
  %v4559 = vsel %vm1945, %v4551, 0
  %4561 = vmatprep.subr.mxu0 0.0
  %4562 = vmatpush1.msra.mxu0 %v4549
  %4563 = vmatprep.subr.mxu0 0.0
  %4564 = vmatpush1.msra.mxu0 %v4559
  %4565 = vmatprep.subr.mxu0 0.0
  %4566 = vmatpush1.msra.mxu0 0.0
  %4567 = vmatprep.subr.mxu0 0.0
  %4568 = vmatpush1.msra.mxu0 0.0
  %4569 = vmatprep.subr.mxu0 0.0
  %4570 = vmatpush1.msra.mxu0 0.0
  %4571 = vmatprep.subr.mxu0 0.0
  %4572 = vmatpush1.msra.mxu0 0.0
  %4573 = vmatprep.subr.mxu0 0.0
  %4574 = vmatpush1.msra.mxu0 0.0
  %4575 = vmatprep.subr.mxu0 0.0
  %4576 = vmatpush1.msra.mxu0 0.0
  %4577 = vmatprep.subr.mxu0 0.0
  %4578 = vmatpush1.msra.mxu0 0.0
  %4579 = vmatprep.subr.mxu0 0.0
  %4580 = vmatpush1.msra.mxu0 0.0
  %4581 = vmatprep.subr.mxu0 0.0
  %4582 = vmatpush1.msra.mxu0 0.0
  %4583 = vmatprep.subr.mxu0 0.0
  %4584 = vmatpush1.msra.mxu0 0.0
  %4585 = vmatprep.subr.mxu0 0.0
  %4586 = vmatpush1.msra.mxu0 0.0
  %4587 = vmatprep.subr.mxu0 0.0
  %4588 = vmatpush1.msra.mxu0 0.0
  %4589 = vmatprep.subr.mxu0 0.0
  %4590 = vmatpush1.msra.mxu0 0.0
  %4591 = vmatprep.subr.mxu0 0.0
  %4592 = vmatpush1.msra.mxu0 0.0
  %4593 = vmatprep.subr.mxu0 0.0
  %4594 = vmatpush1.msra.mxu0 0.0
  %4595 = vmatprep.subr.mxu0 0.0
  %4596 = vmatpush1.msra.mxu0 0.0
  %4597 = vmatprep.subr.mxu0 0.0
  %4598 = vmatpush1.msra.mxu0 0.0
  %4599 = vmatprep.subr.mxu0 0.0
  %4600 = vmatpush1.msra.mxu0 0.0
  %4601 = vmatprep.subr.mxu0 0.0
  %4602 = vmatpush1.msra.mxu0 0.0
  %4603 = vmatprep.subr.mxu0 0.0
  %4604 = vmatpush1.msra.mxu0 0.0
  %4605 = vmatprep.subr.mxu0 0.0
  %4606 = vmatpush1.msra.mxu0 0.0
  %4607 = vmatprep.subr.mxu0 0.0
  %4608 = vmatpush1.msra.mxu0 0.0
  %4609 = vmatprep.subr.mxu0 0.0
  %4610 = vmatpush1.msra.mxu0 0.0
  %4611 = vmatprep.subr.mxu0 0.0
  %4612 = vmatpush1.msra.mxu0 0.0
  %4613 = vmatprep.subr.mxu0 0.0
  %4614 = vmatpush1.msra.mxu0 0.0
  %4615 = vmatprep.subr.mxu0 0.0
  %4616 = vmatpush1.msra.mxu0 0.0
  %4617 = vmatprep.subr.mxu0 0.0
  %4618 = vmatpush1.msra.mxu0 0.0
  %4619 = vmatprep.subr.mxu0 0.0
  %4620 = vmatpush1.msra.mxu0 0.0
  %4621 = vmatprep.subr.mxu0 0.0
  %4622 = vmatpush1.msra.mxu0 0.0
  %4623 = vmatprep.subr.mxu0 0.0
  %4624 = vmatpush1.msra.mxu0 0.0
  %4625 = vmatprep.mubr.f32.mxu0 0.0
  %4626 = vmatmul.mubr.f32.gmra.mrb[0].mxu0 %v4554
  %v4627 = vpop.f32.mrb[0].mxu0
  %v4628 = vadd.f32 0.0, %v4627
  %v4629 = vpop.f32.mrb[0].mxu0
  %4630 = vmatprep.mubr.f32.mxu0 0.0
  %4631 = vmatmul.mubr.f32.gmra.mrb[0].mxu0 %v4557
  %v4632 = vpop.f32.mrb[0].mxu0
  %v4633 = vadd.f32 0.0, %v4632
  %v4634 = vpop.f32.mrb[0].mxu0
  %4635 = vdwg.mxu0
  %4638 = vrot.lane.b32.xlu0 %v4628, 16
  %v4639 = vpop.permute.xlu0 %4638
  %4640 = vrot.lane.b32.xlu0 %v4633, 16
  %v4641 = vpop.permute.xlu0 %4640
  %4644 = vst.msk [vmem:[#allocation3] sm:$0xff] %vm2448, %v4639
  %4645 = vst.msk [vmem:[#allocation3 + $0x8] sm:$0x1] %vm2450, %v4641
  %4646 = vrot.lane.b32.xlu0 %v4010, 104
  %v4647 = vpop.permute.xlu0 %4646
  %4648 = vrot.lane.b32.xlu0 %v4015, 104
  %v4649 = vpop.permute.xlu0 %4648
  %4650 = vrot.lane.b32.xlu0 %v4010, 72
  %v4651 = vpop.permute.xlu0 %4650
  %4652 = vrot.lane.b32.xlu0 %v4015, 72
  %v4653 = vpop.permute.xlu0 %4652
  %v4654 = vsel %vm1826, %v4647, 0
  %v4656 = vsel %vm1826, %v4649, 0
  %v4658 = vsel %vm1826, %v4651, 0
  %v4660 = vsel %vm1826, %v4653, 0
  %4662 = vmatprep.subr.mxu0 0.0
  %4663 = vmatpush1.xpose.msra.mxu0 %v4658
  %4664 = vmatprep.subr.mxu0 0.0
  %4665 = vmatpush1.xpose.msra.mxu0 %v4660
  %4666 = vmatprep.subr.mxu0 0.0
  %4667 = vmatpush1.xpose.msra.mxu0 0.0
  %4668 = vmatprep.subr.mxu0 0.0
  %4669 = vmatpush1.xpose.msra.mxu0 0.0
  %4670 = vmatprep.subr.mxu0 0.0
  %4671 = vmatpush1.xpose.msra.mxu0 0.0
  %4672 = vmatprep.subr.mxu0 0.0
  %4673 = vmatpush1.xpose.msra.mxu0 0.0
  %4674 = vmatprep.subr.mxu0 0.0
  %4675 = vmatpush1.xpose.msra.mxu0 0.0
  %4676 = vmatprep.subr.mxu0 0.0
  %4677 = vmatpush1.xpose.msra.mxu0 0.0
  %4678 = vmatprep.subr.mxu0 0.0
  %4679 = vmatpush1.xpose.msra.mxu0 0.0
  %4680 = vmatprep.subr.mxu0 0.0
  %4681 = vmatpush1.xpose.msra.mxu0 0.0
  %4682 = vmatprep.subr.mxu0 0.0
  %4683 = vmatpush1.xpose.msra.mxu0 0.0
  %4684 = vmatprep.subr.mxu0 0.0
  %4685 = vmatpush1.xpose.msra.mxu0 0.0
  %4686 = vmatprep.subr.mxu0 0.0
  %4687 = vmatpush1.xpose.msra.mxu0 0.0
  %4688 = vmatprep.subr.mxu0 0.0
  %4689 = vmatpush1.xpose.msra.mxu0 0.0
  %4690 = vmatprep.subr.mxu0 0.0
  %4691 = vmatpush1.xpose.msra.mxu0 0.0
  %4692 = vmatprep.subr.mxu0 0.0
  %4693 = vmatpush1.xpose.msra.mxu0 0.0
  %4694 = vmatprep.subr.mxu0 0.0
  %4695 = vmatpush1.xpose.msra.mxu0 0.0
  %4696 = vmatprep.subr.mxu0 0.0
  %4697 = vmatpush1.xpose.msra.mxu0 0.0
  %4698 = vmatprep.subr.mxu0 0.0
  %4699 = vmatpush1.xpose.msra.mxu0 0.0
  %4700 = vmatprep.subr.mxu0 0.0
  %4701 = vmatpush1.xpose.msra.mxu0 0.0
  %4702 = vmatprep.subr.mxu0 0.0
  %4703 = vmatpush1.xpose.msra.mxu0 0.0
  %4704 = vmatprep.subr.mxu0 0.0
  %4705 = vmatpush1.xpose.msra.mxu0 0.0
  %4706 = vmatprep.subr.mxu0 0.0
  %4707 = vmatpush1.xpose.msra.mxu0 0.0
  %4708 = vmatprep.subr.mxu0 0.0
  %4709 = vmatpush1.xpose.msra.mxu0 0.0
  %4710 = vmatprep.subr.mxu0 0.0
  %4711 = vmatpush1.xpose.msra.mxu0 0.0
  %4712 = vmatprep.subr.mxu0 0.0
  %4713 = vmatpush1.xpose.msra.mxu0 0.0
  %4714 = vmatprep.subr.mxu0 0.0
  %4715 = vmatpush1.xpose.msra.mxu0 0.0
  %4716 = vmatprep.subr.mxu0 0.0
  %4717 = vmatpush1.xpose.msra.mxu0 0.0
  %4718 = vmatprep.subr.mxu0 0.0
  %4719 = vmatpush1.xpose.msra.mxu0 0.0
  %4720 = vmatprep.subr.mxu0 0.0
  %4721 = vmatpush1.xpose.msra.mxu0 0.0
  %4722 = vmatprep.subr.mxu0 0.0
  %4723 = vmatpush1.xpose.msra.mxu0 0.0
  %4724 = vmatprep.subr.mxu0 0.0
  %4725 = vmatpush1.xpose.msra.mxu0 0.0
  %4726 = vmatprep.mubr.f32.mxu0 0.0
  %4727 = vmatmul.mubr.f32.gmra.mrb[0].mxu0 %v4654
  %v4728 = vpop.f32.mrb[0].mxu0
  %v4729 = vadd.f32 %v1703, %v4728
  %v4730 = vpop.f32.mrb[0].mxu0
  %4731 = vmatprep.mubr.f32.mxu0 0.0
  %4732 = vmatmul.mubr.f32.gmra.mrb[0].mxu0 %v4656
  %v4733 = vpop.f32.mrb[0].mxu0
  %v4734 = vadd.f32 %v1704, %v4733
  %v4735 = vpop.f32.mrb[0].mxu0
  %4736 = vdwg.mxu0
  %v4737 = vsel %vm1910, %v4729, -inf
  %4738 = vmax.xlane.f32.xlu0 %v4737
  %v4739 = vpop.xlane.xlu0 %4738
  %v4740 = vsel %vm1914, %v4734, -inf
  %4741 = vmax.xlane.f32.xlu0 %v4740
  %v4742 = vpop.xlane.xlu0 %4741
  %v4743 = vsub.f32 %v4729, %v4739
  %v4744 = vsub.f32 %v4734, %v4742
  %v4745 = vmul.f32 %v4743, 1.442695
  %v4746 = vpow.pop %v4745
  %v4747 = vmul.f32 %v4744, 1.442695
  %v4748 = vpow.pop %v4747
  %v4749 = vsel %vm1910, %v4746, 0.0
  %4750 = vadd.xlane.f32.xlu0 %v4749
  %v4751 = vpop.xlane.xlu0 %4750
  %v4752 = vsel %vm1914, %v4748, 0.0
  %4753 = vadd.xlane.f32.xlu0 %v4752
  %v4754 = vpop.xlane.xlu0 %4753
  %v4755 = vrcp.pop %v4751
  %v4756 = vrcp.pop %v4754
  %v4757 = vmul.f32 %v4746, %v4755
  %v4758 = vmul.f32 %v4748, %v4756
  %4759 = vrot.lane.b32.xlu0 %v4010, 40
  %v4760 = vpop.permute.xlu0 %4759
  %4761 = vrot.lane.b32.xlu0 %v4015, 40
  %v4762 = vpop.permute.xlu0 %4761
  %v4765 = vsel %vm1910, %v4757, 0
  %v4768 = vsel %vm1910, %v4758, 0
  %v4770 = vsel %vm1945, %v4762, 0
  %4772 = vmatprep.subr.mxu0 0.0
  %4773 = vmatpush1.msra.mxu0 %v4760
  %4774 = vmatprep.subr.mxu0 0.0
  %4775 = vmatpush1.msra.mxu0 %v4770
  %4776 = vmatprep.subr.mxu0 0.0
  %4777 = vmatpush1.msra.mxu0 0.0
  %4778 = vmatprep.subr.mxu0 0.0
  %4779 = vmatpush1.msra.mxu0 0.0
  %4780 = vmatprep.subr.mxu0 0.0
  %4781 = vmatpush1.msra.mxu0 0.0
  %4782 = vmatprep.subr.mxu0 0.0
  %4783 = vmatpush1.msra.mxu0 0.0
  %4784 = vmatprep.subr.mxu0 0.0
  %4785 = vmatpush1.msra.mxu0 0.0
  %4786 = vmatprep.subr.mxu0 0.0
  %4787 = vmatpush1.msra.mxu0 0.0
  %4788 = vmatprep.subr.mxu0 0.0
  %4789 = vmatpush1.msra.mxu0 0.0
  %4790 = vmatprep.subr.mxu0 0.0
  %4791 = vmatpush1.msra.mxu0 0.0
  %4792 = vmatprep.subr.mxu0 0.0
  %4793 = vmatpush1.msra.mxu0 0.0
  %4794 = vmatprep.subr.mxu0 0.0
  %4795 = vmatpush1.msra.mxu0 0.0
  %4796 = vmatprep.subr.mxu0 0.0
  %4797 = vmatpush1.msra.mxu0 0.0
  %4798 = vmatprep.subr.mxu0 0.0
  %4799 = vmatpush1.msra.mxu0 0.0
  %4800 = vmatprep.subr.mxu0 0.0
  %4801 = vmatpush1.msra.mxu0 0.0
  %4802 = vmatprep.subr.mxu0 0.0
  %4803 = vmatpush1.msra.mxu0 0.0
  %4804 = vmatprep.subr.mxu0 0.0
  %4805 = vmatpush1.msra.mxu0 0.0
  %4806 = vmatprep.subr.mxu0 0.0
  %4807 = vmatpush1.msra.mxu0 0.0
  %4808 = vmatprep.subr.mxu0 0.0
  %4809 = vmatpush1.msra.mxu0 0.0
  %4810 = vmatprep.subr.mxu0 0.0
  %4811 = vmatpush1.msra.mxu0 0.0
  %4812 = vmatprep.subr.mxu0 0.0
  %4813 = vmatpush1.msra.mxu0 0.0
  %4814 = vmatprep.subr.mxu0 0.0
  %4815 = vmatpush1.msra.mxu0 0.0
  %4816 = vmatprep.subr.mxu0 0.0
  %4817 = vmatpush1.msra.mxu0 0.0
  %4818 = vmatprep.subr.mxu0 0.0
  %4819 = vmatpush1.msra.mxu0 0.0
  %4820 = vmatprep.subr.mxu0 0.0
  %4821 = vmatpush1.msra.mxu0 0.0
  %4822 = vmatprep.subr.mxu0 0.0
  %4823 = vmatpush1.msra.mxu0 0.0
  %4824 = vmatprep.subr.mxu0 0.0
  %4825 = vmatpush1.msra.mxu0 0.0
  %4826 = vmatprep.subr.mxu0 0.0
  %4827 = vmatpush1.msra.mxu0 0.0
  %4828 = vmatprep.subr.mxu0 0.0
  %4829 = vmatpush1.msra.mxu0 0.0
  %4830 = vmatprep.subr.mxu0 0.0
  %4831 = vmatpush1.msra.mxu0 0.0
  %4832 = vmatprep.subr.mxu0 0.0
  %4833 = vmatpush1.msra.mxu0 0.0
  %4834 = vmatprep.subr.mxu0 0.0
  %4835 = vmatpush1.msra.mxu0 0.0
  %4836 = vmatprep.mubr.f32.mxu0 0.0
  %4837 = vmatmul.mubr.f32.gmra.mrb[0].mxu0 %v4765
  %v4838 = vpop.f32.mrb[0].mxu0
  %v4839 = vadd.f32 0.0, %v4838
  %v4840 = vpop.f32.mrb[0].mxu0
  %4841 = vmatprep.mubr.f32.mxu0 0.0
  %4842 = vmatmul.mubr.f32.gmra.mrb[0].mxu0 %v4768
  %v4843 = vpop.f32.mrb[0].mxu0
  %v4844 = vadd.f32 0.0, %v4843
  %v4845 = vpop.f32.mrb[0].mxu0
  %4846 = vdwg.mxu0
  %4849 = vrot.lane.b32.xlu0 %v4839, 24
  %v4850 = vpop.permute.xlu0 %4849
  %4851 = vrot.lane.b32.xlu0 %v4844, 24
  %v4852 = vpop.permute.xlu0 %4851
  %4855 = vst.msk [vmem:[#allocation3] sm:$0xff] %vm2661, %v4850
  %4856 = vst.msk [vmem:[#allocation3 + $0x8] sm:$0x1] %vm2663, %v4852
  %v4858 = vrot.slane %v4015, 1
  %v4859 = vrot.slane %v4020, 1
  %v4860 = vsel %vm2666, %v4858, %v4859
  %4861 = vrot.lane.b32.xlu0 %v4860, 96
  %v4862 = vpop.permute.xlu0 %4861
  %4863 = vrot.lane.b32.xlu0 %v4859, 96
  %v4864 = vpop.permute.xlu0 %4863
  %v4865 = vsel %vm1826, %v4860, 0
  %v4867 = vsel %vm1826, %v4859, 0
  %v4869 = vsel %vm1826, %v4862, 0
  %v4871 = vsel %vm1826, %v4864, 0
  %4873 = vmatprep.subr.mxu0 0.0
  %4874 = vmatpush1.xpose.msra.mxu0 %v4869
  %4875 = vmatprep.subr.mxu0 0.0
  %4876 = vmatpush1.xpose.msra.mxu0 %v4871
  %4877 = vmatprep.subr.mxu0 0.0
  %4878 = vmatpush1.xpose.msra.mxu0 0.0
  %4879 = vmatprep.subr.mxu0 0.0
  %4880 = vmatpush1.xpose.msra.mxu0 0.0
  %4881 = vmatprep.subr.mxu0 0.0
  %4882 = vmatpush1.xpose.msra.mxu0 0.0
  %4883 = vmatprep.subr.mxu0 0.0
  %4884 = vmatpush1.xpose.msra.mxu0 0.0
  %4885 = vmatprep.subr.mxu0 0.0
  %4886 = vmatpush1.xpose.msra.mxu0 0.0
  %4887 = vmatprep.subr.mxu0 0.0
  %4888 = vmatpush1.xpose.msra.mxu0 0.0
  %4889 = vmatprep.subr.mxu0 0.0
  %4890 = vmatpush1.xpose.msra.mxu0 0.0
  %4891 = vmatprep.subr.mxu0 0.0
  %4892 = vmatpush1.xpose.msra.mxu0 0.0
  %4893 = vmatprep.subr.mxu0 0.0
  %4894 = vmatpush1.xpose.msra.mxu0 0.0
  %4895 = vmatprep.subr.mxu0 0.0
  %4896 = vmatpush1.xpose.msra.mxu0 0.0
  %4897 = vmatprep.subr.mxu0 0.0
  %4898 = vmatpush1.xpose.msra.mxu0 0.0
  %4899 = vmatprep.subr.mxu0 0.0
  %4900 = vmatpush1.xpose.msra.mxu0 0.0
  %4901 = vmatprep.subr.mxu0 0.0
  %4902 = vmatpush1.xpose.msra.mxu0 0.0
  %4903 = vmatprep.subr.mxu0 0.0
  %4904 = vmatpush1.xpose.msra.mxu0 0.0
  %4905 = vmatprep.subr.mxu0 0.0
  %4906 = vmatpush1.xpose.msra.mxu0 0.0
  %4907 = vmatprep.subr.mxu0 0.0
  %4908 = vmatpush1.xpose.msra.mxu0 0.0
  %4909 = vmatprep.subr.mxu0 0.0
  %4910 = vmatpush1.xpose.msra.mxu0 0.0
  %4911 = vmatprep.subr.mxu0 0.0
  %4912 = vmatpush1.xpose.msra.mxu0 0.0
  %4913 = vmatprep.subr.mxu0 0.0
  %4914 = vmatpush1.xpose.msra.mxu0 0.0
  %4915 = vmatprep.subr.mxu0 0.0
  %4916 = vmatpush1.xpose.msra.mxu0 0.0
  %4917 = vmatprep.subr.mxu0 0.0
  %4918 = vmatpush1.xpose.msra.mxu0 0.0
  %4919 = vmatprep.subr.mxu0 0.0
  %4920 = vmatpush1.xpose.msra.mxu0 0.0
  %4921 = vmatprep.subr.mxu0 0.0
  %4922 = vmatpush1.xpose.msra.mxu0 0.0
  %4923 = vmatprep.subr.mxu0 0.0
  %4924 = vmatpush1.xpose.msra.mxu0 0.0
  %4925 = vmatprep.subr.mxu0 0.0
  %4926 = vmatpush1.xpose.msra.mxu0 0.0
  %4927 = vmatprep.subr.mxu0 0.0
  %4928 = vmatpush1.xpose.msra.mxu0 0.0
  %4929 = vmatprep.subr.mxu0 0.0
  %4930 = vmatpush1.xpose.msra.mxu0 0.0
  %4931 = vmatprep.subr.mxu0 0.0
  %4932 = vmatpush1.xpose.msra.mxu0 0.0
  %4933 = vmatprep.subr.mxu0 0.0
  %4934 = vmatpush1.xpose.msra.mxu0 0.0
  %4935 = vmatprep.subr.mxu0 0.0
  %4936 = vmatpush1.xpose.msra.mxu0 0.0
  %4937 = vmatprep.mubr.f32.mxu0 0.0
  %4938 = vmatmul.mubr.f32.gmra.mrb[0].mxu0 %v4865
  %v4939 = vpop.f32.mrb[0].mxu0
  %v4940 = vadd.f32 %v1703, %v4939
  %v4941 = vpop.f32.mrb[0].mxu0
  %4942 = vmatprep.mubr.f32.mxu0 0.0
  %4943 = vmatmul.mubr.f32.gmra.mrb[0].mxu0 %v4867
  %v4944 = vpop.f32.mrb[0].mxu0
  %v4945 = vadd.f32 %v1704, %v4944
  %v4946 = vpop.f32.mrb[0].mxu0
  %4947 = vdwg.mxu0
  %v4948 = vsel %vm1910, %v4940, -inf
  %4949 = vmax.xlane.f32.xlu0 %v4948
  %v4950 = vpop.xlane.xlu0 %4949
  %v4951 = vsel %vm1914, %v4945, -inf
  %4952 = vmax.xlane.f32.xlu0 %v4951
  %v4953 = vpop.xlane.xlu0 %4952
  %v4954 = vsub.f32 %v4940, %v4950
  %v4955 = vsub.f32 %v4945, %v4953
  %v4956 = vmul.f32 %v4954, 1.442695
  %v4957 = vpow.pop %v4956
  %v4958 = vmul.f32 %v4955, 1.442695
  %v4959 = vpow.pop %v4958
  %v4960 = vsel %vm1910, %v4957, 0.0
  %4961 = vadd.xlane.f32.xlu0 %v4960
  %v4962 = vpop.xlane.xlu0 %4961
  %v4963 = vsel %vm1914, %v4959, 0.0
  %4964 = vadd.xlane.f32.xlu0 %v4963
  %v4965 = vpop.xlane.xlu0 %4964
  %v4966 = vrcp.pop %v4962
  %v4967 = vrcp.pop %v4965
  %v4968 = vmul.f32 %v4957, %v4966
  %v4969 = vmul.f32 %v4959, %v4967
  %4970 = vrot.lane.b32.xlu0 %v4860, 64
  %v4971 = vpop.permute.xlu0 %4970
  %4972 = vrot.lane.b32.xlu0 %v4859, 64
  %v4973 = vpop.permute.xlu0 %4972
  %v4976 = vsel %vm1910, %v4968, 0
  %v4979 = vsel %vm1910, %v4969, 0
  %v4981 = vsel %vm1945, %v4973, 0
  %4983 = vmatprep.subr.mxu0 0.0
  %4984 = vmatpush1.msra.mxu0 %v4971
  %4985 = vmatprep.subr.mxu0 0.0
  %4986 = vmatpush1.msra.mxu0 %v4981
  %4987 = vmatprep.subr.mxu0 0.0
  %4988 = vmatpush1.msra.mxu0 0.0
  %4989 = vmatprep.subr.mxu0 0.0
  %4990 = vmatpush1.msra.mxu0 0.0
  %4991 = vmatprep.subr.mxu0 0.0
  %4992 = vmatpush1.msra.mxu0 0.0
  %4993 = vmatprep.subr.mxu0 0.0
  %4994 = vmatpush1.msra.mxu0 0.0
  %4995 = vmatprep.subr.mxu0 0.0
  %4996 = vmatpush1.msra.mxu0 0.0
  %4997 = vmatprep.subr.mxu0 0.0
  %4998 = vmatpush1.msra.mxu0 0.0
  %4999 = vmatprep.subr.mxu0 0.0
  %5000 = vmatpush1.msra.mxu0 0.0
  %5001 = vmatprep.subr.mxu0 0.0
  %5002 = vmatpush1.msra.mxu0 0.0
  %5003 = vmatprep.subr.mxu0 0.0
  %5004 = vmatpush1.msra.mxu0 0.0
  %5005 = vmatprep.subr.mxu0 0.0
  %5006 = vmatpush1.msra.mxu0 0.0
  %5007 = vmatprep.subr.mxu0 0.0
  %5008 = vmatpush1.msra.mxu0 0.0
  %5009 = vmatprep.subr.mxu0 0.0
  %5010 = vmatpush1.msra.mxu0 0.0
  %5011 = vmatprep.subr.mxu0 0.0
  %5012 = vmatpush1.msra.mxu0 0.0
  %5013 = vmatprep.subr.mxu0 0.0
  %5014 = vmatpush1.msra.mxu0 0.0
  %5015 = vmatprep.subr.mxu0 0.0
  %5016 = vmatpush1.msra.mxu0 0.0
  %5017 = vmatprep.subr.mxu0 0.0
  %5018 = vmatpush1.msra.mxu0 0.0
  %5019 = vmatprep.subr.mxu0 0.0
  %5020 = vmatpush1.msra.mxu0 0.0
  %5021 = vmatprep.subr.mxu0 0.0
  %5022 = vmatpush1.msra.mxu0 0.0
  %5023 = vmatprep.subr.mxu0 0.0
  %5024 = vmatpush1.msra.mxu0 0.0
  %5025 = vmatprep.subr.mxu0 0.0
  %5026 = vmatpush1.msra.mxu0 0.0
  %5027 = vmatprep.subr.mxu0 0.0
  %5028 = vmatpush1.msra.mxu0 0.0
  %5029 = vmatprep.subr.mxu0 0.0
  %5030 = vmatpush1.msra.mxu0 0.0
  %5031 = vmatprep.subr.mxu0 0.0
  %5032 = vmatpush1.msra.mxu0 0.0
  %5033 = vmatprep.subr.mxu0 0.0
  %5034 = vmatpush1.msra.mxu0 0.0
  %5035 = vmatprep.subr.mxu0 0.0
  %5036 = vmatpush1.msra.mxu0 0.0
  %5037 = vmatprep.subr.mxu0 0.0
  %5038 = vmatpush1.msra.mxu0 0.0
  %5039 = vmatprep.subr.mxu0 0.0
  %5040 = vmatpush1.msra.mxu0 0.0
  %5041 = vmatprep.subr.mxu0 0.0
  %5042 = vmatpush1.msra.mxu0 0.0
  %5043 = vmatprep.subr.mxu0 0.0
  %5044 = vmatpush1.msra.mxu0 0.0
  %5045 = vmatprep.subr.mxu0 0.0
  %5046 = vmatpush1.msra.mxu0 0.0
  %5047 = vmatprep.mubr.f32.mxu0 0.0
  %5048 = vmatmul.mubr.f32.gmra.mrb[0].mxu0 %v4976
  %v5049 = vpop.f32.mrb[0].mxu0
  %v5050 = vadd.f32 0.0, %v5049
  %v5051 = vpop.f32.mrb[0].mxu0
  %5052 = vmatprep.mubr.f32.mxu0 0.0
  %5053 = vmatmul.mubr.f32.gmra.mrb[0].mxu0 %v4979
  %v5054 = vpop.f32.mrb[0].mxu0
  %v5055 = vadd.f32 0.0, %v5054
  %v5056 = vpop.f32.mrb[0].mxu0
  %5057 = vdwg.mxu0
  %5058 = vst.msk [vmem:[#allocation3 + $0x9] sm:$0xff] %vm1826, %v5050
  %5059 = vst.msk [vmem:[#allocation3 + $0x11] sm:$0x1] %vm2024, %v5055
  %5060 = vrot.lane.b32.xlu0 %v4860, 120
  %v5061 = vpop.permute.xlu0 %5060
  %5062 = vrot.lane.b32.xlu0 %v4859, 120
  %v5063 = vpop.permute.xlu0 %5062
  %5064 = vrot.lane.b32.xlu0 %v4860, 88
  %v5065 = vpop.permute.xlu0 %5064
  %5066 = vrot.lane.b32.xlu0 %v4859, 88
  %v5067 = vpop.permute.xlu0 %5066
  %v5068 = vsel %vm1826, %v5061, 0
  %v5070 = vsel %vm1826, %v5063, 0
  %v5072 = vsel %vm1826, %v5065, 0
  %v5074 = vsel %vm1826, %v5067, 0
  %5076 = vmatprep.subr.mxu0 0.0
  %5077 = vmatpush1.xpose.msra.mxu0 %v5072
  %5078 = vmatprep.subr.mxu0 0.0
  %5079 = vmatpush1.xpose.msra.mxu0 %v5074
  %5080 = vmatprep.subr.mxu0 0.0
  %5081 = vmatpush1.xpose.msra.mxu0 0.0
  %5082 = vmatprep.subr.mxu0 0.0
  %5083 = vmatpush1.xpose.msra.mxu0 0.0
  %5084 = vmatprep.subr.mxu0 0.0
  %5085 = vmatpush1.xpose.msra.mxu0 0.0
  %5086 = vmatprep.subr.mxu0 0.0
  %5087 = vmatpush1.xpose.msra.mxu0 0.0
  %5088 = vmatprep.subr.mxu0 0.0
  %5089 = vmatpush1.xpose.msra.mxu0 0.0
  %5090 = vmatprep.subr.mxu0 0.0
  %5091 = vmatpush1.xpose.msra.mxu0 0.0
  %5092 = vmatprep.subr.mxu0 0.0
  %5093 = vmatpush1.xpose.msra.mxu0 0.0
  %5094 = vmatprep.subr.mxu0 0.0
  %5095 = vmatpush1.xpose.msra.mxu0 0.0
  %5096 = vmatprep.subr.mxu0 0.0
  %5097 = vmatpush1.xpose.msra.mxu0 0.0
  %5098 = vmatprep.subr.mxu0 0.0
  %5099 = vmatpush1.xpose.msra.mxu0 0.0
  %5100 = vmatprep.subr.mxu0 0.0
  %5101 = vmatpush1.xpose.msra.mxu0 0.0
  %5102 = vmatprep.subr.mxu0 0.0
  %5103 = vmatpush1.xpose.msra.mxu0 0.0
  %5104 = vmatprep.subr.mxu0 0.0
  %5105 = vmatpush1.xpose.msra.mxu0 0.0
  %5106 = vmatprep.subr.mxu0 0.0
  %5107 = vmatpush1.xpose.msra.mxu0 0.0
  %5108 = vmatprep.subr.mxu0 0.0
  %5109 = vmatpush1.xpose.msra.mxu0 0.0
  %5110 = vmatprep.subr.mxu0 0.0
  %5111 = vmatpush1.xpose.msra.mxu0 0.0
  %5112 = vmatprep.subr.mxu0 0.0
  %5113 = vmatpush1.xpose.msra.mxu0 0.0
  %5114 = vmatprep.subr.mxu0 0.0
  %5115 = vmatpush1.xpose.msra.mxu0 0.0
  %5116 = vmatprep.subr.mxu0 0.0
  %5117 = vmatpush1.xpose.msra.mxu0 0.0
  %5118 = vmatprep.subr.mxu0 0.0
  %5119 = vmatpush1.xpose.msra.mxu0 0.0
  %5120 = vmatprep.subr.mxu0 0.0
  %5121 = vmatpush1.xpose.msra.mxu0 0.0
  %5122 = vmatprep.subr.mxu0 0.0
  %5123 = vmatpush1.xpose.msra.mxu0 0.0
  %5124 = vmatprep.subr.mxu0 0.0
  %5125 = vmatpush1.xpose.msra.mxu0 0.0
  %5126 = vmatprep.subr.mxu0 0.0
  %5127 = vmatpush1.xpose.msra.mxu0 0.0
  %5128 = vmatprep.subr.mxu0 0.0
  %5129 = vmatpush1.xpose.msra.mxu0 0.0
  %5130 = vmatprep.subr.mxu0 0.0
  %5131 = vmatpush1.xpose.msra.mxu0 0.0
  %5132 = vmatprep.subr.mxu0 0.0
  %5133 = vmatpush1.xpose.msra.mxu0 0.0
  %5134 = vmatprep.subr.mxu0 0.0
  %5135 = vmatpush1.xpose.msra.mxu0 0.0
  %5136 = vmatprep.subr.mxu0 0.0
  %5137 = vmatpush1.xpose.msra.mxu0 0.0
  %5138 = vmatprep.subr.mxu0 0.0
  %5139 = vmatpush1.xpose.msra.mxu0 0.0
  %5140 = vmatprep.mubr.f32.mxu0 0.0
  %5141 = vmatmul.mubr.f32.gmra.mrb[0].mxu0 %v5068
  %v5142 = vpop.f32.mrb[0].mxu0
  %v5143 = vadd.f32 %v1703, %v5142
  %v5144 = vpop.f32.mrb[0].mxu0
  %5145 = vmatprep.mubr.f32.mxu0 0.0
  %5146 = vmatmul.mubr.f32.gmra.mrb[0].mxu0 %v5070
  %v5147 = vpop.f32.mrb[0].mxu0
  %v5148 = vadd.f32 %v1704, %v5147
  %v5149 = vpop.f32.mrb[0].mxu0
  %5150 = vdwg.mxu0
  %v5151 = vsel %vm1910, %v5143, -inf
  %5152 = vmax.xlane.f32.xlu0 %v5151
  %v5153 = vpop.xlane.xlu0 %5152
  %v5154 = vsel %vm1914, %v5148, -inf
  %5155 = vmax.xlane.f32.xlu0 %v5154
  %v5156 = vpop.xlane.xlu0 %5155
  %v5157 = vsub.f32 %v5143, %v5153
  %v5158 = vsub.f32 %v5148, %v5156
  %v5159 = vmul.f32 %v5157, 1.442695
  %v5160 = vpow.pop %v5159
  %v5161 = vmul.f32 %v5158, 1.442695
  %v5162 = vpow.pop %v5161
  %v5163 = vsel %vm1910, %v5160, 0.0
  %5164 = vadd.xlane.f32.xlu0 %v5163
  %v5165 = vpop.xlane.xlu0 %5164
  %v5166 = vsel %vm1914, %v5162, 0.0
  %5167 = vadd.xlane.f32.xlu0 %v5166
  %v5168 = vpop.xlane.xlu0 %5167
  %v5169 = vrcp.pop %v5165
  %v5170 = vrcp.pop %v5168
  %v5171 = vmul.f32 %v5160, %v5169
  %v5172 = vmul.f32 %v5162, %v5170
  %5173 = vrot.lane.b32.xlu0 %v4860, 56
  %v5174 = vpop.permute.xlu0 %5173
  %5175 = vrot.lane.b32.xlu0 %v4859, 56
  %v5176 = vpop.permute.xlu0 %5175
  %v5179 = vsel %vm1910, %v5171, 0
  %v5182 = vsel %vm1910, %v5172, 0
  %v5184 = vsel %vm1945, %v5176, 0
  %5186 = vmatprep.subr.mxu0 0.0
  %5187 = vmatpush1.msra.mxu0 %v5174
  %5188 = vmatprep.subr.mxu0 0.0
  %5189 = vmatpush1.msra.mxu0 %v5184
  %5190 = vmatprep.subr.mxu0 0.0
  %5191 = vmatpush1.msra.mxu0 0.0
  %5192 = vmatprep.subr.mxu0 0.0
  %5193 = vmatpush1.msra.mxu0 0.0
  %5194 = vmatprep.subr.mxu0 0.0
  %5195 = vmatpush1.msra.mxu0 0.0
  %5196 = vmatprep.subr.mxu0 0.0
  %5197 = vmatpush1.msra.mxu0 0.0
  %5198 = vmatprep.subr.mxu0 0.0
  %5199 = vmatpush1.msra.mxu0 0.0
  %5200 = vmatprep.subr.mxu0 0.0
  %5201 = vmatpush1.msra.mxu0 0.0
  %5202 = vmatprep.subr.mxu0 0.0
  %5203 = vmatpush1.msra.mxu0 0.0
  %5204 = vmatprep.subr.mxu0 0.0
  %5205 = vmatpush1.msra.mxu0 0.0
  %5206 = vmatprep.subr.mxu0 0.0
  %5207 = vmatpush1.msra.mxu0 0.0
  %5208 = vmatprep.subr.mxu0 0.0
  %5209 = vmatpush1.msra.mxu0 0.0
  %5210 = vmatprep.subr.mxu0 0.0
  %5211 = vmatpush1.msra.mxu0 0.0
  %5212 = vmatprep.subr.mxu0 0.0
  %5213 = vmatpush1.msra.mxu0 0.0
  %5214 = vmatprep.subr.mxu0 0.0
  %5215 = vmatpush1.msra.mxu0 0.0
  %5216 = vmatprep.subr.mxu0 0.0
  %5217 = vmatpush1.msra.mxu0 0.0
  %5218 = vmatprep.subr.mxu0 0.0
  %5219 = vmatpush1.msra.mxu0 0.0
  %5220 = vmatprep.subr.mxu0 0.0
  %5221 = vmatpush1.msra.mxu0 0.0
  %5222 = vmatprep.subr.mxu0 0.0
  %5223 = vmatpush1.msra.mxu0 0.0
  %5224 = vmatprep.subr.mxu0 0.0
  %5225 = vmatpush1.msra.mxu0 0.0
  %5226 = vmatprep.subr.mxu0 0.0
  %5227 = vmatpush1.msra.mxu0 0.0
  %5228 = vmatprep.subr.mxu0 0.0
  %5229 = vmatpush1.msra.mxu0 0.0
  %5230 = vmatprep.subr.mxu0 0.0
  %5231 = vmatpush1.msra.mxu0 0.0
  %5232 = vmatprep.subr.mxu0 0.0
  %5233 = vmatpush1.msra.mxu0 0.0
  %5234 = vmatprep.subr.mxu0 0.0
  %5235 = vmatpush1.msra.mxu0 0.0
  %5236 = vmatprep.subr.mxu0 0.0
  %5237 = vmatpush1.msra.mxu0 0.0
  %5238 = vmatprep.subr.mxu0 0.0
  %5239 = vmatpush1.msra.mxu0 0.0
  %5240 = vmatprep.subr.mxu0 0.0
  %5241 = vmatpush1.msra.mxu0 0.0
  %5242 = vmatprep.subr.mxu0 0.0
  %5243 = vmatpush1.msra.mxu0 0.0
  %5244 = vmatprep.subr.mxu0 0.0
  %5245 = vmatpush1.msra.mxu0 0.0
  %5246 = vmatprep.subr.mxu0 0.0
  %5247 = vmatpush1.msra.mxu0 0.0
  %5248 = vmatprep.subr.mxu0 0.0
  %5249 = vmatpush1.msra.mxu0 0.0
  %5250 = vmatprep.mubr.f32.mxu0 0.0
  %5251 = vmatmul.mubr.f32.gmra.mrb[0].mxu0 %v5179
  %v5252 = vpop.f32.mrb[0].mxu0
  %v5253 = vadd.f32 0.0, %v5252
  %v5254 = vpop.f32.mrb[0].mxu0
  %5255 = vmatprep.mubr.f32.mxu0 0.0
  %5256 = vmatmul.mubr.f32.gmra.mrb[0].mxu0 %v5182
  %v5257 = vpop.f32.mrb[0].mxu0
  %v5258 = vadd.f32 0.0, %v5257
  %v5259 = vpop.f32.mrb[0].mxu0
  %5260 = vdwg.mxu0
  %5263 = vrot.lane.b32.xlu0 %v5253, 8
  %v5264 = vpop.permute.xlu0 %5263
  %5265 = vrot.lane.b32.xlu0 %v5258, 8
  %v5266 = vpop.permute.xlu0 %5265
  %5269 = vst.msk [vmem:[#allocation3 + $0x9] sm:$0xff] %vm2235, %v5264
  %5270 = vst.msk [vmem:[#allocation3 + $0x11] sm:$0x1] %vm2237, %v5266
  %5271 = vrot.lane.b32.xlu0 %v4860, 112
  %v5272 = vpop.permute.xlu0 %5271
  %5273 = vrot.lane.b32.xlu0 %v4859, 112
  %v5274 = vpop.permute.xlu0 %5273
  %5275 = vrot.lane.b32.xlu0 %v4860, 80
  %v5276 = vpop.permute.xlu0 %5275
  %5277 = vrot.lane.b32.xlu0 %v4859, 80
  %v5278 = vpop.permute.xlu0 %5277
  %v5279 = vsel %vm1826, %v5272, 0
  %v5281 = vsel %vm1826, %v5274, 0
  %v5283 = vsel %vm1826, %v5276, 0
  %v5285 = vsel %vm1826, %v5278, 0
  %5287 = vmatprep.subr.mxu0 0.0
  %5288 = vmatpush1.xpose.msra.mxu0 %v5283
  %5289 = vmatprep.subr.mxu0 0.0
  %5290 = vmatpush1.xpose.msra.mxu0 %v5285
  %5291 = vmatprep.subr.mxu0 0.0
  %5292 = vmatpush1.xpose.msra.mxu0 0.0
  %5293 = vmatprep.subr.mxu0 0.0
  %5294 = vmatpush1.xpose.msra.mxu0 0.0
  %5295 = vmatprep.subr.mxu0 0.0
  %5296 = vmatpush1.xpose.msra.mxu0 0.0
  %5297 = vmatprep.subr.mxu0 0.0
  %5298 = vmatpush1.xpose.msra.mxu0 0.0
  %5299 = vmatprep.subr.mxu0 0.0
  %5300 = vmatpush1.xpose.msra.mxu0 0.0
  %5301 = vmatprep.subr.mxu0 0.0
  %5302 = vmatpush1.xpose.msra.mxu0 0.0
  %5303 = vmatprep.subr.mxu0 0.0
  %5304 = vmatpush1.xpose.msra.mxu0 0.0
  %5305 = vmatprep.subr.mxu0 0.0
  %5306 = vmatpush1.xpose.msra.mxu0 0.0
  %5307 = vmatprep.subr.mxu0 0.0
  %5308 = vmatpush1.xpose.msra.mxu0 0.0
  %5309 = vmatprep.subr.mxu0 0.0
  %5310 = vmatpush1.xpose.msra.mxu0 0.0
  %5311 = vmatprep.subr.mxu0 0.0
  %5312 = vmatpush1.xpose.msra.mxu0 0.0
  %5313 = vmatprep.subr.mxu0 0.0
  %5314 = vmatpush1.xpose.msra.mxu0 0.0
  %5315 = vmatprep.subr.mxu0 0.0
  %5316 = vmatpush1.xpose.msra.mxu0 0.0
  %5317 = vmatprep.subr.mxu0 0.0
  %5318 = vmatpush1.xpose.msra.mxu0 0.0
  %5319 = vmatprep.subr.mxu0 0.0
  %5320 = vmatpush1.xpose.msra.mxu0 0.0
  %5321 = vmatprep.subr.mxu0 0.0
  %5322 = vmatpush1.xpose.msra.mxu0 0.0
  %5323 = vmatprep.subr.mxu0 0.0
  %5324 = vmatpush1.xpose.msra.mxu0 0.0
  %5325 = vmatprep.subr.mxu0 0.0
  %5326 = vmatpush1.xpose.msra.mxu0 0.0
  %5327 = vmatprep.subr.mxu0 0.0
  %5328 = vmatpush1.xpose.msra.mxu0 0.0
  %5329 = vmatprep.subr.mxu0 0.0
  %5330 = vmatpush1.xpose.msra.mxu0 0.0
  %5331 = vmatprep.subr.mxu0 0.0
  %5332 = vmatpush1.xpose.msra.mxu0 0.0
  %5333 = vmatprep.subr.mxu0 0.0
  %5334 = vmatpush1.xpose.msra.mxu0 0.0
  %5335 = vmatprep.subr.mxu0 0.0
  %5336 = vmatpush1.xpose.msra.mxu0 0.0
  %5337 = vmatprep.subr.mxu0 0.0
  %5338 = vmatpush1.xpose.msra.mxu0 0.0
  %5339 = vmatprep.subr.mxu0 0.0
  %5340 = vmatpush1.xpose.msra.mxu0 0.0
  %5341 = vmatprep.subr.mxu0 0.0
  %5342 = vmatpush1.xpose.msra.mxu0 0.0
  %5343 = vmatprep.subr.mxu0 0.0
  %5344 = vmatpush1.xpose.msra.mxu0 0.0
  %5345 = vmatprep.subr.mxu0 0.0
  %5346 = vmatpush1.xpose.msra.mxu0 0.0
  %5347 = vmatprep.subr.mxu0 0.0
  %5348 = vmatpush1.xpose.msra.mxu0 0.0
  %5349 = vmatprep.subr.mxu0 0.0
  %5350 = vmatpush1.xpose.msra.mxu0 0.0
  %5351 = vmatprep.mubr.f32.mxu0 0.0
  %5352 = vmatmul.mubr.f32.gmra.mrb[0].mxu0 %v5279
  %v5353 = vpop.f32.mrb[0].mxu0
  %v5354 = vadd.f32 %v1703, %v5353
  %v5355 = vpop.f32.mrb[0].mxu0
  %5356 = vmatprep.mubr.f32.mxu0 0.0
  %5357 = vmatmul.mubr.f32.gmra.mrb[0].mxu0 %v5281
  %v5358 = vpop.f32.mrb[0].mxu0
  %v5359 = vadd.f32 %v1704, %v5358
  %v5360 = vpop.f32.mrb[0].mxu0
  %5361 = vdwg.mxu0
  %v5362 = vsel %vm1910, %v5354, -inf
  %5363 = vmax.xlane.f32.xlu0 %v5362
  %v5364 = vpop.xlane.xlu0 %5363
  %v5365 = vsel %vm1914, %v5359, -inf
  %5366 = vmax.xlane.f32.xlu0 %v5365
  %v5367 = vpop.xlane.xlu0 %5366
  %v5368 = vsub.f32 %v5354, %v5364
  %v5369 = vsub.f32 %v5359, %v5367
  %v5370 = vmul.f32 %v5368, 1.442695
  %v5371 = vpow.pop %v5370
  %v5372 = vmul.f32 %v5369, 1.442695
  %v5373 = vpow.pop %v5372
  %v5374 = vsel %vm1910, %v5371, 0.0
  %5375 = vadd.xlane.f32.xlu0 %v5374
  %v5376 = vpop.xlane.xlu0 %5375
  %v5377 = vsel %vm1914, %v5373, 0.0
  %5378 = vadd.xlane.f32.xlu0 %v5377
  %v5379 = vpop.xlane.xlu0 %5378
  %v5380 = vrcp.pop %v5376
  %v5381 = vrcp.pop %v5379
  %v5382 = vmul.f32 %v5371, %v5380
  %v5383 = vmul.f32 %v5373, %v5381
  %5384 = vrot.lane.b32.xlu0 %v4860, 48
  %v5385 = vpop.permute.xlu0 %5384
  %5386 = vrot.lane.b32.xlu0 %v4859, 48
  %v5387 = vpop.permute.xlu0 %5386
  %v5390 = vsel %vm1910, %v5382, 0
  %v5393 = vsel %vm1910, %v5383, 0
  %v5395 = vsel %vm1945, %v5387, 0
  %5397 = vmatprep.subr.mxu0 0.0
  %5398 = vmatpush1.msra.mxu0 %v5385
  %5399 = vmatprep.subr.mxu0 0.0
  %5400 = vmatpush1.msra.mxu0 %v5395
  %5401 = vmatprep.subr.mxu0 0.0
  %5402 = vmatpush1.msra.mxu0 0.0
  %5403 = vmatprep.subr.mxu0 0.0
  %5404 = vmatpush1.msra.mxu0 0.0
  %5405 = vmatprep.subr.mxu0 0.0
  %5406 = vmatpush1.msra.mxu0 0.0
  %5407 = vmatprep.subr.mxu0 0.0
  %5408 = vmatpush1.msra.mxu0 0.0
  %5409 = vmatprep.subr.mxu0 0.0
  %5410 = vmatpush1.msra.mxu0 0.0
  %5411 = vmatprep.subr.mxu0 0.0
  %5412 = vmatpush1.msra.mxu0 0.0
  %5413 = vmatprep.subr.mxu0 0.0
  %5414 = vmatpush1.msra.mxu0 0.0
  %5415 = vmatprep.subr.mxu0 0.0
  %5416 = vmatpush1.msra.mxu0 0.0
  %5417 = vmatprep.subr.mxu0 0.0
  %5418 = vmatpush1.msra.mxu0 0.0
  %5419 = vmatprep.subr.mxu0 0.0
  %5420 = vmatpush1.msra.mxu0 0.0
  %5421 = vmatprep.subr.mxu0 0.0
  %5422 = vmatpush1.msra.mxu0 0.0
  %5423 = vmatprep.subr.mxu0 0.0
  %5424 = vmatpush1.msra.mxu0 0.0
  %5425 = vmatprep.subr.mxu0 0.0
  %5426 = vmatpush1.msra.mxu0 0.0
  %5427 = vmatprep.subr.mxu0 0.0
  %5428 = vmatpush1.msra.mxu0 0.0
  %5429 = vmatprep.subr.mxu0 0.0
  %5430 = vmatpush1.msra.mxu0 0.0
  %5431 = vmatprep.subr.mxu0 0.0
  %5432 = vmatpush1.msra.mxu0 0.0
  %5433 = vmatprep.subr.mxu0 0.0
  %5434 = vmatpush1.msra.mxu0 0.0
  %5435 = vmatprep.subr.mxu0 0.0
  %5436 = vmatpush1.msra.mxu0 0.0
  %5437 = vmatprep.subr.mxu0 0.0
  %5438 = vmatpush1.msra.mxu0 0.0
  %5439 = vmatprep.subr.mxu0 0.0
  %5440 = vmatpush1.msra.mxu0 0.0
  %5441 = vmatprep.subr.mxu0 0.0
  %5442 = vmatpush1.msra.mxu0 0.0
  %5443 = vmatprep.subr.mxu0 0.0
  %5444 = vmatpush1.msra.mxu0 0.0
  %5445 = vmatprep.subr.mxu0 0.0
  %5446 = vmatpush1.msra.mxu0 0.0
  %5447 = vmatprep.subr.mxu0 0.0
  %5448 = vmatpush1.msra.mxu0 0.0
  %5449 = vmatprep.subr.mxu0 0.0
  %5450 = vmatpush1.msra.mxu0 0.0
  %5451 = vmatprep.subr.mxu0 0.0
  %5452 = vmatpush1.msra.mxu0 0.0
  %5453 = vmatprep.subr.mxu0 0.0
  %5454 = vmatpush1.msra.mxu0 0.0
  %5455 = vmatprep.subr.mxu0 0.0
  %5456 = vmatpush1.msra.mxu0 0.0
  %5457 = vmatprep.subr.mxu0 0.0
  %5458 = vmatpush1.msra.mxu0 0.0
  %5459 = vmatprep.subr.mxu0 0.0
  %5460 = vmatpush1.msra.mxu0 0.0
  %5461 = vmatprep.mubr.f32.mxu0 0.0
  %5462 = vmatmul.mubr.f32.gmra.mrb[0].mxu0 %v5390
  %v5463 = vpop.f32.mrb[0].mxu0
  %v5464 = vadd.f32 0.0, %v5463
  %v5465 = vpop.f32.mrb[0].mxu0
  %5466 = vmatprep.mubr.f32.mxu0 0.0
  %5467 = vmatmul.mubr.f32.gmra.mrb[0].mxu0 %v5393
  %v5468 = vpop.f32.mrb[0].mxu0
  %v5469 = vadd.f32 0.0, %v5468
  %v5470 = vpop.f32.mrb[0].mxu0
  %5471 = vdwg.mxu0
  %5474 = vrot.lane.b32.xlu0 %v5464, 16
  %v5475 = vpop.permute.xlu0 %5474
  %5476 = vrot.lane.b32.xlu0 %v5469, 16
  %v5477 = vpop.permute.xlu0 %5476
  %5480 = vst.msk [vmem:[#allocation3 + $0x9] sm:$0xff] %vm2448, %v5475
  %5481 = vst.msk [vmem:[#allocation3 + $0x11] sm:$0x1] %vm2450, %v5477
  %5482 = vrot.lane.b32.xlu0 %v4860, 104
  %v5483 = vpop.permute.xlu0 %5482
  %5484 = vrot.lane.b32.xlu0 %v4859, 104
  %v5485 = vpop.permute.xlu0 %5484
  %5486 = vrot.lane.b32.xlu0 %v4860, 72
  %v5487 = vpop.permute.xlu0 %5486
  %5488 = vrot.lane.b32.xlu0 %v4859, 72
  %v5489 = vpop.permute.xlu0 %5488
  %v5490 = vsel %vm1826, %v5483, 0
  %v5492 = vsel %vm1826, %v5485, 0
  %v5494 = vsel %vm1826, %v5487, 0
  %v5496 = vsel %vm1826, %v5489, 0
  %5498 = vmatprep.subr.mxu0 0.0
  %5499 = vmatpush1.xpose.msra.mxu0 %v5494
  %5500 = vmatprep.subr.mxu0 0.0
  %5501 = vmatpush1.xpose.msra.mxu0 %v5496
  %5502 = vmatprep.subr.mxu0 0.0
  %5503 = vmatpush1.xpose.msra.mxu0 0.0
  %5504 = vmatprep.subr.mxu0 0.0
  %5505 = vmatpush1.xpose.msra.mxu0 0.0
  %5506 = vmatprep.subr.mxu0 0.0
  %5507 = vmatpush1.xpose.msra.mxu0 0.0
  %5508 = vmatprep.subr.mxu0 0.0
  %5509 = vmatpush1.xpose.msra.mxu0 0.0
  %5510 = vmatprep.subr.mxu0 0.0
  %5511 = vmatpush1.xpose.msra.mxu0 0.0
  %5512 = vmatprep.subr.mxu0 0.0
  %5513 = vmatpush1.xpose.msra.mxu0 0.0
  %5514 = vmatprep.subr.mxu0 0.0
  %5515 = vmatpush1.xpose.msra.mxu0 0.0
  %5516 = vmatprep.subr.mxu0 0.0
  %5517 = vmatpush1.xpose.msra.mxu0 0.0
  %5518 = vmatprep.subr.mxu0 0.0
  %5519 = vmatpush1.xpose.msra.mxu0 0.0
  %5520 = vmatprep.subr.mxu0 0.0
  %5521 = vmatpush1.xpose.msra.mxu0 0.0
  %5522 = vmatprep.subr.mxu0 0.0
  %5523 = vmatpush1.xpose.msra.mxu0 0.0
  %5524 = vmatprep.subr.mxu0 0.0
  %5525 = vmatpush1.xpose.msra.mxu0 0.0
  %5526 = vmatprep.subr.mxu0 0.0
  %5527 = vmatpush1.xpose.msra.mxu0 0.0
  %5528 = vmatprep.subr.mxu0 0.0
  %5529 = vmatpush1.xpose.msra.mxu0 0.0
  %5530 = vmatprep.subr.mxu0 0.0
  %5531 = vmatpush1.xpose.msra.mxu0 0.0
  %5532 = vmatprep.subr.mxu0 0.0
  %5533 = vmatpush1.xpose.msra.mxu0 0.0
  %5534 = vmatprep.subr.mxu0 0.0
  %5535 = vmatpush1.xpose.msra.mxu0 0.0
  %5536 = vmatprep.subr.mxu0 0.0
  %5537 = vmatpush1.xpose.msra.mxu0 0.0
  %5538 = vmatprep.subr.mxu0 0.0
  %5539 = vmatpush1.xpose.msra.mxu0 0.0
  %5540 = vmatprep.subr.mxu0 0.0
  %5541 = vmatpush1.xpose.msra.mxu0 0.0
  %5542 = vmatprep.subr.mxu0 0.0
  %5543 = vmatpush1.xpose.msra.mxu0 0.0
  %5544 = vmatprep.subr.mxu0 0.0
  %5545 = vmatpush1.xpose.msra.mxu0 0.0
  %5546 = vmatprep.subr.mxu0 0.0
  %5547 = vmatpush1.xpose.msra.mxu0 0.0
  %5548 = vmatprep.subr.mxu0 0.0
  %5549 = vmatpush1.xpose.msra.mxu0 0.0
  %5550 = vmatprep.subr.mxu0 0.0
  %5551 = vmatpush1.xpose.msra.mxu0 0.0
  %5552 = vmatprep.subr.mxu0 0.0
  %5553 = vmatpush1.xpose.msra.mxu0 0.0
  %5554 = vmatprep.subr.mxu0 0.0
  %5555 = vmatpush1.xpose.msra.mxu0 0.0
  %5556 = vmatprep.subr.mxu0 0.0
  %5557 = vmatpush1.xpose.msra.mxu0 0.0
  %5558 = vmatprep.subr.mxu0 0.0
  %5559 = vmatpush1.xpose.msra.mxu0 0.0
  %5560 = vmatprep.subr.mxu0 0.0
  %5561 = vmatpush1.xpose.msra.mxu0 0.0
  %5562 = vmatprep.mubr.f32.mxu0 0.0
  %5563 = vmatmul.mubr.f32.gmra.mrb[0].mxu0 %v5490
  %v5564 = vpop.f32.mrb[0].mxu0
  %v5565 = vadd.f32 %v1703, %v5564
  %v5566 = vpop.f32.mrb[0].mxu0
  %5567 = vmatprep.mubr.f32.mxu0 0.0
  %5568 = vmatmul.mubr.f32.gmra.mrb[0].mxu0 %v5492
  %v5569 = vpop.f32.mrb[0].mxu0
  %v5570 = vadd.f32 %v1704, %v5569
  %v5571 = vpop.f32.mrb[0].mxu0
  %5572 = vdwg.mxu0
  %v5573 = vsel %vm1910, %v5565, -inf
  %5574 = vmax.xlane.f32.xlu0 %v5573
  %v5575 = vpop.xlane.xlu0 %5574
  %v5576 = vsel %vm1914, %v5570, -inf
  %5577 = vmax.xlane.f32.xlu0 %v5576
  %v5578 = vpop.xlane.xlu0 %5577
  %v5579 = vsub.f32 %v5565, %v5575
  %v5580 = vsub.f32 %v5570, %v5578
  %v5581 = vmul.f32 %v5579, 1.442695
  %v5582 = vpow.pop %v5581
  %v5583 = vmul.f32 %v5580, 1.442695
  %v5584 = vpow.pop %v5583
  %v5585 = vsel %vm1910, %v5582, 0.0
  %5586 = vadd.xlane.f32.xlu0 %v5585
  %v5587 = vpop.xlane.xlu0 %5586
  %v5588 = vsel %vm1914, %v5584, 0.0
  %5589 = vadd.xlane.f32.xlu0 %v5588
  %v5590 = vpop.xlane.xlu0 %5589
  %v5591 = vrcp.pop %v5587
  %v5592 = vrcp.pop %v5590
  %v5593 = vmul.f32 %v5582, %v5591
  %v5594 = vmul.f32 %v5584, %v5592
  %5595 = vrot.lane.b32.xlu0 %v4860, 40
  %v5596 = vpop.permute.xlu0 %5595
  %5597 = vrot.lane.b32.xlu0 %v4859, 40
  %v5598 = vpop.permute.xlu0 %5597
  %v5601 = vsel %vm1910, %v5593, 0
  %v5604 = vsel %vm1910, %v5594, 0
  %v5606 = vsel %vm1945, %v5598, 0
  %5608 = vmatprep.subr.mxu0 0.0
  %5609 = vmatpush1.msra.mxu0 %v5596
  %5610 = vmatprep.subr.mxu0 0.0
  %5611 = vmatpush1.msra.mxu0 %v5606
  %5612 = vmatprep.subr.mxu0 0.0
  %5613 = vmatpush1.msra.mxu0 0.0
  %5614 = vmatprep.subr.mxu0 0.0
  %5615 = vmatpush1.msra.mxu0 0.0
  %5616 = vmatprep.subr.mxu0 0.0
  %5617 = vmatpush1.msra.mxu0 0.0
  %5618 = vmatprep.subr.mxu0 0.0
  %5619 = vmatpush1.msra.mxu0 0.0
  %5620 = vmatprep.subr.mxu0 0.0
  %5621 = vmatpush1.msra.mxu0 0.0
  %5622 = vmatprep.subr.mxu0 0.0
  %5623 = vmatpush1.msra.mxu0 0.0
  %5624 = vmatprep.subr.mxu0 0.0
  %5625 = vmatpush1.msra.mxu0 0.0
  %5626 = vmatprep.subr.mxu0 0.0
  %5627 = vmatpush1.msra.mxu0 0.0
  %5628 = vmatprep.subr.mxu0 0.0
  %5629 = vmatpush1.msra.mxu0 0.0
  %5630 = vmatprep.subr.mxu0 0.0
  %5631 = vmatpush1.msra.mxu0 0.0
  %5632 = vmatprep.subr.mxu0 0.0
  %5633 = vmatpush1.msra.mxu0 0.0
  %5634 = vmatprep.subr.mxu0 0.0
  %5635 = vmatpush1.msra.mxu0 0.0
  %5636 = vmatprep.subr.mxu0 0.0
  %5637 = vmatpush1.msra.mxu0 0.0
  %5638 = vmatprep.subr.mxu0 0.0
  %5639 = vmatpush1.msra.mxu0 0.0
  %5640 = vmatprep.subr.mxu0 0.0
  %5641 = vmatpush1.msra.mxu0 0.0
  %5642 = vmatprep.subr.mxu0 0.0
  %5643 = vmatpush1.msra.mxu0 0.0
  %5644 = vmatprep.subr.mxu0 0.0
  %5645 = vmatpush1.msra.mxu0 0.0
  %5646 = vmatprep.subr.mxu0 0.0
  %5647 = vmatpush1.msra.mxu0 0.0
  %5648 = vmatprep.subr.mxu0 0.0
  %5649 = vmatpush1.msra.mxu0 0.0
  %5650 = vmatprep.subr.mxu0 0.0
  %5651 = vmatpush1.msra.mxu0 0.0
  %5652 = vmatprep.subr.mxu0 0.0
  %5653 = vmatpush1.msra.mxu0 0.0
  %5654 = vmatprep.subr.mxu0 0.0
  %5655 = vmatpush1.msra.mxu0 0.0
  %5656 = vmatprep.subr.mxu0 0.0
  %5657 = vmatpush1.msra.mxu0 0.0
  %5658 = vmatprep.subr.mxu0 0.0
  %5659 = vmatpush1.msra.mxu0 0.0
  %5660 = vmatprep.subr.mxu0 0.0
  %5661 = vmatpush1.msra.mxu0 0.0
  %5662 = vmatprep.subr.mxu0 0.0
  %5663 = vmatpush1.msra.mxu0 0.0
  %5664 = vmatprep.subr.mxu0 0.0
  %5665 = vmatpush1.msra.mxu0 0.0
  %5666 = vmatprep.subr.mxu0 0.0
  %5667 = vmatpush1.msra.mxu0 0.0
  %5668 = vmatprep.subr.mxu0 0.0
  %5669 = vmatpush1.msra.mxu0 0.0
  %5670 = vmatprep.subr.mxu0 0.0
  %5671 = vmatpush1.msra.mxu0 0.0
  %5672 = vmatprep.mubr.f32.mxu0 0.0
  %5673 = vmatmul.mubr.f32.gmra.mrb[0].mxu0 %v5601
  %v5674 = vpop.f32.mrb[0].mxu0
  %v5675 = vadd.f32 0.0, %v5674
  %v5676 = vpop.f32.mrb[0].mxu0
  %5677 = vmatprep.mubr.f32.mxu0 0.0
  %5678 = vmatmul.mubr.f32.gmra.mrb[0].mxu0 %v5604
  %v5679 = vpop.f32.mrb[0].mxu0
  %v5680 = vadd.f32 0.0, %v5679
  %v5681 = vpop.f32.mrb[0].mxu0
  %5682 = vdwg.mxu0
  %5685 = vrot.lane.b32.xlu0 %v5675, 24
  %v5686 = vpop.permute.xlu0 %5685
  %5687 = vrot.lane.b32.xlu0 %v5680, 24
  %v5688 = vpop.permute.xlu0 %5687
  %5691 = vst.msk [vmem:[#allocation3 + $0x9] sm:$0xff] %vm2661, %v5686
  %5692 = vst.msk [vmem:[#allocation3 + $0x11] sm:$0x1] %vm2663, %v5688
  %v5693 = vld [vmem:[#allocation3] sm:$0xff]
  %v5694 = vld [vmem:[#allocation3 + $0x8] sm:$0xff]
  %v5695 = vld [vmem:[#allocation3 + $0x10] sm:$0x3]
  %v5696 = vlaneseq
  %v5697 = vshrl.u32 %v5696, 7
  %v5698 = vsub.s32 0, %v5697
  %v5699 = vrot.slane %v3929, %v5698
  %v5701 = vsel %vm1686, %v5693, 0
  %v5704 = vsel %vm1686, %v5694, 0
  %v5707 = vsel %vm1686, %v5695, 0
  %5709 = vmatprep.subr.mxu0 0.0
  %5710 = vmatpush1.msra.mxu0 %v3908
  %5711 = vmatprep.subr.mxu0 0.0
  %5712 = vmatpush1.msra.mxu0 %v3909
  %5713 = vmatprep.subr.mxu0 0.0
  %5714 = vmatpush1.msra.mxu0 %v3910
  %5715 = vmatprep.subr.mxu0 0.0
  %5716 = vmatpush1.msra.mxu0 %v3911
  %5717 = vmatprep.subr.mxu0 0.0
  %5718 = vmatpush1.msra.mxu0 0.0
  %5719 = vmatprep.subr.mxu0 0.0
  %5720 = vmatpush1.msra.mxu0 0.0
  %5721 = vmatprep.subr.mxu0 0.0
  %5722 = vmatpush1.msra.mxu0 0.0
  %5723 = vmatprep.subr.mxu0 0.0
  %5724 = vmatpush1.msra.mxu0 0.0
  %5725 = vmatprep.subr.mxu0 0.0
  %5726 = vmatpush1.msra.mxu0 0.0
  %5727 = vmatprep.subr.mxu0 0.0
  %5728 = vmatpush1.msra.mxu0 0.0
  %5729 = vmatprep.subr.mxu0 0.0
  %5730 = vmatpush1.msra.mxu0 0.0
  %5731 = vmatprep.subr.mxu0 0.0
  %5732 = vmatpush1.msra.mxu0 0.0
  %5733 = vmatprep.subr.mxu0 0.0
  %5734 = vmatpush1.msra.mxu0 0.0
  %5735 = vmatprep.subr.mxu0 0.0
  %5736 = vmatpush1.msra.mxu0 0.0
  %5737 = vmatprep.subr.mxu0 0.0
  %5738 = vmatpush1.msra.mxu0 0.0
  %5739 = vmatprep.subr.mxu0 0.0
  %5740 = vmatpush1.msra.mxu0 0.0
  %5741 = vmatprep.subr.mxu0 0.0
  %5742 = vmatpush1.msra.mxu0 0.0
  %5743 = vmatprep.subr.mxu0 0.0
  %5744 = vmatpush1.msra.mxu0 0.0
  %5745 = vmatprep.subr.mxu0 0.0
  %5746 = vmatpush1.msra.mxu0 0.0
  %5747 = vmatprep.subr.mxu0 0.0
  %5748 = vmatpush1.msra.mxu0 0.0
  %5749 = vmatprep.subr.mxu0 0.0
  %5750 = vmatpush1.msra.mxu0 0.0
  %5751 = vmatprep.subr.mxu0 0.0
  %5752 = vmatpush1.msra.mxu0 0.0
  %5753 = vmatprep.subr.mxu0 0.0
  %5754 = vmatpush1.msra.mxu0 0.0
  %5755 = vmatprep.subr.mxu0 0.0
  %5756 = vmatpush1.msra.mxu0 0.0
  %5757 = vmatprep.subr.mxu0 0.0
  %5758 = vmatpush1.msra.mxu0 0.0
  %5759 = vmatprep.subr.mxu0 0.0
  %5760 = vmatpush1.msra.mxu0 0.0
  %5761 = vmatprep.subr.mxu0 0.0
  %5762 = vmatpush1.msra.mxu0 0.0
  %5763 = vmatprep.subr.mxu0 0.0
  %5764 = vmatpush1.msra.mxu0 0.0
  %5765 = vmatprep.subr.mxu0 0.0
  %5766 = vmatpush1.msra.mxu0 0.0
  %5767 = vmatprep.subr.mxu0 0.0
  %5768 = vmatpush1.msra.mxu0 0.0
  %5769 = vmatprep.subr.mxu0 0.0
  %5770 = vmatpush1.msra.mxu0 0.0
  %5771 = vmatprep.subr.mxu0 0.0
  %5772 = vmatpush1.msra.mxu0 0.0
  %5773 = vmatprep.mubr.f32.mxu0 0.0
  %5774 = vmatmul.mubr.f32.gmra.mrb[0].mxu0 %v5701
  %v5775 = vpop.f32.mrb[0].mxu0
  %v5776 = vadd.f32 %v5699, %v5775
  %v5777 = vpop.f32.mrb[0].mxu0
  %5778 = vmatprep.mubr.f32.mxu0 0.0
  %5779 = vmatmul.mubr.f32.gmra.mrb[0].mxu0 %v5704
  %v5780 = vpop.f32.mrb[0].mxu0
  %v5781 = vadd.f32 %v5699, %v5780
  %v5782 = vpop.f32.mrb[0].mxu0
  %5783 = vmatprep.mubr.f32.mxu0 0.0
  %5784 = vmatmul.mubr.f32.gmra.mrb[0].mxu0 %v5707
  %v5785 = vpop.f32.mrb[0].mxu0
  %v5786 = vadd.f32 %v5699, %v5785
  %v5787 = vpop.f32.mrb[0].mxu0
  %5788 = vdwg.mxu0
  %v5789 = vadd.f32 %v3899, %v5776
  %v5790 = vadd.f32 %v3900, %v5781
  %v5791 = vadd.f32 %v3901, %v5786
  %v5792 = vsel %vm1686, %v5789, 0.0
  %5793 = vadd.xlane.f32.xlu0 %v5792
  %v5794 = vpop.xlane.xlu0 %5793
  %v5795 = vsel %vm1686, %v5790, 0.0
  %5796 = vadd.xlane.f32.xlu0 %v5795
  %v5797 = vpop.xlane.xlu0 %5796
  %v5798 = vsel %vm3607, %v5791, 0.0
  %5799 = vadd.xlane.f32.xlu0 %v5798
  %v5800 = vpop.xlane.xlu0 %5799
  %v5801 = vmul.f32 %v5794, %v3611
  %v5802 = vmul.f32 %v5797, %v3611
  %v5803 = vmul.f32 %v5800, %v3611
  %v5804 = vsub.f32 %v5789, %v5801
  %v5805 = vsub.f32 %v5790, %v5802
  %v5806 = vsub.f32 %v5791, %v5803
  %v5807 = vmul.f32 %v5804, %v5804
  %v5808 = vmul.f32 %v5805, %v5805
  %v5809 = vmul.f32 %v5806, %v5806
  %v5810 = vsel %vm1686, %v5807, 0.0
  %5811 = vadd.xlane.f32.xlu0 %v5810
  %v5812 = vpop.xlane.xlu0 %5811
  %v5813 = vsel %vm1686, %v5808, 0.0
  %5814 = vadd.xlane.f32.xlu0 %v5813
  %v5815 = vpop.xlane.xlu0 %5814
  %v5816 = vsel %vm3607, %v5809, 0.0
  %5817 = vadd.xlane.f32.xlu0 %v5816
  %v5818 = vpop.xlane.xlu0 %5817
  %v5819 = vmul.f32 %v5812, %v3611
  %v5820 = vmul.f32 %v5815, %v3611
  %v5821 = vmul.f32 %v5818, %v3611
  %v5822 = vadd.f32 %v5819, 1e-05
  %v5823 = vadd.f32 %v5820, 1e-05
  %v5824 = vadd.f32 %v5821, 1e-05
  %v5825 = vrsqrt.pop %v5822
  %v5826 = vrsqrt.pop %v5823
  %v5827 = vrsqrt.pop %v5824
  %v5828 = vmul.f32 %v5804, %v5825
  %v5829 = vmul.f32 %v5805, %v5826
  %v5830 = vmul.f32 %v5806, %v5827
  %v5831 = vlaneseq
  %v5832 = vshrl.u32 %v5831, 7
  %v5833 = vsub.s32 1, %v5832
  %v5834 = vrot.slane %v3929, %v5833
  %v5835 = vmul.f32 %v5828, %v5834
  %v5836 = vmul.f32 %v5829, %v5834
  %v5837 = vmul.f32 %v5830, %v5834
  %v5838 = vlaneseq
  %v5839 = vshrl.u32 %v5838, 7
  %v5840 = vsub.s32 2, %v5839
  %v5841 = vrot.slane %v3929, %v5840
  %v5842 = vadd.f32 %v5835, %v5841
  %v5843 = vadd.f32 %v5836, %v5841
  %v5844 = vadd.f32 %v5837, %v5841
  %v5845 = vlaneseq
  %v5846 = vshrl.u32 %v5845, 7
  %v5847 = vsub.s32 1, %v5846
  %v5848 = vrot.slane %v3927, %v5847
  %v5850 = vsel %vm1686, %v5842, 0
  %v5853 = vsel %vm1686, %v5843, 0
  %v5856 = vsel %vm1686, %v5844, 0
  %5858 = vmatprep.subr.mxu0 0.0
  %5859 = vmatpush1.msra.mxu0 %v3913
  %5860 = vmatprep.subr.mxu0 0.0
  %5861 = vmatpush1.msra.mxu0 %v3914
  %5862 = vmatprep.subr.mxu0 0.0
  %5863 = vmatpush1.msra.mxu0 %v3915
  %5864 = vmatprep.subr.mxu0 0.0
  %5865 = vmatpush1.msra.mxu0 %v3916
  %5866 = vmatprep.subr.mxu0 0.0
  %5867 = vmatpush1.msra.mxu0 0.0
  %5868 = vmatprep.subr.mxu0 0.0
  %5869 = vmatpush1.msra.mxu0 0.0
  %5870 = vmatprep.subr.mxu0 0.0
  %5871 = vmatpush1.msra.mxu0 0.0
  %5872 = vmatprep.subr.mxu0 0.0
  %5873 = vmatpush1.msra.mxu0 0.0
  %5874 = vmatprep.subr.mxu0 0.0
  %5875 = vmatpush1.msra.mxu0 0.0
  %5876 = vmatprep.subr.mxu0 0.0
  %5877 = vmatpush1.msra.mxu0 0.0
  %5878 = vmatprep.subr.mxu0 0.0
  %5879 = vmatpush1.msra.mxu0 0.0
  %5880 = vmatprep.subr.mxu0 0.0
  %5881 = vmatpush1.msra.mxu0 0.0
  %5882 = vmatprep.subr.mxu0 0.0
  %5883 = vmatpush1.msra.mxu0 0.0
  %5884 = vmatprep.subr.mxu0 0.0
  %5885 = vmatpush1.msra.mxu0 0.0
  %5886 = vmatprep.subr.mxu0 0.0
  %5887 = vmatpush1.msra.mxu0 0.0
  %5888 = vmatprep.subr.mxu0 0.0
  %5889 = vmatpush1.msra.mxu0 0.0
  %5890 = vmatprep.subr.mxu0 0.0
  %5891 = vmatpush1.msra.mxu0 0.0
  %5892 = vmatprep.subr.mxu0 0.0
  %5893 = vmatpush1.msra.mxu0 0.0
  %5894 = vmatprep.subr.mxu0 0.0
  %5895 = vmatpush1.msra.mxu0 0.0
  %5896 = vmatprep.subr.mxu0 0.0
  %5897 = vmatpush1.msra.mxu0 0.0
  %5898 = vmatprep.subr.mxu0 0.0
  %5899 = vmatpush1.msra.mxu0 0.0
  %5900 = vmatprep.subr.mxu0 0.0
  %5901 = vmatpush1.msra.mxu0 0.0
  %5902 = vmatprep.subr.mxu0 0.0
  %5903 = vmatpush1.msra.mxu0 0.0
  %5904 = vmatprep.subr.mxu0 0.0
  %5905 = vmatpush1.msra.mxu0 0.0
  %5906 = vmatprep.subr.mxu0 0.0
  %5907 = vmatpush1.msra.mxu0 0.0
  %5908 = vmatprep.subr.mxu0 0.0
  %5909 = vmatpush1.msra.mxu0 0.0
  %5910 = vmatprep.subr.mxu0 0.0
  %5911 = vmatpush1.msra.mxu0 0.0
  %5912 = vmatprep.subr.mxu0 0.0
  %5913 = vmatpush1.msra.mxu0 0.0
  %5914 = vmatprep.subr.mxu0 0.0
  %5915 = vmatpush1.msra.mxu0 0.0
  %5916 = vmatprep.subr.mxu0 0.0
  %5917 = vmatpush1.msra.mxu0 0.0
  %5918 = vmatprep.subr.mxu0 0.0
  %5919 = vmatpush1.msra.mxu0 0.0
  %5920 = vmatprep.subr.mxu0 0.0
  %5921 = vmatpush1.msra.mxu0 0.0
  %5922 = vmatprep.mubr.f32.mxu0 0.0
  %5923 = vmatmul.mubr.f32.gmra.mrb[0].mxu0 %v5850
  %v5924 = vpop.f32.mrb[0].mxu0
  %v5925 = vadd.f32 %v5848, %v5924
  %v5926 = vpop.f32.mrb[0].mxu0
  %5927 = vmatprep.mubr.f32.mxu0 0.0
  %5928 = vmatmul.mubr.f32.gmra.mrb[0].mxu0 %v5853
  %v5929 = vpop.f32.mrb[0].mxu0
  %v5930 = vadd.f32 %v5848, %v5929
  %v5931 = vpop.f32.mrb[0].mxu0
  %5932 = vmatprep.mubr.f32.mxu0 0.0
  %5933 = vmatmul.mubr.f32.gmra.mrb[0].mxu0 %v5856
  %v5934 = vpop.f32.mrb[0].mxu0
  %v5935 = vadd.f32 %v5848, %v5934
  %v5936 = vpop.f32.mrb[0].mxu0
  %5937 = vdwg.mxu0
  %v5938 = vmax.f32 %v5925, 0.0
  %v5939 = vmax.f32 %v5930, 0.0
  %v5940 = vmax.f32 %v5935, 0.0
  %v5941 = vlaneseq
  %v5942 = vshrl.u32 %v5941, 7
  %v5943 = vsub.s32 3, %v5942
  %v5944 = vrot.slane %v3929, %v5943
  %v5946 = vsel %vm3756, %v5938, 0
  %v5949 = vsel %vm3756, %v5939, 0
  %v5952 = vsel %vm3756, %v5940, 0
  %5954 = vmatprep.subr.mxu0 0.0
  %5955 = vmatpush1.msra.mxu0 %v3918
  %5956 = vmatprep.subr.mxu0 0.0
  %5957 = vmatpush1.msra.mxu0 %v3919
  %5958 = vmatprep.subr.mxu0 0.0
  %5959 = vmatpush1.msra.mxu0 %v3920
  %5960 = vmatprep.subr.mxu0 0.0
  %5961 = vmatpush1.msra.mxu0 %v3921
  %5962 = vmatprep.subr.mxu0 0.0
  %5963 = vmatpush1.msra.mxu0 %v3922
  %5964 = vmatprep.subr.mxu0 0.0
  %5965 = vmatpush1.msra.mxu0 %v3923
  %5966 = vmatprep.subr.mxu0 0.0
  %5967 = vmatpush1.msra.mxu0 %v3924
  %5968 = vmatprep.subr.mxu0 0.0
  %5969 = vmatpush1.msra.mxu0 %v3925
  %5970 = vmatprep.subr.mxu0 0.0
  %5971 = vmatpush1.msra.mxu0 0.0
  %5972 = vmatprep.subr.mxu0 0.0
  %5973 = vmatpush1.msra.mxu0 0.0
  %5974 = vmatprep.subr.mxu0 0.0
  %5975 = vmatpush1.msra.mxu0 0.0
  %5976 = vmatprep.subr.mxu0 0.0
  %5977 = vmatpush1.msra.mxu0 0.0
  %5978 = vmatprep.subr.mxu0 0.0
  %5979 = vmatpush1.msra.mxu0 0.0
  %5980 = vmatprep.subr.mxu0 0.0
  %5981 = vmatpush1.msra.mxu0 0.0
  %5982 = vmatprep.subr.mxu0 0.0
  %5983 = vmatpush1.msra.mxu0 0.0
  %5984 = vmatprep.subr.mxu0 0.0
  %5985 = vmatpush1.msra.mxu0 0.0
  %5986 = vmatprep.subr.mxu0 0.0
  %5987 = vmatpush1.msra.mxu0 0.0
  %5988 = vmatprep.subr.mxu0 0.0
  %5989 = vmatpush1.msra.mxu0 0.0
  %5990 = vmatprep.subr.mxu0 0.0
  %5991 = vmatpush1.msra.mxu0 0.0
  %5992 = vmatprep.subr.mxu0 0.0
  %5993 = vmatpush1.msra.mxu0 0.0
  %5994 = vmatprep.subr.mxu0 0.0
  %5995 = vmatpush1.msra.mxu0 0.0
  %5996 = vmatprep.subr.mxu0 0.0
  %5997 = vmatpush1.msra.mxu0 0.0
  %5998 = vmatprep.subr.mxu0 0.0
  %5999 = vmatpush1.msra.mxu0 0.0
  %6000 = vmatprep.subr.mxu0 0.0
  %6001 = vmatpush1.msra.mxu0 0.0
  %6002 = vmatprep.subr.mxu0 0.0
  %6003 = vmatpush1.msra.mxu0 0.0
  %6004 = vmatprep.subr.mxu0 0.0
  %6005 = vmatpush1.msra.mxu0 0.0
  %6006 = vmatprep.subr.mxu0 0.0
  %6007 = vmatpush1.msra.mxu0 0.0
  %6008 = vmatprep.subr.mxu0 0.0
  %6009 = vmatpush1.msra.mxu0 0.0
  %6010 = vmatprep.subr.mxu0 0.0
  %6011 = vmatpush1.msra.mxu0 0.0
  %6012 = vmatprep.subr.mxu0 0.0
  %6013 = vmatpush1.msra.mxu0 0.0
  %6014 = vmatprep.subr.mxu0 0.0
  %6015 = vmatpush1.msra.mxu0 0.0
  %6016 = vmatprep.subr.mxu0 0.0
  %6017 = vmatpush1.msra.mxu0 0.0
  %6018 = vmatprep.mubr.f32.mxu0 0.0
  %6019 = vmatmul.mubr.f32.gmra.mrb[0].mxu0 %v5946
  %v6020 = vpop.f32.mrb[0].mxu0
  %v6021 = vadd.f32 %v5944, %v6020
  %v6022 = vpop.f32.mrb[0].mxu0
  %6023 = vmatprep.mubr.f32.mxu0 0.0
  %6024 = vmatmul.mubr.f32.gmra.mrb[0].mxu0 %v5949
  %v6025 = vpop.f32.mrb[0].mxu0
  %v6026 = vadd.f32 %v5944, %v6025
  %v6027 = vpop.f32.mrb[0].mxu0
  %6028 = vmatprep.mubr.f32.mxu0 0.0
  %6029 = vmatmul.mubr.f32.gmra.mrb[0].mxu0 %v5952
  %v6030 = vpop.f32.mrb[0].mxu0
  %v6031 = vadd.f32 %v5944, %v6030
  %v6032 = vpop.f32.mrb[0].mxu0
  %6033 = vdwg.mxu0
  %v6034 = vadd.f32 %v5842, %v6021
  %v6035 = vadd.f32 %v5843, %v6026
  %v6036 = vadd.f32 %v5844, %v6031
  %v6037 = vsel %vm1686, %v6034, 0.0
  %6038 = vadd.xlane.f32.xlu0 %v6037
  %v6039 = vpop.xlane.xlu0 %6038
  %v6040 = vsel %vm1686, %v6035, 0.0
  %6041 = vadd.xlane.f32.xlu0 %v6040
  %v6042 = vpop.xlane.xlu0 %6041
  %v6043 = vsel %vm3607, %v6036, 0.0
  %6044 = vadd.xlane.f32.xlu0 %v6043
  %v6045 = vpop.xlane.xlu0 %6044
  %v6046 = vmul.f32 %v6039, %v3611
  %v6047 = vmul.f32 %v6042, %v3611
  %v6048 = vmul.f32 %v6045, %v3611
  %v6049 = vsub.f32 %v6034, %v6046
  %v6050 = vsub.f32 %v6035, %v6047
  %v6051 = vsub.f32 %v6036, %v6048
  %v6052 = vmul.f32 %v6049, %v6049
  %v6053 = vmul.f32 %v6050, %v6050
  %v6054 = vmul.f32 %v6051, %v6051
  %v6055 = vsel %vm1686, %v6052, 0.0
  %6056 = vadd.xlane.f32.xlu0 %v6055
  %v6057 = vpop.xlane.xlu0 %6056
  %v6058 = vsel %vm1686, %v6053, 0.0
  %6059 = vadd.xlane.f32.xlu0 %v6058
  %v6060 = vpop.xlane.xlu0 %6059
  %v6061 = vsel %vm3607, %v6054, 0.0
  %6062 = vadd.xlane.f32.xlu0 %v6061
  %v6063 = vpop.xlane.xlu0 %6062
  %v6064 = vmul.f32 %v6057, %v3611
  %v6065 = vmul.f32 %v6060, %v3611
  %v6066 = vmul.f32 %v6063, %v3611
  %v6067 = vadd.f32 %v6064, 1e-05
  %v6068 = vadd.f32 %v6065, 1e-05
  %v6069 = vadd.f32 %v6066, 1e-05
  %v6070 = vrsqrt.pop %v6067
  %v6071 = vrsqrt.pop %v6068
  %v6072 = vrsqrt.pop %v6069
  %v6073 = vmul.f32 %v6049, %v6070
  %v6074 = vmul.f32 %v6050, %v6071
  %v6075 = vmul.f32 %v6051, %v6072
  %v6076 = vlaneseq
  %v6077 = vshrl.u32 %v6076, 7
  %v6078 = vsub.s32 4, %v6077
  %v6079 = vrot.slane %v3929, %v6078
  %v6080 = vmul.f32 %v6073, %v6079
  %v6081 = vmul.f32 %v6074, %v6079
  %v6082 = vmul.f32 %v6075, %v6079
  %v6083 = vlaneseq
  %v6084 = vshrl.u32 %v6083, 7
  %v6085 = vsub.s32 5, %v6084
  %v6086 = vrot.slane %v3929, %v6085
  %v6087 = vadd.f32 %v6080, %v6086
  %v6088 = vadd.f32 %v6081, %v6086
  %v6089 = vadd.f32 %v6082, %v6086
  %v6090 = vld [vmem:[%s12] sm:$0xff]
  %v6091 = vld [vmem:[%s12 + $0x8] sm:$0xff]
  %v6092 = vld [vmem:[%s12 + $0x10] sm:$0xff]
  %v6093 = vld [vmem:[%s12 + $0x18] sm:$0xff]
  %v6094 = vld [vmem:[%s13] sm:$0x1]
  %v6096 = vlaneseq
  %v6097 = vshrl.u32 %v6096, 7
  %v6098 = vsub.s32 0, %v6097
  %v6099 = vrot.slane %v6094, %v6098
  %v6102 = vsel %vm1686, %v6087, 0
  %v6105 = vsel %vm1686, %v6088, 0
  %v6108 = vsel %vm1686, %v6089, 0
  %6110 = vmatprep.subr.mxu0 0.0
  %6111 = vmatpush1.msra.mxu0 %v6090
  %6112 = vmatprep.subr.mxu0 0.0
  %6113 = vmatpush1.msra.mxu0 %v6091
  %6114 = vmatprep.subr.mxu0 0.0
  %6115 = vmatpush1.msra.mxu0 %v6092
  %6116 = vmatprep.subr.mxu0 0.0
  %6117 = vmatpush1.msra.mxu0 %v6093
  %6118 = vmatprep.subr.mxu0 0.0
  %6119 = vmatpush1.msra.mxu0 0.0
  %6120 = vmatprep.subr.mxu0 0.0
  %6121 = vmatpush1.msra.mxu0 0.0
  %6122 = vmatprep.subr.mxu0 0.0
  %6123 = vmatpush1.msra.mxu0 0.0
  %6124 = vmatprep.subr.mxu0 0.0
  %6125 = vmatpush1.msra.mxu0 0.0
  %6126 = vmatprep.subr.mxu0 0.0
  %6127 = vmatpush1.msra.mxu0 0.0
  %6128 = vmatprep.subr.mxu0 0.0
  %6129 = vmatpush1.msra.mxu0 0.0
  %6130 = vmatprep.subr.mxu0 0.0
  %6131 = vmatpush1.msra.mxu0 0.0
  %6132 = vmatprep.subr.mxu0 0.0
  %6133 = vmatpush1.msra.mxu0 0.0
  %6134 = vmatprep.subr.mxu0 0.0
  %6135 = vmatpush1.msra.mxu0 0.0
  %6136 = vmatprep.subr.mxu0 0.0
  %6137 = vmatpush1.msra.mxu0 0.0
  %6138 = vmatprep.subr.mxu0 0.0
  %6139 = vmatpush1.msra.mxu0 0.0
  %6140 = vmatprep.subr.mxu0 0.0
  %6141 = vmatpush1.msra.mxu0 0.0
  %6142 = vmatprep.subr.mxu0 0.0
  %6143 = vmatpush1.msra.mxu0 0.0
  %6144 = vmatprep.subr.mxu0 0.0
  %6145 = vmatpush1.msra.mxu0 0.0
  %6146 = vmatprep.subr.mxu0 0.0
  %6147 = vmatpush1.msra.mxu0 0.0
  %6148 = vmatprep.subr.mxu0 0.0
  %6149 = vmatpush1.msra.mxu0 0.0
  %6150 = vmatprep.subr.mxu0 0.0
  %6151 = vmatpush1.msra.mxu0 0.0
  %6152 = vmatprep.subr.mxu0 0.0
  %6153 = vmatpush1.msra.mxu0 0.0
  %6154 = vmatprep.subr.mxu0 0.0
  %6155 = vmatpush1.msra.mxu0 0.0
  %6156 = vmatprep.subr.mxu0 0.0
  %6157 = vmatpush1.msra.mxu0 0.0
  %6158 = vmatprep.subr.mxu0 0.0
  %6159 = vmatpush1.msra.mxu0 0.0
  %6160 = vmatprep.subr.mxu0 0.0
  %6161 = vmatpush1.msra.mxu0 0.0
  %6162 = vmatprep.subr.mxu0 0.0
  %6163 = vmatpush1.msra.mxu0 0.0
  %6164 = vmatprep.subr.mxu0 0.0
  %6165 = vmatpush1.msra.mxu0 0.0
  %6166 = vmatprep.subr.mxu0 0.0
  %6167 = vmatpush1.msra.mxu0 0.0
  %6168 = vmatprep.subr.mxu0 0.0
  %6169 = vmatpush1.msra.mxu0 0.0
  %6170 = vmatprep.subr.mxu0 0.0
  %6171 = vmatpush1.msra.mxu0 0.0
  %6172 = vmatprep.subr.mxu0 0.0
  %6173 = vmatpush1.msra.mxu0 0.0
  %6174 = vmatprep.mubr.f32.mxu0 0.0
  %6175 = vmatmul.mubr.f32.gmra.mrb[0].mxu0 %v6102
  %v6176 = vpop.f32.mrb[0].mxu0
  %v6177 = vadd.f32 %v6099, %v6176
  %v6178 = vpop.f32.mrb[0].mxu0
  %6179 = vmatprep.mubr.f32.mxu0 0.0
  %6180 = vmatmul.mubr.f32.gmra.mrb[0].mxu0 %v6105
  %v6181 = vpop.f32.mrb[0].mxu0
  %v6182 = vadd.f32 %v6099, %v6181
  %v6183 = vpop.f32.mrb[0].mxu0
  %6184 = vmatprep.mubr.f32.mxu0 0.0
  %6185 = vmatmul.mubr.f32.gmra.mrb[0].mxu0 %v6108
  %v6186 = vpop.f32.mrb[0].mxu0
  %v6187 = vadd.f32 %v6099, %v6186
  %v6188 = vpop.f32.mrb[0].mxu0
  %6189 = vdwg.mxu0
  %6190 = vst.msk [vmem:[%s14] sm:$0xff] %vm165, %v6177
  %vm6191 = vcmask 122880
  %6192 = vst.msk [vmem:[%s14 + $0x8] sm:$0x1] %vm6191, %v6182
  %s6193 = scalar_lea.vmem %s14, 16
  %vm6194 = vcmask 130049
  %6195 = vst.msk [vmem:[%s6193 - $0x1] sm:$0xfe] %vm6194, %v6182
  %vm6196 = vcmask 123904
  %6197 = vst.msk [vmem:[%s6193 + $0x7] sm:$0x3] %vm6196, %v6187
  // Predicated region
  $region58: #{tpu_custom_call.1} parent=0 // pred_check
    _
  $region59: #{tpu_custom_call.1} parent=0 // pred_check_branch
    %6199 = sbr.rel (0) target = $region61
  $region60: #{tpu_custom_call.1} parent=0 // pred_region
    _
  $region61: #{tpu_custom_call.1} parent=0 // pred_fallthru
    _
  // Predicated region
  $region62: #{tpu_custom_call.1} parent=0 // pred_check
    _
  $region63: #{tpu_custom_call.1} parent=0 // pred_check_branch
    %6201 = sbr.rel (0) target = $region65
  $region64: #{tpu_custom_call.1} parent=0 // pred_region
    _
  $region65: #{tpu_custom_call.1} parent=0 // pred_fallthru
    _

</llo_original>
